<compile_context>
chip_gen: v6e
topology: v6e:2x2x1
jax: 0.10.0
libtpu: 0.0.40
codegen_flags: <defaults>
</compile_context>

<pallas_src>
import functools

import jax
import jax.numpy as jnp
from jax.experimental import pallas as pl
from jax.experimental.pallas import tpu as pltpu


# ----------------------------------------------------------------------------
# Pallas kernel: fused im2col (4 contiguous taps) + matmul + bias + ReLU
# ----------------------------------------------------------------------------
def _conv_block_kernel(x_ref, w_ref, b_ref, o_ref, *, group, n_taps, w2,
                       s_out, kchunk):
    """Process `group` images, each as one flat [s_out, K] x [K, Cout] matmul.

    x_ref: [group, s_in, kchunk]        bf16 phase image, flattened spatial
    w_ref: [n_taps*n_taps*kchunk, cout] bf16 reordered conv weights
    b_ref: [1, cout]                    f32
    o_ref: [group, s_out, cout]         bf16 (intermediate) / f32 (last layer)
    """
    bias = b_ref[...]                                     # [1, cout] f32
    for g in range(group):
        acc = None
        t = 0
        for qh in range(n_taps):
            for qw in range(n_taps):
                off = qh * w2 + qw
                tap = x_ref[g, off:off + s_out, :]        # [s_out, kchunk] bf16
                wt = w_ref[t * kchunk:(t + 1) * kchunk, :]
                d = jnp.dot(tap, wt, preferred_element_type=jnp.float32)
                acc = d if acc is None else acc + d
                t += 1
        o_ref[g, :, :] = jnp.maximum(acc + bias, 0.0).astype(o_ref.dtype)


# ----------------------------------------------------------------------------
# One conv + ReLU layer (NHWC in / NHWC out), Pallas hot path
# ----------------------------------------------------------------------------
def _conv2d_relu_layer(x_nhwc, w, b, *, kernel_size, stride, out_dtype,
                       tm_rows=1024, max_group=32):
    # TODO(synk): only strides that divide the kernel size are implemented
    # (covers the module's kernel_size=4, stride=2 default).
    assert kernel_size % stride == 0, (kernel_size, stride)
    B, H, W, C = x_nhwc.shape
    kh, kw, cin, cout = w.shape
    assert (kh, kw, cin) == (kernel_size, kernel_size, C), (w.shape, x_nhwc.shape)
    s, q = stride, kernel_size // stride

    ho = (H - kernel_size) // stride + 1          # true valid output height
    wo = (W - kernel_size) // stride + 1
    h2 = -(-H // s)                               # phase-image height (ceil)
    w2 = -(-W // s)
    hc = h2 - (q - 1)                             # rows computed (>= ho)
    s_out = hc * w2                               # flat rows per image
    kchunk = s * s * C                            # phase-image channels
    pad_rows = 8                                  # taps reach <= q-2 rows past end
    s_in = h2 * w2 + pad_rows

    # --- space-to-depth (plain JAX layout pass): stride-s conv -> stride-1 ---
    xb = x_nhwc.astype(jnp.bfloat16)
    xb = jnp.pad(xb, ((0, 0), (0, h2 * s - H), (0, w2 * s - W), (0, 0)))
    xb = xb.reshape(B, h2, s, w2, s, C).transpose(0, 1, 3, 2, 4, 5)
    xb = xb.reshape(B, h2 * w2, kchunk)
    xb = jnp.pad(xb, ((0, 0), (0, pad_rows), (0, 0)))          # zero tail rows

    # --- reorder weights to tap-major [(q*q)*(s*s*C), cout], cast to bf16 ---
    w2d = w.reshape(q, s, q, s, C, cout).transpose(0, 2, 1, 3, 4, 5)
    w2d = w2d.reshape(q * q * kchunk, cout).astype(jnp.bfloat16)
    b2 = b.reshape(1, cout).astype(jnp.float32)

    # --- batch group so each grid step has ~tm_rows of matmul M ---
    group = max(1, min(max_group, B, tm_rows // max(1, s_out)))
    while B % group:
        group -= 1

    kernel = functools.partial(_conv_block_kernel, group=group, n_taps=q,
                               w2=w2, s_out=s_out, kchunk=kchunk)

    out_flat = pl.pallas_call(
        kernel,
        out_shape=jax.ShapeDtypeStruct((B, s_out, cout), out_dtype),
        grid_spec=pltpu.PrefetchScalarGridSpec(
            num_scalar_prefetch=0,
            grid=(B // group,),
            in_specs=[
                pl.BlockSpec((group, s_in, kchunk), lambda i: (i, 0, 0)),
                pl.BlockSpec((q * q * kchunk, cout), lambda i: (0, 0)),
                pl.BlockSpec((1, cout), lambda i: (0, 0)),
            ],
            out_specs=pl.BlockSpec((group, s_out, cout), lambda i: (i, 0, 0)),
        ),
        compiler_params=pltpu.CompilerParams(
            dimension_semantics=("parallel",),
            vmem_limit_bytes=32 * 1024 * 1024,
        ),
    )(xb, w2d, b2)

    # Drop wrap-around garbage columns / rows (cheap layout-only slice).
    out = out_flat.reshape(B, hc, w2, cout)[:, :ho, :wo, :]
    return out


# ----------------------------------------------------------------------------
# ObservationEncoder forward
# ----------------------------------------------------------------------------
def conv_out(h_in, padding, kernel_size, stride):
    return int((h_in + 2.0 * padding - (kernel_size - 1.0) - 1.0) / stride + 1.0)


def init_encoder_params(key, depth=32, shape=(3, 64, 64)):
    """Deterministic synthetic parameters (shapes mirror the PyTorch module)."""
    cin = shape[0]
    chans = [cin, 1 * depth, 2 * depth, 4 * depth, 8 * depth]
    params = []
    for li in range(4):
        key, kw_key = jax.random.split(key)
        fan_in = chans[li] * 4 * 4
        w = jax.random.normal(
            kw_key, (4, 4, chans[li], chans[li + 1]), jnp.float32
        ) * (1.0 / jnp.sqrt(fan_in))
        b = jnp.zeros((chans[li + 1],), jnp.float32)
        params.append((w, b))
    return params


def observation_encoder_forward(obs, params, *, stride=2, kernel_size=4):
    """obs: [..., C, H, W] float32 (NCHW like PyTorch). Returns [..., embed]."""
    batch_shape = obs.shape[:-3]
    C, H, W = obs.shape[-3:]
    x = obs.reshape(-1, C, H, W)
    x = jnp.transpose(x, (0, 2, 3, 1))            # NCHW -> NHWC
    n_layers = len(params)
    for li, (w, b) in enumerate(params):
        out_dtype = jnp.float32 if li == n_layers - 1 else jnp.bfloat16
        x = _conv2d_relu_layer(x, w, b, kernel_size=kernel_size, stride=stride,
                               out_dtype=out_dtype)
    # match torch.reshape of an NCHW tensor: flatten in (C, H, W) order
    x = jnp.transpose(x, (0, 3, 1, 2))
    B = x.shape[0]
    embed = x.reshape(B, -1)
    return embed.reshape(*batch_shape, -1)


def embed_size(depth, shape, stride):
    h = shape[1:]
    for _ in range(4):
        h = tuple(conv_out(v, 0, 4, stride) for v in h)
    return 8 * depth * h[0] * h[1]


# ----------------------------------------------------------------------------
# Pure-JAX f32 reference (for correctness check only)
# ----------------------------------------------------------------------------
def _reference_forward(obs, params, *, stride=2):
    batch_shape = obs.shape[:-3]
    C, H, W = obs.shape[-3:]
    x = obs.reshape(-1, C, H, W)
    for (w, b) in params:
        w_oihw = jnp.transpose(w, (3, 2, 0, 1))   # HWIO -> OIHW
        x = jax.lax.conv_general_dilated(
            x, w_oihw, window_strides=(stride, stride), padding="VALID",
            dimension_numbers=("NCHW", "OIHW", "NCHW"))
        x = jax.nn.relu(x + b[None, :, None, None])
    return x.reshape(*batch_shape, -1)


if __name__ == "__main__":
    # Small but shape-consistent config: depth=8, image (3, 64, 64), batch=2.
    depth, stride, shape = 8, 2, (3, 64, 64)
    key = jax.random.PRNGKey(0)
    key, obs_key = jax.random.split(key)

    params = init_encoder_params(key, depth=depth, shape=shape)
    obs = jax.random.normal(obs_key, (2, *shape), jnp.float32)

    fwd = jax.jit(functools.partial(observation_encoder_forward, stride=stride))
    out = jax.block_until_ready(fwd(obs, params))

    expected = (2, embed_size(depth, shape, stride))
    assert out.shape == expected, (out.shape, expected)

    ref = jax.block_until_ready(_reference_forward(obs, params, stride=stride))
    # bf16 dot operands vs f32 reference -> compare in relative L2 norm.
    rel = float(jnp.linalg.norm(out - ref) / (jnp.linalg.norm(ref) + 1e-12))
    assert rel < 5e-2, f"relative L2 error vs f32 reference too large: {rel}"

    print("KERNEL_OK")
</pallas_src>

<mosaic_0001>
module attributes {stable_mosaic.version = 11 : i64} {
  func.func @_conv_block_kernel(%arg0: i32, %arg1: memref<1x1032x12xbf16, #tpu.memory_space<vmem>>, %arg2: memref<48x8xbf16, #tpu.memory_space<vmem>>, %arg3: memref<1x8xf32, #tpu.memory_space<vmem>>, %arg4: memref<1x992x8xbf16, #tpu.memory_space<vmem>>) attributes {dimension_semantics = [#tpu.dimension_semantics<parallel>], iteration_bounds = array<i64: 2>, scalar_prefetch = 0 : i64, scratch_operands = 0 : i64, tpu.core_type = #tpu.core_type<tc>, window_params = [{transform_indices = @transform_0, window_bounds = array<i64: 1, 1032, 12>}, {pipeline_mode = #tpu.pipeline_mode<synchronous>, transform_indices = @transform_1, window_bounds = array<i64: 48, 8>}, {pipeline_mode = #tpu.pipeline_mode<synchronous>, transform_indices = @transform_2, window_bounds = array<i64: 1, 8>}, {transform_indices = @transform_3, window_bounds = array<i64: 1, 992, 8>}]} {
    %c0 = arith.constant 0 : index
    %c0_0 = arith.constant 0 : index
    %0 = vector.load %arg3[%c0, %c0_0] : memref<1x8xf32, #tpu.memory_space<vmem>>, vector<1x8xf32>
    %c0_1 = arith.constant 0 : index
    %c0_2 = arith.constant 0 : index
    %c0_3 = arith.constant 0 : index
    %1 = vector.load %arg1[%c0_1, %c0_2, %c0_3] : memref<1x1032x12xbf16, #tpu.memory_space<vmem>>, vector<1x992x12xbf16>
    %2 = vector.shape_cast %1 : vector<1x992x12xbf16> to vector<992x12xbf16>
    %c0_4 = arith.constant 0 : index
    %c0_5 = arith.constant 0 : index
    %3 = vector.load %arg2[%c0_4, %c0_5] : memref<48x8xbf16, #tpu.memory_space<vmem>>, vector<12x8xbf16>
    %cst = arith.constant dense<0.000000e+00> : vector<992x8xf32>
    %4 = tpu.matmul %2, %3, %cst {dimension_numbers = #tpu.dot_dimension_numbers<[1], [0], [0], [1], [0, 0, 1, 1], [], []>} : vector<992x12xbf16>, vector<12x8xbf16>, vector<992x8xf32> -> vector<992x8xf32>
    %c0_6 = arith.constant 0 : index
    %c1 = arith.constant 1 : index
    %c0_7 = arith.constant 0 : index
    %5 = vector.load %arg1[%c0_6, %c1, %c0_7] : memref<1x1032x12xbf16, #tpu.memory_space<vmem>>, vector<1x992x12xbf16>
    %6 = vector.shape_cast %5 : vector<1x992x12xbf16> to vector<992x12xbf16>
    %c12 = arith.constant 12 : index
    %c0_8 = arith.constant 0 : index
    %7 = vector.load %arg2[%c12, %c0_8] : memref<48x8xbf16, #tpu.memory_space<vmem>>, vector<12x8xbf16>
    %cst_9 = arith.constant dense<0.000000e+00> : vector<992x8xf32>
    %8 = tpu.matmul %6, %7, %cst_9 {dimension_numbers = #tpu.dot_dimension_numbers<[1], [0], [0], [1], [0, 0, 1, 1], [], []>} : vector<992x12xbf16>, vector<12x8xbf16>, vector<992x8xf32> -> vector<992x8xf32>
    %9 = arith.addf %4, %8 : vector<992x8xf32>
    %c0_10 = arith.constant 0 : index
    %c32 = arith.constant 32 : index
    %c0_11 = arith.constant 0 : index
    %10 = vector.load %arg1[%c0_10, %c32, %c0_11] : memref<1x1032x12xbf16, #tpu.memory_space<vmem>>, vector<1x992x12xbf16>
    %11 = vector.shape_cast %10 : vector<1x992x12xbf16> to vector<992x12xbf16>
    %c24 = arith.constant 24 : index
    %c0_12 = arith.constant 0 : index
    %12 = vector.load %arg2[%c24, %c0_12] : memref<48x8xbf16, #tpu.memory_space<vmem>>, vector<12x8xbf16>
    %cst_13 = arith.constant dense<0.000000e+00> : vector<992x8xf32>
    %13 = tpu.matmul %11, %12, %cst_13 {dimension_numbers = #tpu.dot_dimension_numbers<[1], [0], [0], [1], [0, 0, 1, 1], [], []>} : vector<992x12xbf16>, vector<12x8xbf16>, vector<992x8xf32> -> vector<992x8xf32>
    %14 = arith.addf %9, %13 : vector<992x8xf32>
    %c0_14 = arith.constant 0 : index
    %c33 = arith.constant 33 : index
    %c0_15 = arith.constant 0 : index
    %15 = vector.load %arg1[%c0_14, %c33, %c0_15] : memref<1x1032x12xbf16, #tpu.memory_space<vmem>>, vector<1x992x12xbf16>
    %16 = vector.shape_cast %15 : vector<1x992x12xbf16> to vector<992x12xbf16>
    %c36 = arith.constant 36 : index
    %c0_16 = arith.constant 0 : index
    %17 = vector.load %arg2[%c36, %c0_16] : memref<48x8xbf16, #tpu.memory_space<vmem>>, vector<12x8xbf16>
    %cst_17 = arith.constant dense<0.000000e+00> : vector<992x8xf32>
    %18 = tpu.matmul %16, %17, %cst_17 {dimension_numbers = #tpu.dot_dimension_numbers<[1], [0], [0], [1], [0, 0, 1, 1], [], []>} : vector<992x12xbf16>, vector<12x8xbf16>, vector<992x8xf32> -> vector<992x8xf32>
    %19 = arith.addf %14, %18 : vector<992x8xf32>
    %20 = vector.broadcast %0 : vector<1x8xf32> to vector<992x8xf32>
    %21 = arith.addf %19, %20 : vector<992x8xf32>
    %cst_18 = arith.constant 0.000000e+00 : f32
    %22 = vector.broadcast %cst_18 : f32 to vector<992x8xf32>
    %23 = arith.maximumf %21, %22 : vector<992x8xf32>
    %24 = arith.truncf %23 : vector<992x8xf32> to vector<992x8xbf16>
    %c0_19 = arith.constant 0 : index
    %c0_20 = arith.constant 0 : index
    %c0_21 = arith.constant 0 : index
    %25 = vector.load %arg4[%c0_19, %c0_20, %c0_21] : memref<1x992x8xbf16, #tpu.memory_space<vmem>>, vector<1x992x8xbf16>
    %26 = vector.shape_cast %25 : vector<1x992x8xbf16> to vector<992x8xbf16>
    %27 = vector.shape_cast %24 : vector<992x8xbf16> to vector<1x992x8xbf16>
    tpu.vector_store %arg4[%c0_19, %c0_20, %c0_21], %27 {strides = array<i32>} : memref<1x992x8xbf16, #tpu.memory_space<vmem>>, vector<1x992x8xbf16>,
    return
  }
  func.func @transform_0(%arg0: i32) -> (i32, i32, i32) {
    %c0_i32 = arith.constant 0 : i32
    %c0_i32_0 = arith.constant 0 : i32
    %c0_i32_1 = arith.constant 0 : i32
    return %arg0, %c0_i32, %c0_i32_0 : i32, i32, i32
  }
  func.func @transform_1(%arg0: i32) -> (i32, i32) {
    %c0_i32 = arith.constant 0 : i32
    %c0_i32_0 = arith.constant 0 : i32
    %c0_i32_1 = arith.constant 0 : i32
    return %c0_i32, %c0_i32_0 : i32, i32
  }
  func.func @transform_2(%arg0: i32) -> (i32, i32) {
    %c0_i32 = arith.constant 0 : i32
    %c0_i32_0 = arith.constant 0 : i32
    %c0_i32_1 = arith.constant 0 : i32
    return %c0_i32, %c0_i32_0 : i32, i32
  }
  func.func @transform_3(%arg0: i32) -> (i32, i32, i32) {
    %c0_i32 = arith.constant 0 : i32
    %c0_i32_0 = arith.constant 0 : i32
    %c0_i32_1 = arith.constant 0 : i32
    return %arg0, %c0_i32, %c0_i32_0 : i32, i32, i32
  }
}

module attributes {stable_mosaic.version = 11 : i64} {
  func.func @_conv_block_kernel(%arg0: i32, %arg1: memref<2x264x32xbf16, #tpu.memory_space<vmem>>, %arg2: memref<128x16xbf16, #tpu.memory_space<vmem>>, %arg3: memref<1x16xf32, #tpu.memory_space<vmem>>, %arg4: memref<2x240x16xbf16, #tpu.memory_space<vmem>>) attributes {dimension_semantics = [#tpu.dimension_semantics<parallel>], iteration_bounds = array<i64: 1>, scalar_prefetch = 0 : i64, scratch_operands = 0 : i64, tpu.core_type = #tpu.core_type<tc>, window_params = [{transform_indices = @transform_0, window_bounds = array<i64: 2, 264, 32>}, {pipeline_mode = #tpu.pipeline_mode<synchronous>, transform_indices = @transform_1, window_bounds = array<i64: 128, 16>}, {pipeline_mode = #tpu.pipeline_mode<synchronous>, transform_indices = @transform_2, window_bounds = array<i64: 1, 16>}, {transform_indices = @transform_3, window_bounds = array<i64: 2, 240, 16>}]} {
    %c0 = arith.constant 0 : index
    %c0_0 = arith.constant 0 : index
    %0 = vector.load %arg3[%c0, %c0_0] : memref<1x16xf32, #tpu.memory_space<vmem>>, vector<1x16xf32>
    %c0_1 = arith.constant 0 : index
    %c0_2 = arith.constant 0 : index
    %c0_3 = arith.constant 0 : index
    %1 = vector.load %arg1[%c0_1, %c0_2, %c0_3] : memref<2x264x32xbf16, #tpu.memory_space<vmem>>, vector<1x240x32xbf16>
    %2 = vector.shape_cast %1 : vector<1x240x32xbf16> to vector<240x32xbf16>
    %c0_4 = arith.constant 0 : index
    %c0_5 = arith.constant 0 : index
    %3 = vector.load %arg2[%c0_4, %c0_5] : memref<128x16xbf16, #tpu.memory_space<vmem>>, vector<32x16xbf16>
    %cst = arith.constant dense<0.000000e+00> : vector<240x16xf32>
    %4 = tpu.matmul %2, %3, %cst {dimension_numbers = #tpu.dot_dimension_numbers<[1], [0], [0], [1], [0, 0, 1, 1], [], []>} : vector<240x32xbf16>, vector<32x16xbf16>, vector<240x16xf32> -> vector<240x16xf32>
    %c0_6 = arith.constant 0 : index
    %c1 = arith.constant 1 : index
    %c0_7 = arith.constant 0 : index
    %5 = vector.load %arg1[%c0_6, %c1, %c0_7] : memref<2x264x32xbf16, #tpu.memory_space<vmem>>, vector<1x240x32xbf16>
    %6 = vector.shape_cast %5 : vector<1x240x32xbf16> to vector<240x32xbf16>
    %c32 = arith.constant 32 : index
    %c0_8 = arith.constant 0 : index
    %7 = vector.load %arg2[%c32, %c0_8] : memref<128x16xbf16, #tpu.memory_space<vmem>>, vector<32x16xbf16>
    %cst_9 = arith.constant dense<0.000000e+00> : vector<240x16xf32>
    %8 = tpu.matmul %6, %7, %cst_9 {dimension_numbers = #tpu.dot_dimension_numbers<[1], [0], [0], [1], [0, 0, 1, 1], [], []>} : vector<240x32xbf16>, vector<32x16xbf16>, vector<240x16xf32> -> vector<240x16xf32>
    %9 = arith.addf %4, %8 : vector<240x16xf32>
    %c0_10 = arith.constant 0 : index
    %c16 = arith.constant 16 : index
    %c0_11 = arith.constant 0 : index
    %10 = vector.load %arg1[%c0_10, %c16, %c0_11] : memref<2x264x32xbf16, #tpu.memory_space<vmem>>, vector<1x240x32xbf16>
    %11 = vector.shape_cast %10 : vector<1x240x32xbf16> to vector<240x32xbf16>
    %c64 = arith.constant 64 : index
    %c0_12 = arith.constant 0 : index
    %12 = vector.load %arg2[%c64, %c0_12] : memref<128x16xbf16, #tpu.memory_space<vmem>>, vector<32x16xbf16>
    %cst_13 = arith.constant dense<0.000000e+00> : vector<240x16xf32>
    %13 = tpu.matmul %11, %12, %cst_13 {dimension_numbers = #tpu.dot_dimension_numbers<[1], [0], [0], [1], [0, 0, 1, 1], [], []>} : vector<240x32xbf16>, vector<32x16xbf16>, vector<240x16xf32> -> vector<240x16xf32>
    %14 = arith.addf %9, %13 : vector<240x16xf32>
    %c0_14 = arith.constant 0 : index
    %c17 = arith.constant 17 : index
    %c0_15 = arith.constant 0 : index
    %15 = vector.load %arg1[%c0_14, %c17, %c0_15] : memref<2x264x32xbf16, #tpu.memory_space<vmem>>, vector<1x240x32xbf16>
    %16 = vector.shape_cast %15 : vector<1x240x32xbf16> to vector<240x32xbf16>
    %c96 = arith.constant 96 : index
    %c0_16 = arith.constant 0 : index
    %17 = vector.load %arg2[%c96, %c0_16] : memref<128x16xbf16, #tpu.memory_space<vmem>>, vector<32x16xbf16>
    %cst_17 = arith.constant dense<0.000000e+00> : vector<240x16xf32>
    %18 = tpu.matmul %16, %17, %cst_17 {dimension_numbers = #tpu.dot_dimension_numbers<[1], [0], [0], [1], [0, 0, 1, 1], [], []>} : vector<240x32xbf16>, vector<32x16xbf16>, vector<240x16xf32> -> vector<240x16xf32>
    %19 = arith.addf %14, %18 : vector<240x16xf32>
    %20 = vector.broadcast %0 : vector<1x16xf32> to vector<240x16xf32>
    %21 = arith.addf %19, %20 : vector<240x16xf32>
    %cst_18 = arith.constant 0.000000e+00 : f32
    %22 = vector.broadcast %cst_18 : f32 to vector<240x16xf32>
    %23 = arith.maximumf %21, %22 : vector<240x16xf32>
    %24 = arith.truncf %23 : vector<240x16xf32> to vector<240x16xbf16>
    %c0_19 = arith.constant 0 : index
    %c0_20 = arith.constant 0 : index
    %c0_21 = arith.constant 0 : index
    %25 = vector.load %arg4[%c0_19, %c0_20, %c0_21] : memref<2x240x16xbf16, #tpu.memory_space<vmem>>, vector<1x240x16xbf16>
    %26 = vector.shape_cast %25 : vector<1x240x16xbf16> to vector<240x16xbf16>
    %27 = vector.shape_cast %24 : vector<240x16xbf16> to vector<1x240x16xbf16>
    tpu.vector_store %arg4[%c0_19, %c0_20, %c0_21], %27 {strides = array<i32>} : memref<2x240x16xbf16, #tpu.memory_space<vmem>>, vector<1x240x16xbf16>,
    %c1_22 = arith.constant 1 : index
    %c0_23 = arith.constant 0 : index
    %c0_24 = arith.constant 0 : index
    %28 = vector.load %arg1[%c1_22, %c0_23, %c0_24] : memref<2x264x32xbf16, #tpu.memory_space<vmem>>, vector<1x240x32xbf16>
    %29 = vector.shape_cast %28 : vector<1x240x32xbf16> to vector<240x32xbf16>
    %c0_25 = arith.constant 0 : index
    %c0_26 = arith.constant 0 : index
    %30 = vector.load %arg2[%c0_25, %c0_26] : memref<128x16xbf16, #tpu.memory_space<vmem>>, vector<32x16xbf16>
    %cst_27 = arith.constant dense<0.000000e+00> : vector<240x16xf32>
    %31 = tpu.matmul %29, %30, %cst_27 {dimension_numbers = #tpu.dot_dimension_numbers<[1], [0], [0], [1], [0, 0, 1, 1], [], []>} : vector<240x32xbf16>, vector<32x16xbf16>, vector<240x16xf32> -> vector<240x16xf32>
    %c1_28 = arith.constant 1 : index
    %c1_29 = arith.constant 1 : index
    %c0_30 = arith.constant 0 : index
    %32 = vector.load %arg1[%c1_28, %c1_29, %c0_30] : memref<2x264x32xbf16, #tpu.memory_space<vmem>>, vector<1x240x32xbf16>
    %33 = vector.shape_cast %32 : vector<1x240x32xbf16> to vector<240x32xbf16>
    %c32_31 = arith.constant 32 : index
    %c0_32 = arith.constant 0 : index
    %34 = vector.load %arg2[%c32_31, %c0_32] : memref<128x16xbf16, #tpu.memory_space<vmem>>, vector<32x16xbf16>
    %cst_33 = arith.constant dense<0.000000e+00> : vector<240x16xf32>
    %35 = tpu.matmul %33, %34, %cst_33 {dimension_numbers = #tpu.dot_dimension_numbers<[1], [0], [0], [1], [0, 0, 1, 1], [], []>} : vector<240x32xbf16>, vector<32x16xbf16>, vector<240x16xf32> -> vector<240x16xf32>
    %36 = arith.addf %31, %35 : vector<240x16xf32>
    %c1_34 = arith.constant 1 : index
    %c16_35 = arith.constant 16 : index
    %c0_36 = arith.constant 0 : index
    %37 = vector.load %arg1[%c1_34, %c16_35, %c0_36] : memref<2x264x32xbf16, #tpu.memory_space<vmem>>, vector<1x240x32xbf16>
    %38 = vector.shape_cast %37 : vector<1x240x32xbf16> to vector<240x32xbf16>
    %c64_37 = arith.constant 64 : index
    %c0_38 = arith.constant 0 : index
    %39 = vector.load %arg2[%c64_37, %c0_38] : memref<128x16xbf16, #tpu.memory_space<vmem>>, vector<32x16xbf16>
    %cst_39 = arith.constant dense<0.000000e+00> : vector<240x16xf32>
    %40 = tpu.matmul %38, %39, %cst_39 {dimension_numbers = #tpu.dot_dimension_numbers<[1], [0], [0], [1], [0, 0, 1, 1], [], []>} : vector<240x32xbf16>, vector<32x16xbf16>, vector<240x16xf32> -> vector<240x16xf32>
    %41 = arith.addf %36, %40 : vector<240x16xf32>
    %c1_40 = arith.constant 1 : index
    %c17_41 = arith.constant 17 : index
    %c0_42 = arith.constant 0 : index
    %42 = vector.load %arg1[%c1_40, %c17_41, %c0_42] : memref<2x264x32xbf16, #tpu.memory_space<vmem>>, vector<1x240x32xbf16>
    %43 = vector.shape_cast %42 : vector<1x240x32xbf16> to vector<240x32xbf16>
    %c96_43 = arith.constant 96 : index
    %c0_44 = arith.constant 0 : index
    %44 = vector.load %arg2[%c96_43, %c0_44] : memref<128x16xbf16, #tpu.memory_space<vmem>>, vector<32x16xbf16>
    %cst_45 = arith.constant dense<0.000000e+00> : vector<240x16xf32>
    %45 = tpu.matmul %43, %44, %cst_45 {dimension_numbers = #tpu.dot_dimension_numbers<[1], [0], [0], [1], [0, 0, 1, 1], [], []>} : vector<240x32xbf16>, vector<32x16xbf16>, vector<240x16xf32> -> vector<240x16xf32>
    %46 = arith.addf %41, %45 : vector<240x16xf32>
    %47 = vector.broadcast %0 : vector<1x16xf32> to vector<240x16xf32>
    %48 = arith.addf %46, %47 : vector<240x16xf32>
    %cst_46 = arith.constant 0.000000e+00 : f32
    %49 = vector.broadcast %cst_46 : f32 to vector<240x16xf32>
    %50 = arith.maximumf %48, %49 : vector<240x16xf32>
    %51 = arith.truncf %50 : vector<240x16xf32> to vector<240x16xbf16>
    %c1_47 = arith.constant 1 : index
    %c0_48 = arith.constant 0 : index
    %c0_49 = arith.constant 0 : index
    %52 = vector.load %arg4[%c1_47, %c0_48, %c0_49] : memref<2x240x16xbf16, #tpu.memory_space<vmem>>, vector<1x240x16xbf16>
    %53 = vector.shape_cast %52 : vector<1x240x16xbf16> to vector<240x16xbf16>
    %54 = vector.shape_cast %51 : vector<240x16xbf16> to vector<1x240x16xbf16>
    tpu.vector_store %arg4[%c1_47, %c0_48, %c0_49], %54 {strides = array<i32>} : memref<2x240x16xbf16, #tpu.memory_space<vmem>>, vector<1x240x16xbf16>,
    return
  }
  func.func @transform_0(%arg0: i32) -> (i32, i32, i32) {
    %c0_i32 = arith.constant 0 : i32
    %c0_i32_0 = arith.constant 0 : i32
    %c0_i32_1 = arith.constant 0 : i32
    return %arg0, %c0_i32, %c0_i32_0 : i32, i32, i32
  }
  func.func @transform_1(%arg0: i32) -> (i32, i32) {
    %c0_i32 = arith.constant 0 : i32
    %c0_i32_0 = arith.constant 0 : i32
    %c0_i32_1 = arith.constant 0 : i32
    return %c0_i32, %c0_i32_0 : i32, i32
  }
  func.func @transform_2(%arg0: i32) -> (i32, i32) {
    %c0_i32 = arith.constant 0 : i32
    %c0_i32_0 = arith.constant 0 : i32
    %c0_i32_1 = arith.constant 0 : i32
    return %c0_i32, %c0_i32_0 : i32, i32
  }
  func.func @transform_3(%arg0: i32) -> (i32, i32, i32) {
    %c0_i32 = arith.constant 0 : i32
    %c0_i32_0 = arith.constant 0 : i32
    %c0_i32_1 = arith.constant 0 : i32
    return %arg0, %c0_i32, %c0_i32_0 : i32, i32, i32
  }
}

module attributes {stable_mosaic.version = 11 : i64} {
  func.func @_conv_block_kernel(%arg0: i32, %arg1: memref<2x57x64xbf16, #tpu.memory_space<vmem>>, %arg2: memref<256x32xbf16, #tpu.memory_space<vmem>>, %arg3: memref<1x32xf32, #tpu.memory_space<vmem>>, %arg4: memref<2x42x32xbf16, #tpu.memory_space<vmem>>) attributes {dimension_semantics = [#tpu.dimension_semantics<parallel>], iteration_bounds = array<i64: 1>, scalar_prefetch = 0 : i64, scratch_operands = 0 : i64, tpu.core_type = #tpu.core_type<tc>, window_params = [{transform_indices = @transform_0, window_bounds = array<i64: 2, 57, 64>}, {pipeline_mode = #tpu.pipeline_mode<synchronous>, transform_indices = @transform_1, window_bounds = array<i64: 256, 32>}, {pipeline_mode = #tpu.pipeline_mode<synchronous>, transform_indices = @transform_2, window_bounds = array<i64: 1, 32>}, {transform_indices = @transform_3, window_bounds = array<i64: 2, 42, 32>}]} {
    %c0 = arith.constant 0 : index
    %c0_0 = arith.constant 0 : index
    %0 = vector.load %arg3[%c0, %c0_0] : memref<1x32xf32, #tpu.memory_space<vmem>>, vector<1x32xf32>
    %c0_1 = arith.constant 0 : index
    %c0_2 = arith.constant 0 : index
    %c0_3 = arith.constant 0 : index
    %1 = vector.load %arg1[%c0_1, %c0_2, %c0_3] : memref<2x57x64xbf16, #tpu.memory_space<vmem>>, vector<1x42x64xbf16>
    %2 = vector.shape_cast %1 : vector<1x42x64xbf16> to vector<42x64xbf16>
    %c0_4 = arith.constant 0 : index
    %c0_5 = arith.constant 0 : index
    %3 = vector.load %arg2[%c0_4, %c0_5] : memref<256x32xbf16, #tpu.memory_space<vmem>>, vector<64x32xbf16>
    %cst = arith.constant dense<0.000000e+00> : vector<42x32xf32>
    %4 = tpu.matmul %2, %3, %cst {dimension_numbers = #tpu.dot_dimension_numbers<[1], [0], [0], [1], [0, 0, 1, 1], [], []>} : vector<42x64xbf16>, vector<64x32xbf16>, vector<42x32xf32> -> vector<42x32xf32>
    %c0_6 = arith.constant 0 : index
    %c1 = arith.constant 1 : index
    %c0_7 = arith.constant 0 : index
    %5 = vector.load %arg1[%c0_6, %c1, %c0_7] : memref<2x57x64xbf16, #tpu.memory_space<vmem>>, vector<1x42x64xbf16>
    %6 = vector.shape_cast %5 : vector<1x42x64xbf16> to vector<42x64xbf16>
    %c64 = arith.constant 64 : index
    %c0_8 = arith.constant 0 : index
    %7 = vector.load %arg2[%c64, %c0_8] : memref<256x32xbf16, #tpu.memory_space<vmem>>, vector<64x32xbf16>
    %cst_9 = arith.constant dense<0.000000e+00> : vector<42x32xf32>
    %8 = tpu.matmul %6, %7, %cst_9 {dimension_numbers = #tpu.dot_dimension_numbers<[1], [0], [0], [1], [0, 0, 1, 1], [], []>} : vector<42x64xbf16>, vector<64x32xbf16>, vector<42x32xf32> -> vector<42x32xf32>
    %9 = arith.addf %4, %8 : vector<42x32xf32>
    %c0_10 = arith.constant 0 : index
    %c7 = arith.constant 7 : index
    %c0_11 = arith.constant 0 : index
    %10 = vector.load %arg1[%c0_10, %c7, %c0_11] : memref<2x57x64xbf16, #tpu.memory_space<vmem>>, vector<1x42x64xbf16>
    %11 = vector.shape_cast %10 : vector<1x42x64xbf16> to vector<42x64xbf16>
    %c128 = arith.constant 128 : index
    %c0_12 = arith.constant 0 : index
    %12 = vector.load %arg2[%c128, %c0_12] : memref<256x32xbf16, #tpu.memory_space<vmem>>, vector<64x32xbf16>
    %cst_13 = arith.constant dense<0.000000e+00> : vector<42x32xf32>
    %13 = tpu.matmul %11, %12, %cst_13 {dimension_numbers = #tpu.dot_dimension_numbers<[1], [0], [0], [1], [0, 0, 1, 1], [], []>} : vector<42x64xbf16>, vector<64x32xbf16>, vector<42x32xf32> -> vector<42x32xf32>
    %14 = arith.addf %9, %13 : vector<42x32xf32>
    %c0_14 = arith.constant 0 : index
    %c8 = arith.constant 8 : index
    %c0_15 = arith.constant 0 : index
    %15 = vector.load %arg1[%c0_14, %c8, %c0_15] : memref<2x57x64xbf16, #tpu.memory_space<vmem>>, vector<1x42x64xbf16>
    %16 = vector.shape_cast %15 : vector<1x42x64xbf16> to vector<42x64xbf16>
    %c192 = arith.constant 192 : index
    %c0_16 = arith.constant 0 : index
    %17 = vector.load %arg2[%c192, %c0_16] : memref<256x32xbf16, #tpu.memory_space<vmem>>, vector<64x32xbf16>
    %cst_17 = arith.constant dense<0.000000e+00> : vector<42x32xf32>
    %18 = tpu.matmul %16, %17, %cst_17 {dimension_numbers = #tpu.dot_dimension_numbers<[1], [0], [0], [1], [0, 0, 1, 1], [], []>} : vector<42x64xbf16>, vector<64x32xbf16>, vector<42x32xf32> -> vector<42x32xf32>
    %19 = arith.addf %14, %18 : vector<42x32xf32>
    %20 = vector.broadcast %0 : vector<1x32xf32> to vector<42x32xf32>
    %21 = arith.addf %19, %20 : vector<42x32xf32>
    %cst_18 = arith.constant 0.000000e+00 : f32
    %22 = vector.broadcast %cst_18 : f32 to vector<42x32xf32>
    %23 = arith.maximumf %21, %22 : vector<42x32xf32>
    %24 = arith.truncf %23 : vector<42x32xf32> to vector<42x32xbf16>
    %c0_19 = arith.constant 0 : index
    %c0_20 = arith.constant 0 : index
    %c0_21 = arith.constant 0 : index
    %25 = vector.load %arg4[%c0_19, %c0_20, %c0_21] : memref<2x42x32xbf16, #tpu.memory_space<vmem>>, vector<1x42x32xbf16>
    %26 = vector.shape_cast %25 : vector<1x42x32xbf16> to vector<42x32xbf16>
    %27 = vector.shape_cast %24 : vector<42x32xbf16> to vector<1x42x32xbf16>
    tpu.vector_store %arg4[%c0_19, %c0_20, %c0_21], %27 {strides = array<i32>} : memref<2x42x32xbf16, #tpu.memory_space<vmem>>, vector<1x42x32xbf16>,
    %c1_22 = arith.constant 1 : index
    %c0_23 = arith.constant 0 : index
    %c0_24 = arith.constant 0 : index
    %28 = vector.load %arg1[%c1_22, %c0_23, %c0_24] : memref<2x57x64xbf16, #tpu.memory_space<vmem>>, vector<1x42x64xbf16>
    %29 = vector.shape_cast %28 : vector<1x42x64xbf16> to vector<42x64xbf16>
    %c0_25 = arith.constant 0 : index
    %c0_26 = arith.constant 0 : index
    %30 = vector.load %arg2[%c0_25, %c0_26] : memref<256x32xbf16, #tpu.memory_space<vmem>>, vector<64x32xbf16>
    %cst_27 = arith.constant dense<0.000000e+00> : vector<42x32xf32>
    %31 = tpu.matmul %29, %30, %cst_27 {dimension_numbers = #tpu.dot_dimension_numbers<[1], [0], [0], [1], [0, 0, 1, 1], [], []>} : vector<42x64xbf16>, vector<64x32xbf16>, vector<42x32xf32> -> vector<42x32xf32>
    %c1_28 = arith.constant 1 : index
    %c1_29 = arith.constant 1 : index
    %c0_30 = arith.constant 0 : index
    %32 = vector.load %arg1[%c1_28, %c1_29, %c0_30] : memref<2x57x64xbf16, #tpu.memory_space<vmem>>, vector<1x42x64xbf16>
    %33 = vector.shape_cast %32 : vector<1x42x64xbf16> to vector<42x64xbf16>
    %c64_31 = arith.constant 64 : index
    %c0_32 = arith.constant 0 : index
    %34 = vector.load %arg2[%c64_31, %c0_32] : memref<256x32xbf16, #tpu.memory_space<vmem>>, vector<64x32xbf16>
    %cst_33 = arith.constant dense<0.000000e+00> : vector<42x32xf32>
    %35 = tpu.matmul %33, %34, %cst_33 {dimension_numbers = #tpu.dot_dimension_numbers<[1], [0], [0], [1], [0, 0, 1, 1], [], []>} : vector<42x64xbf16>, vector<64x32xbf16>, vector<42x32xf32> -> vector<42x32xf32>
    %36 = arith.addf %31, %35 : vector<42x32xf32>
    %c1_34 = arith.constant 1 : index
    %c7_35 = arith.constant 7 : index
    %c0_36 = arith.constant 0 : index
    %37 = vector.load %arg1[%c1_34, %c7_35, %c0_36] : memref<2x57x64xbf16, #tpu.memory_space<vmem>>, vector<1x42x64xbf16>
    %38 = vector.shape_cast %37 : vector<1x42x64xbf16> to vector<42x64xbf16>
    %c128_37 = arith.constant 128 : index
    %c0_38 = arith.constant 0 : index
    %39 = vector.load %arg2[%c128_37, %c0_38] : memref<256x32xbf16, #tpu.memory_space<vmem>>, vector<64x32xbf16>
    %cst_39 = arith.constant dense<0.000000e+00> : vector<42x32xf32>
    %40 = tpu.matmul %38, %39, %cst_39 {dimension_numbers = #tpu.dot_dimension_numbers<[1], [0], [0], [1], [0, 0, 1, 1], [], []>} : vector<42x64xbf16>, vector<64x32xbf16>, vector<42x32xf32> -> vector<42x32xf32>
    %41 = arith.addf %36, %40 : vector<42x32xf32>
    %c1_40 = arith.constant 1 : index
    %c8_41 = arith.constant 8 : index
    %c0_42 = arith.constant 0 : index
    %42 = vector.load %arg1[%c1_40, %c8_41, %c0_42] : memref<2x57x64xbf16, #tpu.memory_space<vmem>>, vector<1x42x64xbf16>
    %43 = vector.shape_cast %42 : vector<1x42x64xbf16> to vector<42x64xbf16>
    %c192_43 = arith.constant 192 : index
    %c0_44 = arith.constant 0 : index
    %44 = vector.load %arg2[%c192_43, %c0_44] : memref<256x32xbf16, #tpu.memory_space<vmem>>, vector<64x32xbf16>
    %cst_45 = arith.constant dense<0.000000e+00> : vector<42x32xf32>
    %45 = tpu.matmul %43, %44, %cst_45 {dimension_numbers = #tpu.dot_dimension_numbers<[1], [0], [0], [1], [0, 0, 1, 1], [], []>} : vector<42x64xbf16>, vector<64x32xbf16>, vector<42x32xf32> -> vector<42x32xf32>
    %46 = arith.addf %41, %45 : vector<42x32xf32>
    %47 = vector.broadcast %0 : vector<1x32xf32> to vector<42x32xf32>
    %48 = arith.addf %46, %47 : vector<42x32xf32>
    %cst_46 = arith.constant 0.000000e+00 : f32
    %49 = vector.broadcast %cst_46 : f32 to vector<42x32xf32>
    %50 = arith.maximumf %48, %49 : vector<42x32xf32>
    %51 = arith.truncf %50 : vector<42x32xf32> to vector<42x32xbf16>
    %c1_47 = arith.constant 1 : index
    %c0_48 = arith.constant 0 : index
    %c0_49 = arith.constant 0 : index
    %52 = vector.load %arg4[%c1_47, %c0_48, %c0_49] : memref<2x42x32xbf16, #tpu.memory_space<vmem>>, vector<1x42x32xbf16>
    %53 = vector.shape_cast %52 : vector<1x42x32xbf16> to vector<42x32xbf16>
    %54 = vector.shape_cast %51 : vector<42x32xbf16> to vector<1x42x32xbf16>
    tpu.vector_store %arg4[%c1_47, %c0_48, %c0_49], %54 {strides = array<i32>} : memref<2x42x32xbf16, #tpu.memory_space<vmem>>, vector<1x42x32xbf16>,
    return
  }
  func.func @transform_0(%arg0: i32) -> (i32, i32, i32) {
    %c0_i32 = arith.constant 0 : i32
    %c0_i32_0 = arith.constant 0 : i32
    %c0_i32_1 = arith.constant 0 : i32
    return %arg0, %c0_i32, %c0_i32_0 : i32, i32, i32
  }
  func.func @transform_1(%arg0: i32) -> (i32, i32) {
    %c0_i32 = arith.constant 0 : i32
    %c0_i32_0 = arith.constant 0 : i32
    %c0_i32_1 = arith.constant 0 : i32
    return %c0_i32, %c0_i32_0 : i32, i32
  }
  func.func @transform_2(%arg0: i32) -> (i32, i32) {
    %c0_i32 = arith.constant 0 : i32
    %c0_i32_0 = arith.constant 0 : i32
    %c0_i32_1 = arith.constant 0 : i32
    return %c0_i32, %c0_i32_0 : i32, i32
  }
  func.func @transform_3(%arg0: i32) -> (i32, i32, i32) {
    %c0_i32 = arith.constant 0 : i32
    %c0_i32_0 = arith.constant 0 : i32
    %c0_i32_1 = arith.constant 0 : i32
    return %arg0, %c0_i32, %c0_i32_0 : i32, i32, i32
  }
}

module attributes {stable_mosaic.version = 11 : i64} {
  func.func @_conv_block_kernel(%arg0: i32, %arg1: memref<2x17x128xbf16, #tpu.memory_space<vmem>>, %arg2: memref<512x64xbf16, #tpu.memory_space<vmem>>, %arg3: memref<1x64xf32, #tpu.memory_space<vmem>>, %arg4: memref<2x6x64xf32, #tpu.memory_space<vmem>>) attributes {dimension_semantics = [#tpu.dimension_semantics<parallel>], iteration_bounds = array<i64: 1>, scalar_prefetch = 0 : i64, scratch_operands = 0 : i64, tpu.core_type = #tpu.core_type<tc>, window_params = [{transform_indices = @transform_0, window_bounds = array<i64: 2, 17, 128>}, {pipeline_mode = #tpu.pipeline_mode<synchronous>, transform_indices = @transform_1, window_bounds = array<i64: 512, 64>}, {pipeline_mode = #tpu.pipeline_mode<synchronous>, transform_indices = @transform_2, window_bounds = array<i64: 1, 64>}, {transform_indices = @transform_3, window_bounds = array<i64: 2, 6, 64>}]} {
    %c0 = arith.constant 0 : index
    %c0_0 = arith.constant 0 : index
    %0 = vector.load %arg3[%c0, %c0_0] : memref<1x64xf32, #tpu.memory_space<vmem>>, vector<1x64xf32>
    %c0_1 = arith.constant 0 : index
    %c0_2 = arith.constant 0 : index
    %c0_3 = arith.constant 0 : index
    %1 = vector.load %arg1[%c0_1, %c0_2, %c0_3] : memref<2x17x128xbf16, #tpu.memory_space<vmem>>, vector<1x6x128xbf16>
    %2 = vector.shape_cast %1 : vector<1x6x128xbf16> to vector<6x128xbf16>
    %c0_4 = arith.constant 0 : index
    %c0_5 = arith.constant 0 : index
    %3 = vector.load %arg2[%c0_4, %c0_5] : memref<512x64xbf16, #tpu.memory_space<vmem>>, vector<128x64xbf16>
    %cst = arith.constant dense<0.000000e+00> : vector<6x64xf32>
    %4 = tpu.matmul %2, %3, %cst {dimension_numbers = #tpu.dot_dimension_numbers<[1], [0], [0], [1], [0, 0, 1, 1], [], []>} : vector<6x128xbf16>, vector<128x64xbf16>, vector<6x64xf32> -> vector<6x64xf32>
    %c0_6 = arith.constant 0 : index
    %c1 = arith.constant 1 : index
    %c0_7 = arith.constant 0 : index
    %5 = vector.load %arg1[%c0_6, %c1, %c0_7] : memref<2x17x128xbf16, #tpu.memory_space<vmem>>, vector<1x6x128xbf16>
    %6 = vector.shape_cast %5 : vector<1x6x128xbf16> to vector<6x128xbf16>
    %c128 = arith.constant 128 : index
    %c0_8 = arith.constant 0 : index
    %7 = vector.load %arg2[%c128, %c0_8] : memref<512x64xbf16, #tpu.memory_space<vmem>>, vector<128x64xbf16>
    %cst_9 = arith.constant dense<0.000000e+00> : vector<6x64xf32>
    %8 = tpu.matmul %6, %7, %cst_9 {dimension_numbers = #tpu.dot_dimension_numbers<[1], [0], [0], [1], [0, 0, 1, 1], [], []>} : vector<6x128xbf16>, vector<128x64xbf16>, vector<6x64xf32> -> vector<6x64xf32>
    %9 = arith.addf %4, %8 : vector<6x64xf32>
    %c0_10 = arith.constant 0 : index
    %c3 = arith.constant 3 : index
    %c0_11 = arith.constant 0 : index
    %10 = vector.load %arg1[%c0_10, %c3, %c0_11] : memref<2x17x128xbf16, #tpu.memory_space<vmem>>, vector<1x6x128xbf16>
    %11 = vector.shape_cast %10 : vector<1x6x128xbf16> to vector<6x128xbf16>
    %c256 = arith.constant 256 : index
    %c0_12 = arith.constant 0 : index
    %12 = vector.load %arg2[%c256, %c0_12] : memref<512x64xbf16, #tpu.memory_space<vmem>>, vector<128x64xbf16>
    %cst_13 = arith.constant dense<0.000000e+00> : vector<6x64xf32>
    %13 = tpu.matmul %11, %12, %cst_13 {dimension_numbers = #tpu.dot_dimension_numbers<[1], [0], [0], [1], [0, 0, 1, 1], [], []>} : vector<6x128xbf16>, vector<128x64xbf16>, vector<6x64xf32> -> vector<6x64xf32>
    %14 = arith.addf %9, %13 : vector<6x64xf32>
    %c0_14 = arith.constant 0 : index
    %c4 = arith.constant 4 : index
    %c0_15 = arith.constant 0 : index
    %15 = vector.load %arg1[%c0_14, %c4, %c0_15] : memref<2x17x128xbf16, #tpu.memory_space<vmem>>, vector<1x6x128xbf16>
    %16 = vector.shape_cast %15 : vector<1x6x128xbf16> to vector<6x128xbf16>
    %c384 = arith.constant 384 : index
    %c0_16 = arith.constant 0 : index
    %17 = vector.load %arg2[%c384, %c0_16] : memref<512x64xbf16, #tpu.memory_space<vmem>>, vector<128x64xbf16>
    %cst_17 = arith.constant dense<0.000000e+00> : vector<6x64xf32>
    %18 = tpu.matmul %16, %17, %cst_17 {dimension_numbers = #tpu.dot_dimension_numbers<[1], [0], [0], [1], [0, 0, 1, 1], [], []>} : vector<6x128xbf16>, vector<128x64xbf16>, vector<6x64xf32> -> vector<6x64xf32>
    %19 = arith.addf %14, %18 : vector<6x64xf32>
    %20 = vector.broadcast %0 : vector<1x64xf32> to vector<6x64xf32>
    %21 = arith.addf %19, %20 : vector<6x64xf32>
    %cst_18 = arith.constant 0.000000e+00 : f32
    %22 = vector.broadcast %cst_18 : f32 to vector<6x64xf32>
    %23 = arith.maximumf %21, %22 : vector<6x64xf32>
    %c0_19 = arith.constant 0 : index
    %c0_20 = arith.constant 0 : index
    %c0_21 = arith.constant 0 : index
    %24 = vector.load %arg4[%c0_19, %c0_20, %c0_21] : memref<2x6x64xf32, #tpu.memory_space<vmem>>, vector<1x6x64xf32>
    %25 = vector.shape_cast %24 : vector<1x6x64xf32> to vector<6x64xf32>
    %26 = vector.shape_cast %23 : vector<6x64xf32> to vector<1x6x64xf32>
    tpu.vector_store %arg4[%c0_19, %c0_20, %c0_21], %26 {strides = array<i32>} : memref<2x6x64xf32, #tpu.memory_space<vmem>>, vector<1x6x64xf32>,
    %c1_22 = arith.constant 1 : index
    %c0_23 = arith.constant 0 : index
    %c0_24 = arith.constant 0 : index
    %27 = vector.load %arg1[%c1_22, %c0_23, %c0_24] : memref<2x17x128xbf16, #tpu.memory_space<vmem>>, vector<1x6x128xbf16>
    %28 = vector.shape_cast %27 : vector<1x6x128xbf16> to vector<6x128xbf16>
    %c0_25 = arith.constant 0 : index
    %c0_26 = arith.constant 0 : index
    %29 = vector.load %arg2[%c0_25, %c0_26] : memref<512x64xbf16, #tpu.memory_space<vmem>>, vector<128x64xbf16>
    %cst_27 = arith.constant dense<0.000000e+00> : vector<6x64xf32>
    %30 = tpu.matmul %28, %29, %cst_27 {dimension_numbers = #tpu.dot_dimension_numbers<[1], [0], [0], [1], [0, 0, 1, 1], [], []>} : vector<6x128xbf16>, vector<128x64xbf16>, vector<6x64xf32> -> vector<6x64xf32>
    %c1_28 = arith.constant 1 : index
    %c1_29 = arith.constant 1 : index
    %c0_30 = arith.constant 0 : index
    %31 = vector.load %arg1[%c1_28, %c1_29, %c0_30] : memref<2x17x128xbf16, #tpu.memory_space<vmem>>, vector<1x6x128xbf16>
    %32 = vector.shape_cast %31 : vector<1x6x128xbf16> to vector<6x128xbf16>
    %c128_31 = arith.constant 128 : index
    %c0_32 = arith.constant 0 : index
    %33 = vector.load %arg2[%c128_31, %c0_32] : memref<512x64xbf16, #tpu.memory_space<vmem>>, vector<128x64xbf16>
    %cst_33 = arith.constant dense<0.000000e+00> : vector<6x64xf32>
    %34 = tpu.matmul %32, %33, %cst_33 {dimension_numbers = #tpu.dot_dimension_numbers<[1], [0], [0], [1], [0, 0, 1, 1], [], []>} : vector<6x128xbf16>, vector<128x64xbf16>, vector<6x64xf32> -> vector<6x64xf32>
    %35 = arith.addf %30, %34 : vector<6x64xf32>
    %c1_34 = arith.constant 1 : index
    %c3_35 = arith.constant 3 : index
    %c0_36 = arith.constant 0 : index
    %36 = vector.load %arg1[%c1_34, %c3_35, %c0_36] : memref<2x17x128xbf16, #tpu.memory_space<vmem>>, vector<1x6x128xbf16>
    %37 = vector.shape_cast %36 : vector<1x6x128xbf16> to vector<6x128xbf16>
    %c256_37 = arith.constant 256 : index
    %c0_38 = arith.constant 0 : index
    %38 = vector.load %arg2[%c256_37, %c0_38] : memref<512x64xbf16, #tpu.memory_space<vmem>>, vector<128x64xbf16>
    %cst_39 = arith.constant dense<0.000000e+00> : vector<6x64xf32>
    %39 = tpu.matmul %37, %38, %cst_39 {dimension_numbers = #tpu.dot_dimension_numbers<[1], [0], [0], [1], [0, 0, 1, 1], [], []>} : vector<6x128xbf16>, vector<128x64xbf16>, vector<6x64xf32> -> vector<6x64xf32>
    %40 = arith.addf %35, %39 : vector<6x64xf32>
    %c1_40 = arith.constant 1 : index
    %c4_41 = arith.constant 4 : index
    %c0_42 = arith.constant 0 : index
    %41 = vector.load %arg1[%c1_40, %c4_41, %c0_42] : memref<2x17x128xbf16, #tpu.memory_space<vmem>>, vector<1x6x128xbf16>
    %42 = vector.shape_cast %41 : vector<1x6x128xbf16> to vector<6x128xbf16>
    %c384_43 = arith.constant 384 : index
    %c0_44 = arith.constant 0 : index
    %43 = vector.load %arg2[%c384_43, %c0_44] : memref<512x64xbf16, #tpu.memory_space<vmem>>, vector<128x64xbf16>
    %cst_45 = arith.constant dense<0.000000e+00> : vector<6x64xf32>
    %44 = tpu.matmul %42, %43, %cst_45 {dimension_numbers = #tpu.dot_dimension_numbers<[1], [0], [0], [1], [0, 0, 1, 1], [], []>} : vector<6x128xbf16>, vector<128x64xbf16>, vector<6x64xf32> -> vector<6x64xf32>
    %45 = arith.addf %40, %44 : vector<6x64xf32>
    %46 = vector.broadcast %0 : vector<1x64xf32> to vector<6x64xf32>
    %47 = arith.addf %45, %46 : vector<6x64xf32>
    %cst_46 = arith.constant 0.000000e+00 : f32
    %48 = vector.broadcast %cst_46 : f32 to vector<6x64xf32>
    %49 = arith.maximumf %47, %48 : vector<6x64xf32>
    %c1_47 = arith.constant 1 : index
    %c0_48 = arith.constant 0 : index
    %c0_49 = arith.constant 0 : index
    %50 = vector.load %arg4[%c1_47, %c0_48, %c0_49] : memref<2x6x64xf32, #tpu.memory_space<vmem>>, vector<1x6x64xf32>
    %51 = vector.shape_cast %50 : vector<1x6x64xf32> to vector<6x64xf32>
    %52 = vector.shape_cast %49 : vector<6x64xf32> to vector<1x6x64xf32>
    tpu.vector_store %arg4[%c1_47, %c0_48, %c0_49], %52 {strides = array<i32>} : memref<2x6x64xf32, #tpu.memory_space<vmem>>, vector<1x6x64xf32>,
    return
  }
  func.func @transform_0(%arg0: i32) -> (i32, i32, i32) {
    %c0_i32 = arith.constant 0 : i32
    %c0_i32_0 = arith.constant 0 : i32
    %c0_i32_1 = arith.constant 0 : i32
    return %arg0, %c0_i32, %c0_i32_0 : i32, i32, i32
  }
  func.func @transform_1(%arg0: i32) -> (i32, i32) {
    %c0_i32 = arith.constant 0 : i32
    %c0_i32_0 = arith.constant 0 : i32
    %c0_i32_1 = arith.constant 0 : i32
    return %c0_i32, %c0_i32_0 : i32, i32
  }
  func.func @transform_2(%arg0: i32) -> (i32, i32) {
    %c0_i32 = arith.constant 0 : i32
    %c0_i32_0 = arith.constant 0 : i32
    %c0_i32_1 = arith.constant 0 : i32
    return %c0_i32, %c0_i32_0 : i32, i32
  }
  func.func @transform_3(%arg0: i32) -> (i32, i32, i32) {
    %c0_i32 = arith.constant 0 : i32
    %c0_i32_0 = arith.constant 0 : i32
    %c0_i32_1 = arith.constant 0 : i32
    return %arg0, %c0_i32, %c0_i32_0 : i32, i32, i32
  }
}

</mosaic_0001>

<llo_original>
// kernel: observation_encoder_forward.4
$region0: #{observation_encoder_forward.4}
  #allocation0 [shape = 'u32[]', space=smem, size = 0x4, offset = 0x4, fixed_abs, tag = 'smem constant byte address 0x4 - core index']
  #allocation1 [shape = 'u32[144,128]{1,0:T(1,128)}', space=vmem, size = 0x12000, scoped, tag = 'internal scratch']
  %s0 = inlined_call_operand.vmem [shape: bf16[2,1032,12], index: 0, kind: input, shape index: {}]
  %s1 = inlined_call_operand.vmem [shape: bf16[48,8], index: 1, kind: input, shape index: {}]
  %s2 = inlined_call_operand.vmem [shape: f32[1,8], index: 2, kind: input, shape index: {}]
  %s3 = inlined_call_operand.vmem [shape: bf16[2,992,8], index: 3, kind: output, shape index: {}]
  %s4 = sld [smem:[#allocation0]]
  $region45: #{observation_encoder_forward.4} parent=0
    _
  %s6 = ssub.s32 1, %s4
  %s7 = scalar_select 0, %s6, %s4
  loop: start=0, step=1, limit=4
  $region2: #{observation_encoder_forward.4} parent=0 // loop_pre_header
    _
  $region3: #{observation_encoder_forward.4} parent=0 // loop_header
    %s9 = sphi 0, %s13
    %p10 = scmp.ge.s32.totalorder %s9, 4
    %s19 = sphi 0, %s21
    %s22 = sphi 0, %s19
    %s23 = sphi 0, %s22
    %s39 = sphi 0, %s23
    %s43 = sphi 0, %s43
    %s45 = sphi 0, %s43
    %s46 = sphi 0, %s45
    %s60 = sphi 0, %s46
    %s64 = sphi 0, %s64
    %s66 = sphi 0, %s64
    %s67 = sphi 0, %s66
    %s81 = sphi 0, %s67
    %s87 = sphi 0, %s89
    %s90 = sphi 0, %s87
    %s91 = sphi 0, %s90
    %s107 = sphi 0, %s91
  $region4: #{observation_encoder_forward.4} parent=0 // loop_header_branch
    %12 = sbr.rel (%p10) target = $region8
  $region5: #{observation_encoder_forward.4} parent=0 // loop_body
    %s14 = ssub.s32 %s9, 1
    %s15 = ssub.s32 %s9, 2
    %s16 = sadd.s32 %s9, 1
    %s17 = ssub.s32 %s9, %s16
    %p18 = scmp.eq.s32.totalorder %s17, 0
    %s20 = sadd.s32 %s19, 1
    %s21 = scalar_select %p18, %s19, %s20
    %p24 = pneg %p18
    %p25 = scmp.eq.s32.totalorder %s9, 1
    %p26 = por %p24, %p25
    %p27 = scmp.ne.s32.totalorder %s19, %s22
    %p28 = scmp.eq.s32.totalorder %s9, 0
    %p29 = por %p27, %p28
    %p30 = scmp.ne.s32.totalorder %s19, %s22
    %p31 = scmp.eq.s32.totalorder %s14, 1
    %p32 = por %p30, %p31
    %p33 = scmp.ne.s32.totalorder %s22, %s23
    %p34 = scmp.eq.s32.totalorder %s14, 0
    %p35 = por %p33, %p34
    %p36 = scmp.ne.s32.totalorder %s22, %s23
    %p37 = scmp.eq.s32.totalorder %s15, 1
    %p38 = por %p36, %p37
    %p40 = scmp.ne.s32.totalorder %s23, %s39
    %p41 = scmp.eq.s32.totalorder %s15, 0
    %p42 = por %p40, %p41
    %s44 = sadd.s32 %s43, 1
    %p47 = scmp.eq.s32.totalorder %s9, 1
    %p48 = scmp.ne.s32.totalorder %s43, %s45
    %p49 = scmp.eq.s32.totalorder %s9, 0
    %p50 = por %p48, %p49
    %p51 = scmp.ne.s32.totalorder %s43, %s45
    %p52 = scmp.eq.s32.totalorder %s14, 1
    %p53 = por %p51, %p52
    %p54 = scmp.ne.s32.totalorder %s45, %s46
    %p55 = scmp.eq.s32.totalorder %s14, 0
    %p56 = por %p54, %p55
    %p57 = scmp.ne.s32.totalorder %s45, %s46
    %p58 = scmp.eq.s32.totalorder %s15, 1
    %p59 = por %p57, %p58
    %p61 = scmp.ne.s32.totalorder %s46, %s60
    %p62 = scmp.eq.s32.totalorder %s15, 0
    %p63 = por %p61, %p62
    %s65 = sadd.s32 %s64, 1
    %p68 = scmp.eq.s32.totalorder %s9, 1
    %p69 = scmp.ne.s32.totalorder %s64, %s66
    %p70 = scmp.eq.s32.totalorder %s9, 0
    %p71 = por %p69, %p70
    %p72 = scmp.ne.s32.totalorder %s64, %s66
    %p73 = scmp.eq.s32.totalorder %s14, 1
    %p74 = por %p72, %p73
    %p75 = scmp.ne.s32.totalorder %s66, %s67
    %p76 = scmp.eq.s32.totalorder %s14, 0
    %p77 = por %p75, %p76
    %p78 = scmp.ne.s32.totalorder %s66, %s67
    %p79 = scmp.eq.s32.totalorder %s15, 1
    %p80 = por %p78, %p79
    %p82 = scmp.ne.s32.totalorder %s67, %s81
    %p83 = scmp.eq.s32.totalorder %s15, 0
    %p84 = por %p82, %p83
    %s85 = ssub.s32 %s9, %s16
    %p86 = scmp.eq.s32.totalorder %s85, 0
    %s88 = sadd.s32 %s87, 1
    %s89 = scalar_select %p86, %s87, %s88
    %p92 = pneg %p86
    %p93 = scmp.eq.s32.totalorder %s9, 1
    %p94 = por %p92, %p93
    %p95 = scmp.ne.s32.totalorder %s87, %s90
    %p96 = scmp.eq.s32.totalorder %s9, 0
    %p97 = por %p95, %p96
    %p98 = scmp.ne.s32.totalorder %s87, %s90
    %p99 = scmp.eq.s32.totalorder %s14, 1
    %p100 = por %p98, %p99
    %p101 = scmp.ne.s32.totalorder %s90, %s91
    %p102 = scmp.eq.s32.totalorder %s14, 0
    %p103 = por %p101, %p102
    %p104 = scmp.ne.s32.totalorder %s90, %s91
    %p105 = scmp.eq.s32.totalorder %s15, 1
    %p106 = por %p104, %p105
    %p108 = scmp.ne.s32.totalorder %s91, %s107
    %p109 = scmp.eq.s32.totalorder %s15, 0
    %p110 = por %p108, %p109
    %p111 = scmp.le.s32.totalorder 1, %s9
    %p112 = scmp.lt.s32.totalorder %s9, 3
    %p113 = pnand %p111, %p112
    %p114 = pneg %p113
    // Predicated region
    $region9: #{observation_encoder_forward.4} parent=5 // pred_check
      _
    $region10: #{observation_encoder_forward.4} parent=5 // pred_check_branch
      %116 = sbr.rel (%p113) target = $region12
    $region11: #{observation_encoder_forward.4} parent=5 // pred_region
      %s117 = ssub.s32 %s9, 1
      // Predicated region
      $region13: #{observation_encoder_forward.4} parent=11 // pred_check
        %p118 = pneg %p56
      $region14: #{observation_encoder_forward.4} parent=11 // pred_check_branch
        %120 = sbr.rel (%p118) target = $region16
      $region15: #{observation_encoder_forward.4} parent=11 // pred_region
        _
      $region16: #{observation_encoder_forward.4} parent=11 // pred_fallthru
        _
      // Predicated region
      $region17: #{observation_encoder_forward.4} parent=11 // pred_check
        %p121 = pneg %p77
      $region18: #{observation_encoder_forward.4} parent=11 // pred_check_branch
        %123 = sbr.rel (%p121) target = $region20
      $region19: #{observation_encoder_forward.4} parent=11 // pred_region
        _
      $region20: #{observation_encoder_forward.4} parent=11 // pred_fallthru
        _
    $region12: #{observation_encoder_forward.4} parent=5 // pred_fallthru
      _
    %p124 = scmp.lt.s32.totalorder %s9, 2
    // Predicated region
    $region21: #{observation_encoder_forward.4} parent=5 // pred_check
      %p125 = pneg %p124
    $region22: #{observation_encoder_forward.4} parent=5 // pred_check_branch
      %127 = sbr.rel (%p125) target = $region24
    $region23: #{observation_encoder_forward.4} parent=5 // pred_region
      // Predicated region
      $region25: #{observation_encoder_forward.4} parent=23 // pred_check
        %p128 = pneg %p29
      $region26: #{observation_encoder_forward.4} parent=23 // pred_check_branch
        %130 = sbr.rel (%p128) target = $region28
      $region27: #{observation_encoder_forward.4} parent=23 // pred_region
        %p131 = scmp.lt.s32.totalorder %s9, 1
        %s132 = scalar_select %p131, %s9, 1
        %s133 = smul.addr %s132, 129
        %s134 = smul.addr %s133, 4
        %s135 = scalar_lea.vmem %s0, %s134
      $region28: #{observation_encoder_forward.4} parent=23 // pred_fallthru
        _
    $region24: #{observation_encoder_forward.4} parent=5 // pred_fallthru
      _
    %p136 = scmp.le.s32.totalorder 1, %s9
    %p137 = scmp.lt.s32.totalorder %s9, 3
    %p138 = pnand %p136, %p137
    %p139 = pneg %p138
    // Predicated region
    $region29: #{observation_encoder_forward.4} parent=5 // pred_check
      _
    $region30: #{observation_encoder_forward.4} parent=5 // pred_check_branch
      %141 = sbr.rel (%p138) target = $region32
    $region31: #{observation_encoder_forward.4} parent=5 // pred_region
      %s142 = ssub.s32 %s9, 1
      %p143 = scmp.lt.s32.totalorder %s14, 1
      %s144 = scalar_select %p143, %s14, 1
      %s145 = smul.addr %s144, 129
      %s146 = smul.addr %s145, 4
      %s147 = scalar_lea.vmem %s0, %s146
      %p148 = pneg %p35
      %p149 = pneg %p32
      %p150 = pneg %p56
      %p151 = pneg %p53
      %p152 = pneg %p77
      %p153 = pneg %p74
      %p154 = pneg %p103
      %p155 = pneg %p100
      %p156 = scmp.lt.s32.totalorder %s14, 1
      %s157 = scalar_select %p156, %s14, 1
      %s158 = smul.addr %s157, 124
      %s159 = smul.addr %s158, 4
      %s160 = scalar_lea.vmem %s3, %s159
      %p161 = scmp.lt.s32.totalorder %s14, 1
      %s162 = scalar_select %p161, %s14, 1
      %s163 = smul.addr %s162, 129
      %s164 = smul.addr %s163, 4
      %s165 = scalar_lea.vmem %s0, %s164
      %p166 = scmp.lt.s32.totalorder %s14, 1
      %s167 = scalar_select %p166, %s14, 1
      %s168 = smul.addr %s167, 124
      %s169 = smul.addr %s168, 4
      %s170 = scalar_lea.vmem %s3, %s169
      %v172 = vld [vmem:[%s2] sm:$0x1]
      %v173 = vld [vmem:[%s165] sm:$0xf]
      %v174 = vld [vmem:[%s165 + $0x4] sm:$0xf]
      %v175 = vld [vmem:[%s165 + $0x8] sm:$0xf]
      %v176 = vld [vmem:[%s165 + $0xc] sm:$0xf]
      %v177 = vld [vmem:[%s165 + $0x10] sm:$0xf]
      %v178 = vld [vmem:[%s165 + $0x14] sm:$0xf]
      %v179 = vld [vmem:[%s165 + $0x18] sm:$0xf]
      %v180 = vld [vmem:[%s165 + $0x1c] sm:$0xf]
      %v181 = vld [vmem:[%s165 + $0x20] sm:$0xf]
      %v182 = vld [vmem:[%s165 + $0x24] sm:$0xf]
      %v183 = vld [vmem:[%s165 + $0x28] sm:$0xf]
      %v184 = vld [vmem:[%s165 + $0x2c] sm:$0xf]
      %v185 = vld [vmem:[%s165 + $0x30] sm:$0xf]
      %v186 = vld [vmem:[%s165 + $0x34] sm:$0xf]
      %v187 = vld [vmem:[%s165 + $0x38] sm:$0xf]
      %v188 = vld [vmem:[%s165 + $0x3c] sm:$0xf]
      %v189 = vld [vmem:[%s165 + $0x40] sm:$0xf]
      %v190 = vld [vmem:[%s165 + $0x44] sm:$0xf]
      %v191 = vld [vmem:[%s165 + $0x48] sm:$0xf]
      %v192 = vld [vmem:[%s165 + $0x4c] sm:$0xf]
      %v193 = vld [vmem:[%s165 + $0x50] sm:$0xf]
      %v194 = vld [vmem:[%s165 + $0x54] sm:$0xf]
      %v195 = vld [vmem:[%s165 + $0x58] sm:$0xf]
      %v196 = vld [vmem:[%s165 + $0x5c] sm:$0xf]
      %v197 = vld [vmem:[%s165 + $0x60] sm:$0xf]
      %v198 = vld [vmem:[%s165 + $0x64] sm:$0xf]
      %v199 = vld [vmem:[%s165 + $0x68] sm:$0xf]
      %v200 = vld [vmem:[%s165 + $0x6c] sm:$0xf]
      %v201 = vld [vmem:[%s165 + $0x70] sm:$0xf]
      %v202 = vld [vmem:[%s165 + $0x74] sm:$0xf]
      %v203 = vld [vmem:[%s165 + $0x78] sm:$0xf]
      %v204 = vld [vmem:[%s165 + $0x7c] sm:$0xf]
      %v205 = vld [vmem:[%s165 + $0x80] sm:$0xf]
      %v206 = vld [vmem:[%s165 + $0x84] sm:$0xf]
      %v207 = vld [vmem:[%s165 + $0x88] sm:$0xf]
      %v208 = vld [vmem:[%s165 + $0x8c] sm:$0xf]
      %v209 = vld [vmem:[%s165 + $0x90] sm:$0xf]
      %v210 = vld [vmem:[%s165 + $0x94] sm:$0xf]
      %v211 = vld [vmem:[%s165 + $0x98] sm:$0xf]
      %v212 = vld [vmem:[%s165 + $0x9c] sm:$0xf]
      %v213 = vld [vmem:[%s165 + $0xa0] sm:$0xf]
      %v214 = vld [vmem:[%s165 + $0xa4] sm:$0xf]
      %v215 = vld [vmem:[%s165 + $0xa8] sm:$0xf]
      %v216 = vld [vmem:[%s165 + $0xac] sm:$0xf]
      %v217 = vld [vmem:[%s165 + $0xb0] sm:$0xf]
      %v218 = vld [vmem:[%s165 + $0xb4] sm:$0xf]
      %v219 = vld [vmem:[%s165 + $0xb8] sm:$0xf]
      %v220 = vld [vmem:[%s165 + $0xbc] sm:$0xf]
      %v221 = vld [vmem:[%s165 + $0xc0] sm:$0xf]
      %v222 = vld [vmem:[%s165 + $0xc4] sm:$0xf]
      %v223 = vld [vmem:[%s165 + $0xc8] sm:$0xf]
      %v224 = vld [vmem:[%s165 + $0xcc] sm:$0xf]
      %v225 = vld [vmem:[%s165 + $0xd0] sm:$0xf]
      %v226 = vld [vmem:[%s165 + $0xd4] sm:$0xf]
      %v227 = vld [vmem:[%s165 + $0xd8] sm:$0xf]
      %v228 = vld [vmem:[%s165 + $0xdc] sm:$0xf]
      %v229 = vld [vmem:[%s165 + $0xe0] sm:$0xf]
      %v230 = vld [vmem:[%s165 + $0xe4] sm:$0xf]
      %v231 = vld [vmem:[%s165 + $0xe8] sm:$0xf]
      %v232 = vld [vmem:[%s165 + $0xec] sm:$0xf]
      %v233 = vld [vmem:[%s165 + $0xf0] sm:$0xf]
      %v234 = vld [vmem:[%s165 + $0xf4] sm:$0xf]
      %v235 = vld [vmem:[%s165 + $0xf8] sm:$0xf]
      %v236 = vld [vmem:[%s165 + $0xfc] sm:$0xf]
      %v237 = vld [vmem:[%s165 + $0x100] sm:$0xf]
      %v238 = vld [vmem:[%s165 + $0x104] sm:$0xf]
      %v239 = vld [vmem:[%s165 + $0x108] sm:$0xf]
      %v240 = vld [vmem:[%s165 + $0x10c] sm:$0xf]
      %v241 = vld [vmem:[%s165 + $0x110] sm:$0xf]
      %v242 = vld [vmem:[%s165 + $0x114] sm:$0xf]
      %v243 = vld [vmem:[%s165 + $0x118] sm:$0xf]
      %v244 = vld [vmem:[%s165 + $0x11c] sm:$0xf]
      %v245 = vld [vmem:[%s165 + $0x120] sm:$0xf]
      %v246 = vld [vmem:[%s165 + $0x124] sm:$0xf]
      %v247 = vld [vmem:[%s165 + $0x128] sm:$0xf]
      %v248 = vld [vmem:[%s165 + $0x12c] sm:$0xf]
      %v249 = vld [vmem:[%s165 + $0x130] sm:$0xf]
      %v250 = vld [vmem:[%s165 + $0x134] sm:$0xf]
      %v251 = vld [vmem:[%s165 + $0x138] sm:$0xf]
      %v252 = vld [vmem:[%s165 + $0x13c] sm:$0xf]
      %v253 = vld [vmem:[%s165 + $0x140] sm:$0xf]
      %v254 = vld [vmem:[%s165 + $0x144] sm:$0xf]
      %v255 = vld [vmem:[%s165 + $0x148] sm:$0xf]
      %v256 = vld [vmem:[%s165 + $0x14c] sm:$0xf]
      %v257 = vld [vmem:[%s165 + $0x150] sm:$0xf]
      %v258 = vld [vmem:[%s165 + $0x154] sm:$0xf]
      %v259 = vld [vmem:[%s165 + $0x158] sm:$0xf]
      %v260 = vld [vmem:[%s165 + $0x15c] sm:$0xf]
      %v261 = vld [vmem:[%s165 + $0x160] sm:$0xf]
      %v262 = vld [vmem:[%s165 + $0x164] sm:$0xf]
      %v263 = vld [vmem:[%s165 + $0x168] sm:$0xf]
      %v264 = vld [vmem:[%s165 + $0x16c] sm:$0xf]
      %v265 = vld [vmem:[%s165 + $0x170] sm:$0xf]
      %v266 = vld [vmem:[%s165 + $0x174] sm:$0xf]
      %v267 = vld [vmem:[%s165 + $0x178] sm:$0xf]
      %v268 = vld [vmem:[%s165 + $0x17c] sm:$0xf]
      %v269 = vld [vmem:[%s165 + $0x180] sm:$0xf]
      %v270 = vld [vmem:[%s165 + $0x184] sm:$0xf]
      %v271 = vld [vmem:[%s165 + $0x188] sm:$0xf]
      %v272 = vld [vmem:[%s165 + $0x18c] sm:$0xf]
      %v273 = vld [vmem:[%s165 + $0x190] sm:$0xf]
      %v274 = vld [vmem:[%s165 + $0x194] sm:$0xf]
      %v275 = vld [vmem:[%s165 + $0x198] sm:$0xf]
      %v276 = vld [vmem:[%s165 + $0x19c] sm:$0xf]
      %v277 = vld [vmem:[%s165 + $0x1a0] sm:$0xf]
      %v278 = vld [vmem:[%s165 + $0x1a4] sm:$0xf]
      %v279 = vld [vmem:[%s165 + $0x1a8] sm:$0xf]
      %v280 = vld [vmem:[%s165 + $0x1ac] sm:$0xf]
      %v281 = vld [vmem:[%s165 + $0x1b0] sm:$0xf]
      %v282 = vld [vmem:[%s165 + $0x1b4] sm:$0xf]
      %v283 = vld [vmem:[%s165 + $0x1b8] sm:$0xf]
      %v284 = vld [vmem:[%s165 + $0x1bc] sm:$0xf]
      %v285 = vld [vmem:[%s165 + $0x1c0] sm:$0xf]
      %v286 = vld [vmem:[%s165 + $0x1c4] sm:$0xf]
      %v287 = vld [vmem:[%s165 + $0x1c8] sm:$0xf]
      %v288 = vld [vmem:[%s165 + $0x1cc] sm:$0xf]
      %v289 = vld [vmem:[%s165 + $0x1d0] sm:$0xf]
      %v290 = vld [vmem:[%s165 + $0x1d4] sm:$0xf]
      %v291 = vld [vmem:[%s165 + $0x1d8] sm:$0xf]
      %v292 = vld [vmem:[%s165 + $0x1dc] sm:$0xf]
      %v293 = vld [vmem:[%s165 + $0x1e0] sm:$0xf]
      %v294 = vld [vmem:[%s165 + $0x1e4] sm:$0xf]
      %v295 = vld [vmem:[%s165 + $0x1e8] sm:$0xf]
      %v296 = vld [vmem:[%s165 + $0x1ec] sm:$0xf]
      %v297 = vld [vmem:[%s1] sm:$0xf]
      %v298 = vld [vmem:[%s1 + $0x4] sm:$0x3]
      %v299 = vld [vmem:[%s165 + $0x1f0] sm:$0x1]
      %v300 = vld [vmem:[%s1 + $0x4] sm:$0xc]
      %v301 = vld [vmem:[%s1 + $0x8] sm:$0xf]
      %v427 = vunpack.c.l.b16 %v173
      %v428 = vunpack.c.l.b16 %v174
      %v429 = vunpack.c.l.b16 %v175
      %v430 = vunpack.c.l.b16 %v176
      %v431 = vunpack.c.l.b16 %v177
      %v432 = vunpack.c.l.b16 %v178
      %v433 = vunpack.c.l.b16 %v179
      %v434 = vunpack.c.l.b16 %v180
      %v435 = vunpack.c.l.b16 %v181
      %v436 = vunpack.c.l.b16 %v182
      %v437 = vunpack.c.l.b16 %v183
      %v438 = vunpack.c.l.b16 %v184
      %v439 = vunpack.c.l.b16 %v185
      %v440 = vunpack.c.l.b16 %v186
      %v441 = vunpack.c.l.b16 %v187
      %v442 = vunpack.c.l.b16 %v188
      %v443 = vunpack.c.l.b16 %v189
      %v444 = vunpack.c.l.b16 %v190
      %v445 = vunpack.c.l.b16 %v191
      %v446 = vunpack.c.l.b16 %v192
      %v447 = vunpack.c.l.b16 %v193
      %v448 = vunpack.c.l.b16 %v194
      %v449 = vunpack.c.l.b16 %v195
      %v450 = vunpack.c.l.b16 %v196
      %v451 = vunpack.c.l.b16 %v197
      %v452 = vunpack.c.l.b16 %v198
      %v453 = vunpack.c.l.b16 %v199
      %v454 = vunpack.c.l.b16 %v200
      %v455 = vunpack.c.l.b16 %v201
      %v456 = vunpack.c.l.b16 %v202
      %v457 = vunpack.c.l.b16 %v203
      %v458 = vunpack.c.l.b16 %v204
      %v459 = vunpack.c.l.b16 %v205
      %v460 = vunpack.c.l.b16 %v206
      %v461 = vunpack.c.l.b16 %v207
      %v462 = vunpack.c.l.b16 %v208
      %v463 = vunpack.c.l.b16 %v209
      %v464 = vunpack.c.l.b16 %v210
      %v465 = vunpack.c.l.b16 %v211
      %v466 = vunpack.c.l.b16 %v212
      %v467 = vunpack.c.l.b16 %v213
      %v468 = vunpack.c.l.b16 %v214
      %v469 = vunpack.c.l.b16 %v215
      %v470 = vunpack.c.l.b16 %v216
      %v471 = vunpack.c.l.b16 %v217
      %v472 = vunpack.c.l.b16 %v218
      %v473 = vunpack.c.l.b16 %v219
      %v474 = vunpack.c.l.b16 %v220
      %v475 = vunpack.c.l.b16 %v221
      %v476 = vunpack.c.l.b16 %v222
      %v477 = vunpack.c.l.b16 %v223
      %v478 = vunpack.c.l.b16 %v224
      %v479 = vunpack.c.l.b16 %v225
      %v480 = vunpack.c.l.b16 %v226
      %v481 = vunpack.c.l.b16 %v227
      %v482 = vunpack.c.l.b16 %v228
      %v483 = vunpack.c.l.b16 %v229
      %v484 = vunpack.c.l.b16 %v230
      %v485 = vunpack.c.l.b16 %v231
      %v486 = vunpack.c.l.b16 %v232
      %v487 = vunpack.c.l.b16 %v233
      %v488 = vunpack.c.l.b16 %v234
      %v489 = vunpack.c.l.b16 %v235
      %v490 = vunpack.c.l.b16 %v236
      %v491 = vunpack.c.l.b16 %v237
      %v492 = vunpack.c.l.b16 %v238
      %v493 = vunpack.c.l.b16 %v239
      %v494 = vunpack.c.l.b16 %v240
      %v495 = vunpack.c.l.b16 %v241
      %v496 = vunpack.c.l.b16 %v242
      %v497 = vunpack.c.l.b16 %v243
      %v498 = vunpack.c.l.b16 %v244
      %v499 = vunpack.c.l.b16 %v245
      %v500 = vunpack.c.l.b16 %v246
      %v501 = vunpack.c.l.b16 %v247
      %v502 = vunpack.c.l.b16 %v248
      %v503 = vunpack.c.l.b16 %v249
      %v504 = vunpack.c.l.b16 %v250
      %v505 = vunpack.c.l.b16 %v251
      %v506 = vunpack.c.l.b16 %v252
      %v507 = vunpack.c.l.b16 %v253
      %v508 = vunpack.c.l.b16 %v254
      %v509 = vunpack.c.l.b16 %v255
      %v510 = vunpack.c.l.b16 %v256
      %v511 = vunpack.c.l.b16 %v257
      %v512 = vunpack.c.l.b16 %v258
      %v513 = vunpack.c.l.b16 %v259
      %v514 = vunpack.c.l.b16 %v260
      %v515 = vunpack.c.l.b16 %v261
      %v516 = vunpack.c.l.b16 %v262
      %v517 = vunpack.c.l.b16 %v263
      %v518 = vunpack.c.l.b16 %v264
      %v519 = vunpack.c.l.b16 %v265
      %v520 = vunpack.c.l.b16 %v266
      %v521 = vunpack.c.l.b16 %v267
      %v522 = vunpack.c.l.b16 %v268
      %v523 = vunpack.c.l.b16 %v269
      %v524 = vunpack.c.l.b16 %v270
      %v525 = vunpack.c.l.b16 %v271
      %v526 = vunpack.c.l.b16 %v272
      %v527 = vunpack.c.l.b16 %v273
      %v528 = vunpack.c.l.b16 %v274
      %v529 = vunpack.c.l.b16 %v275
      %v530 = vunpack.c.l.b16 %v276
      %v531 = vunpack.c.l.b16 %v277
      %v532 = vunpack.c.l.b16 %v278
      %v533 = vunpack.c.l.b16 %v279
      %v534 = vunpack.c.l.b16 %v280
      %v535 = vunpack.c.l.b16 %v281
      %v536 = vunpack.c.l.b16 %v282
      %v537 = vunpack.c.l.b16 %v283
      %v538 = vunpack.c.l.b16 %v284
      %v539 = vunpack.c.l.b16 %v285
      %v540 = vunpack.c.l.b16 %v286
      %v541 = vunpack.c.l.b16 %v287
      %v542 = vunpack.c.l.b16 %v288
      %v543 = vunpack.c.l.b16 %v289
      %v544 = vunpack.c.l.b16 %v290
      %v545 = vunpack.c.l.b16 %v291
      %v546 = vunpack.c.l.b16 %v292
      %v547 = vunpack.c.l.b16 %v293
      %v548 = vunpack.c.l.b16 %v294
      %v549 = vunpack.c.l.b16 %v295
      %v550 = vunpack.c.l.b16 %v296
      %v551 = vunpack.c.l.b16 %v299
      %v552 = vpack.c.b16 %v428, %v427
      %v553 = vpack.c.b16 %v430, %v429
      %v554 = vpack.c.b16 %v432, %v431
      %v555 = vpack.c.b16 %v434, %v433
      %v556 = vpack.c.b16 %v436, %v435
      %v557 = vpack.c.b16 %v438, %v437
      %v558 = vpack.c.b16 %v440, %v439
      %v559 = vpack.c.b16 %v442, %v441
      %v560 = vpack.c.b16 %v444, %v443
      %v561 = vpack.c.b16 %v446, %v445
      %v562 = vpack.c.b16 %v448, %v447
      %v563 = vpack.c.b16 %v450, %v449
      %v564 = vpack.c.b16 %v452, %v451
      %v565 = vpack.c.b16 %v454, %v453
      %v566 = vpack.c.b16 %v456, %v455
      %v567 = vpack.c.b16 %v458, %v457
      %v568 = vpack.c.b16 %v460, %v459
      %v569 = vpack.c.b16 %v462, %v461
      %v570 = vpack.c.b16 %v464, %v463
      %v571 = vpack.c.b16 %v466, %v465
      %v572 = vpack.c.b16 %v468, %v467
      %v573 = vpack.c.b16 %v470, %v469
      %v574 = vpack.c.b16 %v472, %v471
      %v575 = vpack.c.b16 %v474, %v473
      %v576 = vpack.c.b16 %v476, %v475
      %v577 = vpack.c.b16 %v478, %v477
      %v578 = vpack.c.b16 %v480, %v479
      %v579 = vpack.c.b16 %v482, %v481
      %v580 = vpack.c.b16 %v484, %v483
      %v581 = vpack.c.b16 %v486, %v485
      %v582 = vpack.c.b16 %v488, %v487
      %v583 = vpack.c.b16 %v490, %v489
      %v584 = vpack.c.b16 %v492, %v491
      %v585 = vpack.c.b16 %v494, %v493
      %v586 = vpack.c.b16 %v496, %v495
      %v587 = vpack.c.b16 %v498, %v497
      %v588 = vpack.c.b16 %v500, %v499
      %v589 = vpack.c.b16 %v502, %v501
      %v590 = vpack.c.b16 %v504, %v503
      %v591 = vpack.c.b16 %v506, %v505
      %v592 = vpack.c.b16 %v508, %v507
      %v593 = vpack.c.b16 %v510, %v509
      %v594 = vpack.c.b16 %v512, %v511
      %v595 = vpack.c.b16 %v514, %v513
      %v596 = vpack.c.b16 %v516, %v515
      %v597 = vpack.c.b16 %v518, %v517
      %v598 = vpack.c.b16 %v520, %v519
      %v599 = vpack.c.b16 %v522, %v521
      %v600 = vpack.c.b16 %v524, %v523
      %v601 = vpack.c.b16 %v526, %v525
      %v602 = vpack.c.b16 %v528, %v527
      %v603 = vpack.c.b16 %v530, %v529
      %v604 = vpack.c.b16 %v532, %v531
      %v605 = vpack.c.b16 %v534, %v533
      %v606 = vpack.c.b16 %v536, %v535
      %v607 = vpack.c.b16 %v538, %v537
      %v608 = vpack.c.b16 %v540, %v539
      %v609 = vpack.c.b16 %v542, %v541
      %v610 = vpack.c.b16 %v544, %v543
      %v611 = vpack.c.b16 %v546, %v545
      %v612 = vpack.c.b16 %v548, %v547
      %v613 = vpack.c.b16 %v550, %v549
      %v614 = vpack.c.b16 %v551, %v551
      %vm615 = vsmask.f32 7424
      %v617 = vshrl.u32 %v552, 16
      %v619 = vshll.u32 %v552, 16
      %v621 = vrot.slane %v619, 1
      %v622 = vor.u32 %v617, %v621
      %v624 = vshll.u32 %v553, 16
      %v626 = vrot.slane %v624, 1
      %v627 = vsel %vm615, %v622, %v626
      %v628 = vshrl.u32 %v553, 16
      %v630 = vor.u32 %v628, %v626
      %v632 = vshll.u32 %v554, 16
      %v634 = vrot.slane %v632, 1
      %v635 = vsel %vm615, %v630, %v634
      %v636 = vshrl.u32 %v554, 16
      %v638 = vor.u32 %v636, %v634
      %v640 = vshll.u32 %v555, 16
      %v642 = vrot.slane %v640, 1
      %v643 = vsel %vm615, %v638, %v642
      %v644 = vshrl.u32 %v555, 16
      %v646 = vor.u32 %v644, %v642
      %v648 = vshll.u32 %v556, 16
      %v650 = vrot.slane %v648, 1
      %v651 = vsel %vm615, %v646, %v650
      %v652 = vshrl.u32 %v556, 16
      %v654 = vor.u32 %v652, %v650
      %v656 = vshll.u32 %v557, 16
      %v658 = vrot.slane %v656, 1
      %v659 = vsel %vm615, %v654, %v658
      %v660 = vshrl.u32 %v557, 16
      %v662 = vor.u32 %v660, %v658
      %v664 = vshll.u32 %v558, 16
      %v666 = vrot.slane %v664, 1
      %v667 = vsel %vm615, %v662, %v666
      %v668 = vshrl.u32 %v558, 16
      %v670 = vor.u32 %v668, %v666
      %v672 = vshll.u32 %v559, 16
      %v674 = vrot.slane %v672, 1
      %v675 = vsel %vm615, %v670, %v674
      %v676 = vshrl.u32 %v559, 16
      %v678 = vor.u32 %v676, %v674
      %v680 = vshll.u32 %v560, 16
      %v682 = vrot.slane %v680, 1
      %v683 = vsel %vm615, %v678, %v682
      %v684 = vshrl.u32 %v560, 16
      %v686 = vor.u32 %v684, %v682
      %v688 = vshll.u32 %v561, 16
      %v690 = vrot.slane %v688, 1
      %v691 = vsel %vm615, %v686, %v690
      %v692 = vshrl.u32 %v561, 16
      %v694 = vor.u32 %v692, %v690
      %v696 = vshll.u32 %v562, 16
      %v698 = vrot.slane %v696, 1
      %v699 = vsel %vm615, %v694, %v698
      %v700 = vshrl.u32 %v562, 16
      %v702 = vor.u32 %v700, %v698
      %v704 = vshll.u32 %v563, 16
      %v706 = vrot.slane %v704, 1
      %v707 = vsel %vm615, %v702, %v706
      %v708 = vshrl.u32 %v563, 16
      %v710 = vor.u32 %v708, %v706
      %v712 = vshll.u32 %v564, 16
      %v714 = vrot.slane %v712, 1
      %v715 = vsel %vm615, %v710, %v714
      %v716 = vshrl.u32 %v564, 16
      %v718 = vor.u32 %v716, %v714
      %v720 = vshll.u32 %v565, 16
      %v722 = vrot.slane %v720, 1
      %v723 = vsel %vm615, %v718, %v722
      %v724 = vshrl.u32 %v565, 16
      %v726 = vor.u32 %v724, %v722
      %v728 = vshll.u32 %v566, 16
      %v730 = vrot.slane %v728, 1
      %v731 = vsel %vm615, %v726, %v730
      %v732 = vshrl.u32 %v566, 16
      %v734 = vor.u32 %v732, %v730
      %v736 = vshll.u32 %v567, 16
      %v738 = vrot.slane %v736, 1
      %v739 = vsel %vm615, %v734, %v738
      %v740 = vshrl.u32 %v567, 16
      %v742 = vor.u32 %v740, %v738
      %v744 = vshll.u32 %v568, 16
      %v746 = vrot.slane %v744, 1
      %v747 = vsel %vm615, %v742, %v746
      %v748 = vshrl.u32 %v568, 16
      %v750 = vor.u32 %v748, %v746
      %v752 = vshll.u32 %v569, 16
      %v754 = vrot.slane %v752, 1
      %v755 = vsel %vm615, %v750, %v754
      %v756 = vshrl.u32 %v569, 16
      %v758 = vor.u32 %v756, %v754
      %v760 = vshll.u32 %v570, 16
      %v762 = vrot.slane %v760, 1
      %v763 = vsel %vm615, %v758, %v762
      %v764 = vshrl.u32 %v570, 16
      %v766 = vor.u32 %v764, %v762
      %v768 = vshll.u32 %v571, 16
      %v770 = vrot.slane %v768, 1
      %v771 = vsel %vm615, %v766, %v770
      %v772 = vshrl.u32 %v571, 16
      %v774 = vor.u32 %v772, %v770
      %v776 = vshll.u32 %v572, 16
      %v778 = vrot.slane %v776, 1
      %v779 = vsel %vm615, %v774, %v778
      %v780 = vshrl.u32 %v572, 16
      %v782 = vor.u32 %v780, %v778
      %v784 = vshll.u32 %v573, 16
      %v786 = vrot.slane %v784, 1
      %v787 = vsel %vm615, %v782, %v786
      %v788 = vshrl.u32 %v573, 16
      %v790 = vor.u32 %v788, %v786
      %v792 = vshll.u32 %v574, 16
      %v794 = vrot.slane %v792, 1
      %v795 = vsel %vm615, %v790, %v794
      %v796 = vshrl.u32 %v574, 16
      %v798 = vor.u32 %v796, %v794
      %v800 = vshll.u32 %v575, 16
      %v802 = vrot.slane %v800, 1
      %v803 = vsel %vm615, %v798, %v802
      %v804 = vshrl.u32 %v575, 16
      %v806 = vor.u32 %v804, %v802
      %v808 = vshll.u32 %v576, 16
      %v810 = vrot.slane %v808, 1
      %v811 = vsel %vm615, %v806, %v810
      %v812 = vshrl.u32 %v576, 16
      %v814 = vor.u32 %v812, %v810
      %v816 = vshll.u32 %v577, 16
      %v818 = vrot.slane %v816, 1
      %v819 = vsel %vm615, %v814, %v818
      %v820 = vshrl.u32 %v577, 16
      %v822 = vor.u32 %v820, %v818
      %v824 = vshll.u32 %v578, 16
      %v826 = vrot.slane %v824, 1
      %v827 = vsel %vm615, %v822, %v826
      %v828 = vshrl.u32 %v578, 16
      %v830 = vor.u32 %v828, %v826
      %v832 = vshll.u32 %v579, 16
      %v834 = vrot.slane %v832, 1
      %v835 = vsel %vm615, %v830, %v834
      %v836 = vshrl.u32 %v579, 16
      %v838 = vor.u32 %v836, %v834
      %v840 = vshll.u32 %v580, 16
      %v842 = vrot.slane %v840, 1
      %v843 = vsel %vm615, %v838, %v842
      %v844 = vshrl.u32 %v580, 16
      %v846 = vor.u32 %v844, %v842
      %v848 = vshll.u32 %v581, 16
      %v850 = vrot.slane %v848, 1
      %v851 = vsel %vm615, %v846, %v850
      %v852 = vshrl.u32 %v581, 16
      %v854 = vor.u32 %v852, %v850
      %v856 = vshll.u32 %v582, 16
      %v858 = vrot.slane %v856, 1
      %v859 = vsel %vm615, %v854, %v858
      %v860 = vshrl.u32 %v582, 16
      %v862 = vor.u32 %v860, %v858
      %v864 = vshll.u32 %v583, 16
      %v866 = vrot.slane %v864, 1
      %v867 = vsel %vm615, %v862, %v866
      %v868 = vshrl.u32 %v583, 16
      %v870 = vor.u32 %v868, %v866
      %v872 = vshll.u32 %v584, 16
      %v874 = vrot.slane %v872, 1
      %v875 = vsel %vm615, %v870, %v874
      %v876 = vshrl.u32 %v584, 16
      %v878 = vor.u32 %v876, %v874
      %v880 = vshll.u32 %v585, 16
      %v882 = vrot.slane %v880, 1
      %v883 = vsel %vm615, %v878, %v882
      %v884 = vshrl.u32 %v585, 16
      %v886 = vor.u32 %v884, %v882
      %v888 = vshll.u32 %v586, 16
      %v890 = vrot.slane %v888, 1
      %v891 = vsel %vm615, %v886, %v890
      %v892 = vshrl.u32 %v586, 16
      %v894 = vor.u32 %v892, %v890
      %v896 = vshll.u32 %v587, 16
      %v898 = vrot.slane %v896, 1
      %v899 = vsel %vm615, %v894, %v898
      %v900 = vshrl.u32 %v587, 16
      %v902 = vor.u32 %v900, %v898
      %v904 = vshll.u32 %v588, 16
      %v906 = vrot.slane %v904, 1
      %v907 = vsel %vm615, %v902, %v906
      %v908 = vshrl.u32 %v588, 16
      %v910 = vor.u32 %v908, %v906
      %v912 = vshll.u32 %v589, 16
      %v914 = vrot.slane %v912, 1
      %v915 = vsel %vm615, %v910, %v914
      %v916 = vshrl.u32 %v589, 16
      %v918 = vor.u32 %v916, %v914
      %v920 = vshll.u32 %v590, 16
      %v922 = vrot.slane %v920, 1
      %v923 = vsel %vm615, %v918, %v922
      %v924 = vshrl.u32 %v590, 16
      %v926 = vor.u32 %v924, %v922
      %v928 = vshll.u32 %v591, 16
      %v930 = vrot.slane %v928, 1
      %v931 = vsel %vm615, %v926, %v930
      %v932 = vshrl.u32 %v591, 16
      %v934 = vor.u32 %v932, %v930
      %v936 = vshll.u32 %v592, 16
      %v938 = vrot.slane %v936, 1
      %v939 = vsel %vm615, %v934, %v938
      %v940 = vshrl.u32 %v592, 16
      %v942 = vor.u32 %v940, %v938
      %v944 = vshll.u32 %v593, 16
      %v946 = vrot.slane %v944, 1
      %v947 = vsel %vm615, %v942, %v946
      %v948 = vshrl.u32 %v593, 16
      %v950 = vor.u32 %v948, %v946
      %v952 = vshll.u32 %v594, 16
      %v954 = vrot.slane %v952, 1
      %v955 = vsel %vm615, %v950, %v954
      %v956 = vshrl.u32 %v594, 16
      %v958 = vor.u32 %v956, %v954
      %v960 = vshll.u32 %v595, 16
      %v962 = vrot.slane %v960, 1
      %v963 = vsel %vm615, %v958, %v962
      %v964 = vshrl.u32 %v595, 16
      %v966 = vor.u32 %v964, %v962
      %v968 = vshll.u32 %v596, 16
      %v970 = vrot.slane %v968, 1
      %v971 = vsel %vm615, %v966, %v970
      %v972 = vshrl.u32 %v596, 16
      %v974 = vor.u32 %v972, %v970
      %v976 = vshll.u32 %v597, 16
      %v978 = vrot.slane %v976, 1
      %v979 = vsel %vm615, %v974, %v978
      %v980 = vshrl.u32 %v597, 16
      %v982 = vor.u32 %v980, %v978
      %v984 = vshll.u32 %v598, 16
      %v986 = vrot.slane %v984, 1
      %v987 = vsel %vm615, %v982, %v986
      %v988 = vshrl.u32 %v598, 16
      %v990 = vor.u32 %v988, %v986
      %v992 = vshll.u32 %v599, 16
      %v994 = vrot.slane %v992, 1
      %v995 = vsel %vm615, %v990, %v994
      %v996 = vshrl.u32 %v599, 16
      %v998 = vor.u32 %v996, %v994
      %v1000 = vshll.u32 %v600, 16
      %v1002 = vrot.slane %v1000, 1
      %v1003 = vsel %vm615, %v998, %v1002
      %v1004 = vshrl.u32 %v600, 16
      %v1006 = vor.u32 %v1004, %v1002
      %v1008 = vshll.u32 %v601, 16
      %v1010 = vrot.slane %v1008, 1
      %v1011 = vsel %vm615, %v1006, %v1010
      %v1012 = vshrl.u32 %v601, 16
      %v1014 = vor.u32 %v1012, %v1010
      %v1016 = vshll.u32 %v602, 16
      %v1018 = vrot.slane %v1016, 1
      %v1019 = vsel %vm615, %v1014, %v1018
      %v1020 = vshrl.u32 %v602, 16
      %v1022 = vor.u32 %v1020, %v1018
      %v1024 = vshll.u32 %v603, 16
      %v1026 = vrot.slane %v1024, 1
      %v1027 = vsel %vm615, %v1022, %v1026
      %v1028 = vshrl.u32 %v603, 16
      %v1030 = vor.u32 %v1028, %v1026
      %v1032 = vshll.u32 %v604, 16
      %v1034 = vrot.slane %v1032, 1
      %v1035 = vsel %vm615, %v1030, %v1034
      %v1036 = vshrl.u32 %v604, 16
      %v1038 = vor.u32 %v1036, %v1034
      %v1040 = vshll.u32 %v605, 16
      %v1042 = vrot.slane %v1040, 1
      %v1043 = vsel %vm615, %v1038, %v1042
      %v1044 = vshrl.u32 %v605, 16
      %v1046 = vor.u32 %v1044, %v1042
      %v1048 = vshll.u32 %v606, 16
      %v1050 = vrot.slane %v1048, 1
      %v1051 = vsel %vm615, %v1046, %v1050
      %v1052 = vshrl.u32 %v606, 16
      %v1054 = vor.u32 %v1052, %v1050
      %v1056 = vshll.u32 %v607, 16
      %v1058 = vrot.slane %v1056, 1
      %v1059 = vsel %vm615, %v1054, %v1058
      %v1060 = vshrl.u32 %v607, 16
      %v1062 = vor.u32 %v1060, %v1058
      %v1064 = vshll.u32 %v608, 16
      %v1066 = vrot.slane %v1064, 1
      %v1067 = vsel %vm615, %v1062, %v1066
      %v1068 = vshrl.u32 %v608, 16
      %v1070 = vor.u32 %v1068, %v1066
      %v1072 = vshll.u32 %v609, 16
      %v1074 = vrot.slane %v1072, 1
      %v1075 = vsel %vm615, %v1070, %v1074
      %v1076 = vshrl.u32 %v609, 16
      %v1078 = vor.u32 %v1076, %v1074
      %v1080 = vshll.u32 %v610, 16
      %v1082 = vrot.slane %v1080, 1
      %v1083 = vsel %vm615, %v1078, %v1082
      %v1084 = vshrl.u32 %v610, 16
      %v1086 = vor.u32 %v1084, %v1082
      %v1088 = vshll.u32 %v611, 16
      %v1090 = vrot.slane %v1088, 1
      %v1091 = vsel %vm615, %v1086, %v1090
      %v1092 = vshrl.u32 %v611, 16
      %v1094 = vor.u32 %v1092, %v1090
      %v1096 = vshll.u32 %v612, 16
      %v1098 = vrot.slane %v1096, 1
      %v1099 = vsel %vm615, %v1094, %v1098
      %v1100 = vshrl.u32 %v612, 16
      %v1102 = vor.u32 %v1100, %v1098
      %v1104 = vshll.u32 %v613, 16
      %v1106 = vrot.slane %v1104, 1
      %v1107 = vsel %vm615, %v1102, %v1106
      %v1108 = vshrl.u32 %v613, 16
      %v1110 = vor.u32 %v1108, %v1106
      %v1112 = vshll.u32 %v614, 16
      %v1114 = vrot.slane %v1112, 1
      %v1115 = vsel %vm615, %v1110, %v1114
      %v1118 = vunpack.c.l.b16 %v300
      %v1119 = vunpack.c.l.b16 %v301
      %v1120 = vpack.c.b16 %v1119, %v1118
      %v1121 = vrot.slane %v1120, 2
      %vm1122 = vcmask 97280
      %v1124 = vsel %vm1122, %v627, 0
      %v1127 = vsel %vm1122, %v635, 0
      %v1130 = vsel %vm1122, %v643, 0
      %v1133 = vsel %vm1122, %v651, 0
      %v1136 = vsel %vm1122, %v659, 0
      %v1139 = vsel %vm1122, %v667, 0
      %v1142 = vsel %vm1122, %v675, 0
      %v1145 = vsel %vm1122, %v683, 0
      %v1148 = vsel %vm1122, %v691, 0
      %v1151 = vsel %vm1122, %v699, 0
      %v1154 = vsel %vm1122, %v707, 0
      %v1157 = vsel %vm1122, %v715, 0
      %v1160 = vsel %vm1122, %v723, 0
      %v1163 = vsel %vm1122, %v731, 0
      %v1166 = vsel %vm1122, %v739, 0
      %v1169 = vsel %vm1122, %v747, 0
      %v1172 = vsel %vm1122, %v755, 0
      %v1175 = vsel %vm1122, %v763, 0
      %v1178 = vsel %vm1122, %v771, 0
      %v1181 = vsel %vm1122, %v779, 0
      %v1184 = vsel %vm1122, %v787, 0
      %v1187 = vsel %vm1122, %v795, 0
      %v1190 = vsel %vm1122, %v803, 0
      %v1193 = vsel %vm1122, %v811, 0
      %v1196 = vsel %vm1122, %v819, 0
      %v1199 = vsel %vm1122, %v827, 0
      %v1202 = vsel %vm1122, %v835, 0
      %v1205 = vsel %vm1122, %v843, 0
      %v1208 = vsel %vm1122, %v851, 0
      %v1211 = vsel %vm1122, %v859, 0
      %v1214 = vsel %vm1122, %v867, 0
      %v1217 = vsel %vm1122, %v875, 0
      %v1220 = vsel %vm1122, %v883, 0
      %v1223 = vsel %vm1122, %v891, 0
      %v1226 = vsel %vm1122, %v899, 0
      %v1229 = vsel %vm1122, %v907, 0
      %v1232 = vsel %vm1122, %v915, 0
      %v1235 = vsel %vm1122, %v923, 0
      %v1238 = vsel %vm1122, %v931, 0
      %v1241 = vsel %vm1122, %v939, 0
      %v1244 = vsel %vm1122, %v947, 0
      %v1247 = vsel %vm1122, %v955, 0
      %v1250 = vsel %vm1122, %v963, 0
      %v1253 = vsel %vm1122, %v971, 0
      %v1256 = vsel %vm1122, %v979, 0
      %v1259 = vsel %vm1122, %v987, 0
      %v1262 = vsel %vm1122, %v995, 0
      %v1265 = vsel %vm1122, %v1003, 0
      %v1268 = vsel %vm1122, %v1011, 0
      %v1271 = vsel %vm1122, %v1019, 0
      %v1274 = vsel %vm1122, %v1027, 0
      %v1277 = vsel %vm1122, %v1035, 0
      %v1280 = vsel %vm1122, %v1043, 0
      %v1283 = vsel %vm1122, %v1051, 0
      %v1286 = vsel %vm1122, %v1059, 0
      %v1289 = vsel %vm1122, %v1067, 0
      %v1292 = vsel %vm1122, %v1075, 0
      %v1295 = vsel %vm1122, %v1083, 0
      %v1298 = vsel %vm1122, %v1091, 0
      %v1301 = vsel %vm1122, %v1099, 0
      %v1304 = vsel %vm1122, %v1107, 0
      %v1307 = vsel %vm1122, %v1115, 0
      %vm1309 = vcmask 1045504
      %v1311 = vsel %vm1309, %v1121, 0
      %1313 = vmatprep.subr.bf16.mxu0 0
      %1314 = vmatpush1.bf16.msra.mxu0 0
      %1315 = vmatprep.subr.bf16.mxu0 0
      %1316 = vmatpush1.bf16.msra.mxu0 0
      %1317 = vmatprep.subr.bf16.mxu0 0
      %1318 = vmatpush1.bf16.msra.mxu0 0
      %1319 = vmatprep.subr.bf16.mxu0 0
      %1320 = vmatpush1.bf16.msra.mxu0 0
      %1321 = vmatprep.subr.bf16.mxu0 0
      %1322 = vmatpush1.bf16.msra.mxu0 0
      %1323 = vmatprep.subr.bf16.mxu0 0
      %1324 = vmatpush1.bf16.msra.mxu0 0
      %1325 = vmatprep.subr.bf16.mxu0 0
      %1326 = vmatpush1.bf16.msra.mxu0 0
      %1327 = vmatprep.subr.bf16.mxu0 0
      %1328 = vmatpush1.bf16.msra.mxu0 %v1311
      %1329 = vmatprep.subr.bf16.mxu0 0
      %1330 = vmatpush2.bf16.msra.mxu0 0
      %1331 = vmatprep.subr.bf16.mxu0 0
      %1332 = vmatpush2.bf16.msra.mxu0 0
      %1333 = vmatprep.subr.bf16.mxu0 0
      %1334 = vmatpush2.bf16.msra.mxu0 0
      %1335 = vmatprep.subr.bf16.mxu0 0
      %1336 = vmatpush2.bf16.msra.mxu0 0
      %1337 = vmatprep.subr.bf16.mxu0 0
      %1338 = vmatpush2.bf16.msra.mxu0 0
      %1339 = vmatprep.subr.bf16.mxu0 0
      %1340 = vmatpush2.bf16.msra.mxu0 0
      %1341 = vmatprep.subr.bf16.mxu0 0
      %1342 = vmatpush2.bf16.msra.mxu0 0
      %1343 = vmatprep.subr.bf16.mxu0 0
      %1344 = vmatpush2.bf16.msra.mxu0 0
      %1345 = vmatprep.mubr.bf16.mxu0 0
      %1346 = vmatmul.mubr.bf16.gmra.mxu0 %v1124
      %v1347 = vpop.f32.mrf.mxu0
      %v1348 = vadd.f32 0.0, %v1347
      %v1349 = vpop.f32.mrf.mxu0
      %v1350 = vpop.f32.mrf.mxu0
      %v1351 = vadd.f32 0.0, %v1350
      %v1352 = vpop.f32.mrf.mxu0
      %1353 = vmatprep.mubr.bf16.mxu0 0
      %1354 = vmatmul.mubr.bf16.gmra.mxu0 %v1127
      %v1355 = vpop.f32.mrf.mxu0
      %v1356 = vadd.f32 0.0, %v1355
      %v1357 = vpop.f32.mrf.mxu0
      %v1358 = vpop.f32.mrf.mxu0
      %v1359 = vadd.f32 0.0, %v1358
      %v1360 = vpop.f32.mrf.mxu0
      %1361 = vmatprep.mubr.bf16.mxu0 0
      %1362 = vmatmul.mubr.bf16.gmra.mxu0 %v1130
      %v1363 = vpop.f32.mrf.mxu0
      %v1364 = vadd.f32 0.0, %v1363
      %v1365 = vpop.f32.mrf.mxu0
      %v1366 = vpop.f32.mrf.mxu0
      %v1367 = vadd.f32 0.0, %v1366
      %v1368 = vpop.f32.mrf.mxu0
      %1369 = vmatprep.mubr.bf16.mxu0 0
      %1370 = vmatmul.mubr.bf16.gmra.mxu0 %v1133
      %v1371 = vpop.f32.mrf.mxu0
      %v1372 = vadd.f32 0.0, %v1371
      %v1373 = vpop.f32.mrf.mxu0
      %v1374 = vpop.f32.mrf.mxu0
      %v1375 = vadd.f32 0.0, %v1374
      %v1376 = vpop.f32.mrf.mxu0
      %1377 = vmatprep.mubr.bf16.mxu0 0
      %1378 = vmatmul.mubr.bf16.gmra.mxu0 %v1136
      %v1379 = vpop.f32.mrf.mxu0
      %v1380 = vadd.f32 0.0, %v1379
      %v1381 = vpop.f32.mrf.mxu0
      %v1382 = vpop.f32.mrf.mxu0
      %v1383 = vadd.f32 0.0, %v1382
      %v1384 = vpop.f32.mrf.mxu0
      %1385 = vmatprep.mubr.bf16.mxu0 0
      %1386 = vmatmul.mubr.bf16.gmra.mxu0 %v1139
      %v1387 = vpop.f32.mrf.mxu0
      %v1388 = vadd.f32 0.0, %v1387
      %v1389 = vpop.f32.mrf.mxu0
      %v1390 = vpop.f32.mrf.mxu0
      %v1391 = vadd.f32 0.0, %v1390
      %v1392 = vpop.f32.mrf.mxu0
      %1393 = vmatprep.mubr.bf16.mxu0 0
      %1394 = vmatmul.mubr.bf16.gmra.mxu0 %v1142
      %v1395 = vpop.f32.mrf.mxu0
      %v1396 = vadd.f32 0.0, %v1395
      %v1397 = vpop.f32.mrf.mxu0
      %v1398 = vpop.f32.mrf.mxu0
      %v1399 = vadd.f32 0.0, %v1398
      %v1400 = vpop.f32.mrf.mxu0
      %1401 = vmatprep.mubr.bf16.mxu0 0
      %1402 = vmatmul.mubr.bf16.gmra.mxu0 %v1145
      %v1403 = vpop.f32.mrf.mxu0
      %v1404 = vadd.f32 0.0, %v1403
      %v1405 = vpop.f32.mrf.mxu0
      %v1406 = vpop.f32.mrf.mxu0
      %v1407 = vadd.f32 0.0, %v1406
      %v1408 = vpop.f32.mrf.mxu0
      %1409 = vmatprep.mubr.bf16.mxu0 0
      %1410 = vmatmul.mubr.bf16.gmra.mxu0 %v1148
      %v1411 = vpop.f32.mrf.mxu0
      %v1412 = vadd.f32 0.0, %v1411
      %v1413 = vpop.f32.mrf.mxu0
      %v1414 = vpop.f32.mrf.mxu0
      %v1415 = vadd.f32 0.0, %v1414
      %v1416 = vpop.f32.mrf.mxu0
      %1417 = vmatprep.mubr.bf16.mxu0 0
      %1418 = vmatmul.mubr.bf16.gmra.mxu0 %v1151
      %v1419 = vpop.f32.mrf.mxu0
      %v1420 = vadd.f32 0.0, %v1419
      %v1421 = vpop.f32.mrf.mxu0
      %v1422 = vpop.f32.mrf.mxu0
      %v1423 = vadd.f32 0.0, %v1422
      %v1424 = vpop.f32.mrf.mxu0
      %1425 = vmatprep.mubr.bf16.mxu0 0
      %1426 = vmatmul.mubr.bf16.gmra.mxu0 %v1154
      %v1427 = vpop.f32.mrf.mxu0
      %v1428 = vadd.f32 0.0, %v1427
      %v1429 = vpop.f32.mrf.mxu0
      %v1430 = vpop.f32.mrf.mxu0
      %v1431 = vadd.f32 0.0, %v1430
      %v1432 = vpop.f32.mrf.mxu0
      %1433 = vmatprep.mubr.bf16.mxu0 0
      %1434 = vmatmul.mubr.bf16.gmra.mxu0 %v1157
      %v1435 = vpop.f32.mrf.mxu0
      %v1436 = vadd.f32 0.0, %v1435
      %v1437 = vpop.f32.mrf.mxu0
      %v1438 = vpop.f32.mrf.mxu0
      %v1439 = vadd.f32 0.0, %v1438
      %v1440 = vpop.f32.mrf.mxu0
      %1441 = vmatprep.mubr.bf16.mxu0 0
      %1442 = vmatmul.mubr.bf16.gmra.mxu0 %v1160
      %v1443 = vpop.f32.mrf.mxu0
      %v1444 = vadd.f32 0.0, %v1443
      %v1445 = vpop.f32.mrf.mxu0
      %v1446 = vpop.f32.mrf.mxu0
      %v1447 = vadd.f32 0.0, %v1446
      %v1448 = vpop.f32.mrf.mxu0
      %1449 = vmatprep.mubr.bf16.mxu0 0
      %1450 = vmatmul.mubr.bf16.gmra.mxu0 %v1163
      %v1451 = vpop.f32.mrf.mxu0
      %v1452 = vadd.f32 0.0, %v1451
      %v1453 = vpop.f32.mrf.mxu0
      %v1454 = vpop.f32.mrf.mxu0
      %v1455 = vadd.f32 0.0, %v1454
      %v1456 = vpop.f32.mrf.mxu0
      %1457 = vmatprep.mubr.bf16.mxu0 0
      %1458 = vmatmul.mubr.bf16.gmra.mxu0 %v1166
      %v1459 = vpop.f32.mrf.mxu0
      %v1460 = vadd.f32 0.0, %v1459
      %v1461 = vpop.f32.mrf.mxu0
      %v1462 = vpop.f32.mrf.mxu0
      %v1463 = vadd.f32 0.0, %v1462
      %v1464 = vpop.f32.mrf.mxu0
      %1465 = vmatprep.mubr.bf16.mxu0 0
      %1466 = vmatmul.mubr.bf16.gmra.mxu0 %v1169
      %v1467 = vpop.f32.mrf.mxu0
      %v1468 = vadd.f32 0.0, %v1467
      %v1469 = vpop.f32.mrf.mxu0
      %v1470 = vpop.f32.mrf.mxu0
      %v1471 = vadd.f32 0.0, %v1470
      %v1472 = vpop.f32.mrf.mxu0
      %1473 = vmatprep.mubr.bf16.mxu0 0
      %1474 = vmatmul.mubr.bf16.gmra.mxu0 %v1172
      %v1475 = vpop.f32.mrf.mxu0
      %v1476 = vadd.f32 0.0, %v1475
      %v1477 = vpop.f32.mrf.mxu0
      %v1478 = vpop.f32.mrf.mxu0
      %v1479 = vadd.f32 0.0, %v1478
      %v1480 = vpop.f32.mrf.mxu0
      %1481 = vmatprep.mubr.bf16.mxu0 0
      %1482 = vmatmul.mubr.bf16.gmra.mxu0 %v1175
      %v1483 = vpop.f32.mrf.mxu0
      %v1484 = vadd.f32 0.0, %v1483
      %v1485 = vpop.f32.mrf.mxu0
      %v1486 = vpop.f32.mrf.mxu0
      %v1487 = vadd.f32 0.0, %v1486
      %v1488 = vpop.f32.mrf.mxu0
      %1489 = vmatprep.mubr.bf16.mxu0 0
      %1490 = vmatmul.mubr.bf16.gmra.mxu0 %v1178
      %v1491 = vpop.f32.mrf.mxu0
      %v1492 = vadd.f32 0.0, %v1491
      %v1493 = vpop.f32.mrf.mxu0
      %v1494 = vpop.f32.mrf.mxu0
      %v1495 = vadd.f32 0.0, %v1494
      %v1496 = vpop.f32.mrf.mxu0
      %1497 = vmatprep.mubr.bf16.mxu0 0
      %1498 = vmatmul.mubr.bf16.gmra.mxu0 %v1181
      %v1499 = vpop.f32.mrf.mxu0
      %v1500 = vadd.f32 0.0, %v1499
      %v1501 = vpop.f32.mrf.mxu0
      %v1502 = vpop.f32.mrf.mxu0
      %v1503 = vadd.f32 0.0, %v1502
      %v1504 = vpop.f32.mrf.mxu0
      %1505 = vmatprep.mubr.bf16.mxu0 0
      %1506 = vmatmul.mubr.bf16.gmra.mxu0 %v1184
      %v1507 = vpop.f32.mrf.mxu0
      %v1508 = vadd.f32 0.0, %v1507
      %v1509 = vpop.f32.mrf.mxu0
      %v1510 = vpop.f32.mrf.mxu0
      %v1511 = vadd.f32 0.0, %v1510
      %v1512 = vpop.f32.mrf.mxu0
      %1513 = vmatprep.mubr.bf16.mxu0 0
      %1514 = vmatmul.mubr.bf16.gmra.mxu0 %v1187
      %v1515 = vpop.f32.mrf.mxu0
      %v1516 = vadd.f32 0.0, %v1515
      %v1517 = vpop.f32.mrf.mxu0
      %v1518 = vpop.f32.mrf.mxu0
      %v1519 = vadd.f32 0.0, %v1518
      %v1520 = vpop.f32.mrf.mxu0
      %1521 = vmatprep.mubr.bf16.mxu0 0
      %1522 = vmatmul.mubr.bf16.gmra.mxu0 %v1190
      %v1523 = vpop.f32.mrf.mxu0
      %v1524 = vadd.f32 0.0, %v1523
      %v1525 = vpop.f32.mrf.mxu0
      %v1526 = vpop.f32.mrf.mxu0
      %v1527 = vadd.f32 0.0, %v1526
      %v1528 = vpop.f32.mrf.mxu0
      %1529 = vmatprep.mubr.bf16.mxu0 0
      %1530 = vmatmul.mubr.bf16.gmra.mxu0 %v1193
      %v1531 = vpop.f32.mrf.mxu0
      %v1532 = vadd.f32 0.0, %v1531
      %v1533 = vpop.f32.mrf.mxu0
      %v1534 = vpop.f32.mrf.mxu0
      %v1535 = vadd.f32 0.0, %v1534
      %v1536 = vpop.f32.mrf.mxu0
      %1537 = vmatprep.mubr.bf16.mxu0 0
      %1538 = vmatmul.mubr.bf16.gmra.mxu0 %v1196
      %v1539 = vpop.f32.mrf.mxu0
      %v1540 = vadd.f32 0.0, %v1539
      %v1541 = vpop.f32.mrf.mxu0
      %v1542 = vpop.f32.mrf.mxu0
      %v1543 = vadd.f32 0.0, %v1542
      %v1544 = vpop.f32.mrf.mxu0
      %1545 = vmatprep.mubr.bf16.mxu0 0
      %1546 = vmatmul.mubr.bf16.gmra.mxu0 %v1199
      %v1547 = vpop.f32.mrf.mxu0
      %v1548 = vadd.f32 0.0, %v1547
      %v1549 = vpop.f32.mrf.mxu0
      %v1550 = vpop.f32.mrf.mxu0
      %v1551 = vadd.f32 0.0, %v1550
      %v1552 = vpop.f32.mrf.mxu0
      %1553 = vmatprep.mubr.bf16.mxu0 0
      %1554 = vmatmul.mubr.bf16.gmra.mxu0 %v1202
      %v1555 = vpop.f32.mrf.mxu0
      %v1556 = vadd.f32 0.0, %v1555
      %v1557 = vpop.f32.mrf.mxu0
      %v1558 = vpop.f32.mrf.mxu0
      %v1559 = vadd.f32 0.0, %v1558
      %v1560 = vpop.f32.mrf.mxu0
      %1561 = vmatprep.mubr.bf16.mxu0 0
      %1562 = vmatmul.mubr.bf16.gmra.mxu0 %v1205
      %v1563 = vpop.f32.mrf.mxu0
      %v1564 = vadd.f32 0.0, %v1563
      %v1565 = vpop.f32.mrf.mxu0
      %v1566 = vpop.f32.mrf.mxu0
      %v1567 = vadd.f32 0.0, %v1566
      %v1568 = vpop.f32.mrf.mxu0
      %1569 = vmatprep.mubr.bf16.mxu0 0
      %1570 = vmatmul.mubr.bf16.gmra.mxu0 %v1208
      %v1571 = vpop.f32.mrf.mxu0
      %v1572 = vadd.f32 0.0, %v1571
      %v1573 = vpop.f32.mrf.mxu0
      %v1574 = vpop.f32.mrf.mxu0
      %v1575 = vadd.f32 0.0, %v1574
      %v1576 = vpop.f32.mrf.mxu0
      %1577 = vmatprep.mubr.bf16.mxu0 0
      %1578 = vmatmul.mubr.bf16.gmra.mxu0 %v1211
      %v1579 = vpop.f32.mrf.mxu0
      %v1580 = vadd.f32 0.0, %v1579
      %v1581 = vpop.f32.mrf.mxu0
      %v1582 = vpop.f32.mrf.mxu0
      %v1583 = vadd.f32 0.0, %v1582
      %v1584 = vpop.f32.mrf.mxu0
      %1585 = vmatprep.mubr.bf16.mxu0 0
      %1586 = vmatmul.mubr.bf16.gmra.mxu0 %v1214
      %v1587 = vpop.f32.mrf.mxu0
      %v1588 = vadd.f32 0.0, %v1587
      %v1589 = vpop.f32.mrf.mxu0
      %v1590 = vpop.f32.mrf.mxu0
      %v1591 = vadd.f32 0.0, %v1590
      %v1592 = vpop.f32.mrf.mxu0
      %1593 = vmatprep.mubr.bf16.mxu0 0
      %1594 = vmatmul.mubr.bf16.gmra.mxu0 %v1217
      %v1595 = vpop.f32.mrf.mxu0
      %v1596 = vadd.f32 0.0, %v1595
      %v1597 = vpop.f32.mrf.mxu0
      %v1598 = vpop.f32.mrf.mxu0
      %v1599 = vadd.f32 0.0, %v1598
      %v1600 = vpop.f32.mrf.mxu0
      %1601 = vmatprep.mubr.bf16.mxu0 0
      %1602 = vmatmul.mubr.bf16.gmra.mxu0 %v1220
      %v1603 = vpop.f32.mrf.mxu0
      %v1604 = vadd.f32 0.0, %v1603
      %v1605 = vpop.f32.mrf.mxu0
      %v1606 = vpop.f32.mrf.mxu0
      %v1607 = vadd.f32 0.0, %v1606
      %v1608 = vpop.f32.mrf.mxu0
      %1609 = vmatprep.mubr.bf16.mxu0 0
      %1610 = vmatmul.mubr.bf16.gmra.mxu0 %v1223
      %v1611 = vpop.f32.mrf.mxu0
      %v1612 = vadd.f32 0.0, %v1611
      %v1613 = vpop.f32.mrf.mxu0
      %v1614 = vpop.f32.mrf.mxu0
      %v1615 = vadd.f32 0.0, %v1614
      %v1616 = vpop.f32.mrf.mxu0
      %1617 = vmatprep.mubr.bf16.mxu0 0
      %1618 = vmatmul.mubr.bf16.gmra.mxu0 %v1226
      %v1619 = vpop.f32.mrf.mxu0
      %v1620 = vadd.f32 0.0, %v1619
      %v1621 = vpop.f32.mrf.mxu0
      %v1622 = vpop.f32.mrf.mxu0
      %v1623 = vadd.f32 0.0, %v1622
      %v1624 = vpop.f32.mrf.mxu0
      %1625 = vmatprep.mubr.bf16.mxu0 0
      %1626 = vmatmul.mubr.bf16.gmra.mxu0 %v1229
      %v1627 = vpop.f32.mrf.mxu0
      %v1628 = vadd.f32 0.0, %v1627
      %v1629 = vpop.f32.mrf.mxu0
      %v1630 = vpop.f32.mrf.mxu0
      %v1631 = vadd.f32 0.0, %v1630
      %v1632 = vpop.f32.mrf.mxu0
      %1633 = vmatprep.mubr.bf16.mxu0 0
      %1634 = vmatmul.mubr.bf16.gmra.mxu0 %v1232
      %v1635 = vpop.f32.mrf.mxu0
      %v1636 = vadd.f32 0.0, %v1635
      %v1637 = vpop.f32.mrf.mxu0
      %v1638 = vpop.f32.mrf.mxu0
      %v1639 = vadd.f32 0.0, %v1638
      %v1640 = vpop.f32.mrf.mxu0
      %1641 = vmatprep.mubr.bf16.mxu0 0
      %1642 = vmatmul.mubr.bf16.gmra.mxu0 %v1235
      %v1643 = vpop.f32.mrf.mxu0
      %v1644 = vadd.f32 0.0, %v1643
      %v1645 = vpop.f32.mrf.mxu0
      %v1646 = vpop.f32.mrf.mxu0
      %v1647 = vadd.f32 0.0, %v1646
      %v1648 = vpop.f32.mrf.mxu0
      %1649 = vmatprep.mubr.bf16.mxu0 0
      %1650 = vmatmul.mubr.bf16.gmra.mxu0 %v1238
      %v1651 = vpop.f32.mrf.mxu0
      %v1652 = vadd.f32 0.0, %v1651
      %v1653 = vpop.f32.mrf.mxu0
      %v1654 = vpop.f32.mrf.mxu0
      %v1655 = vadd.f32 0.0, %v1654
      %v1656 = vpop.f32.mrf.mxu0
      %1657 = vmatprep.mubr.bf16.mxu0 0
      %1658 = vmatmul.mubr.bf16.gmra.mxu0 %v1241
      %v1659 = vpop.f32.mrf.mxu0
      %v1660 = vadd.f32 0.0, %v1659
      %v1661 = vpop.f32.mrf.mxu0
      %v1662 = vpop.f32.mrf.mxu0
      %v1663 = vadd.f32 0.0, %v1662
      %v1664 = vpop.f32.mrf.mxu0
      %1665 = vmatprep.mubr.bf16.mxu0 0
      %1666 = vmatmul.mubr.bf16.gmra.mxu0 %v1244
      %v1667 = vpop.f32.mrf.mxu0
      %v1668 = vadd.f32 0.0, %v1667
      %v1669 = vpop.f32.mrf.mxu0
      %v1670 = vpop.f32.mrf.mxu0
      %v1671 = vadd.f32 0.0, %v1670
      %v1672 = vpop.f32.mrf.mxu0
      %1673 = vmatprep.mubr.bf16.mxu0 0
      %1674 = vmatmul.mubr.bf16.gmra.mxu0 %v1247
      %v1675 = vpop.f32.mrf.mxu0
      %v1676 = vadd.f32 0.0, %v1675
      %v1677 = vpop.f32.mrf.mxu0
      %v1678 = vpop.f32.mrf.mxu0
      %v1679 = vadd.f32 0.0, %v1678
      %v1680 = vpop.f32.mrf.mxu0
      %1681 = vmatprep.mubr.bf16.mxu0 0
      %1682 = vmatmul.mubr.bf16.gmra.mxu0 %v1250
      %v1683 = vpop.f32.mrf.mxu0
      %v1684 = vadd.f32 0.0, %v1683
      %v1685 = vpop.f32.mrf.mxu0
      %v1686 = vpop.f32.mrf.mxu0
      %v1687 = vadd.f32 0.0, %v1686
      %v1688 = vpop.f32.mrf.mxu0
      %1689 = vmatprep.mubr.bf16.mxu0 0
      %1690 = vmatmul.mubr.bf16.gmra.mxu0 %v1253
      %v1691 = vpop.f32.mrf.mxu0
      %v1692 = vadd.f32 0.0, %v1691
      %v1693 = vpop.f32.mrf.mxu0
      %v1694 = vpop.f32.mrf.mxu0
      %v1695 = vadd.f32 0.0, %v1694
      %v1696 = vpop.f32.mrf.mxu0
      %1697 = vmatprep.mubr.bf16.mxu0 0
      %1698 = vmatmul.mubr.bf16.gmra.mxu0 %v1256
      %v1699 = vpop.f32.mrf.mxu0
      %v1700 = vadd.f32 0.0, %v1699
      %v1701 = vpop.f32.mrf.mxu0
      %v1702 = vpop.f32.mrf.mxu0
      %v1703 = vadd.f32 0.0, %v1702
      %v1704 = vpop.f32.mrf.mxu0
      %1705 = vmatprep.mubr.bf16.mxu0 0
      %1706 = vmatmul.mubr.bf16.gmra.mxu0 %v1259
      %v1707 = vpop.f32.mrf.mxu0
      %v1708 = vadd.f32 0.0, %v1707
      %v1709 = vpop.f32.mrf.mxu0
      %v1710 = vpop.f32.mrf.mxu0
      %v1711 = vadd.f32 0.0, %v1710
      %v1712 = vpop.f32.mrf.mxu0
      %1713 = vmatprep.mubr.bf16.mxu0 0
      %1714 = vmatmul.mubr.bf16.gmra.mxu0 %v1262
      %v1715 = vpop.f32.mrf.mxu0
      %v1716 = vadd.f32 0.0, %v1715
      %v1717 = vpop.f32.mrf.mxu0
      %v1718 = vpop.f32.mrf.mxu0
      %v1719 = vadd.f32 0.0, %v1718
      %v1720 = vpop.f32.mrf.mxu0
      %1721 = vmatprep.mubr.bf16.mxu0 0
      %1722 = vmatmul.mubr.bf16.gmra.mxu0 %v1265
      %v1723 = vpop.f32.mrf.mxu0
      %v1724 = vadd.f32 0.0, %v1723
      %v1725 = vpop.f32.mrf.mxu0
      %v1726 = vpop.f32.mrf.mxu0
      %v1727 = vadd.f32 0.0, %v1726
      %v1728 = vpop.f32.mrf.mxu0
      %1729 = vmatprep.mubr.bf16.mxu0 0
      %1730 = vmatmul.mubr.bf16.gmra.mxu0 %v1268
      %v1731 = vpop.f32.mrf.mxu0
      %v1732 = vadd.f32 0.0, %v1731
      %v1733 = vpop.f32.mrf.mxu0
      %v1734 = vpop.f32.mrf.mxu0
      %v1735 = vadd.f32 0.0, %v1734
      %v1736 = vpop.f32.mrf.mxu0
      %1737 = vmatprep.mubr.bf16.mxu0 0
      %1738 = vmatmul.mubr.bf16.gmra.mxu0 %v1271
      %v1739 = vpop.f32.mrf.mxu0
      %v1740 = vadd.f32 0.0, %v1739
      %v1741 = vpop.f32.mrf.mxu0
      %v1742 = vpop.f32.mrf.mxu0
      %v1743 = vadd.f32 0.0, %v1742
      %v1744 = vpop.f32.mrf.mxu0
      %1745 = vmatprep.mubr.bf16.mxu0 0
      %1746 = vmatmul.mubr.bf16.gmra.mxu0 %v1274
      %v1747 = vpop.f32.mrf.mxu0
      %v1748 = vadd.f32 0.0, %v1747
      %v1749 = vpop.f32.mrf.mxu0
      %v1750 = vpop.f32.mrf.mxu0
      %v1751 = vadd.f32 0.0, %v1750
      %v1752 = vpop.f32.mrf.mxu0
      %1753 = vmatprep.mubr.bf16.mxu0 0
      %1754 = vmatmul.mubr.bf16.gmra.mxu0 %v1277
      %v1755 = vpop.f32.mrf.mxu0
      %v1756 = vadd.f32 0.0, %v1755
      %v1757 = vpop.f32.mrf.mxu0
      %v1758 = vpop.f32.mrf.mxu0
      %v1759 = vadd.f32 0.0, %v1758
      %v1760 = vpop.f32.mrf.mxu0
      %1761 = vmatprep.mubr.bf16.mxu0 0
      %1762 = vmatmul.mubr.bf16.gmra.mxu0 %v1280
      %v1763 = vpop.f32.mrf.mxu0
      %v1764 = vadd.f32 0.0, %v1763
      %v1765 = vpop.f32.mrf.mxu0
      %v1766 = vpop.f32.mrf.mxu0
      %v1767 = vadd.f32 0.0, %v1766
      %v1768 = vpop.f32.mrf.mxu0
      %1769 = vmatprep.mubr.bf16.mxu0 0
      %1770 = vmatmul.mubr.bf16.gmra.mxu0 %v1283
      %v1771 = vpop.f32.mrf.mxu0
      %v1772 = vadd.f32 0.0, %v1771
      %v1773 = vpop.f32.mrf.mxu0
      %v1774 = vpop.f32.mrf.mxu0
      %v1775 = vadd.f32 0.0, %v1774
      %v1776 = vpop.f32.mrf.mxu0
      %1777 = vmatprep.mubr.bf16.mxu0 0
      %1778 = vmatmul.mubr.bf16.gmra.mxu0 %v1286
      %v1779 = vpop.f32.mrf.mxu0
      %v1780 = vadd.f32 0.0, %v1779
      %v1781 = vpop.f32.mrf.mxu0
      %v1782 = vpop.f32.mrf.mxu0
      %v1783 = vadd.f32 0.0, %v1782
      %v1784 = vpop.f32.mrf.mxu0
      %1785 = vmatprep.mubr.bf16.mxu0 0
      %1786 = vmatmul.mubr.bf16.gmra.mxu0 %v1289
      %v1787 = vpop.f32.mrf.mxu0
      %v1788 = vadd.f32 0.0, %v1787
      %v1789 = vpop.f32.mrf.mxu0
      %v1790 = vpop.f32.mrf.mxu0
      %v1791 = vadd.f32 0.0, %v1790
      %v1792 = vpop.f32.mrf.mxu0
      %1793 = vmatprep.mubr.bf16.mxu0 0
      %1794 = vmatmul.mubr.bf16.gmra.mxu0 %v1292
      %v1795 = vpop.f32.mrf.mxu0
      %v1796 = vadd.f32 0.0, %v1795
      %v1797 = vpop.f32.mrf.mxu0
      %v1798 = vpop.f32.mrf.mxu0
      %v1799 = vadd.f32 0.0, %v1798
      %v1800 = vpop.f32.mrf.mxu0
      %1801 = vmatprep.mubr.bf16.mxu0 0
      %1802 = vmatmul.mubr.bf16.gmra.mxu0 %v1295
      %v1803 = vpop.f32.mrf.mxu0
      %v1804 = vadd.f32 0.0, %v1803
      %v1805 = vpop.f32.mrf.mxu0
      %v1806 = vpop.f32.mrf.mxu0
      %v1807 = vadd.f32 0.0, %v1806
      %v1808 = vpop.f32.mrf.mxu0
      %1809 = vmatprep.mubr.bf16.mxu0 0
      %1810 = vmatmul.mubr.bf16.gmra.mxu0 %v1298
      %v1811 = vpop.f32.mrf.mxu0
      %v1812 = vadd.f32 0.0, %v1811
      %v1813 = vpop.f32.mrf.mxu0
      %v1814 = vpop.f32.mrf.mxu0
      %v1815 = vadd.f32 0.0, %v1814
      %v1816 = vpop.f32.mrf.mxu0
      %1817 = vmatprep.mubr.bf16.mxu0 0
      %1818 = vmatmul.mubr.bf16.gmra.mxu0 %v1301
      %v1819 = vpop.f32.mrf.mxu0
      %v1820 = vadd.f32 0.0, %v1819
      %v1821 = vpop.f32.mrf.mxu0
      %v1822 = vpop.f32.mrf.mxu0
      %v1823 = vadd.f32 0.0, %v1822
      %v1824 = vpop.f32.mrf.mxu0
      %1825 = vmatprep.mubr.bf16.mxu0 0
      %1826 = vmatmul.mubr.bf16.gmra.mxu0 %v1304
      %v1827 = vpop.f32.mrf.mxu0
      %v1828 = vadd.f32 0.0, %v1827
      %v1829 = vpop.f32.mrf.mxu0
      %v1830 = vpop.f32.mrf.mxu0
      %v1831 = vadd.f32 0.0, %v1830
      %v1832 = vpop.f32.mrf.mxu0
      %1833 = vmatprep.mubr.bf16.mxu0 0
      %1834 = vmatmul.mubr.bf16.gmra.mxu0 %v1307
      %v1835 = vpop.f32.mrf.mxu0
      %v1836 = vadd.f32 0.0, %v1835
      %v1837 = vpop.f32.mrf.mxu0
      %v1838 = vpop.f32.mrf.mxu0
      %v1839 = vadd.f32 0.0, %v1838
      %v1840 = vpop.f32.mrf.mxu0
      %1841 = vdwg.mxu0
      %v1844 = vunpack.c.l.b16 %v297
      %v1845 = vunpack.c.l.b16 %v298
      %v1846 = vpack.c.b16 %v1845, %v1844
      %v1847 = vsel %vm1122, %v552, 0
      %v1849 = vsel %vm1122, %v553, 0
      %v1851 = vsel %vm1122, %v554, 0
      %v1853 = vsel %vm1122, %v555, 0
      %v1855 = vsel %vm1122, %v556, 0
      %v1857 = vsel %vm1122, %v557, 0
      %v1859 = vsel %vm1122, %v558, 0
      %v1861 = vsel %vm1122, %v559, 0
      %v1863 = vsel %vm1122, %v560, 0
      %v1865 = vsel %vm1122, %v561, 0
      %v1867 = vsel %vm1122, %v562, 0
      %v1869 = vsel %vm1122, %v563, 0
      %v1871 = vsel %vm1122, %v564, 0
      %v1873 = vsel %vm1122, %v565, 0
      %v1875 = vsel %vm1122, %v566, 0
      %v1877 = vsel %vm1122, %v567, 0
      %v1879 = vsel %vm1122, %v568, 0
      %v1881 = vsel %vm1122, %v569, 0
      %v1883 = vsel %vm1122, %v570, 0
      %v1885 = vsel %vm1122, %v571, 0
      %v1887 = vsel %vm1122, %v572, 0
      %v1889 = vsel %vm1122, %v573, 0
      %v1891 = vsel %vm1122, %v574, 0
      %v1893 = vsel %vm1122, %v575, 0
      %v1895 = vsel %vm1122, %v576, 0
      %v1897 = vsel %vm1122, %v577, 0
      %v1899 = vsel %vm1122, %v578, 0
      %v1901 = vsel %vm1122, %v579, 0
      %v1903 = vsel %vm1122, %v580, 0
      %v1905 = vsel %vm1122, %v581, 0
      %v1907 = vsel %vm1122, %v582, 0
      %v1909 = vsel %vm1122, %v583, 0
      %v1911 = vsel %vm1122, %v584, 0
      %v1913 = vsel %vm1122, %v585, 0
      %v1915 = vsel %vm1122, %v586, 0
      %v1917 = vsel %vm1122, %v587, 0
      %v1919 = vsel %vm1122, %v588, 0
      %v1921 = vsel %vm1122, %v589, 0
      %v1923 = vsel %vm1122, %v590, 0
      %v1925 = vsel %vm1122, %v591, 0
      %v1927 = vsel %vm1122, %v592, 0
      %v1929 = vsel %vm1122, %v593, 0
      %v1931 = vsel %vm1122, %v594, 0
      %v1933 = vsel %vm1122, %v595, 0
      %v1935 = vsel %vm1122, %v596, 0
      %v1937 = vsel %vm1122, %v597, 0
      %v1939 = vsel %vm1122, %v598, 0
      %v1941 = vsel %vm1122, %v599, 0
      %v1943 = vsel %vm1122, %v600, 0
      %v1945 = vsel %vm1122, %v601, 0
      %v1947 = vsel %vm1122, %v602, 0
      %v1949 = vsel %vm1122, %v603, 0
      %v1951 = vsel %vm1122, %v604, 0
      %v1953 = vsel %vm1122, %v605, 0
      %v1955 = vsel %vm1122, %v606, 0
      %v1957 = vsel %vm1122, %v607, 0
      %v1959 = vsel %vm1122, %v608, 0
      %v1961 = vsel %vm1122, %v609, 0
      %v1963 = vsel %vm1122, %v610, 0
      %v1965 = vsel %vm1122, %v611, 0
      %v1967 = vsel %vm1122, %v612, 0
      %v1969 = vsel %vm1122, %v613, 0
      %v1972 = vsel %vm1309, %v1846, 0
      %1974 = vmatprep.subr.bf16.mxu0 0
      %1975 = vmatpush1.bf16.msra.mxu0 0
      %1976 = vmatprep.subr.bf16.mxu0 0
      %1977 = vmatpush1.bf16.msra.mxu0 0
      %1978 = vmatprep.subr.bf16.mxu0 0
      %1979 = vmatpush1.bf16.msra.mxu0 0
      %1980 = vmatprep.subr.bf16.mxu0 0
      %1981 = vmatpush1.bf16.msra.mxu0 0
      %1982 = vmatprep.subr.bf16.mxu0 0
      %1983 = vmatpush1.bf16.msra.mxu0 0
      %1984 = vmatprep.subr.bf16.mxu0 0
      %1985 = vmatpush1.bf16.msra.mxu0 0
      %1986 = vmatprep.subr.bf16.mxu0 0
      %1987 = vmatpush1.bf16.msra.mxu0 0
      %1988 = vmatprep.subr.bf16.mxu0 0
      %1989 = vmatpush1.bf16.msra.mxu0 %v1972
      %1990 = vmatprep.subr.bf16.mxu0 0
      %1991 = vmatpush2.bf16.msra.mxu0 0
      %1992 = vmatprep.subr.bf16.mxu0 0
      %1993 = vmatpush2.bf16.msra.mxu0 0
      %1994 = vmatprep.subr.bf16.mxu0 0
      %1995 = vmatpush2.bf16.msra.mxu0 0
      %1996 = vmatprep.subr.bf16.mxu0 0
      %1997 = vmatpush2.bf16.msra.mxu0 0
      %1998 = vmatprep.subr.bf16.mxu0 0
      %1999 = vmatpush2.bf16.msra.mxu0 0
      %2000 = vmatprep.subr.bf16.mxu0 0
      %2001 = vmatpush2.bf16.msra.mxu0 0
      %2002 = vmatprep.subr.bf16.mxu0 0
      %2003 = vmatpush2.bf16.msra.mxu0 0
      %2004 = vmatprep.subr.bf16.mxu0 0
      %2005 = vmatpush2.bf16.msra.mxu0 0
      %2006 = vmatprep.mubr.bf16.mxu0 0
      %2007 = vmatmul.mubr.bf16.gmra.mxu0 %v1847
      %v2008 = vpop.f32.mrf.mxu0
      %v2009 = vadd.f32 %v1348, %v2008
      %v2010 = vpop.f32.mrf.mxu0
      %v2011 = vpop.f32.mrf.mxu0
      %v2012 = vadd.f32 %v1351, %v2011
      %v2013 = vpop.f32.mrf.mxu0
      %2014 = vmatprep.mubr.bf16.mxu0 0
      %2015 = vmatmul.mubr.bf16.gmra.mxu0 %v1849
      %v2016 = vpop.f32.mrf.mxu0
      %v2017 = vadd.f32 %v1356, %v2016
      %v2018 = vpop.f32.mrf.mxu0
      %v2019 = vpop.f32.mrf.mxu0
      %v2020 = vadd.f32 %v1359, %v2019
      %v2021 = vpop.f32.mrf.mxu0
      %2022 = vmatprep.mubr.bf16.mxu0 0
      %2023 = vmatmul.mubr.bf16.gmra.mxu0 %v1851
      %v2024 = vpop.f32.mrf.mxu0
      %v2025 = vadd.f32 %v1364, %v2024
      %v2026 = vpop.f32.mrf.mxu0
      %v2027 = vpop.f32.mrf.mxu0
      %v2028 = vadd.f32 %v1367, %v2027
      %v2029 = vpop.f32.mrf.mxu0
      %2030 = vmatprep.mubr.bf16.mxu0 0
      %2031 = vmatmul.mubr.bf16.gmra.mxu0 %v1853
      %v2032 = vpop.f32.mrf.mxu0
      %v2033 = vadd.f32 %v1372, %v2032
      %v2034 = vpop.f32.mrf.mxu0
      %v2035 = vpop.f32.mrf.mxu0
      %v2036 = vadd.f32 %v1375, %v2035
      %v2037 = vpop.f32.mrf.mxu0
      %2038 = vmatprep.mubr.bf16.mxu0 0
      %2039 = vmatmul.mubr.bf16.gmra.mxu0 %v1855
      %v2040 = vpop.f32.mrf.mxu0
      %v2041 = vadd.f32 %v1380, %v2040
      %v2042 = vpop.f32.mrf.mxu0
      %v2043 = vpop.f32.mrf.mxu0
      %v2044 = vadd.f32 %v1383, %v2043
      %v2045 = vpop.f32.mrf.mxu0
      %2046 = vmatprep.mubr.bf16.mxu0 0
      %2047 = vmatmul.mubr.bf16.gmra.mxu0 %v1857
      %v2048 = vpop.f32.mrf.mxu0
      %v2049 = vadd.f32 %v1388, %v2048
      %v2050 = vpop.f32.mrf.mxu0
      %v2051 = vpop.f32.mrf.mxu0
      %v2052 = vadd.f32 %v1391, %v2051
      %v2053 = vpop.f32.mrf.mxu0
      %2054 = vmatprep.mubr.bf16.mxu0 0
      %2055 = vmatmul.mubr.bf16.gmra.mxu0 %v1859
      %v2056 = vpop.f32.mrf.mxu0
      %v2057 = vadd.f32 %v1396, %v2056
      %v2058 = vpop.f32.mrf.mxu0
      %v2059 = vpop.f32.mrf.mxu0
      %v2060 = vadd.f32 %v1399, %v2059
      %v2061 = vpop.f32.mrf.mxu0
      %2062 = vmatprep.mubr.bf16.mxu0 0
      %2063 = vmatmul.mubr.bf16.gmra.mxu0 %v1861
      %v2064 = vpop.f32.mrf.mxu0
      %v2065 = vadd.f32 %v1404, %v2064
      %v2066 = vpop.f32.mrf.mxu0
      %v2067 = vpop.f32.mrf.mxu0
      %v2068 = vadd.f32 %v1407, %v2067
      %v2069 = vpop.f32.mrf.mxu0
      %2070 = vmatprep.mubr.bf16.mxu0 0
      %2071 = vmatmul.mubr.bf16.gmra.mxu0 %v1863
      %v2072 = vpop.f32.mrf.mxu0
      %v2073 = vadd.f32 %v1412, %v2072
      %v2074 = vpop.f32.mrf.mxu0
      %v2075 = vpop.f32.mrf.mxu0
      %v2076 = vadd.f32 %v1415, %v2075
      %v2077 = vpop.f32.mrf.mxu0
      %2078 = vmatprep.mubr.bf16.mxu0 0
      %2079 = vmatmul.mubr.bf16.gmra.mxu0 %v1865
      %v2080 = vpop.f32.mrf.mxu0
      %v2081 = vadd.f32 %v1420, %v2080
      %v2082 = vpop.f32.mrf.mxu0
      %v2083 = vpop.f32.mrf.mxu0
      %v2084 = vadd.f32 %v1423, %v2083
      %v2085 = vpop.f32.mrf.mxu0
      %2086 = vmatprep.mubr.bf16.mxu0 0
      %2087 = vmatmul.mubr.bf16.gmra.mxu0 %v1867
      %v2088 = vpop.f32.mrf.mxu0
      %v2089 = vadd.f32 %v1428, %v2088
      %v2090 = vpop.f32.mrf.mxu0
      %v2091 = vpop.f32.mrf.mxu0
      %v2092 = vadd.f32 %v1431, %v2091
      %v2093 = vpop.f32.mrf.mxu0
      %2094 = vmatprep.mubr.bf16.mxu0 0
      %2095 = vmatmul.mubr.bf16.gmra.mxu0 %v1869
      %v2096 = vpop.f32.mrf.mxu0
      %v2097 = vadd.f32 %v1436, %v2096
      %v2098 = vpop.f32.mrf.mxu0
      %v2099 = vpop.f32.mrf.mxu0
      %v2100 = vadd.f32 %v1439, %v2099
      %v2101 = vpop.f32.mrf.mxu0
      %2102 = vmatprep.mubr.bf16.mxu0 0
      %2103 = vmatmul.mubr.bf16.gmra.mxu0 %v1871
      %v2104 = vpop.f32.mrf.mxu0
      %v2105 = vadd.f32 %v1444, %v2104
      %v2106 = vpop.f32.mrf.mxu0
      %v2107 = vpop.f32.mrf.mxu0
      %v2108 = vadd.f32 %v1447, %v2107
      %v2109 = vpop.f32.mrf.mxu0
      %2110 = vmatprep.mubr.bf16.mxu0 0
      %2111 = vmatmul.mubr.bf16.gmra.mxu0 %v1873
      %v2112 = vpop.f32.mrf.mxu0
      %v2113 = vadd.f32 %v1452, %v2112
      %v2114 = vpop.f32.mrf.mxu0
      %v2115 = vpop.f32.mrf.mxu0
      %v2116 = vadd.f32 %v1455, %v2115
      %v2117 = vpop.f32.mrf.mxu0
      %2118 = vmatprep.mubr.bf16.mxu0 0
      %2119 = vmatmul.mubr.bf16.gmra.mxu0 %v1875
      %v2120 = vpop.f32.mrf.mxu0
      %v2121 = vadd.f32 %v1460, %v2120
      %v2122 = vpop.f32.mrf.mxu0
      %v2123 = vpop.f32.mrf.mxu0
      %v2124 = vadd.f32 %v1463, %v2123
      %v2125 = vpop.f32.mrf.mxu0
      %2126 = vmatprep.mubr.bf16.mxu0 0
      %2127 = vmatmul.mubr.bf16.gmra.mxu0 %v1877
      %v2128 = vpop.f32.mrf.mxu0
      %v2129 = vadd.f32 %v1468, %v2128
      %v2130 = vpop.f32.mrf.mxu0
      %v2131 = vpop.f32.mrf.mxu0
      %v2132 = vadd.f32 %v1471, %v2131
      %v2133 = vpop.f32.mrf.mxu0
      %2134 = vmatprep.mubr.bf16.mxu0 0
      %2135 = vmatmul.mubr.bf16.gmra.mxu0 %v1879
      %v2136 = vpop.f32.mrf.mxu0
      %v2137 = vadd.f32 %v1476, %v2136
      %v2138 = vpop.f32.mrf.mxu0
      %v2139 = vpop.f32.mrf.mxu0
      %v2140 = vadd.f32 %v1479, %v2139
      %v2141 = vpop.f32.mrf.mxu0
      %2142 = vmatprep.mubr.bf16.mxu0 0
      %2143 = vmatmul.mubr.bf16.gmra.mxu0 %v1881
      %v2144 = vpop.f32.mrf.mxu0
      %v2145 = vadd.f32 %v1484, %v2144
      %v2146 = vpop.f32.mrf.mxu0
      %v2147 = vpop.f32.mrf.mxu0
      %v2148 = vadd.f32 %v1487, %v2147
      %v2149 = vpop.f32.mrf.mxu0
      %2150 = vmatprep.mubr.bf16.mxu0 0
      %2151 = vmatmul.mubr.bf16.gmra.mxu0 %v1883
      %v2152 = vpop.f32.mrf.mxu0
      %v2153 = vadd.f32 %v1492, %v2152
      %v2154 = vpop.f32.mrf.mxu0
      %v2155 = vpop.f32.mrf.mxu0
      %v2156 = vadd.f32 %v1495, %v2155
      %v2157 = vpop.f32.mrf.mxu0
      %2158 = vmatprep.mubr.bf16.mxu0 0
      %2159 = vmatmul.mubr.bf16.gmra.mxu0 %v1885
      %v2160 = vpop.f32.mrf.mxu0
      %v2161 = vadd.f32 %v1500, %v2160
      %v2162 = vpop.f32.mrf.mxu0
      %v2163 = vpop.f32.mrf.mxu0
      %v2164 = vadd.f32 %v1503, %v2163
      %v2165 = vpop.f32.mrf.mxu0
      %2166 = vmatprep.mubr.bf16.mxu0 0
      %2167 = vmatmul.mubr.bf16.gmra.mxu0 %v1887
      %v2168 = vpop.f32.mrf.mxu0
      %v2169 = vadd.f32 %v1508, %v2168
      %v2170 = vpop.f32.mrf.mxu0
      %v2171 = vpop.f32.mrf.mxu0
      %v2172 = vadd.f32 %v1511, %v2171
      %v2173 = vpop.f32.mrf.mxu0
      %2174 = vmatprep.mubr.bf16.mxu0 0
      %2175 = vmatmul.mubr.bf16.gmra.mxu0 %v1889
      %v2176 = vpop.f32.mrf.mxu0
      %v2177 = vadd.f32 %v1516, %v2176
      %v2178 = vpop.f32.mrf.mxu0
      %v2179 = vpop.f32.mrf.mxu0
      %v2180 = vadd.f32 %v1519, %v2179
      %v2181 = vpop.f32.mrf.mxu0
      %2182 = vmatprep.mubr.bf16.mxu0 0
      %2183 = vmatmul.mubr.bf16.gmra.mxu0 %v1891
      %v2184 = vpop.f32.mrf.mxu0
      %v2185 = vadd.f32 %v1524, %v2184
      %v2186 = vpop.f32.mrf.mxu0
      %v2187 = vpop.f32.mrf.mxu0
      %v2188 = vadd.f32 %v1527, %v2187
      %v2189 = vpop.f32.mrf.mxu0
      %2190 = vmatprep.mubr.bf16.mxu0 0
      %2191 = vmatmul.mubr.bf16.gmra.mxu0 %v1893
      %v2192 = vpop.f32.mrf.mxu0
      %v2193 = vadd.f32 %v1532, %v2192
      %v2194 = vpop.f32.mrf.mxu0
      %v2195 = vpop.f32.mrf.mxu0
      %v2196 = vadd.f32 %v1535, %v2195
      %v2197 = vpop.f32.mrf.mxu0
      %2198 = vmatprep.mubr.bf16.mxu0 0
      %2199 = vmatmul.mubr.bf16.gmra.mxu0 %v1895
      %v2200 = vpop.f32.mrf.mxu0
      %v2201 = vadd.f32 %v1540, %v2200
      %v2202 = vpop.f32.mrf.mxu0
      %v2203 = vpop.f32.mrf.mxu0
      %v2204 = vadd.f32 %v1543, %v2203
      %v2205 = vpop.f32.mrf.mxu0
      %2206 = vmatprep.mubr.bf16.mxu0 0
      %2207 = vmatmul.mubr.bf16.gmra.mxu0 %v1897
      %v2208 = vpop.f32.mrf.mxu0
      %v2209 = vadd.f32 %v1548, %v2208
      %v2210 = vpop.f32.mrf.mxu0
      %v2211 = vpop.f32.mrf.mxu0
      %v2212 = vadd.f32 %v1551, %v2211
      %v2213 = vpop.f32.mrf.mxu0
      %2214 = vmatprep.mubr.bf16.mxu0 0
      %2215 = vmatmul.mubr.bf16.gmra.mxu0 %v1899
      %v2216 = vpop.f32.mrf.mxu0
      %v2217 = vadd.f32 %v1556, %v2216
      %v2218 = vpop.f32.mrf.mxu0
      %v2219 = vpop.f32.mrf.mxu0
      %v2220 = vadd.f32 %v1559, %v2219
      %v2221 = vpop.f32.mrf.mxu0
      %2222 = vmatprep.mubr.bf16.mxu0 0
      %2223 = vmatmul.mubr.bf16.gmra.mxu0 %v1901
      %v2224 = vpop.f32.mrf.mxu0
      %v2225 = vadd.f32 %v1564, %v2224
      %v2226 = vpop.f32.mrf.mxu0
      %v2227 = vpop.f32.mrf.mxu0
      %v2228 = vadd.f32 %v1567, %v2227
      %v2229 = vpop.f32.mrf.mxu0
      %2230 = vmatprep.mubr.bf16.mxu0 0
      %2231 = vmatmul.mubr.bf16.gmra.mxu0 %v1903
      %v2232 = vpop.f32.mrf.mxu0
      %v2233 = vadd.f32 %v1572, %v2232
      %v2234 = vpop.f32.mrf.mxu0
      %v2235 = vpop.f32.mrf.mxu0
      %v2236 = vadd.f32 %v1575, %v2235
      %v2237 = vpop.f32.mrf.mxu0
      %2238 = vmatprep.mubr.bf16.mxu0 0
      %2239 = vmatmul.mubr.bf16.gmra.mxu0 %v1905
      %v2240 = vpop.f32.mrf.mxu0
      %v2241 = vadd.f32 %v1580, %v2240
      %v2242 = vpop.f32.mrf.mxu0
      %v2243 = vpop.f32.mrf.mxu0
      %v2244 = vadd.f32 %v1583, %v2243
      %v2245 = vpop.f32.mrf.mxu0
      %2246 = vmatprep.mubr.bf16.mxu0 0
      %2247 = vmatmul.mubr.bf16.gmra.mxu0 %v1907
      %v2248 = vpop.f32.mrf.mxu0
      %v2249 = vadd.f32 %v1588, %v2248
      %v2250 = vpop.f32.mrf.mxu0
      %v2251 = vpop.f32.mrf.mxu0
      %v2252 = vadd.f32 %v1591, %v2251
      %v2253 = vpop.f32.mrf.mxu0
      %2254 = vmatprep.mubr.bf16.mxu0 0
      %2255 = vmatmul.mubr.bf16.gmra.mxu0 %v1909
      %v2256 = vpop.f32.mrf.mxu0
      %v2257 = vadd.f32 %v1596, %v2256
      %v2258 = vpop.f32.mrf.mxu0
      %v2259 = vpop.f32.mrf.mxu0
      %v2260 = vadd.f32 %v1599, %v2259
      %v2261 = vpop.f32.mrf.mxu0
      %2262 = vmatprep.mubr.bf16.mxu0 0
      %2263 = vmatmul.mubr.bf16.gmra.mxu0 %v1911
      %v2264 = vpop.f32.mrf.mxu0
      %v2265 = vadd.f32 %v1604, %v2264
      %v2266 = vpop.f32.mrf.mxu0
      %v2267 = vpop.f32.mrf.mxu0
      %v2268 = vadd.f32 %v1607, %v2267
      %v2269 = vpop.f32.mrf.mxu0
      %2270 = vmatprep.mubr.bf16.mxu0 0
      %2271 = vmatmul.mubr.bf16.gmra.mxu0 %v1913
      %v2272 = vpop.f32.mrf.mxu0
      %v2273 = vadd.f32 %v1612, %v2272
      %v2274 = vpop.f32.mrf.mxu0
      %v2275 = vpop.f32.mrf.mxu0
      %v2276 = vadd.f32 %v1615, %v2275
      %v2277 = vpop.f32.mrf.mxu0
      %2278 = vmatprep.mubr.bf16.mxu0 0
      %2279 = vmatmul.mubr.bf16.gmra.mxu0 %v1915
      %v2280 = vpop.f32.mrf.mxu0
      %v2281 = vadd.f32 %v1620, %v2280
      %v2282 = vpop.f32.mrf.mxu0
      %v2283 = vpop.f32.mrf.mxu0
      %v2284 = vadd.f32 %v1623, %v2283
      %v2285 = vpop.f32.mrf.mxu0
      %2286 = vmatprep.mubr.bf16.mxu0 0
      %2287 = vmatmul.mubr.bf16.gmra.mxu0 %v1917
      %v2288 = vpop.f32.mrf.mxu0
      %v2289 = vadd.f32 %v1628, %v2288
      %v2290 = vpop.f32.mrf.mxu0
      %v2291 = vpop.f32.mrf.mxu0
      %v2292 = vadd.f32 %v1631, %v2291
      %v2293 = vpop.f32.mrf.mxu0
      %2294 = vmatprep.mubr.bf16.mxu0 0
      %2295 = vmatmul.mubr.bf16.gmra.mxu0 %v1919
      %v2296 = vpop.f32.mrf.mxu0
      %v2297 = vadd.f32 %v1636, %v2296
      %v2298 = vpop.f32.mrf.mxu0
      %v2299 = vpop.f32.mrf.mxu0
      %v2300 = vadd.f32 %v1639, %v2299
      %v2301 = vpop.f32.mrf.mxu0
      %2302 = vmatprep.mubr.bf16.mxu0 0
      %2303 = vmatmul.mubr.bf16.gmra.mxu0 %v1921
      %v2304 = vpop.f32.mrf.mxu0
      %v2305 = vadd.f32 %v1644, %v2304
      %v2306 = vpop.f32.mrf.mxu0
      %v2307 = vpop.f32.mrf.mxu0
      %v2308 = vadd.f32 %v1647, %v2307
      %v2309 = vpop.f32.mrf.mxu0
      %2310 = vmatprep.mubr.bf16.mxu0 0
      %2311 = vmatmul.mubr.bf16.gmra.mxu0 %v1923
      %v2312 = vpop.f32.mrf.mxu0
      %v2313 = vadd.f32 %v1652, %v2312
      %v2314 = vpop.f32.mrf.mxu0
      %v2315 = vpop.f32.mrf.mxu0
      %v2316 = vadd.f32 %v1655, %v2315
      %v2317 = vpop.f32.mrf.mxu0
      %2318 = vmatprep.mubr.bf16.mxu0 0
      %2319 = vmatmul.mubr.bf16.gmra.mxu0 %v1925
      %v2320 = vpop.f32.mrf.mxu0
      %v2321 = vadd.f32 %v1660, %v2320
      %v2322 = vpop.f32.mrf.mxu0
      %v2323 = vpop.f32.mrf.mxu0
      %v2324 = vadd.f32 %v1663, %v2323
      %v2325 = vpop.f32.mrf.mxu0
      %2326 = vmatprep.mubr.bf16.mxu0 0
      %2327 = vmatmul.mubr.bf16.gmra.mxu0 %v1927
      %v2328 = vpop.f32.mrf.mxu0
      %v2329 = vadd.f32 %v1668, %v2328
      %v2330 = vpop.f32.mrf.mxu0
      %v2331 = vpop.f32.mrf.mxu0
      %v2332 = vadd.f32 %v1671, %v2331
      %v2333 = vpop.f32.mrf.mxu0
      %2334 = vmatprep.mubr.bf16.mxu0 0
      %2335 = vmatmul.mubr.bf16.gmra.mxu0 %v1929
      %v2336 = vpop.f32.mrf.mxu0
      %v2337 = vadd.f32 %v1676, %v2336
      %v2338 = vpop.f32.mrf.mxu0
      %v2339 = vpop.f32.mrf.mxu0
      %v2340 = vadd.f32 %v1679, %v2339
      %v2341 = vpop.f32.mrf.mxu0
      %2342 = vmatprep.mubr.bf16.mxu0 0
      %2343 = vmatmul.mubr.bf16.gmra.mxu0 %v1931
      %v2344 = vpop.f32.mrf.mxu0
      %v2345 = vadd.f32 %v1684, %v2344
      %v2346 = vpop.f32.mrf.mxu0
      %v2347 = vpop.f32.mrf.mxu0
      %v2348 = vadd.f32 %v1687, %v2347
      %v2349 = vpop.f32.mrf.mxu0
      %2350 = vmatprep.mubr.bf16.mxu0 0
      %2351 = vmatmul.mubr.bf16.gmra.mxu0 %v1933
      %v2352 = vpop.f32.mrf.mxu0
      %v2353 = vadd.f32 %v1692, %v2352
      %v2354 = vpop.f32.mrf.mxu0
      %v2355 = vpop.f32.mrf.mxu0
      %v2356 = vadd.f32 %v1695, %v2355
      %v2357 = vpop.f32.mrf.mxu0
      %2358 = vmatprep.mubr.bf16.mxu0 0
      %2359 = vmatmul.mubr.bf16.gmra.mxu0 %v1935
      %v2360 = vpop.f32.mrf.mxu0
      %v2361 = vadd.f32 %v1700, %v2360
      %v2362 = vpop.f32.mrf.mxu0
      %v2363 = vpop.f32.mrf.mxu0
      %v2364 = vadd.f32 %v1703, %v2363
      %v2365 = vpop.f32.mrf.mxu0
      %2366 = vmatprep.mubr.bf16.mxu0 0
      %2367 = vmatmul.mubr.bf16.gmra.mxu0 %v1937
      %v2368 = vpop.f32.mrf.mxu0
      %v2369 = vadd.f32 %v1708, %v2368
      %v2370 = vpop.f32.mrf.mxu0
      %v2371 = vpop.f32.mrf.mxu0
      %v2372 = vadd.f32 %v1711, %v2371
      %v2373 = vpop.f32.mrf.mxu0
      %2374 = vmatprep.mubr.bf16.mxu0 0
      %2375 = vmatmul.mubr.bf16.gmra.mxu0 %v1939
      %v2376 = vpop.f32.mrf.mxu0
      %v2377 = vadd.f32 %v1716, %v2376
      %v2378 = vpop.f32.mrf.mxu0
      %v2379 = vpop.f32.mrf.mxu0
      %v2380 = vadd.f32 %v1719, %v2379
      %v2381 = vpop.f32.mrf.mxu0
      %2382 = vmatprep.mubr.bf16.mxu0 0
      %2383 = vmatmul.mubr.bf16.gmra.mxu0 %v1941
      %v2384 = vpop.f32.mrf.mxu0
      %v2385 = vadd.f32 %v1724, %v2384
      %v2386 = vpop.f32.mrf.mxu0
      %v2387 = vpop.f32.mrf.mxu0
      %v2388 = vadd.f32 %v1727, %v2387
      %v2389 = vpop.f32.mrf.mxu0
      %2390 = vmatprep.mubr.bf16.mxu0 0
      %2391 = vmatmul.mubr.bf16.gmra.mxu0 %v1943
      %v2392 = vpop.f32.mrf.mxu0
      %v2393 = vadd.f32 %v1732, %v2392
      %v2394 = vpop.f32.mrf.mxu0
      %v2395 = vpop.f32.mrf.mxu0
      %v2396 = vadd.f32 %v1735, %v2395
      %v2397 = vpop.f32.mrf.mxu0
      %2398 = vmatprep.mubr.bf16.mxu0 0
      %2399 = vmatmul.mubr.bf16.gmra.mxu0 %v1945
      %v2400 = vpop.f32.mrf.mxu0
      %v2401 = vadd.f32 %v1740, %v2400
      %v2402 = vpop.f32.mrf.mxu0
      %v2403 = vpop.f32.mrf.mxu0
      %v2404 = vadd.f32 %v1743, %v2403
      %v2405 = vpop.f32.mrf.mxu0
      %2406 = vmatprep.mubr.bf16.mxu0 0
      %2407 = vmatmul.mubr.bf16.gmra.mxu0 %v1947
      %v2408 = vpop.f32.mrf.mxu0
      %v2409 = vadd.f32 %v1748, %v2408
      %v2410 = vpop.f32.mrf.mxu0
      %v2411 = vpop.f32.mrf.mxu0
      %v2412 = vadd.f32 %v1751, %v2411
      %v2413 = vpop.f32.mrf.mxu0
      %2414 = vmatprep.mubr.bf16.mxu0 0
      %2415 = vmatmul.mubr.bf16.gmra.mxu0 %v1949
      %v2416 = vpop.f32.mrf.mxu0
      %v2417 = vadd.f32 %v1756, %v2416
      %v2418 = vpop.f32.mrf.mxu0
      %v2419 = vpop.f32.mrf.mxu0
      %v2420 = vadd.f32 %v1759, %v2419
      %v2421 = vpop.f32.mrf.mxu0
      %2422 = vmatprep.mubr.bf16.mxu0 0
      %2423 = vmatmul.mubr.bf16.gmra.mxu0 %v1951
      %v2424 = vpop.f32.mrf.mxu0
      %v2425 = vadd.f32 %v1764, %v2424
      %v2426 = vpop.f32.mrf.mxu0
      %v2427 = vpop.f32.mrf.mxu0
      %v2428 = vadd.f32 %v1767, %v2427
      %v2429 = vpop.f32.mrf.mxu0
      %2430 = vmatprep.mubr.bf16.mxu0 0
      %2431 = vmatmul.mubr.bf16.gmra.mxu0 %v1953
      %v2432 = vpop.f32.mrf.mxu0
      %v2433 = vadd.f32 %v1772, %v2432
      %v2434 = vpop.f32.mrf.mxu0
      %v2435 = vpop.f32.mrf.mxu0
      %v2436 = vadd.f32 %v1775, %v2435
      %v2437 = vpop.f32.mrf.mxu0
      %2438 = vmatprep.mubr.bf16.mxu0 0
      %2439 = vmatmul.mubr.bf16.gmra.mxu0 %v1955
      %v2440 = vpop.f32.mrf.mxu0
      %v2441 = vadd.f32 %v1780, %v2440
      %v2442 = vpop.f32.mrf.mxu0
      %v2443 = vpop.f32.mrf.mxu0
      %v2444 = vadd.f32 %v1783, %v2443
      %v2445 = vpop.f32.mrf.mxu0
      %2446 = vmatprep.mubr.bf16.mxu0 0
      %2447 = vmatmul.mubr.bf16.gmra.mxu0 %v1957
      %v2448 = vpop.f32.mrf.mxu0
      %v2449 = vadd.f32 %v1788, %v2448
      %v2450 = vpop.f32.mrf.mxu0
      %v2451 = vpop.f32.mrf.mxu0
      %v2452 = vadd.f32 %v1791, %v2451
      %v2453 = vpop.f32.mrf.mxu0
      %2454 = vmatprep.mubr.bf16.mxu0 0
      %2455 = vmatmul.mubr.bf16.gmra.mxu0 %v1959
      %v2456 = vpop.f32.mrf.mxu0
      %v2457 = vadd.f32 %v1796, %v2456
      %v2458 = vpop.f32.mrf.mxu0
      %v2459 = vpop.f32.mrf.mxu0
      %v2460 = vadd.f32 %v1799, %v2459
      %v2461 = vpop.f32.mrf.mxu0
      %2462 = vmatprep.mubr.bf16.mxu0 0
      %2463 = vmatmul.mubr.bf16.gmra.mxu0 %v1961
      %v2464 = vpop.f32.mrf.mxu0
      %v2465 = vadd.f32 %v1804, %v2464
      %v2466 = vpop.f32.mrf.mxu0
      %v2467 = vpop.f32.mrf.mxu0
      %v2468 = vadd.f32 %v1807, %v2467
      %v2469 = vpop.f32.mrf.mxu0
      %2470 = vmatprep.mubr.bf16.mxu0 0
      %2471 = vmatmul.mubr.bf16.gmra.mxu0 %v1963
      %v2472 = vpop.f32.mrf.mxu0
      %v2473 = vadd.f32 %v1812, %v2472
      %v2474 = vpop.f32.mrf.mxu0
      %v2475 = vpop.f32.mrf.mxu0
      %v2476 = vadd.f32 %v1815, %v2475
      %v2477 = vpop.f32.mrf.mxu0
      %2478 = vmatprep.mubr.bf16.mxu0 0
      %2479 = vmatmul.mubr.bf16.gmra.mxu0 %v1965
      %v2480 = vpop.f32.mrf.mxu0
      %v2481 = vadd.f32 %v1820, %v2480
      %v2482 = vpop.f32.mrf.mxu0
      %v2483 = vpop.f32.mrf.mxu0
      %v2484 = vadd.f32 %v1823, %v2483
      %v2485 = vpop.f32.mrf.mxu0
      %2486 = vmatprep.mubr.bf16.mxu0 0
      %2487 = vmatmul.mubr.bf16.gmra.mxu0 %v1967
      %v2488 = vpop.f32.mrf.mxu0
      %v2489 = vadd.f32 %v1828, %v2488
      %v2490 = vpop.f32.mrf.mxu0
      %v2491 = vpop.f32.mrf.mxu0
      %v2492 = vadd.f32 %v1831, %v2491
      %v2493 = vpop.f32.mrf.mxu0
      %2494 = vmatprep.mubr.bf16.mxu0 0
      %2495 = vmatmul.mubr.bf16.gmra.mxu0 %v1969
      %v2496 = vpop.f32.mrf.mxu0
      %v2497 = vadd.f32 %v1836, %v2496
      %v2498 = vpop.f32.mrf.mxu0
      %v2499 = vpop.f32.mrf.mxu0
      %v2500 = vadd.f32 %v1839, %v2499
      %v2501 = vpop.f32.mrf.mxu0
      %2502 = vdwg.mxu0
      %v2503 = vld [vmem:[%s165 + $0x10] sm:$0xf]
      %v2504 = vld [vmem:[%s165 + $0x14] sm:$0xf]
      %v2505 = vld [vmem:[%s165 + $0x18] sm:$0xf]
      %v2506 = vld [vmem:[%s165 + $0x1c] sm:$0xf]
      %v2507 = vld [vmem:[%s165 + $0x20] sm:$0xf]
      %v2508 = vld [vmem:[%s165 + $0x24] sm:$0xf]
      %v2509 = vld [vmem:[%s165 + $0x28] sm:$0xf]
      %v2510 = vld [vmem:[%s165 + $0x2c] sm:$0xf]
      %v2511 = vld [vmem:[%s165 + $0x30] sm:$0xf]
      %v2512 = vld [vmem:[%s165 + $0x34] sm:$0xf]
      %v2513 = vld [vmem:[%s165 + $0x38] sm:$0xf]
      %v2514 = vld [vmem:[%s165 + $0x3c] sm:$0xf]
      %v2515 = vld [vmem:[%s165 + $0x40] sm:$0xf]
      %v2516 = vld [vmem:[%s165 + $0x44] sm:$0xf]
      %v2517 = vld [vmem:[%s165 + $0x48] sm:$0xf]
      %v2518 = vld [vmem:[%s165 + $0x4c] sm:$0xf]
      %v2519 = vld [vmem:[%s165 + $0x50] sm:$0xf]
      %v2520 = vld [vmem:[%s165 + $0x54] sm:$0xf]
      %v2521 = vld [vmem:[%s165 + $0x58] sm:$0xf]
      %v2522 = vld [vmem:[%s165 + $0x5c] sm:$0xf]
      %v2523 = vld [vmem:[%s165 + $0x60] sm:$0xf]
      %v2524 = vld [vmem:[%s165 + $0x64] sm:$0xf]
      %v2525 = vld [vmem:[%s165 + $0x68] sm:$0xf]
      %v2526 = vld [vmem:[%s165 + $0x6c] sm:$0xf]
      %v2527 = vld [vmem:[%s165 + $0x70] sm:$0xf]
      %v2528 = vld [vmem:[%s165 + $0x74] sm:$0xf]
      %v2529 = vld [vmem:[%s165 + $0x78] sm:$0xf]
      %v2530 = vld [vmem:[%s165 + $0x7c] sm:$0xf]
      %v2531 = vld [vmem:[%s165 + $0x80] sm:$0xf]
      %v2532 = vld [vmem:[%s165 + $0x84] sm:$0xf]
      %v2533 = vld [vmem:[%s165 + $0x88] sm:$0xf]
      %v2534 = vld [vmem:[%s165 + $0x8c] sm:$0xf]
      %v2535 = vld [vmem:[%s165 + $0x90] sm:$0xf]
      %v2536 = vld [vmem:[%s165 + $0x94] sm:$0xf]
      %v2537 = vld [vmem:[%s165 + $0x98] sm:$0xf]
      %v2538 = vld [vmem:[%s165 + $0x9c] sm:$0xf]
      %v2539 = vld [vmem:[%s165 + $0xa0] sm:$0xf]
      %v2540 = vld [vmem:[%s165 + $0xa4] sm:$0xf]
      %v2541 = vld [vmem:[%s165 + $0xa8] sm:$0xf]
      %v2542 = vld [vmem:[%s165 + $0xac] sm:$0xf]
      %v2543 = vld [vmem:[%s165 + $0xb0] sm:$0xf]
      %v2544 = vld [vmem:[%s165 + $0xb4] sm:$0xf]
      %v2545 = vld [vmem:[%s165 + $0xb8] sm:$0xf]
      %v2546 = vld [vmem:[%s165 + $0xbc] sm:$0xf]
      %v2547 = vld [vmem:[%s165 + $0xc0] sm:$0xf]
      %v2548 = vld [vmem:[%s165 + $0xc4] sm:$0xf]
      %v2549 = vld [vmem:[%s165 + $0xc8] sm:$0xf]
      %v2550 = vld [vmem:[%s165 + $0xcc] sm:$0xf]
      %v2551 = vld [vmem:[%s165 + $0xd0] sm:$0xf]
      %v2552 = vld [vmem:[%s165 + $0xd4] sm:$0xf]
      %v2553 = vld [vmem:[%s165 + $0xd8] sm:$0xf]
      %v2554 = vld [vmem:[%s165 + $0xdc] sm:$0xf]
      %v2555 = vld [vmem:[%s165 + $0xe0] sm:$0xf]
      %v2556 = vld [vmem:[%s165 + $0xe4] sm:$0xf]
      %v2557 = vld [vmem:[%s165 + $0xe8] sm:$0xf]
      %v2558 = vld [vmem:[%s165 + $0xec] sm:$0xf]
      %v2559 = vld [vmem:[%s165 + $0xf0] sm:$0xf]
      %v2560 = vld [vmem:[%s165 + $0xf4] sm:$0xf]
      %v2561 = vld [vmem:[%s165 + $0xf8] sm:$0xf]
      %v2562 = vld [vmem:[%s165 + $0xfc] sm:$0xf]
      %v2563 = vld [vmem:[%s165 + $0x100] sm:$0xf]
      %v2564 = vld [vmem:[%s165 + $0x104] sm:$0xf]
      %v2565 = vld [vmem:[%s165 + $0x108] sm:$0xf]
      %v2566 = vld [vmem:[%s165 + $0x10c] sm:$0xf]
      %v2567 = vld [vmem:[%s165 + $0x110] sm:$0xf]
      %v2568 = vld [vmem:[%s165 + $0x114] sm:$0xf]
      %v2569 = vld [vmem:[%s165 + $0x118] sm:$0xf]
      %v2570 = vld [vmem:[%s165 + $0x11c] sm:$0xf]
      %v2571 = vld [vmem:[%s165 + $0x120] sm:$0xf]
      %v2572 = vld [vmem:[%s165 + $0x124] sm:$0xf]
      %v2573 = vld [vmem:[%s165 + $0x128] sm:$0xf]
      %v2574 = vld [vmem:[%s165 + $0x12c] sm:$0xf]
      %v2575 = vld [vmem:[%s165 + $0x130] sm:$0xf]
      %v2576 = vld [vmem:[%s165 + $0x134] sm:$0xf]
      %v2577 = vld [vmem:[%s165 + $0x138] sm:$0xf]
      %v2578 = vld [vmem:[%s165 + $0x13c] sm:$0xf]
      %v2579 = vld [vmem:[%s165 + $0x140] sm:$0xf]
      %v2580 = vld [vmem:[%s165 + $0x144] sm:$0xf]
      %v2581 = vld [vmem:[%s165 + $0x148] sm:$0xf]
      %v2582 = vld [vmem:[%s165 + $0x14c] sm:$0xf]
      %v2583 = vld [vmem:[%s165 + $0x150] sm:$0xf]
      %v2584 = vld [vmem:[%s165 + $0x154] sm:$0xf]
      %v2585 = vld [vmem:[%s165 + $0x158] sm:$0xf]
      %v2586 = vld [vmem:[%s165 + $0x15c] sm:$0xf]
      %v2587 = vld [vmem:[%s165 + $0x160] sm:$0xf]
      %v2588 = vld [vmem:[%s165 + $0x164] sm:$0xf]
      %v2589 = vld [vmem:[%s165 + $0x168] sm:$0xf]
      %v2590 = vld [vmem:[%s165 + $0x16c] sm:$0xf]
      %v2591 = vld [vmem:[%s165 + $0x170] sm:$0xf]
      %v2592 = vld [vmem:[%s165 + $0x174] sm:$0xf]
      %v2593 = vld [vmem:[%s165 + $0x178] sm:$0xf]
      %v2594 = vld [vmem:[%s165 + $0x17c] sm:$0xf]
      %v2595 = vld [vmem:[%s165 + $0x180] sm:$0xf]
      %v2596 = vld [vmem:[%s165 + $0x184] sm:$0xf]
      %v2597 = vld [vmem:[%s165 + $0x188] sm:$0xf]
      %v2598 = vld [vmem:[%s165 + $0x18c] sm:$0xf]
      %v2599 = vld [vmem:[%s165 + $0x190] sm:$0xf]
      %v2600 = vld [vmem:[%s165 + $0x194] sm:$0xf]
      %v2601 = vld [vmem:[%s165 + $0x198] sm:$0xf]
      %v2602 = vld [vmem:[%s165 + $0x19c] sm:$0xf]
      %v2603 = vld [vmem:[%s165 + $0x1a0] sm:$0xf]
      %v2604 = vld [vmem:[%s165 + $0x1a4] sm:$0xf]
      %v2605 = vld [vmem:[%s165 + $0x1a8] sm:$0xf]
      %v2606 = vld [vmem:[%s165 + $0x1ac] sm:$0xf]
      %v2607 = vld [vmem:[%s165 + $0x1b0] sm:$0xf]
      %v2608 = vld [vmem:[%s165 + $0x1b4] sm:$0xf]
      %v2609 = vld [vmem:[%s165 + $0x1b8] sm:$0xf]
      %v2610 = vld [vmem:[%s165 + $0x1bc] sm:$0xf]
      %v2611 = vld [vmem:[%s165 + $0x1c0] sm:$0xf]
      %v2612 = vld [vmem:[%s165 + $0x1c4] sm:$0xf]
      %v2613 = vld [vmem:[%s165 + $0x1c8] sm:$0xf]
      %v2614 = vld [vmem:[%s165 + $0x1cc] sm:$0xf]
      %v2615 = vld [vmem:[%s165 + $0x1d0] sm:$0xf]
      %v2616 = vld [vmem:[%s165 + $0x1d4] sm:$0xf]
      %v2617 = vld [vmem:[%s165 + $0x1d8] sm:$0xf]
      %v2618 = vld [vmem:[%s165 + $0x1dc] sm:$0xf]
      %v2619 = vld [vmem:[%s165 + $0x1e0] sm:$0xf]
      %v2620 = vld [vmem:[%s165 + $0x1e4] sm:$0xf]
      %v2621 = vld [vmem:[%s165 + $0x1e8] sm:$0xf]
      %v2622 = vld [vmem:[%s165 + $0x1ec] sm:$0xf]
      %v2623 = vld [vmem:[%s165 + $0x1f0] sm:$0xf]
      %v2624 = vld [vmem:[%s165 + $0x1f4] sm:$0xf]
      %v2625 = vld [vmem:[%s165 + $0x1f8] sm:$0xf]
      %v2626 = vld [vmem:[%s165 + $0x1fc] sm:$0xf]
      %v2627 = vld [vmem:[%s1 + $0xc] sm:$0xf]
      %v2628 = vld [vmem:[%s1 + $0x10] sm:$0x3]
      %v2753 = vunpack.c.l.b16 %v2503
      %v2754 = vunpack.c.l.b16 %v2504
      %v2755 = vunpack.c.l.b16 %v2505
      %v2756 = vunpack.c.l.b16 %v2506
      %v2757 = vunpack.c.l.b16 %v2507
      %v2758 = vunpack.c.l.b16 %v2508
      %v2759 = vunpack.c.l.b16 %v2509
      %v2760 = vunpack.c.l.b16 %v2510
      %v2761 = vunpack.c.l.b16 %v2511
      %v2762 = vunpack.c.l.b16 %v2512
      %v2763 = vunpack.c.l.b16 %v2513
      %v2764 = vunpack.c.l.b16 %v2514
      %v2765 = vunpack.c.l.b16 %v2515
      %v2766 = vunpack.c.l.b16 %v2516
      %v2767 = vunpack.c.l.b16 %v2517
      %v2768 = vunpack.c.l.b16 %v2518
      %v2769 = vunpack.c.l.b16 %v2519
      %v2770 = vunpack.c.l.b16 %v2520
      %v2771 = vunpack.c.l.b16 %v2521
      %v2772 = vunpack.c.l.b16 %v2522
      %v2773 = vunpack.c.l.b16 %v2523
      %v2774 = vunpack.c.l.b16 %v2524
      %v2775 = vunpack.c.l.b16 %v2525
      %v2776 = vunpack.c.l.b16 %v2526
      %v2777 = vunpack.c.l.b16 %v2527
      %v2778 = vunpack.c.l.b16 %v2528
      %v2779 = vunpack.c.l.b16 %v2529
      %v2780 = vunpack.c.l.b16 %v2530
      %v2781 = vunpack.c.l.b16 %v2531
      %v2782 = vunpack.c.l.b16 %v2532
      %v2783 = vunpack.c.l.b16 %v2533
      %v2784 = vunpack.c.l.b16 %v2534
      %v2785 = vunpack.c.l.b16 %v2535
      %v2786 = vunpack.c.l.b16 %v2536
      %v2787 = vunpack.c.l.b16 %v2537
      %v2788 = vunpack.c.l.b16 %v2538
      %v2789 = vunpack.c.l.b16 %v2539
      %v2790 = vunpack.c.l.b16 %v2540
      %v2791 = vunpack.c.l.b16 %v2541
      %v2792 = vunpack.c.l.b16 %v2542
      %v2793 = vunpack.c.l.b16 %v2543
      %v2794 = vunpack.c.l.b16 %v2544
      %v2795 = vunpack.c.l.b16 %v2545
      %v2796 = vunpack.c.l.b16 %v2546
      %v2797 = vunpack.c.l.b16 %v2547
      %v2798 = vunpack.c.l.b16 %v2548
      %v2799 = vunpack.c.l.b16 %v2549
      %v2800 = vunpack.c.l.b16 %v2550
      %v2801 = vunpack.c.l.b16 %v2551
      %v2802 = vunpack.c.l.b16 %v2552
      %v2803 = vunpack.c.l.b16 %v2553
      %v2804 = vunpack.c.l.b16 %v2554
      %v2805 = vunpack.c.l.b16 %v2555
      %v2806 = vunpack.c.l.b16 %v2556
      %v2807 = vunpack.c.l.b16 %v2557
      %v2808 = vunpack.c.l.b16 %v2558
      %v2809 = vunpack.c.l.b16 %v2559
      %v2810 = vunpack.c.l.b16 %v2560
      %v2811 = vunpack.c.l.b16 %v2561
      %v2812 = vunpack.c.l.b16 %v2562
      %v2813 = vunpack.c.l.b16 %v2563
      %v2814 = vunpack.c.l.b16 %v2564
      %v2815 = vunpack.c.l.b16 %v2565
      %v2816 = vunpack.c.l.b16 %v2566
      %v2817 = vunpack.c.l.b16 %v2567
      %v2818 = vunpack.c.l.b16 %v2568
      %v2819 = vunpack.c.l.b16 %v2569
      %v2820 = vunpack.c.l.b16 %v2570
      %v2821 = vunpack.c.l.b16 %v2571
      %v2822 = vunpack.c.l.b16 %v2572
      %v2823 = vunpack.c.l.b16 %v2573
      %v2824 = vunpack.c.l.b16 %v2574
      %v2825 = vunpack.c.l.b16 %v2575
      %v2826 = vunpack.c.l.b16 %v2576
      %v2827 = vunpack.c.l.b16 %v2577
      %v2828 = vunpack.c.l.b16 %v2578
      %v2829 = vunpack.c.l.b16 %v2579
      %v2830 = vunpack.c.l.b16 %v2580
      %v2831 = vunpack.c.l.b16 %v2581
      %v2832 = vunpack.c.l.b16 %v2582
      %v2833 = vunpack.c.l.b16 %v2583
      %v2834 = vunpack.c.l.b16 %v2584
      %v2835 = vunpack.c.l.b16 %v2585
      %v2836 = vunpack.c.l.b16 %v2586
      %v2837 = vunpack.c.l.b16 %v2587
      %v2838 = vunpack.c.l.b16 %v2588
      %v2839 = vunpack.c.l.b16 %v2589
      %v2840 = vunpack.c.l.b16 %v2590
      %v2841 = vunpack.c.l.b16 %v2591
      %v2842 = vunpack.c.l.b16 %v2592
      %v2843 = vunpack.c.l.b16 %v2593
      %v2844 = vunpack.c.l.b16 %v2594
      %v2845 = vunpack.c.l.b16 %v2595
      %v2846 = vunpack.c.l.b16 %v2596
      %v2847 = vunpack.c.l.b16 %v2597
      %v2848 = vunpack.c.l.b16 %v2598
      %v2849 = vunpack.c.l.b16 %v2599
      %v2850 = vunpack.c.l.b16 %v2600
      %v2851 = vunpack.c.l.b16 %v2601
      %v2852 = vunpack.c.l.b16 %v2602
      %v2853 = vunpack.c.l.b16 %v2603
      %v2854 = vunpack.c.l.b16 %v2604
      %v2855 = vunpack.c.l.b16 %v2605
      %v2856 = vunpack.c.l.b16 %v2606
      %v2857 = vunpack.c.l.b16 %v2607
      %v2858 = vunpack.c.l.b16 %v2608
      %v2859 = vunpack.c.l.b16 %v2609
      %v2860 = vunpack.c.l.b16 %v2610
      %v2861 = vunpack.c.l.b16 %v2611
      %v2862 = vunpack.c.l.b16 %v2612
      %v2863 = vunpack.c.l.b16 %v2613
      %v2864 = vunpack.c.l.b16 %v2614
      %v2865 = vunpack.c.l.b16 %v2615
      %v2866 = vunpack.c.l.b16 %v2616
      %v2867 = vunpack.c.l.b16 %v2617
      %v2868 = vunpack.c.l.b16 %v2618
      %v2869 = vunpack.c.l.b16 %v2619
      %v2870 = vunpack.c.l.b16 %v2620
      %v2871 = vunpack.c.l.b16 %v2621
      %v2872 = vunpack.c.l.b16 %v2622
      %v2873 = vunpack.c.l.b16 %v2623
      %v2874 = vunpack.c.l.b16 %v2624
      %v2875 = vunpack.c.l.b16 %v2625
      %v2876 = vunpack.c.l.b16 %v2626
      %v2877 = vpack.c.b16 %v2754, %v2753
      %v2878 = vpack.c.b16 %v2756, %v2755
      %v2879 = vpack.c.b16 %v2758, %v2757
      %v2880 = vpack.c.b16 %v2760, %v2759
      %v2881 = vpack.c.b16 %v2762, %v2761
      %v2882 = vpack.c.b16 %v2764, %v2763
      %v2883 = vpack.c.b16 %v2766, %v2765
      %v2884 = vpack.c.b16 %v2768, %v2767
      %v2885 = vpack.c.b16 %v2770, %v2769
      %v2886 = vpack.c.b16 %v2772, %v2771
      %v2887 = vpack.c.b16 %v2774, %v2773
      %v2888 = vpack.c.b16 %v2776, %v2775
      %v2889 = vpack.c.b16 %v2778, %v2777
      %v2890 = vpack.c.b16 %v2780, %v2779
      %v2891 = vpack.c.b16 %v2782, %v2781
      %v2892 = vpack.c.b16 %v2784, %v2783
      %v2893 = vpack.c.b16 %v2786, %v2785
      %v2894 = vpack.c.b16 %v2788, %v2787
      %v2895 = vpack.c.b16 %v2790, %v2789
      %v2896 = vpack.c.b16 %v2792, %v2791
      %v2897 = vpack.c.b16 %v2794, %v2793
      %v2898 = vpack.c.b16 %v2796, %v2795
      %v2899 = vpack.c.b16 %v2798, %v2797
      %v2900 = vpack.c.b16 %v2800, %v2799
      %v2901 = vpack.c.b16 %v2802, %v2801
      %v2902 = vpack.c.b16 %v2804, %v2803
      %v2903 = vpack.c.b16 %v2806, %v2805
      %v2904 = vpack.c.b16 %v2808, %v2807
      %v2905 = vpack.c.b16 %v2810, %v2809
      %v2906 = vpack.c.b16 %v2812, %v2811
      %v2907 = vpack.c.b16 %v2814, %v2813
      %v2908 = vpack.c.b16 %v2816, %v2815
      %v2909 = vpack.c.b16 %v2818, %v2817
      %v2910 = vpack.c.b16 %v2820, %v2819
      %v2911 = vpack.c.b16 %v2822, %v2821
      %v2912 = vpack.c.b16 %v2824, %v2823
      %v2913 = vpack.c.b16 %v2826, %v2825
      %v2914 = vpack.c.b16 %v2828, %v2827
      %v2915 = vpack.c.b16 %v2830, %v2829
      %v2916 = vpack.c.b16 %v2832, %v2831
      %v2917 = vpack.c.b16 %v2834, %v2833
      %v2918 = vpack.c.b16 %v2836, %v2835
      %v2919 = vpack.c.b16 %v2838, %v2837
      %v2920 = vpack.c.b16 %v2840, %v2839
      %v2921 = vpack.c.b16 %v2842, %v2841
      %v2922 = vpack.c.b16 %v2844, %v2843
      %v2923 = vpack.c.b16 %v2846, %v2845
      %v2924 = vpack.c.b16 %v2848, %v2847
      %v2925 = vpack.c.b16 %v2850, %v2849
      %v2926 = vpack.c.b16 %v2852, %v2851
      %v2927 = vpack.c.b16 %v2854, %v2853
      %v2928 = vpack.c.b16 %v2856, %v2855
      %v2929 = vpack.c.b16 %v2858, %v2857
      %v2930 = vpack.c.b16 %v2860, %v2859
      %v2931 = vpack.c.b16 %v2862, %v2861
      %v2932 = vpack.c.b16 %v2864, %v2863
      %v2933 = vpack.c.b16 %v2866, %v2865
      %v2934 = vpack.c.b16 %v2868, %v2867
      %v2935 = vpack.c.b16 %v2870, %v2869
      %v2936 = vpack.c.b16 %v2872, %v2871
      %v2937 = vpack.c.b16 %v2874, %v2873
      %v2938 = vpack.c.b16 %v2876, %v2875
      %v2941 = vunpack.c.l.b16 %v2627
      %v2942 = vunpack.c.l.b16 %v2628
      %v2943 = vpack.c.b16 %v2942, %v2941
      %v2945 = vsel %vm1122, %v2877, 0
      %v2948 = vsel %vm1122, %v2878, 0
      %v2951 = vsel %vm1122, %v2879, 0
      %v2954 = vsel %vm1122, %v2880, 0
      %v2957 = vsel %vm1122, %v2881, 0
      %v2960 = vsel %vm1122, %v2882, 0
      %v2963 = vsel %vm1122, %v2883, 0
      %v2966 = vsel %vm1122, %v2884, 0
      %v2969 = vsel %vm1122, %v2885, 0
      %v2972 = vsel %vm1122, %v2886, 0
      %v2975 = vsel %vm1122, %v2887, 0
      %v2978 = vsel %vm1122, %v2888, 0
      %v2981 = vsel %vm1122, %v2889, 0
      %v2984 = vsel %vm1122, %v2890, 0
      %v2987 = vsel %vm1122, %v2891, 0
      %v2990 = vsel %vm1122, %v2892, 0
      %v2993 = vsel %vm1122, %v2893, 0
      %v2996 = vsel %vm1122, %v2894, 0
      %v2999 = vsel %vm1122, %v2895, 0
      %v3002 = vsel %vm1122, %v2896, 0
      %v3005 = vsel %vm1122, %v2897, 0
      %v3008 = vsel %vm1122, %v2898, 0
      %v3011 = vsel %vm1122, %v2899, 0
      %v3014 = vsel %vm1122, %v2900, 0
      %v3017 = vsel %vm1122, %v2901, 0
      %v3020 = vsel %vm1122, %v2902, 0
      %v3023 = vsel %vm1122, %v2903, 0
      %v3026 = vsel %vm1122, %v2904, 0
      %v3029 = vsel %vm1122, %v2905, 0
      %v3032 = vsel %vm1122, %v2906, 0
      %v3035 = vsel %vm1122, %v2907, 0
      %v3038 = vsel %vm1122, %v2908, 0
      %v3041 = vsel %vm1122, %v2909, 0
      %v3044 = vsel %vm1122, %v2910, 0
      %v3047 = vsel %vm1122, %v2911, 0
      %v3050 = vsel %vm1122, %v2912, 0
      %v3053 = vsel %vm1122, %v2913, 0
      %v3056 = vsel %vm1122, %v2914, 0
      %v3059 = vsel %vm1122, %v2915, 0
      %v3062 = vsel %vm1122, %v2916, 0
      %v3065 = vsel %vm1122, %v2917, 0
      %v3068 = vsel %vm1122, %v2918, 0
      %v3071 = vsel %vm1122, %v2919, 0
      %v3074 = vsel %vm1122, %v2920, 0
      %v3077 = vsel %vm1122, %v2921, 0
      %v3080 = vsel %vm1122, %v2922, 0
      %v3083 = vsel %vm1122, %v2923, 0
      %v3086 = vsel %vm1122, %v2924, 0
      %v3089 = vsel %vm1122, %v2925, 0
      %v3092 = vsel %vm1122, %v2926, 0
      %v3095 = vsel %vm1122, %v2927, 0
      %v3098 = vsel %vm1122, %v2928, 0
      %v3101 = vsel %vm1122, %v2929, 0
      %v3104 = vsel %vm1122, %v2930, 0
      %v3107 = vsel %vm1122, %v2931, 0
      %v3110 = vsel %vm1122, %v2932, 0
      %v3113 = vsel %vm1122, %v2933, 0
      %v3116 = vsel %vm1122, %v2934, 0
      %v3119 = vsel %vm1122, %v2935, 0
      %v3122 = vsel %vm1122, %v2936, 0
      %v3125 = vsel %vm1122, %v2937, 0
      %v3128 = vsel %vm1122, %v2938, 0
      %v3131 = vsel %vm1309, %v2943, 0
      %3133 = vmatprep.subr.bf16.mxu0 0
      %3134 = vmatpush1.bf16.msra.mxu0 0
      %3135 = vmatprep.subr.bf16.mxu0 0
      %3136 = vmatpush1.bf16.msra.mxu0 0
      %3137 = vmatprep.subr.bf16.mxu0 0
      %3138 = vmatpush1.bf16.msra.mxu0 0
      %3139 = vmatprep.subr.bf16.mxu0 0
      %3140 = vmatpush1.bf16.msra.mxu0 0
      %3141 = vmatprep.subr.bf16.mxu0 0
      %3142 = vmatpush1.bf16.msra.mxu0 0
      %3143 = vmatprep.subr.bf16.mxu0 0
      %3144 = vmatpush1.bf16.msra.mxu0 0
      %3145 = vmatprep.subr.bf16.mxu0 0
      %3146 = vmatpush1.bf16.msra.mxu0 0
      %3147 = vmatprep.subr.bf16.mxu0 0
      %3148 = vmatpush1.bf16.msra.mxu0 %v3131
      %3149 = vmatprep.subr.bf16.mxu0 0
      %3150 = vmatpush2.bf16.msra.mxu0 0
      %3151 = vmatprep.subr.bf16.mxu0 0
      %3152 = vmatpush2.bf16.msra.mxu0 0
      %3153 = vmatprep.subr.bf16.mxu0 0
      %3154 = vmatpush2.bf16.msra.mxu0 0
      %3155 = vmatprep.subr.bf16.mxu0 0
      %3156 = vmatpush2.bf16.msra.mxu0 0
      %3157 = vmatprep.subr.bf16.mxu0 0
      %3158 = vmatpush2.bf16.msra.mxu0 0
      %3159 = vmatprep.subr.bf16.mxu0 0
      %3160 = vmatpush2.bf16.msra.mxu0 0
      %3161 = vmatprep.subr.bf16.mxu0 0
      %3162 = vmatpush2.bf16.msra.mxu0 0
      %3163 = vmatprep.subr.bf16.mxu0 0
      %3164 = vmatpush2.bf16.msra.mxu0 0
      %3165 = vmatprep.mubr.bf16.mxu0 0
      %3166 = vmatmul.mubr.bf16.gmra.mxu0 %v2945
      %v3167 = vpop.f32.mrf.mxu0
      %v3168 = vadd.f32 0.0, %v3167
      %v3169 = vpop.f32.mrf.mxu0
      %v3170 = vpop.f32.mrf.mxu0
      %v3171 = vadd.f32 0.0, %v3170
      %v3172 = vpop.f32.mrf.mxu0
      %3173 = vmatprep.mubr.bf16.mxu0 0
      %3174 = vmatmul.mubr.bf16.gmra.mxu0 %v2948
      %v3175 = vpop.f32.mrf.mxu0
      %v3176 = vadd.f32 0.0, %v3175
      %v3177 = vpop.f32.mrf.mxu0
      %v3178 = vpop.f32.mrf.mxu0
      %v3179 = vadd.f32 0.0, %v3178
      %v3180 = vpop.f32.mrf.mxu0
      %3181 = vmatprep.mubr.bf16.mxu0 0
      %3182 = vmatmul.mubr.bf16.gmra.mxu0 %v2951
      %v3183 = vpop.f32.mrf.mxu0
      %v3184 = vadd.f32 0.0, %v3183
      %v3185 = vpop.f32.mrf.mxu0
      %v3186 = vpop.f32.mrf.mxu0
      %v3187 = vadd.f32 0.0, %v3186
      %v3188 = vpop.f32.mrf.mxu0
      %3189 = vmatprep.mubr.bf16.mxu0 0
      %3190 = vmatmul.mubr.bf16.gmra.mxu0 %v2954
      %v3191 = vpop.f32.mrf.mxu0
      %v3192 = vadd.f32 0.0, %v3191
      %v3193 = vpop.f32.mrf.mxu0
      %v3194 = vpop.f32.mrf.mxu0
      %v3195 = vadd.f32 0.0, %v3194
      %v3196 = vpop.f32.mrf.mxu0
      %3197 = vmatprep.mubr.bf16.mxu0 0
      %3198 = vmatmul.mubr.bf16.gmra.mxu0 %v2957
      %v3199 = vpop.f32.mrf.mxu0
      %v3200 = vadd.f32 0.0, %v3199
      %v3201 = vpop.f32.mrf.mxu0
      %v3202 = vpop.f32.mrf.mxu0
      %v3203 = vadd.f32 0.0, %v3202
      %v3204 = vpop.f32.mrf.mxu0
      %3205 = vmatprep.mubr.bf16.mxu0 0
      %3206 = vmatmul.mubr.bf16.gmra.mxu0 %v2960
      %v3207 = vpop.f32.mrf.mxu0
      %v3208 = vadd.f32 0.0, %v3207
      %v3209 = vpop.f32.mrf.mxu0
      %v3210 = vpop.f32.mrf.mxu0
      %v3211 = vadd.f32 0.0, %v3210
      %v3212 = vpop.f32.mrf.mxu0
      %3213 = vmatprep.mubr.bf16.mxu0 0
      %3214 = vmatmul.mubr.bf16.gmra.mxu0 %v2963
      %v3215 = vpop.f32.mrf.mxu0
      %v3216 = vadd.f32 0.0, %v3215
      %v3217 = vpop.f32.mrf.mxu0
      %v3218 = vpop.f32.mrf.mxu0
      %v3219 = vadd.f32 0.0, %v3218
      %v3220 = vpop.f32.mrf.mxu0
      %3221 = vmatprep.mubr.bf16.mxu0 0
      %3222 = vmatmul.mubr.bf16.gmra.mxu0 %v2966
      %v3223 = vpop.f32.mrf.mxu0
      %v3224 = vadd.f32 0.0, %v3223
      %v3225 = vpop.f32.mrf.mxu0
      %v3226 = vpop.f32.mrf.mxu0
      %v3227 = vadd.f32 0.0, %v3226
      %v3228 = vpop.f32.mrf.mxu0
      %3229 = vmatprep.mubr.bf16.mxu0 0
      %3230 = vmatmul.mubr.bf16.gmra.mxu0 %v2969
      %v3231 = vpop.f32.mrf.mxu0
      %v3232 = vadd.f32 0.0, %v3231
      %v3233 = vpop.f32.mrf.mxu0
      %v3234 = vpop.f32.mrf.mxu0
      %v3235 = vadd.f32 0.0, %v3234
      %v3236 = vpop.f32.mrf.mxu0
      %3237 = vmatprep.mubr.bf16.mxu0 0
      %3238 = vmatmul.mubr.bf16.gmra.mxu0 %v2972
      %v3239 = vpop.f32.mrf.mxu0
      %v3240 = vadd.f32 0.0, %v3239
      %v3241 = vpop.f32.mrf.mxu0
      %v3242 = vpop.f32.mrf.mxu0
      %v3243 = vadd.f32 0.0, %v3242
      %v3244 = vpop.f32.mrf.mxu0
      %3245 = vmatprep.mubr.bf16.mxu0 0
      %3246 = vmatmul.mubr.bf16.gmra.mxu0 %v2975
      %v3247 = vpop.f32.mrf.mxu0
      %v3248 = vadd.f32 0.0, %v3247
      %v3249 = vpop.f32.mrf.mxu0
      %v3250 = vpop.f32.mrf.mxu0
      %v3251 = vadd.f32 0.0, %v3250
      %v3252 = vpop.f32.mrf.mxu0
      %3253 = vmatprep.mubr.bf16.mxu0 0
      %3254 = vmatmul.mubr.bf16.gmra.mxu0 %v2978
      %v3255 = vpop.f32.mrf.mxu0
      %v3256 = vadd.f32 0.0, %v3255
      %v3257 = vpop.f32.mrf.mxu0
      %v3258 = vpop.f32.mrf.mxu0
      %v3259 = vadd.f32 0.0, %v3258
      %v3260 = vpop.f32.mrf.mxu0
      %3261 = vmatprep.mubr.bf16.mxu0 0
      %3262 = vmatmul.mubr.bf16.gmra.mxu0 %v2981
      %v3263 = vpop.f32.mrf.mxu0
      %v3264 = vadd.f32 0.0, %v3263
      %v3265 = vpop.f32.mrf.mxu0
      %v3266 = vpop.f32.mrf.mxu0
      %v3267 = vadd.f32 0.0, %v3266
      %v3268 = vpop.f32.mrf.mxu0
      %3269 = vmatprep.mubr.bf16.mxu0 0
      %3270 = vmatmul.mubr.bf16.gmra.mxu0 %v2984
      %v3271 = vpop.f32.mrf.mxu0
      %v3272 = vadd.f32 0.0, %v3271
      %v3273 = vpop.f32.mrf.mxu0
      %v3274 = vpop.f32.mrf.mxu0
      %v3275 = vadd.f32 0.0, %v3274
      %v3276 = vpop.f32.mrf.mxu0
      %3277 = vmatprep.mubr.bf16.mxu0 0
      %3278 = vmatmul.mubr.bf16.gmra.mxu0 %v2987
      %v3279 = vpop.f32.mrf.mxu0
      %v3280 = vadd.f32 0.0, %v3279
      %v3281 = vpop.f32.mrf.mxu0
      %v3282 = vpop.f32.mrf.mxu0
      %v3283 = vadd.f32 0.0, %v3282
      %v3284 = vpop.f32.mrf.mxu0
      %3285 = vmatprep.mubr.bf16.mxu0 0
      %3286 = vmatmul.mubr.bf16.gmra.mxu0 %v2990
      %v3287 = vpop.f32.mrf.mxu0
      %v3288 = vadd.f32 0.0, %v3287
      %v3289 = vpop.f32.mrf.mxu0
      %v3290 = vpop.f32.mrf.mxu0
      %v3291 = vadd.f32 0.0, %v3290
      %v3292 = vpop.f32.mrf.mxu0
      %3293 = vmatprep.mubr.bf16.mxu0 0
      %3294 = vmatmul.mubr.bf16.gmra.mxu0 %v2993
      %v3295 = vpop.f32.mrf.mxu0
      %v3296 = vadd.f32 0.0, %v3295
      %v3297 = vpop.f32.mrf.mxu0
      %v3298 = vpop.f32.mrf.mxu0
      %v3299 = vadd.f32 0.0, %v3298
      %v3300 = vpop.f32.mrf.mxu0
      %3301 = vmatprep.mubr.bf16.mxu0 0
      %3302 = vmatmul.mubr.bf16.gmra.mxu0 %v2996
      %v3303 = vpop.f32.mrf.mxu0
      %v3304 = vadd.f32 0.0, %v3303
      %v3305 = vpop.f32.mrf.mxu0
      %v3306 = vpop.f32.mrf.mxu0
      %v3307 = vadd.f32 0.0, %v3306
      %v3308 = vpop.f32.mrf.mxu0
      %3309 = vmatprep.mubr.bf16.mxu0 0
      %3310 = vmatmul.mubr.bf16.gmra.mxu0 %v2999
      %v3311 = vpop.f32.mrf.mxu0
      %v3312 = vadd.f32 0.0, %v3311
      %v3313 = vpop.f32.mrf.mxu0
      %v3314 = vpop.f32.mrf.mxu0
      %v3315 = vadd.f32 0.0, %v3314
      %v3316 = vpop.f32.mrf.mxu0
      %3317 = vmatprep.mubr.bf16.mxu0 0
      %3318 = vmatmul.mubr.bf16.gmra.mxu0 %v3002
      %v3319 = vpop.f32.mrf.mxu0
      %v3320 = vadd.f32 0.0, %v3319
      %v3321 = vpop.f32.mrf.mxu0
      %v3322 = vpop.f32.mrf.mxu0
      %v3323 = vadd.f32 0.0, %v3322
      %v3324 = vpop.f32.mrf.mxu0
      %3325 = vmatprep.mubr.bf16.mxu0 0
      %3326 = vmatmul.mubr.bf16.gmra.mxu0 %v3005
      %v3327 = vpop.f32.mrf.mxu0
      %v3328 = vadd.f32 0.0, %v3327
      %v3329 = vpop.f32.mrf.mxu0
      %v3330 = vpop.f32.mrf.mxu0
      %v3331 = vadd.f32 0.0, %v3330
      %v3332 = vpop.f32.mrf.mxu0
      %3333 = vmatprep.mubr.bf16.mxu0 0
      %3334 = vmatmul.mubr.bf16.gmra.mxu0 %v3008
      %v3335 = vpop.f32.mrf.mxu0
      %v3336 = vadd.f32 0.0, %v3335
      %v3337 = vpop.f32.mrf.mxu0
      %v3338 = vpop.f32.mrf.mxu0
      %v3339 = vadd.f32 0.0, %v3338
      %v3340 = vpop.f32.mrf.mxu0
      %3341 = vmatprep.mubr.bf16.mxu0 0
      %3342 = vmatmul.mubr.bf16.gmra.mxu0 %v3011
      %v3343 = vpop.f32.mrf.mxu0
      %v3344 = vadd.f32 0.0, %v3343
      %v3345 = vpop.f32.mrf.mxu0
      %v3346 = vpop.f32.mrf.mxu0
      %v3347 = vadd.f32 0.0, %v3346
      %v3348 = vpop.f32.mrf.mxu0
      %3349 = vmatprep.mubr.bf16.mxu0 0
      %3350 = vmatmul.mubr.bf16.gmra.mxu0 %v3014
      %v3351 = vpop.f32.mrf.mxu0
      %v3352 = vadd.f32 0.0, %v3351
      %v3353 = vpop.f32.mrf.mxu0
      %v3354 = vpop.f32.mrf.mxu0
      %v3355 = vadd.f32 0.0, %v3354
      %v3356 = vpop.f32.mrf.mxu0
      %3357 = vmatprep.mubr.bf16.mxu0 0
      %3358 = vmatmul.mubr.bf16.gmra.mxu0 %v3017
      %v3359 = vpop.f32.mrf.mxu0
      %v3360 = vadd.f32 0.0, %v3359
      %v3361 = vpop.f32.mrf.mxu0
      %v3362 = vpop.f32.mrf.mxu0
      %v3363 = vadd.f32 0.0, %v3362
      %v3364 = vpop.f32.mrf.mxu0
      %3365 = vmatprep.mubr.bf16.mxu0 0
      %3366 = vmatmul.mubr.bf16.gmra.mxu0 %v3020
      %v3367 = vpop.f32.mrf.mxu0
      %v3368 = vadd.f32 0.0, %v3367
      %v3369 = vpop.f32.mrf.mxu0
      %v3370 = vpop.f32.mrf.mxu0
      %v3371 = vadd.f32 0.0, %v3370
      %v3372 = vpop.f32.mrf.mxu0
      %3373 = vmatprep.mubr.bf16.mxu0 0
      %3374 = vmatmul.mubr.bf16.gmra.mxu0 %v3023
      %v3375 = vpop.f32.mrf.mxu0
      %v3376 = vadd.f32 0.0, %v3375
      %v3377 = vpop.f32.mrf.mxu0
      %v3378 = vpop.f32.mrf.mxu0
      %v3379 = vadd.f32 0.0, %v3378
      %v3380 = vpop.f32.mrf.mxu0
      %3381 = vmatprep.mubr.bf16.mxu0 0
      %3382 = vmatmul.mubr.bf16.gmra.mxu0 %v3026
      %v3383 = vpop.f32.mrf.mxu0
      %v3384 = vadd.f32 0.0, %v3383
      %v3385 = vpop.f32.mrf.mxu0
      %v3386 = vpop.f32.mrf.mxu0
      %v3387 = vadd.f32 0.0, %v3386
      %v3388 = vpop.f32.mrf.mxu0
      %3389 = vmatprep.mubr.bf16.mxu0 0
      %3390 = vmatmul.mubr.bf16.gmra.mxu0 %v3029
      %v3391 = vpop.f32.mrf.mxu0
      %v3392 = vadd.f32 0.0, %v3391
      %v3393 = vpop.f32.mrf.mxu0
      %v3394 = vpop.f32.mrf.mxu0
      %v3395 = vadd.f32 0.0, %v3394
      %v3396 = vpop.f32.mrf.mxu0
      %3397 = vmatprep.mubr.bf16.mxu0 0
      %3398 = vmatmul.mubr.bf16.gmra.mxu0 %v3032
      %v3399 = vpop.f32.mrf.mxu0
      %v3400 = vadd.f32 0.0, %v3399
      %v3401 = vpop.f32.mrf.mxu0
      %v3402 = vpop.f32.mrf.mxu0
      %v3403 = vadd.f32 0.0, %v3402
      %v3404 = vpop.f32.mrf.mxu0
      %3405 = vmatprep.mubr.bf16.mxu0 0
      %3406 = vmatmul.mubr.bf16.gmra.mxu0 %v3035
      %v3407 = vpop.f32.mrf.mxu0
      %v3408 = vadd.f32 0.0, %v3407
      %v3409 = vpop.f32.mrf.mxu0
      %v3410 = vpop.f32.mrf.mxu0
      %v3411 = vadd.f32 0.0, %v3410
      %v3412 = vpop.f32.mrf.mxu0
      %3413 = vmatprep.mubr.bf16.mxu0 0
      %3414 = vmatmul.mubr.bf16.gmra.mxu0 %v3038
      %v3415 = vpop.f32.mrf.mxu0
      %v3416 = vadd.f32 0.0, %v3415
      %v3417 = vpop.f32.mrf.mxu0
      %v3418 = vpop.f32.mrf.mxu0
      %v3419 = vadd.f32 0.0, %v3418
      %v3420 = vpop.f32.mrf.mxu0
      %3421 = vmatprep.mubr.bf16.mxu0 0
      %3422 = vmatmul.mubr.bf16.gmra.mxu0 %v3041
      %v3423 = vpop.f32.mrf.mxu0
      %v3424 = vadd.f32 0.0, %v3423
      %v3425 = vpop.f32.mrf.mxu0
      %v3426 = vpop.f32.mrf.mxu0
      %v3427 = vadd.f32 0.0, %v3426
      %v3428 = vpop.f32.mrf.mxu0
      %3429 = vmatprep.mubr.bf16.mxu0 0
      %3430 = vmatmul.mubr.bf16.gmra.mxu0 %v3044
      %v3431 = vpop.f32.mrf.mxu0
      %v3432 = vadd.f32 0.0, %v3431
      %v3433 = vpop.f32.mrf.mxu0
      %v3434 = vpop.f32.mrf.mxu0
      %v3435 = vadd.f32 0.0, %v3434
      %v3436 = vpop.f32.mrf.mxu0
      %3437 = vmatprep.mubr.bf16.mxu0 0
      %3438 = vmatmul.mubr.bf16.gmra.mxu0 %v3047
      %v3439 = vpop.f32.mrf.mxu0
      %v3440 = vadd.f32 0.0, %v3439
      %v3441 = vpop.f32.mrf.mxu0
      %v3442 = vpop.f32.mrf.mxu0
      %v3443 = vadd.f32 0.0, %v3442
      %v3444 = vpop.f32.mrf.mxu0
      %3445 = vmatprep.mubr.bf16.mxu0 0
      %3446 = vmatmul.mubr.bf16.gmra.mxu0 %v3050
      %v3447 = vpop.f32.mrf.mxu0
      %v3448 = vadd.f32 0.0, %v3447
      %v3449 = vpop.f32.mrf.mxu0
      %v3450 = vpop.f32.mrf.mxu0
      %v3451 = vadd.f32 0.0, %v3450
      %v3452 = vpop.f32.mrf.mxu0
      %3453 = vmatprep.mubr.bf16.mxu0 0
      %3454 = vmatmul.mubr.bf16.gmra.mxu0 %v3053
      %v3455 = vpop.f32.mrf.mxu0
      %v3456 = vadd.f32 0.0, %v3455
      %v3457 = vpop.f32.mrf.mxu0
      %v3458 = vpop.f32.mrf.mxu0
      %v3459 = vadd.f32 0.0, %v3458
      %v3460 = vpop.f32.mrf.mxu0
      %3461 = vmatprep.mubr.bf16.mxu0 0
      %3462 = vmatmul.mubr.bf16.gmra.mxu0 %v3056
      %v3463 = vpop.f32.mrf.mxu0
      %v3464 = vadd.f32 0.0, %v3463
      %v3465 = vpop.f32.mrf.mxu0
      %v3466 = vpop.f32.mrf.mxu0
      %v3467 = vadd.f32 0.0, %v3466
      %v3468 = vpop.f32.mrf.mxu0
      %3469 = vmatprep.mubr.bf16.mxu0 0
      %3470 = vmatmul.mubr.bf16.gmra.mxu0 %v3059
      %v3471 = vpop.f32.mrf.mxu0
      %v3472 = vadd.f32 0.0, %v3471
      %v3473 = vpop.f32.mrf.mxu0
      %v3474 = vpop.f32.mrf.mxu0
      %v3475 = vadd.f32 0.0, %v3474
      %v3476 = vpop.f32.mrf.mxu0
      %3477 = vmatprep.mubr.bf16.mxu0 0
      %3478 = vmatmul.mubr.bf16.gmra.mxu0 %v3062
      %v3479 = vpop.f32.mrf.mxu0
      %v3480 = vadd.f32 0.0, %v3479
      %v3481 = vpop.f32.mrf.mxu0
      %v3482 = vpop.f32.mrf.mxu0
      %v3483 = vadd.f32 0.0, %v3482
      %v3484 = vpop.f32.mrf.mxu0
      %3485 = vmatprep.mubr.bf16.mxu0 0
      %3486 = vmatmul.mubr.bf16.gmra.mxu0 %v3065
      %v3487 = vpop.f32.mrf.mxu0
      %v3488 = vadd.f32 0.0, %v3487
      %v3489 = vpop.f32.mrf.mxu0
      %v3490 = vpop.f32.mrf.mxu0
      %v3491 = vadd.f32 0.0, %v3490
      %v3492 = vpop.f32.mrf.mxu0
      %3493 = vmatprep.mubr.bf16.mxu0 0
      %3494 = vmatmul.mubr.bf16.gmra.mxu0 %v3068
      %v3495 = vpop.f32.mrf.mxu0
      %v3496 = vadd.f32 0.0, %v3495
      %v3497 = vpop.f32.mrf.mxu0
      %v3498 = vpop.f32.mrf.mxu0
      %v3499 = vadd.f32 0.0, %v3498
      %v3500 = vpop.f32.mrf.mxu0
      %3501 = vmatprep.mubr.bf16.mxu0 0
      %3502 = vmatmul.mubr.bf16.gmra.mxu0 %v3071
      %v3503 = vpop.f32.mrf.mxu0
      %v3504 = vadd.f32 0.0, %v3503
      %v3505 = vpop.f32.mrf.mxu0
      %v3506 = vpop.f32.mrf.mxu0
      %v3507 = vadd.f32 0.0, %v3506
      %v3508 = vpop.f32.mrf.mxu0
      %3509 = vmatprep.mubr.bf16.mxu0 0
      %3510 = vmatmul.mubr.bf16.gmra.mxu0 %v3074
      %v3511 = vpop.f32.mrf.mxu0
      %v3512 = vadd.f32 0.0, %v3511
      %v3513 = vpop.f32.mrf.mxu0
      %v3514 = vpop.f32.mrf.mxu0
      %v3515 = vadd.f32 0.0, %v3514
      %v3516 = vpop.f32.mrf.mxu0
      %3517 = vmatprep.mubr.bf16.mxu0 0
      %3518 = vmatmul.mubr.bf16.gmra.mxu0 %v3077
      %v3519 = vpop.f32.mrf.mxu0
      %v3520 = vadd.f32 0.0, %v3519
      %v3521 = vpop.f32.mrf.mxu0
      %v3522 = vpop.f32.mrf.mxu0
      %v3523 = vadd.f32 0.0, %v3522
      %v3524 = vpop.f32.mrf.mxu0
      %3525 = vmatprep.mubr.bf16.mxu0 0
      %3526 = vmatmul.mubr.bf16.gmra.mxu0 %v3080
      %v3527 = vpop.f32.mrf.mxu0
      %v3528 = vadd.f32 0.0, %v3527
      %v3529 = vpop.f32.mrf.mxu0
      %v3530 = vpop.f32.mrf.mxu0
      %v3531 = vadd.f32 0.0, %v3530
      %v3532 = vpop.f32.mrf.mxu0
      %3533 = vmatprep.mubr.bf16.mxu0 0
      %3534 = vmatmul.mubr.bf16.gmra.mxu0 %v3083
      %v3535 = vpop.f32.mrf.mxu0
      %v3536 = vadd.f32 0.0, %v3535
      %v3537 = vpop.f32.mrf.mxu0
      %v3538 = vpop.f32.mrf.mxu0
      %v3539 = vadd.f32 0.0, %v3538
      %v3540 = vpop.f32.mrf.mxu0
      %3541 = vmatprep.mubr.bf16.mxu0 0
      %3542 = vmatmul.mubr.bf16.gmra.mxu0 %v3086
      %v3543 = vpop.f32.mrf.mxu0
      %v3544 = vadd.f32 0.0, %v3543
      %v3545 = vpop.f32.mrf.mxu0
      %v3546 = vpop.f32.mrf.mxu0
      %v3547 = vadd.f32 0.0, %v3546
      %v3548 = vpop.f32.mrf.mxu0
      %3549 = vmatprep.mubr.bf16.mxu0 0
      %3550 = vmatmul.mubr.bf16.gmra.mxu0 %v3089
      %v3551 = vpop.f32.mrf.mxu0
      %v3552 = vadd.f32 0.0, %v3551
      %v3553 = vpop.f32.mrf.mxu0
      %v3554 = vpop.f32.mrf.mxu0
      %v3555 = vadd.f32 0.0, %v3554
      %v3556 = vpop.f32.mrf.mxu0
      %3557 = vmatprep.mubr.bf16.mxu0 0
      %3558 = vmatmul.mubr.bf16.gmra.mxu0 %v3092
      %v3559 = vpop.f32.mrf.mxu0
      %v3560 = vadd.f32 0.0, %v3559
      %v3561 = vpop.f32.mrf.mxu0
      %v3562 = vpop.f32.mrf.mxu0
      %v3563 = vadd.f32 0.0, %v3562
      %v3564 = vpop.f32.mrf.mxu0
      %3565 = vmatprep.mubr.bf16.mxu0 0
      %3566 = vmatmul.mubr.bf16.gmra.mxu0 %v3095
      %v3567 = vpop.f32.mrf.mxu0
      %v3568 = vadd.f32 0.0, %v3567
      %v3569 = vpop.f32.mrf.mxu0
      %v3570 = vpop.f32.mrf.mxu0
      %v3571 = vadd.f32 0.0, %v3570
      %v3572 = vpop.f32.mrf.mxu0
      %3573 = vmatprep.mubr.bf16.mxu0 0
      %3574 = vmatmul.mubr.bf16.gmra.mxu0 %v3098
      %v3575 = vpop.f32.mrf.mxu0
      %v3576 = vadd.f32 0.0, %v3575
      %v3577 = vpop.f32.mrf.mxu0
      %v3578 = vpop.f32.mrf.mxu0
      %v3579 = vadd.f32 0.0, %v3578
      %v3580 = vpop.f32.mrf.mxu0
      %3581 = vmatprep.mubr.bf16.mxu0 0
      %3582 = vmatmul.mubr.bf16.gmra.mxu0 %v3101
      %v3583 = vpop.f32.mrf.mxu0
      %v3584 = vadd.f32 0.0, %v3583
      %v3585 = vpop.f32.mrf.mxu0
      %v3586 = vpop.f32.mrf.mxu0
      %v3587 = vadd.f32 0.0, %v3586
      %v3588 = vpop.f32.mrf.mxu0
      %3589 = vmatprep.mubr.bf16.mxu0 0
      %3590 = vmatmul.mubr.bf16.gmra.mxu0 %v3104
      %v3591 = vpop.f32.mrf.mxu0
      %v3592 = vadd.f32 0.0, %v3591
      %v3593 = vpop.f32.mrf.mxu0
      %v3594 = vpop.f32.mrf.mxu0
      %v3595 = vadd.f32 0.0, %v3594
      %v3596 = vpop.f32.mrf.mxu0
      %3597 = vmatprep.mubr.bf16.mxu0 0
      %3598 = vmatmul.mubr.bf16.gmra.mxu0 %v3107
      %v3599 = vpop.f32.mrf.mxu0
      %v3600 = vadd.f32 0.0, %v3599
      %v3601 = vpop.f32.mrf.mxu0
      %v3602 = vpop.f32.mrf.mxu0
      %v3603 = vadd.f32 0.0, %v3602
      %v3604 = vpop.f32.mrf.mxu0
      %3605 = vmatprep.mubr.bf16.mxu0 0
      %3606 = vmatmul.mubr.bf16.gmra.mxu0 %v3110
      %v3607 = vpop.f32.mrf.mxu0
      %v3608 = vadd.f32 0.0, %v3607
      %v3609 = vpop.f32.mrf.mxu0
      %v3610 = vpop.f32.mrf.mxu0
      %v3611 = vadd.f32 0.0, %v3610
      %v3612 = vpop.f32.mrf.mxu0
      %3613 = vmatprep.mubr.bf16.mxu0 0
      %3614 = vmatmul.mubr.bf16.gmra.mxu0 %v3113
      %v3615 = vpop.f32.mrf.mxu0
      %v3616 = vadd.f32 0.0, %v3615
      %v3617 = vpop.f32.mrf.mxu0
      %v3618 = vpop.f32.mrf.mxu0
      %v3619 = vadd.f32 0.0, %v3618
      %v3620 = vpop.f32.mrf.mxu0
      %3621 = vmatprep.mubr.bf16.mxu0 0
      %3622 = vmatmul.mubr.bf16.gmra.mxu0 %v3116
      %v3623 = vpop.f32.mrf.mxu0
      %v3624 = vadd.f32 0.0, %v3623
      %v3625 = vpop.f32.mrf.mxu0
      %v3626 = vpop.f32.mrf.mxu0
      %v3627 = vadd.f32 0.0, %v3626
      %v3628 = vpop.f32.mrf.mxu0
      %3629 = vmatprep.mubr.bf16.mxu0 0
      %3630 = vmatmul.mubr.bf16.gmra.mxu0 %v3119
      %v3631 = vpop.f32.mrf.mxu0
      %v3632 = vadd.f32 0.0, %v3631
      %v3633 = vpop.f32.mrf.mxu0
      %v3634 = vpop.f32.mrf.mxu0
      %v3635 = vadd.f32 0.0, %v3634
      %v3636 = vpop.f32.mrf.mxu0
      %3637 = vmatprep.mubr.bf16.mxu0 0
      %3638 = vmatmul.mubr.bf16.gmra.mxu0 %v3122
      %v3639 = vpop.f32.mrf.mxu0
      %v3640 = vadd.f32 0.0, %v3639
      %v3641 = vpop.f32.mrf.mxu0
      %v3642 = vpop.f32.mrf.mxu0
      %v3643 = vadd.f32 0.0, %v3642
      %v3644 = vpop.f32.mrf.mxu0
      %3645 = vmatprep.mubr.bf16.mxu0 0
      %3646 = vmatmul.mubr.bf16.gmra.mxu0 %v3125
      %v3647 = vpop.f32.mrf.mxu0
      %v3648 = vadd.f32 0.0, %v3647
      %v3649 = vpop.f32.mrf.mxu0
      %v3650 = vpop.f32.mrf.mxu0
      %v3651 = vadd.f32 0.0, %v3650
      %v3652 = vpop.f32.mrf.mxu0
      %3653 = vmatprep.mubr.bf16.mxu0 0
      %3654 = vmatmul.mubr.bf16.gmra.mxu0 %v3128
      %v3655 = vpop.f32.mrf.mxu0
      %v3656 = vadd.f32 0.0, %v3655
      %v3657 = vpop.f32.mrf.mxu0
      %v3658 = vpop.f32.mrf.mxu0
      %v3659 = vadd.f32 0.0, %v3658
      %v3660 = vpop.f32.mrf.mxu0
      %3661 = vdwg.mxu0
      %v3662 = vadd.f32 %v2009, %v3168
      %v3663 = vadd.f32 %v2012, %v3171
      %v3664 = vadd.f32 %v2017, %v3176
      %v3665 = vadd.f32 %v2020, %v3179
      %v3666 = vadd.f32 %v2025, %v3184
      %v3667 = vadd.f32 %v2028, %v3187
      %v3668 = vadd.f32 %v2033, %v3192
      %v3669 = vadd.f32 %v2036, %v3195
      %v3670 = vadd.f32 %v2041, %v3200
      %v3671 = vadd.f32 %v2044, %v3203
      %v3672 = vadd.f32 %v2049, %v3208
      %v3673 = vadd.f32 %v2052, %v3211
      %v3674 = vadd.f32 %v2057, %v3216
      %v3675 = vadd.f32 %v2060, %v3219
      %v3676 = vadd.f32 %v2065, %v3224
      %v3677 = vadd.f32 %v2068, %v3227
      %v3678 = vadd.f32 %v2073, %v3232
      %v3679 = vadd.f32 %v2076, %v3235
      %v3680 = vadd.f32 %v2081, %v3240
      %v3681 = vadd.f32 %v2084, %v3243
      %v3682 = vadd.f32 %v2089, %v3248
      %v3683 = vadd.f32 %v2092, %v3251
      %v3684 = vadd.f32 %v2097, %v3256
      %v3685 = vadd.f32 %v2100, %v3259
      %v3686 = vadd.f32 %v2105, %v3264
      %v3687 = vadd.f32 %v2108, %v3267
      %v3688 = vadd.f32 %v2113, %v3272
      %v3689 = vadd.f32 %v2116, %v3275
      %v3690 = vadd.f32 %v2121, %v3280
      %v3691 = vadd.f32 %v2124, %v3283
      %v3692 = vadd.f32 %v2129, %v3288
      %v3693 = vadd.f32 %v2132, %v3291
      %v3694 = vadd.f32 %v2137, %v3296
      %v3695 = vadd.f32 %v2140, %v3299
      %v3696 = vadd.f32 %v2145, %v3304
      %v3697 = vadd.f32 %v2148, %v3307
      %v3698 = vadd.f32 %v2153, %v3312
      %v3699 = vadd.f32 %v2156, %v3315
      %v3700 = vadd.f32 %v2161, %v3320
      %v3701 = vadd.f32 %v2164, %v3323
      %v3702 = vadd.f32 %v2169, %v3328
      %v3703 = vadd.f32 %v2172, %v3331
      %v3704 = vadd.f32 %v2177, %v3336
      %v3705 = vadd.f32 %v2180, %v3339
      %v3706 = vadd.f32 %v2185, %v3344
      %v3707 = vadd.f32 %v2188, %v3347
      %v3708 = vadd.f32 %v2193, %v3352
      %v3709 = vadd.f32 %v2196, %v3355
      %v3710 = vadd.f32 %v2201, %v3360
      %v3711 = vadd.f32 %v2204, %v3363
      %v3712 = vadd.f32 %v2209, %v3368
      %v3713 = vadd.f32 %v2212, %v3371
      %v3714 = vadd.f32 %v2217, %v3376
      %v3715 = vadd.f32 %v2220, %v3379
      %v3716 = vadd.f32 %v2225, %v3384
      %v3717 = vadd.f32 %v2228, %v3387
      %v3718 = vadd.f32 %v2233, %v3392
      %v3719 = vadd.f32 %v2236, %v3395
      %v3720 = vadd.f32 %v2241, %v3400
      %v3721 = vadd.f32 %v2244, %v3403
      %v3722 = vadd.f32 %v2249, %v3408
      %v3723 = vadd.f32 %v2252, %v3411
      %v3724 = vadd.f32 %v2257, %v3416
      %v3725 = vadd.f32 %v2260, %v3419
      %v3726 = vadd.f32 %v2265, %v3424
      %v3727 = vadd.f32 %v2268, %v3427
      %v3728 = vadd.f32 %v2273, %v3432
      %v3729 = vadd.f32 %v2276, %v3435
      %v3730 = vadd.f32 %v2281, %v3440
      %v3731 = vadd.f32 %v2284, %v3443
      %v3732 = vadd.f32 %v2289, %v3448
      %v3733 = vadd.f32 %v2292, %v3451
      %v3734 = vadd.f32 %v2297, %v3456
      %v3735 = vadd.f32 %v2300, %v3459
      %v3736 = vadd.f32 %v2305, %v3464
      %v3737 = vadd.f32 %v2308, %v3467
      %v3738 = vadd.f32 %v2313, %v3472
      %v3739 = vadd.f32 %v2316, %v3475
      %v3740 = vadd.f32 %v2321, %v3480
      %v3741 = vadd.f32 %v2324, %v3483
      %v3742 = vadd.f32 %v2329, %v3488
      %v3743 = vadd.f32 %v2332, %v3491
      %v3744 = vadd.f32 %v2337, %v3496
      %v3745 = vadd.f32 %v2340, %v3499
      %v3746 = vadd.f32 %v2345, %v3504
      %v3747 = vadd.f32 %v2348, %v3507
      %v3748 = vadd.f32 %v2353, %v3512
      %v3749 = vadd.f32 %v2356, %v3515
      %v3750 = vadd.f32 %v2361, %v3520
      %v3751 = vadd.f32 %v2364, %v3523
      %v3752 = vadd.f32 %v2369, %v3528
      %v3753 = vadd.f32 %v2372, %v3531
      %v3754 = vadd.f32 %v2377, %v3536
      %v3755 = vadd.f32 %v2380, %v3539
      %v3756 = vadd.f32 %v2385, %v3544
      %v3757 = vadd.f32 %v2388, %v3547
      %v3758 = vadd.f32 %v2393, %v3552
      %v3759 = vadd.f32 %v2396, %v3555
      %v3760 = vadd.f32 %v2401, %v3560
      %v3761 = vadd.f32 %v2404, %v3563
      %v3762 = vadd.f32 %v2409, %v3568
      %v3763 = vadd.f32 %v2412, %v3571
      %v3764 = vadd.f32 %v2417, %v3576
      %v3765 = vadd.f32 %v2420, %v3579
      %v3766 = vadd.f32 %v2425, %v3584
      %v3767 = vadd.f32 %v2428, %v3587
      %v3768 = vadd.f32 %v2433, %v3592
      %v3769 = vadd.f32 %v2436, %v3595
      %v3770 = vadd.f32 %v2441, %v3600
      %v3771 = vadd.f32 %v2444, %v3603
      %v3772 = vadd.f32 %v2449, %v3608
      %v3773 = vadd.f32 %v2452, %v3611
      %v3774 = vadd.f32 %v2457, %v3616
      %v3775 = vadd.f32 %v2460, %v3619
      %v3776 = vadd.f32 %v2465, %v3624
      %v3777 = vadd.f32 %v2468, %v3627
      %v3778 = vadd.f32 %v2473, %v3632
      %v3779 = vadd.f32 %v2476, %v3635
      %v3780 = vadd.f32 %v2481, %v3640
      %v3781 = vadd.f32 %v2484, %v3643
      %v3782 = vadd.f32 %v2489, %v3648
      %v3783 = vadd.f32 %v2492, %v3651
      %v3784 = vadd.f32 %v2497, %v3656
      %v3785 = vadd.f32 %v2500, %v3659
      %v3786 = vld [vmem:[%s165 + $0x10] sm:$0xf]
      %v3787 = vld [vmem:[%s165 + $0x14] sm:$0xf]
      %v3788 = vld [vmem:[%s165 + $0x18] sm:$0xf]
      %v3789 = vld [vmem:[%s165 + $0x1c] sm:$0xf]
      %v3790 = vld [vmem:[%s165 + $0x20] sm:$0xf]
      %v3791 = vld [vmem:[%s165 + $0x24] sm:$0xf]
      %v3792 = vld [vmem:[%s165 + $0x28] sm:$0xf]
      %v3793 = vld [vmem:[%s165 + $0x2c] sm:$0xf]
      %v3794 = vld [vmem:[%s165 + $0x30] sm:$0xf]
      %v3795 = vld [vmem:[%s165 + $0x34] sm:$0xf]
      %v3796 = vld [vmem:[%s165 + $0x38] sm:$0xf]
      %v3797 = vld [vmem:[%s165 + $0x3c] sm:$0xf]
      %v3798 = vld [vmem:[%s165 + $0x40] sm:$0xf]
      %v3799 = vld [vmem:[%s165 + $0x44] sm:$0xf]
      %v3800 = vld [vmem:[%s165 + $0x48] sm:$0xf]
      %v3801 = vld [vmem:[%s165 + $0x4c] sm:$0xf]
      %v3802 = vld [vmem:[%s165 + $0x50] sm:$0xf]
      %v3803 = vld [vmem:[%s165 + $0x54] sm:$0xf]
      %v3804 = vld [vmem:[%s165 + $0x58] sm:$0xf]
      %v3805 = vld [vmem:[%s165 + $0x5c] sm:$0xf]
      %v3806 = vld [vmem:[%s165 + $0x60] sm:$0xf]
      %v3807 = vld [vmem:[%s165 + $0x64] sm:$0xf]
      %v3808 = vld [vmem:[%s165 + $0x68] sm:$0xf]
      %v3809 = vld [vmem:[%s165 + $0x6c] sm:$0xf]
      %v3810 = vld [vmem:[%s165 + $0x70] sm:$0xf]
      %v3811 = vld [vmem:[%s165 + $0x74] sm:$0xf]
      %v3812 = vld [vmem:[%s165 + $0x78] sm:$0xf]
      %v3813 = vld [vmem:[%s165 + $0x7c] sm:$0xf]
      %v3814 = vld [vmem:[%s165 + $0x80] sm:$0xf]
      %v3815 = vld [vmem:[%s165 + $0x84] sm:$0xf]
      %v3816 = vld [vmem:[%s165 + $0x88] sm:$0xf]
      %v3817 = vld [vmem:[%s165 + $0x8c] sm:$0xf]
      %v3818 = vld [vmem:[%s165 + $0x90] sm:$0xf]
      %v3819 = vld [vmem:[%s165 + $0x94] sm:$0xf]
      %v3820 = vld [vmem:[%s165 + $0x98] sm:$0xf]
      %v3821 = vld [vmem:[%s165 + $0x9c] sm:$0xf]
      %v3822 = vld [vmem:[%s165 + $0xa0] sm:$0xf]
      %v3823 = vld [vmem:[%s165 + $0xa4] sm:$0xf]
      %v3824 = vld [vmem:[%s165 + $0xa8] sm:$0xf]
      %v3825 = vld [vmem:[%s165 + $0xac] sm:$0xf]
      %v3826 = vld [vmem:[%s165 + $0xb0] sm:$0xf]
      %v3827 = vld [vmem:[%s165 + $0xb4] sm:$0xf]
      %v3828 = vld [vmem:[%s165 + $0xb8] sm:$0xf]
      %v3829 = vld [vmem:[%s165 + $0xbc] sm:$0xf]
      %v3830 = vld [vmem:[%s165 + $0xc0] sm:$0xf]
      %v3831 = vld [vmem:[%s165 + $0xc4] sm:$0xf]
      %v3832 = vld [vmem:[%s165 + $0xc8] sm:$0xf]
      %v3833 = vld [vmem:[%s165 + $0xcc] sm:$0xf]
      %v3834 = vld [vmem:[%s165 + $0xd0] sm:$0xf]
      %v3835 = vld [vmem:[%s165 + $0xd4] sm:$0xf]
      %v3836 = vld [vmem:[%s165 + $0xd8] sm:$0xf]
      %v3837 = vld [vmem:[%s165 + $0xdc] sm:$0xf]
      %v3838 = vld [vmem:[%s165 + $0xe0] sm:$0xf]
      %v3839 = vld [vmem:[%s165 + $0xe4] sm:$0xf]
      %v3840 = vld [vmem:[%s165 + $0xe8] sm:$0xf]
      %v3841 = vld [vmem:[%s165 + $0xec] sm:$0xf]
      %v3842 = vld [vmem:[%s165 + $0xf0] sm:$0xf]
      %v3843 = vld [vmem:[%s165 + $0xf4] sm:$0xf]
      %v3844 = vld [vmem:[%s165 + $0xf8] sm:$0xf]
      %v3845 = vld [vmem:[%s165 + $0xfc] sm:$0xf]
      %v3846 = vld [vmem:[%s165 + $0x100] sm:$0xf]
      %v3847 = vld [vmem:[%s165 + $0x104] sm:$0xf]
      %v3848 = vld [vmem:[%s165 + $0x108] sm:$0xf]
      %v3849 = vld [vmem:[%s165 + $0x10c] sm:$0xf]
      %v3850 = vld [vmem:[%s165 + $0x110] sm:$0xf]
      %v3851 = vld [vmem:[%s165 + $0x114] sm:$0xf]
      %v3852 = vld [vmem:[%s165 + $0x118] sm:$0xf]
      %v3853 = vld [vmem:[%s165 + $0x11c] sm:$0xf]
      %v3854 = vld [vmem:[%s165 + $0x120] sm:$0xf]
      %v3855 = vld [vmem:[%s165 + $0x124] sm:$0xf]
      %v3856 = vld [vmem:[%s165 + $0x128] sm:$0xf]
      %v3857 = vld [vmem:[%s165 + $0x12c] sm:$0xf]
      %v3858 = vld [vmem:[%s165 + $0x130] sm:$0xf]
      %v3859 = vld [vmem:[%s165 + $0x134] sm:$0xf]
      %v3860 = vld [vmem:[%s165 + $0x138] sm:$0xf]
      %v3861 = vld [vmem:[%s165 + $0x13c] sm:$0xf]
      %v3862 = vld [vmem:[%s165 + $0x140] sm:$0xf]
      %v3863 = vld [vmem:[%s165 + $0x144] sm:$0xf]
      %v3864 = vld [vmem:[%s165 + $0x148] sm:$0xf]
      %v3865 = vld [vmem:[%s165 + $0x14c] sm:$0xf]
      %v3866 = vld [vmem:[%s165 + $0x150] sm:$0xf]
      %v3867 = vld [vmem:[%s165 + $0x154] sm:$0xf]
      %v3868 = vld [vmem:[%s165 + $0x158] sm:$0xf]
      %v3869 = vld [vmem:[%s165 + $0x15c] sm:$0xf]
      %v3870 = vld [vmem:[%s165 + $0x160] sm:$0xf]
      %v3871 = vld [vmem:[%s165 + $0x164] sm:$0xf]
      %v3872 = vld [vmem:[%s165 + $0x168] sm:$0xf]
      %v3873 = vld [vmem:[%s165 + $0x16c] sm:$0xf]
      %v3874 = vld [vmem:[%s165 + $0x170] sm:$0xf]
      %v3875 = vld [vmem:[%s165 + $0x174] sm:$0xf]
      %v3876 = vld [vmem:[%s165 + $0x178] sm:$0xf]
      %v3877 = vld [vmem:[%s165 + $0x17c] sm:$0xf]
      %v3878 = vld [vmem:[%s165 + $0x180] sm:$0xf]
      %v3879 = vld [vmem:[%s165 + $0x184] sm:$0xf]
      %v3880 = vld [vmem:[%s165 + $0x188] sm:$0xf]
      %v3881 = vld [vmem:[%s165 + $0x18c] sm:$0xf]
      %v3882 = vld [vmem:[%s165 + $0x190] sm:$0xf]
      %v3883 = vld [vmem:[%s165 + $0x194] sm:$0xf]
      %v3884 = vld [vmem:[%s165 + $0x198] sm:$0xf]
      %v3885 = vld [vmem:[%s165 + $0x19c] sm:$0xf]
      %v3886 = vld [vmem:[%s165 + $0x1a0] sm:$0xf]
      %v3887 = vld [vmem:[%s165 + $0x1a4] sm:$0xf]
      %v3888 = vld [vmem:[%s165 + $0x1a8] sm:$0xf]
      %v3889 = vld [vmem:[%s165 + $0x1ac] sm:$0xf]
      %v3890 = vld [vmem:[%s165 + $0x1b0] sm:$0xf]
      %v3891 = vld [vmem:[%s165 + $0x1b4] sm:$0xf]
      %v3892 = vld [vmem:[%s165 + $0x1b8] sm:$0xf]
      %v3893 = vld [vmem:[%s165 + $0x1bc] sm:$0xf]
      %v3894 = vld [vmem:[%s165 + $0x1c0] sm:$0xf]
      %v3895 = vld [vmem:[%s165 + $0x1c4] sm:$0xf]
      %v3896 = vld [vmem:[%s165 + $0x1c8] sm:$0xf]
      %v3897 = vld [vmem:[%s165 + $0x1cc] sm:$0xf]
      %v3898 = vld [vmem:[%s165 + $0x1d0] sm:$0xf]
      %v3899 = vld [vmem:[%s165 + $0x1d4] sm:$0xf]
      %v3900 = vld [vmem:[%s165 + $0x1d8] sm:$0xf]
      %v3901 = vld [vmem:[%s165 + $0x1dc] sm:$0xf]
      %v3902 = vld [vmem:[%s165 + $0x1e0] sm:$0xf]
      %v3903 = vld [vmem:[%s165 + $0x1e4] sm:$0xf]
      %v3904 = vld [vmem:[%s165 + $0x1e8] sm:$0xf]
      %v3905 = vld [vmem:[%s165 + $0x1ec] sm:$0xf]
      %v3906 = vld [vmem:[%s165 + $0x1f0] sm:$0xf]
      %v3907 = vld [vmem:[%s165 + $0x1f4] sm:$0xf]
      %v3908 = vld [vmem:[%s165 + $0x1f8] sm:$0xf]
      %v3909 = vld [vmem:[%s165 + $0x1fc] sm:$0xf]
      %v3910 = vld [vmem:[%s165 + $0x200] sm:$0x1]
      %v3911 = vld [vmem:[%s1 + $0x10] sm:$0xc]
      %v3912 = vld [vmem:[%s1 + $0x14] sm:$0xf]
      %v4038 = vunpack.c.l.b16 %v3786
      %v4039 = vunpack.c.l.b16 %v3787
      %v4040 = vunpack.c.l.b16 %v3788
      %v4041 = vunpack.c.l.b16 %v3789
      %v4042 = vunpack.c.l.b16 %v3790
      %v4043 = vunpack.c.l.b16 %v3791
      %v4044 = vunpack.c.l.b16 %v3792
      %v4045 = vunpack.c.l.b16 %v3793
      %v4046 = vunpack.c.l.b16 %v3794
      %v4047 = vunpack.c.l.b16 %v3795
      %v4048 = vunpack.c.l.b16 %v3796
      %v4049 = vunpack.c.l.b16 %v3797
      %v4050 = vunpack.c.l.b16 %v3798
      %v4051 = vunpack.c.l.b16 %v3799
      %v4052 = vunpack.c.l.b16 %v3800
      %v4053 = vunpack.c.l.b16 %v3801
      %v4054 = vunpack.c.l.b16 %v3802
      %v4055 = vunpack.c.l.b16 %v3803
      %v4056 = vunpack.c.l.b16 %v3804
      %v4057 = vunpack.c.l.b16 %v3805
      %v4058 = vunpack.c.l.b16 %v3806
      %v4059 = vunpack.c.l.b16 %v3807
      %v4060 = vunpack.c.l.b16 %v3808
      %v4061 = vunpack.c.l.b16 %v3809
      %v4062 = vunpack.c.l.b16 %v3810
      %v4063 = vunpack.c.l.b16 %v3811
      %v4064 = vunpack.c.l.b16 %v3812
      %v4065 = vunpack.c.l.b16 %v3813
      %v4066 = vunpack.c.l.b16 %v3814
      %v4067 = vunpack.c.l.b16 %v3815
      %v4068 = vunpack.c.l.b16 %v3816
      %v4069 = vunpack.c.l.b16 %v3817
      %v4070 = vunpack.c.l.b16 %v3818
      %v4071 = vunpack.c.l.b16 %v3819
      %v4072 = vunpack.c.l.b16 %v3820
      %v4073 = vunpack.c.l.b16 %v3821
      %v4074 = vunpack.c.l.b16 %v3822
      %v4075 = vunpack.c.l.b16 %v3823
      %v4076 = vunpack.c.l.b16 %v3824
      %v4077 = vunpack.c.l.b16 %v3825
      %v4078 = vunpack.c.l.b16 %v3826
      %v4079 = vunpack.c.l.b16 %v3827
      %v4080 = vunpack.c.l.b16 %v3828
      %v4081 = vunpack.c.l.b16 %v3829
      %v4082 = vunpack.c.l.b16 %v3830
      %v4083 = vunpack.c.l.b16 %v3831
      %v4084 = vunpack.c.l.b16 %v3832
      %v4085 = vunpack.c.l.b16 %v3833
      %v4086 = vunpack.c.l.b16 %v3834
      %v4087 = vunpack.c.l.b16 %v3835
      %v4088 = vunpack.c.l.b16 %v3836
      %v4089 = vunpack.c.l.b16 %v3837
      %v4090 = vunpack.c.l.b16 %v3838
      %v4091 = vunpack.c.l.b16 %v3839
      %v4092 = vunpack.c.l.b16 %v3840
      %v4093 = vunpack.c.l.b16 %v3841
      %v4094 = vunpack.c.l.b16 %v3842
      %v4095 = vunpack.c.l.b16 %v3843
      %v4096 = vunpack.c.l.b16 %v3844
      %v4097 = vunpack.c.l.b16 %v3845
      %v4098 = vunpack.c.l.b16 %v3846
      %v4099 = vunpack.c.l.b16 %v3847
      %v4100 = vunpack.c.l.b16 %v3848
      %v4101 = vunpack.c.l.b16 %v3849
      %v4102 = vunpack.c.l.b16 %v3850
      %v4103 = vunpack.c.l.b16 %v3851
      %v4104 = vunpack.c.l.b16 %v3852
      %v4105 = vunpack.c.l.b16 %v3853
      %v4106 = vunpack.c.l.b16 %v3854
      %v4107 = vunpack.c.l.b16 %v3855
      %v4108 = vunpack.c.l.b16 %v3856
      %v4109 = vunpack.c.l.b16 %v3857
      %v4110 = vunpack.c.l.b16 %v3858
      %v4111 = vunpack.c.l.b16 %v3859
      %v4112 = vunpack.c.l.b16 %v3860
      %v4113 = vunpack.c.l.b16 %v3861
      %v4114 = vunpack.c.l.b16 %v3862
      %v4115 = vunpack.c.l.b16 %v3863
      %v4116 = vunpack.c.l.b16 %v3864
      %v4117 = vunpack.c.l.b16 %v3865
      %v4118 = vunpack.c.l.b16 %v3866
      %v4119 = vunpack.c.l.b16 %v3867
      %v4120 = vunpack.c.l.b16 %v3868
      %v4121 = vunpack.c.l.b16 %v3869
      %v4122 = vunpack.c.l.b16 %v3870
      %v4123 = vunpack.c.l.b16 %v3871
      %v4124 = vunpack.c.l.b16 %v3872
      %v4125 = vunpack.c.l.b16 %v3873
      %v4126 = vunpack.c.l.b16 %v3874
      %v4127 = vunpack.c.l.b16 %v3875
      %v4128 = vunpack.c.l.b16 %v3876
      %v4129 = vunpack.c.l.b16 %v3877
      %v4130 = vunpack.c.l.b16 %v3878
      %v4131 = vunpack.c.l.b16 %v3879
      %v4132 = vunpack.c.l.b16 %v3880
      %v4133 = vunpack.c.l.b16 %v3881
      %v4134 = vunpack.c.l.b16 %v3882
      %v4135 = vunpack.c.l.b16 %v3883
      %v4136 = vunpack.c.l.b16 %v3884
      %v4137 = vunpack.c.l.b16 %v3885
      %v4138 = vunpack.c.l.b16 %v3886
      %v4139 = vunpack.c.l.b16 %v3887
      %v4140 = vunpack.c.l.b16 %v3888
      %v4141 = vunpack.c.l.b16 %v3889
      %v4142 = vunpack.c.l.b16 %v3890
      %v4143 = vunpack.c.l.b16 %v3891
      %v4144 = vunpack.c.l.b16 %v3892
      %v4145 = vunpack.c.l.b16 %v3893
      %v4146 = vunpack.c.l.b16 %v3894
      %v4147 = vunpack.c.l.b16 %v3895
      %v4148 = vunpack.c.l.b16 %v3896
      %v4149 = vunpack.c.l.b16 %v3897
      %v4150 = vunpack.c.l.b16 %v3898
      %v4151 = vunpack.c.l.b16 %v3899
      %v4152 = vunpack.c.l.b16 %v3900
      %v4153 = vunpack.c.l.b16 %v3901
      %v4154 = vunpack.c.l.b16 %v3902
      %v4155 = vunpack.c.l.b16 %v3903
      %v4156 = vunpack.c.l.b16 %v3904
      %v4157 = vunpack.c.l.b16 %v3905
      %v4158 = vunpack.c.l.b16 %v3906
      %v4159 = vunpack.c.l.b16 %v3907
      %v4160 = vunpack.c.l.b16 %v3908
      %v4161 = vunpack.c.l.b16 %v3909
      %v4162 = vunpack.c.l.b16 %v3910
      %v4163 = vpack.c.b16 %v4039, %v4038
      %v4164 = vpack.c.b16 %v4041, %v4040
      %v4165 = vpack.c.b16 %v4043, %v4042
      %v4166 = vpack.c.b16 %v4045, %v4044
      %v4167 = vpack.c.b16 %v4047, %v4046
      %v4168 = vpack.c.b16 %v4049, %v4048
      %v4169 = vpack.c.b16 %v4051, %v4050
      %v4170 = vpack.c.b16 %v4053, %v4052
      %v4171 = vpack.c.b16 %v4055, %v4054
      %v4172 = vpack.c.b16 %v4057, %v4056
      %v4173 = vpack.c.b16 %v4059, %v4058
      %v4174 = vpack.c.b16 %v4061, %v4060
      %v4175 = vpack.c.b16 %v4063, %v4062
      %v4176 = vpack.c.b16 %v4065, %v4064
      %v4177 = vpack.c.b16 %v4067, %v4066
      %v4178 = vpack.c.b16 %v4069, %v4068
      %v4179 = vpack.c.b16 %v4071, %v4070
      %v4180 = vpack.c.b16 %v4073, %v4072
      %v4181 = vpack.c.b16 %v4075, %v4074
      %v4182 = vpack.c.b16 %v4077, %v4076
      %v4183 = vpack.c.b16 %v4079, %v4078
      %v4184 = vpack.c.b16 %v4081, %v4080
      %v4185 = vpack.c.b16 %v4083, %v4082
      %v4186 = vpack.c.b16 %v4085, %v4084
      %v4187 = vpack.c.b16 %v4087, %v4086
      %v4188 = vpack.c.b16 %v4089, %v4088
      %v4189 = vpack.c.b16 %v4091, %v4090
      %v4190 = vpack.c.b16 %v4093, %v4092
      %v4191 = vpack.c.b16 %v4095, %v4094
      %v4192 = vpack.c.b16 %v4097, %v4096
      %v4193 = vpack.c.b16 %v4099, %v4098
      %v4194 = vpack.c.b16 %v4101, %v4100
      %v4195 = vpack.c.b16 %v4103, %v4102
      %v4196 = vpack.c.b16 %v4105, %v4104
      %v4197 = vpack.c.b16 %v4107, %v4106
      %v4198 = vpack.c.b16 %v4109, %v4108
      %v4199 = vpack.c.b16 %v4111, %v4110
      %v4200 = vpack.c.b16 %v4113, %v4112
      %v4201 = vpack.c.b16 %v4115, %v4114
      %v4202 = vpack.c.b16 %v4117, %v4116
      %v4203 = vpack.c.b16 %v4119, %v4118
      %v4204 = vpack.c.b16 %v4121, %v4120
      %v4205 = vpack.c.b16 %v4123, %v4122
      %v4206 = vpack.c.b16 %v4125, %v4124
      %v4207 = vpack.c.b16 %v4127, %v4126
      %v4208 = vpack.c.b16 %v4129, %v4128
      %v4209 = vpack.c.b16 %v4131, %v4130
      %v4210 = vpack.c.b16 %v4133, %v4132
      %v4211 = vpack.c.b16 %v4135, %v4134
      %v4212 = vpack.c.b16 %v4137, %v4136
      %v4213 = vpack.c.b16 %v4139, %v4138
      %v4214 = vpack.c.b16 %v4141, %v4140
      %v4215 = vpack.c.b16 %v4143, %v4142
      %v4216 = vpack.c.b16 %v4145, %v4144
      %v4217 = vpack.c.b16 %v4147, %v4146
      %v4218 = vpack.c.b16 %v4149, %v4148
      %v4219 = vpack.c.b16 %v4151, %v4150
      %v4220 = vpack.c.b16 %v4153, %v4152
      %v4221 = vpack.c.b16 %v4155, %v4154
      %v4222 = vpack.c.b16 %v4157, %v4156
      %v4223 = vpack.c.b16 %v4159, %v4158
      %v4224 = vpack.c.b16 %v4161, %v4160
      %v4225 = vpack.c.b16 %v4162, %v4162
      %v4227 = vshrl.u32 %v4163, 16
      %v4229 = vshll.u32 %v4163, 16
      %v4231 = vrot.slane %v4229, 1
      %v4232 = vor.u32 %v4227, %v4231
      %v4234 = vshll.u32 %v4164, 16
      %v4236 = vrot.slane %v4234, 1
      %v4237 = vsel %vm615, %v4232, %v4236
      %v4238 = vshrl.u32 %v4164, 16
      %v4240 = vor.u32 %v4238, %v4236
      %v4242 = vshll.u32 %v4165, 16
      %v4244 = vrot.slane %v4242, 1
      %v4245 = vsel %vm615, %v4240, %v4244
      %v4246 = vshrl.u32 %v4165, 16
      %v4248 = vor.u32 %v4246, %v4244
      %v4250 = vshll.u32 %v4166, 16
      %v4252 = vrot.slane %v4250, 1
      %v4253 = vsel %vm615, %v4248, %v4252
      %v4254 = vshrl.u32 %v4166, 16
      %v4256 = vor.u32 %v4254, %v4252
      %v4258 = vshll.u32 %v4167, 16
      %v4260 = vrot.slane %v4258, 1
      %v4261 = vsel %vm615, %v4256, %v4260
      %v4262 = vshrl.u32 %v4167, 16
      %v4264 = vor.u32 %v4262, %v4260
      %v4266 = vshll.u32 %v4168, 16
      %v4268 = vrot.slane %v4266, 1
      %v4269 = vsel %vm615, %v4264, %v4268
      %v4270 = vshrl.u32 %v4168, 16
      %v4272 = vor.u32 %v4270, %v4268
      %v4274 = vshll.u32 %v4169, 16
      %v4276 = vrot.slane %v4274, 1
      %v4277 = vsel %vm615, %v4272, %v4276
      %v4278 = vshrl.u32 %v4169, 16
      %v4280 = vor.u32 %v4278, %v4276
      %v4282 = vshll.u32 %v4170, 16
      %v4284 = vrot.slane %v4282, 1
      %v4285 = vsel %vm615, %v4280, %v4284
      %v4286 = vshrl.u32 %v4170, 16
      %v4288 = vor.u32 %v4286, %v4284
      %v4290 = vshll.u32 %v4171, 16
      %v4292 = vrot.slane %v4290, 1
      %v4293 = vsel %vm615, %v4288, %v4292
      %v4294 = vshrl.u32 %v4171, 16
      %v4296 = vor.u32 %v4294, %v4292
      %v4298 = vshll.u32 %v4172, 16
      %v4300 = vrot.slane %v4298, 1
      %v4301 = vsel %vm615, %v4296, %v4300
      %v4302 = vshrl.u32 %v4172, 16
      %v4304 = vor.u32 %v4302, %v4300
      %v4306 = vshll.u32 %v4173, 16
      %v4308 = vrot.slane %v4306, 1
      %v4309 = vsel %vm615, %v4304, %v4308
      %v4310 = vshrl.u32 %v4173, 16
      %v4312 = vor.u32 %v4310, %v4308
      %v4314 = vshll.u32 %v4174, 16
      %v4316 = vrot.slane %v4314, 1
      %v4317 = vsel %vm615, %v4312, %v4316
      %v4318 = vshrl.u32 %v4174, 16
      %v4320 = vor.u32 %v4318, %v4316
      %v4322 = vshll.u32 %v4175, 16
      %v4324 = vrot.slane %v4322, 1
      %v4325 = vsel %vm615, %v4320, %v4324
      %v4326 = vshrl.u32 %v4175, 16
      %v4328 = vor.u32 %v4326, %v4324
      %v4330 = vshll.u32 %v4176, 16
      %v4332 = vrot.slane %v4330, 1
      %v4333 = vsel %vm615, %v4328, %v4332
      %v4334 = vshrl.u32 %v4176, 16
      %v4336 = vor.u32 %v4334, %v4332
      %v4338 = vshll.u32 %v4177, 16
      %v4340 = vrot.slane %v4338, 1
      %v4341 = vsel %vm615, %v4336, %v4340
      %v4342 = vshrl.u32 %v4177, 16
      %v4344 = vor.u32 %v4342, %v4340
      %v4346 = vshll.u32 %v4178, 16
      %v4348 = vrot.slane %v4346, 1
      %v4349 = vsel %vm615, %v4344, %v4348
      %v4350 = vshrl.u32 %v4178, 16
      %v4352 = vor.u32 %v4350, %v4348
      %v4354 = vshll.u32 %v4179, 16
      %v4356 = vrot.slane %v4354, 1
      %v4357 = vsel %vm615, %v4352, %v4356
      %v4358 = vshrl.u32 %v4179, 16
      %v4360 = vor.u32 %v4358, %v4356
      %v4362 = vshll.u32 %v4180, 16
      %v4364 = vrot.slane %v4362, 1
      %v4365 = vsel %vm615, %v4360, %v4364
      %v4366 = vshrl.u32 %v4180, 16
      %v4368 = vor.u32 %v4366, %v4364
      %v4370 = vshll.u32 %v4181, 16
      %v4372 = vrot.slane %v4370, 1
      %v4373 = vsel %vm615, %v4368, %v4372
      %v4374 = vshrl.u32 %v4181, 16
      %v4376 = vor.u32 %v4374, %v4372
      %v4378 = vshll.u32 %v4182, 16
      %v4380 = vrot.slane %v4378, 1
      %v4381 = vsel %vm615, %v4376, %v4380
      %v4382 = vshrl.u32 %v4182, 16
      %v4384 = vor.u32 %v4382, %v4380
      %v4386 = vshll.u32 %v4183, 16
      %v4388 = vrot.slane %v4386, 1
      %v4389 = vsel %vm615, %v4384, %v4388
      %v4390 = vshrl.u32 %v4183, 16
      %v4392 = vor.u32 %v4390, %v4388
      %v4394 = vshll.u32 %v4184, 16
      %v4396 = vrot.slane %v4394, 1
      %v4397 = vsel %vm615, %v4392, %v4396
      %v4398 = vshrl.u32 %v4184, 16
      %v4400 = vor.u32 %v4398, %v4396
      %v4402 = vshll.u32 %v4185, 16
      %v4404 = vrot.slane %v4402, 1
      %v4405 = vsel %vm615, %v4400, %v4404
      %v4406 = vshrl.u32 %v4185, 16
      %v4408 = vor.u32 %v4406, %v4404
      %v4410 = vshll.u32 %v4186, 16
      %v4412 = vrot.slane %v4410, 1
      %v4413 = vsel %vm615, %v4408, %v4412
      %v4414 = vshrl.u32 %v4186, 16
      %v4416 = vor.u32 %v4414, %v4412
      %v4418 = vshll.u32 %v4187, 16
      %v4420 = vrot.slane %v4418, 1
      %v4421 = vsel %vm615, %v4416, %v4420
      %v4422 = vshrl.u32 %v4187, 16
      %v4424 = vor.u32 %v4422, %v4420
      %v4426 = vshll.u32 %v4188, 16
      %v4428 = vrot.slane %v4426, 1
      %v4429 = vsel %vm615, %v4424, %v4428
      %v4430 = vshrl.u32 %v4188, 16
      %v4432 = vor.u32 %v4430, %v4428
      %v4434 = vshll.u32 %v4189, 16
      %v4436 = vrot.slane %v4434, 1
      %v4437 = vsel %vm615, %v4432, %v4436
      %v4438 = vshrl.u32 %v4189, 16
      %v4440 = vor.u32 %v4438, %v4436
      %v4442 = vshll.u32 %v4190, 16
      %v4444 = vrot.slane %v4442, 1
      %v4445 = vsel %vm615, %v4440, %v4444
      %v4446 = vshrl.u32 %v4190, 16
      %v4448 = vor.u32 %v4446, %v4444
      %v4450 = vshll.u32 %v4191, 16
      %v4452 = vrot.slane %v4450, 1
      %v4453 = vsel %vm615, %v4448, %v4452
      %v4454 = vshrl.u32 %v4191, 16
      %v4456 = vor.u32 %v4454, %v4452
      %v4458 = vshll.u32 %v4192, 16
      %v4460 = vrot.slane %v4458, 1
      %v4461 = vsel %vm615, %v4456, %v4460
      %v4462 = vshrl.u32 %v4192, 16
      %v4464 = vor.u32 %v4462, %v4460
      %v4466 = vshll.u32 %v4193, 16
      %v4468 = vrot.slane %v4466, 1
      %v4469 = vsel %vm615, %v4464, %v4468
      %v4470 = vshrl.u32 %v4193, 16
      %v4472 = vor.u32 %v4470, %v4468
      %v4474 = vshll.u32 %v4194, 16
      %v4476 = vrot.slane %v4474, 1
      %v4477 = vsel %vm615, %v4472, %v4476
      %v4478 = vshrl.u32 %v4194, 16
      %v4480 = vor.u32 %v4478, %v4476
      %v4482 = vshll.u32 %v4195, 16
      %v4484 = vrot.slane %v4482, 1
      %v4485 = vsel %vm615, %v4480, %v4484
      %v4486 = vshrl.u32 %v4195, 16
      %v4488 = vor.u32 %v4486, %v4484
      %v4490 = vshll.u32 %v4196, 16
      %v4492 = vrot.slane %v4490, 1
      %v4493 = vsel %vm615, %v4488, %v4492
      %v4494 = vshrl.u32 %v4196, 16
      %v4496 = vor.u32 %v4494, %v4492
      %v4498 = vshll.u32 %v4197, 16
      %v4500 = vrot.slane %v4498, 1
      %v4501 = vsel %vm615, %v4496, %v4500
      %v4502 = vshrl.u32 %v4197, 16
      %v4504 = vor.u32 %v4502, %v4500
      %v4506 = vshll.u32 %v4198, 16
      %v4508 = vrot.slane %v4506, 1
      %v4509 = vsel %vm615, %v4504, %v4508
      %v4510 = vshrl.u32 %v4198, 16
      %v4512 = vor.u32 %v4510, %v4508
      %v4514 = vshll.u32 %v4199, 16
      %v4516 = vrot.slane %v4514, 1
      %v4517 = vsel %vm615, %v4512, %v4516
      %v4518 = vshrl.u32 %v4199, 16
      %v4520 = vor.u32 %v4518, %v4516
      %v4522 = vshll.u32 %v4200, 16
      %v4524 = vrot.slane %v4522, 1
      %v4525 = vsel %vm615, %v4520, %v4524
      %v4526 = vshrl.u32 %v4200, 16
      %v4528 = vor.u32 %v4526, %v4524
      %v4530 = vshll.u32 %v4201, 16
      %v4532 = vrot.slane %v4530, 1
      %v4533 = vsel %vm615, %v4528, %v4532
      %v4534 = vshrl.u32 %v4201, 16
      %v4536 = vor.u32 %v4534, %v4532
      %v4538 = vshll.u32 %v4202, 16
      %v4540 = vrot.slane %v4538, 1
      %v4541 = vsel %vm615, %v4536, %v4540
      %v4542 = vshrl.u32 %v4202, 16
      %v4544 = vor.u32 %v4542, %v4540
      %v4546 = vshll.u32 %v4203, 16
      %v4548 = vrot.slane %v4546, 1
      %v4549 = vsel %vm615, %v4544, %v4548
      %v4550 = vshrl.u32 %v4203, 16
      %v4552 = vor.u32 %v4550, %v4548
      %v4554 = vshll.u32 %v4204, 16
      %v4556 = vrot.slane %v4554, 1
      %v4557 = vsel %vm615, %v4552, %v4556
      %v4558 = vshrl.u32 %v4204, 16
      %v4560 = vor.u32 %v4558, %v4556
      %v4562 = vshll.u32 %v4205, 16
      %v4564 = vrot.slane %v4562, 1
      %v4565 = vsel %vm615, %v4560, %v4564
      %v4566 = vshrl.u32 %v4205, 16
      %v4568 = vor.u32 %v4566, %v4564
      %v4570 = vshll.u32 %v4206, 16
      %v4572 = vrot.slane %v4570, 1
      %v4573 = vsel %vm615, %v4568, %v4572
      %v4574 = vshrl.u32 %v4206, 16
      %v4576 = vor.u32 %v4574, %v4572
      %v4578 = vshll.u32 %v4207, 16
      %v4580 = vrot.slane %v4578, 1
      %v4581 = vsel %vm615, %v4576, %v4580
      %v4582 = vshrl.u32 %v4207, 16
      %v4584 = vor.u32 %v4582, %v4580
      %v4586 = vshll.u32 %v4208, 16
      %v4588 = vrot.slane %v4586, 1
      %v4589 = vsel %vm615, %v4584, %v4588
      %v4590 = vshrl.u32 %v4208, 16
      %v4592 = vor.u32 %v4590, %v4588
      %v4594 = vshll.u32 %v4209, 16
      %v4596 = vrot.slane %v4594, 1
      %v4597 = vsel %vm615, %v4592, %v4596
      %v4598 = vshrl.u32 %v4209, 16
      %v4600 = vor.u32 %v4598, %v4596
      %v4602 = vshll.u32 %v4210, 16
      %v4604 = vrot.slane %v4602, 1
      %v4605 = vsel %vm615, %v4600, %v4604
      %v4606 = vshrl.u32 %v4210, 16
      %v4608 = vor.u32 %v4606, %v4604
      %v4610 = vshll.u32 %v4211, 16
      %v4612 = vrot.slane %v4610, 1
      %v4613 = vsel %vm615, %v4608, %v4612
      %v4614 = vshrl.u32 %v4211, 16
      %v4616 = vor.u32 %v4614, %v4612
      %v4618 = vshll.u32 %v4212, 16
      %v4620 = vrot.slane %v4618, 1
      %v4621 = vsel %vm615, %v4616, %v4620
      %v4622 = vshrl.u32 %v4212, 16
      %v4624 = vor.u32 %v4622, %v4620
      %v4626 = vshll.u32 %v4213, 16
      %v4628 = vrot.slane %v4626, 1
      %v4629 = vsel %vm615, %v4624, %v4628
      %v4630 = vshrl.u32 %v4213, 16
      %v4632 = vor.u32 %v4630, %v4628
      %v4634 = vshll.u32 %v4214, 16
      %v4636 = vrot.slane %v4634, 1
      %v4637 = vsel %vm615, %v4632, %v4636
      %v4638 = vshrl.u32 %v4214, 16
      %v4640 = vor.u32 %v4638, %v4636
      %v4642 = vshll.u32 %v4215, 16
      %v4644 = vrot.slane %v4642, 1
      %v4645 = vsel %vm615, %v4640, %v4644
      %v4646 = vshrl.u32 %v4215, 16
      %v4648 = vor.u32 %v4646, %v4644
      %v4650 = vshll.u32 %v4216, 16
      %v4652 = vrot.slane %v4650, 1
      %v4653 = vsel %vm615, %v4648, %v4652
      %v4654 = vshrl.u32 %v4216, 16
      %v4656 = vor.u32 %v4654, %v4652
      %v4658 = vshll.u32 %v4217, 16
      %v4660 = vrot.slane %v4658, 1
      %v4661 = vsel %vm615, %v4656, %v4660
      %v4662 = vshrl.u32 %v4217, 16
      %v4664 = vor.u32 %v4662, %v4660
      %v4666 = vshll.u32 %v4218, 16
      %v4668 = vrot.slane %v4666, 1
      %v4669 = vsel %vm615, %v4664, %v4668
      %v4670 = vshrl.u32 %v4218, 16
      %v4672 = vor.u32 %v4670, %v4668
      %v4674 = vshll.u32 %v4219, 16
      %v4676 = vrot.slane %v4674, 1
      %v4677 = vsel %vm615, %v4672, %v4676
      %v4678 = vshrl.u32 %v4219, 16
      %v4680 = vor.u32 %v4678, %v4676
      %v4682 = vshll.u32 %v4220, 16
      %v4684 = vrot.slane %v4682, 1
      %v4685 = vsel %vm615, %v4680, %v4684
      %v4686 = vshrl.u32 %v4220, 16
      %v4688 = vor.u32 %v4686, %v4684
      %v4690 = vshll.u32 %v4221, 16
      %v4692 = vrot.slane %v4690, 1
      %v4693 = vsel %vm615, %v4688, %v4692
      %v4694 = vshrl.u32 %v4221, 16
      %v4696 = vor.u32 %v4694, %v4692
      %v4698 = vshll.u32 %v4222, 16
      %v4700 = vrot.slane %v4698, 1
      %v4701 = vsel %vm615, %v4696, %v4700
      %v4702 = vshrl.u32 %v4222, 16
      %v4704 = vor.u32 %v4702, %v4700
      %v4706 = vshll.u32 %v4223, 16
      %v4708 = vrot.slane %v4706, 1
      %v4709 = vsel %vm615, %v4704, %v4708
      %v4710 = vshrl.u32 %v4223, 16
      %v4712 = vor.u32 %v4710, %v4708
      %v4714 = vshll.u32 %v4224, 16
      %v4716 = vrot.slane %v4714, 1
      %v4717 = vsel %vm615, %v4712, %v4716
      %v4718 = vshrl.u32 %v4224, 16
      %v4720 = vor.u32 %v4718, %v4716
      %v4722 = vshll.u32 %v4225, 16
      %v4724 = vrot.slane %v4722, 1
      %v4725 = vsel %vm615, %v4720, %v4724
      %v4728 = vunpack.c.l.b16 %v3911
      %v4729 = vunpack.c.l.b16 %v3912
      %v4730 = vpack.c.b16 %v4729, %v4728
      %v4731 = vrot.slane %v4730, 2
      %v4733 = vsel %vm1122, %v4237, 0
      %v4736 = vsel %vm1122, %v4245, 0
      %v4739 = vsel %vm1122, %v4253, 0
      %v4742 = vsel %vm1122, %v4261, 0
      %v4745 = vsel %vm1122, %v4269, 0
      %v4748 = vsel %vm1122, %v4277, 0
      %v4751 = vsel %vm1122, %v4285, 0
      %v4754 = vsel %vm1122, %v4293, 0
      %v4757 = vsel %vm1122, %v4301, 0
      %v4760 = vsel %vm1122, %v4309, 0
      %v4763 = vsel %vm1122, %v4317, 0
      %v4766 = vsel %vm1122, %v4325, 0
      %v4769 = vsel %vm1122, %v4333, 0
      %v4772 = vsel %vm1122, %v4341, 0
      %v4775 = vsel %vm1122, %v4349, 0
      %v4778 = vsel %vm1122, %v4357, 0
      %v4781 = vsel %vm1122, %v4365, 0
      %v4784 = vsel %vm1122, %v4373, 0
      %v4787 = vsel %vm1122, %v4381, 0
      %v4790 = vsel %vm1122, %v4389, 0
      %v4793 = vsel %vm1122, %v4397, 0
      %v4796 = vsel %vm1122, %v4405, 0
      %v4799 = vsel %vm1122, %v4413, 0
      %v4802 = vsel %vm1122, %v4421, 0
      %v4805 = vsel %vm1122, %v4429, 0
      %v4808 = vsel %vm1122, %v4437, 0
      %v4811 = vsel %vm1122, %v4445, 0
      %v4814 = vsel %vm1122, %v4453, 0
      %v4817 = vsel %vm1122, %v4461, 0
      %v4820 = vsel %vm1122, %v4469, 0
      %v4823 = vsel %vm1122, %v4477, 0
      %v4826 = vsel %vm1122, %v4485, 0
      %v4829 = vsel %vm1122, %v4493, 0
      %v4832 = vsel %vm1122, %v4501, 0
      %v4835 = vsel %vm1122, %v4509, 0
      %v4838 = vsel %vm1122, %v4517, 0
      %v4841 = vsel %vm1122, %v4525, 0
      %v4844 = vsel %vm1122, %v4533, 0
      %v4847 = vsel %vm1122, %v4541, 0
      %v4850 = vsel %vm1122, %v4549, 0
      %v4853 = vsel %vm1122, %v4557, 0
      %v4856 = vsel %vm1122, %v4565, 0
      %v4859 = vsel %vm1122, %v4573, 0
      %v4862 = vsel %vm1122, %v4581, 0
      %v4865 = vsel %vm1122, %v4589, 0
      %v4868 = vsel %vm1122, %v4597, 0
      %v4871 = vsel %vm1122, %v4605, 0
      %v4874 = vsel %vm1122, %v4613, 0
      %v4877 = vsel %vm1122, %v4621, 0
      %v4880 = vsel %vm1122, %v4629, 0
      %v4883 = vsel %vm1122, %v4637, 0
      %v4886 = vsel %vm1122, %v4645, 0
      %v4889 = vsel %vm1122, %v4653, 0
      %v4892 = vsel %vm1122, %v4661, 0
      %v4895 = vsel %vm1122, %v4669, 0
      %v4898 = vsel %vm1122, %v4677, 0
      %v4901 = vsel %vm1122, %v4685, 0
      %v4904 = vsel %vm1122, %v4693, 0
      %v4907 = vsel %vm1122, %v4701, 0
      %v4910 = vsel %vm1122, %v4709, 0
      %v4913 = vsel %vm1122, %v4717, 0
      %v4916 = vsel %vm1122, %v4725, 0
      %v4919 = vsel %vm1309, %v4731, 0
      %4921 = vmatprep.subr.bf16.mxu0 0
      %4922 = vmatpush1.bf16.msra.mxu0 0
      %4923 = vmatprep.subr.bf16.mxu0 0
      %4924 = vmatpush1.bf16.msra.mxu0 0
      %4925 = vmatprep.subr.bf16.mxu0 0
      %4926 = vmatpush1.bf16.msra.mxu0 0
      %4927 = vmatprep.subr.bf16.mxu0 0
      %4928 = vmatpush1.bf16.msra.mxu0 0
      %4929 = vmatprep.subr.bf16.mxu0 0
      %4930 = vmatpush1.bf16.msra.mxu0 0
      %4931 = vmatprep.subr.bf16.mxu0 0
      %4932 = vmatpush1.bf16.msra.mxu0 0
      %4933 = vmatprep.subr.bf16.mxu0 0
      %4934 = vmatpush1.bf16.msra.mxu0 0
      %4935 = vmatprep.subr.bf16.mxu0 0
      %4936 = vmatpush1.bf16.msra.mxu0 %v4919
      %4937 = vmatprep.subr.bf16.mxu0 0
      %4938 = vmatpush2.bf16.msra.mxu0 0
      %4939 = vmatprep.subr.bf16.mxu0 0
      %4940 = vmatpush2.bf16.msra.mxu0 0
      %4941 = vmatprep.subr.bf16.mxu0 0
      %4942 = vmatpush2.bf16.msra.mxu0 0
      %4943 = vmatprep.subr.bf16.mxu0 0
      %4944 = vmatpush2.bf16.msra.mxu0 0
      %4945 = vmatprep.subr.bf16.mxu0 0
      %4946 = vmatpush2.bf16.msra.mxu0 0
      %4947 = vmatprep.subr.bf16.mxu0 0
      %4948 = vmatpush2.bf16.msra.mxu0 0
      %4949 = vmatprep.subr.bf16.mxu0 0
      %4950 = vmatpush2.bf16.msra.mxu0 0
      %4951 = vmatprep.subr.bf16.mxu0 0
      %4952 = vmatpush2.bf16.msra.mxu0 0
      %4953 = vmatprep.mubr.bf16.mxu0 0
      %4954 = vmatmul.mubr.bf16.gmra.mxu0 %v4733
      %v4955 = vpop.f32.mrf.mxu0
      %v4956 = vadd.f32 0.0, %v4955
      %v4957 = vpop.f32.mrf.mxu0
      %v4958 = vpop.f32.mrf.mxu0
      %v4959 = vadd.f32 0.0, %v4958
      %v4960 = vpop.f32.mrf.mxu0
      %4961 = vmatprep.mubr.bf16.mxu0 0
      %4962 = vmatmul.mubr.bf16.gmra.mxu0 %v4736
      %v4963 = vpop.f32.mrf.mxu0
      %v4964 = vadd.f32 0.0, %v4963
      %v4965 = vpop.f32.mrf.mxu0
      %v4966 = vpop.f32.mrf.mxu0
      %v4967 = vadd.f32 0.0, %v4966
      %v4968 = vpop.f32.mrf.mxu0
      %4969 = vmatprep.mubr.bf16.mxu0 0
      %4970 = vmatmul.mubr.bf16.gmra.mxu0 %v4739
      %v4971 = vpop.f32.mrf.mxu0
      %v4972 = vadd.f32 0.0, %v4971
      %v4973 = vpop.f32.mrf.mxu0
      %v4974 = vpop.f32.mrf.mxu0
      %v4975 = vadd.f32 0.0, %v4974
      %v4976 = vpop.f32.mrf.mxu0
      %4977 = vmatprep.mubr.bf16.mxu0 0
      %4978 = vmatmul.mubr.bf16.gmra.mxu0 %v4742
      %v4979 = vpop.f32.mrf.mxu0
      %v4980 = vadd.f32 0.0, %v4979
      %v4981 = vpop.f32.mrf.mxu0
      %v4982 = vpop.f32.mrf.mxu0
      %v4983 = vadd.f32 0.0, %v4982
      %v4984 = vpop.f32.mrf.mxu0
      %4985 = vmatprep.mubr.bf16.mxu0 0
      %4986 = vmatmul.mubr.bf16.gmra.mxu0 %v4745
      %v4987 = vpop.f32.mrf.mxu0
      %v4988 = vadd.f32 0.0, %v4987
      %v4989 = vpop.f32.mrf.mxu0
      %v4990 = vpop.f32.mrf.mxu0
      %v4991 = vadd.f32 0.0, %v4990
      %v4992 = vpop.f32.mrf.mxu0
      %4993 = vmatprep.mubr.bf16.mxu0 0
      %4994 = vmatmul.mubr.bf16.gmra.mxu0 %v4748
      %v4995 = vpop.f32.mrf.mxu0
      %v4996 = vadd.f32 0.0, %v4995
      %v4997 = vpop.f32.mrf.mxu0
      %v4998 = vpop.f32.mrf.mxu0
      %v4999 = vadd.f32 0.0, %v4998
      %v5000 = vpop.f32.mrf.mxu0
      %5001 = vmatprep.mubr.bf16.mxu0 0
      %5002 = vmatmul.mubr.bf16.gmra.mxu0 %v4751
      %v5003 = vpop.f32.mrf.mxu0
      %v5004 = vadd.f32 0.0, %v5003
      %v5005 = vpop.f32.mrf.mxu0
      %v5006 = vpop.f32.mrf.mxu0
      %v5007 = vadd.f32 0.0, %v5006
      %v5008 = vpop.f32.mrf.mxu0
      %5009 = vmatprep.mubr.bf16.mxu0 0
      %5010 = vmatmul.mubr.bf16.gmra.mxu0 %v4754
      %v5011 = vpop.f32.mrf.mxu0
      %v5012 = vadd.f32 0.0, %v5011
      %v5013 = vpop.f32.mrf.mxu0
      %v5014 = vpop.f32.mrf.mxu0
      %v5015 = vadd.f32 0.0, %v5014
      %v5016 = vpop.f32.mrf.mxu0
      %5017 = vmatprep.mubr.bf16.mxu0 0
      %5018 = vmatmul.mubr.bf16.gmra.mxu0 %v4757
      %v5019 = vpop.f32.mrf.mxu0
      %v5020 = vadd.f32 0.0, %v5019
      %v5021 = vpop.f32.mrf.mxu0
      %v5022 = vpop.f32.mrf.mxu0
      %v5023 = vadd.f32 0.0, %v5022
      %v5024 = vpop.f32.mrf.mxu0
      %5025 = vmatprep.mubr.bf16.mxu0 0
      %5026 = vmatmul.mubr.bf16.gmra.mxu0 %v4760
      %v5027 = vpop.f32.mrf.mxu0
      %v5028 = vadd.f32 0.0, %v5027
      %v5029 = vpop.f32.mrf.mxu0
      %v5030 = vpop.f32.mrf.mxu0
      %v5031 = vadd.f32 0.0, %v5030
      %v5032 = vpop.f32.mrf.mxu0
      %5033 = vmatprep.mubr.bf16.mxu0 0
      %5034 = vmatmul.mubr.bf16.gmra.mxu0 %v4763
      %v5035 = vpop.f32.mrf.mxu0
      %v5036 = vadd.f32 0.0, %v5035
      %v5037 = vpop.f32.mrf.mxu0
      %v5038 = vpop.f32.mrf.mxu0
      %v5039 = vadd.f32 0.0, %v5038
      %v5040 = vpop.f32.mrf.mxu0
      %5041 = vmatprep.mubr.bf16.mxu0 0
      %5042 = vmatmul.mubr.bf16.gmra.mxu0 %v4766
      %v5043 = vpop.f32.mrf.mxu0
      %v5044 = vadd.f32 0.0, %v5043
      %v5045 = vpop.f32.mrf.mxu0
      %v5046 = vpop.f32.mrf.mxu0
      %v5047 = vadd.f32 0.0, %v5046
      %v5048 = vpop.f32.mrf.mxu0
      %5049 = vmatprep.mubr.bf16.mxu0 0
      %5050 = vmatmul.mubr.bf16.gmra.mxu0 %v4769
      %v5051 = vpop.f32.mrf.mxu0
      %v5052 = vadd.f32 0.0, %v5051
      %v5053 = vpop.f32.mrf.mxu0
      %v5054 = vpop.f32.mrf.mxu0
      %v5055 = vadd.f32 0.0, %v5054
      %v5056 = vpop.f32.mrf.mxu0
      %5057 = vmatprep.mubr.bf16.mxu0 0
      %5058 = vmatmul.mubr.bf16.gmra.mxu0 %v4772
      %v5059 = vpop.f32.mrf.mxu0
      %v5060 = vadd.f32 0.0, %v5059
      %v5061 = vpop.f32.mrf.mxu0
      %v5062 = vpop.f32.mrf.mxu0
      %v5063 = vadd.f32 0.0, %v5062
      %v5064 = vpop.f32.mrf.mxu0
      %5065 = vmatprep.mubr.bf16.mxu0 0
      %5066 = vmatmul.mubr.bf16.gmra.mxu0 %v4775
      %v5067 = vpop.f32.mrf.mxu0
      %v5068 = vadd.f32 0.0, %v5067
      %v5069 = vpop.f32.mrf.mxu0
      %v5070 = vpop.f32.mrf.mxu0
      %v5071 = vadd.f32 0.0, %v5070
      %v5072 = vpop.f32.mrf.mxu0
      %5073 = vmatprep.mubr.bf16.mxu0 0
      %5074 = vmatmul.mubr.bf16.gmra.mxu0 %v4778
      %v5075 = vpop.f32.mrf.mxu0
      %v5076 = vadd.f32 0.0, %v5075
      %v5077 = vpop.f32.mrf.mxu0
      %v5078 = vpop.f32.mrf.mxu0
      %v5079 = vadd.f32 0.0, %v5078
      %v5080 = vpop.f32.mrf.mxu0
      %5081 = vmatprep.mubr.bf16.mxu0 0
      %5082 = vmatmul.mubr.bf16.gmra.mxu0 %v4781
      %v5083 = vpop.f32.mrf.mxu0
      %v5084 = vadd.f32 0.0, %v5083
      %v5085 = vpop.f32.mrf.mxu0
      %v5086 = vpop.f32.mrf.mxu0
      %v5087 = vadd.f32 0.0, %v5086
      %v5088 = vpop.f32.mrf.mxu0
      %5089 = vmatprep.mubr.bf16.mxu0 0
      %5090 = vmatmul.mubr.bf16.gmra.mxu0 %v4784
      %v5091 = vpop.f32.mrf.mxu0
      %v5092 = vadd.f32 0.0, %v5091
      %v5093 = vpop.f32.mrf.mxu0
      %v5094 = vpop.f32.mrf.mxu0
      %v5095 = vadd.f32 0.0, %v5094
      %v5096 = vpop.f32.mrf.mxu0
      %5097 = vmatprep.mubr.bf16.mxu0 0
      %5098 = vmatmul.mubr.bf16.gmra.mxu0 %v4787
      %v5099 = vpop.f32.mrf.mxu0
      %v5100 = vadd.f32 0.0, %v5099
      %v5101 = vpop.f32.mrf.mxu0
      %v5102 = vpop.f32.mrf.mxu0
      %v5103 = vadd.f32 0.0, %v5102
      %v5104 = vpop.f32.mrf.mxu0
      %5105 = vmatprep.mubr.bf16.mxu0 0
      %5106 = vmatmul.mubr.bf16.gmra.mxu0 %v4790
      %v5107 = vpop.f32.mrf.mxu0
      %v5108 = vadd.f32 0.0, %v5107
      %v5109 = vpop.f32.mrf.mxu0
      %v5110 = vpop.f32.mrf.mxu0
      %v5111 = vadd.f32 0.0, %v5110
      %v5112 = vpop.f32.mrf.mxu0
      %5113 = vmatprep.mubr.bf16.mxu0 0
      %5114 = vmatmul.mubr.bf16.gmra.mxu0 %v4793
      %v5115 = vpop.f32.mrf.mxu0
      %v5116 = vadd.f32 0.0, %v5115
      %v5117 = vpop.f32.mrf.mxu0
      %v5118 = vpop.f32.mrf.mxu0
      %v5119 = vadd.f32 0.0, %v5118
      %v5120 = vpop.f32.mrf.mxu0
      %5121 = vmatprep.mubr.bf16.mxu0 0
      %5122 = vmatmul.mubr.bf16.gmra.mxu0 %v4796
      %v5123 = vpop.f32.mrf.mxu0
      %v5124 = vadd.f32 0.0, %v5123
      %v5125 = vpop.f32.mrf.mxu0
      %v5126 = vpop.f32.mrf.mxu0
      %v5127 = vadd.f32 0.0, %v5126
      %v5128 = vpop.f32.mrf.mxu0
      %5129 = vmatprep.mubr.bf16.mxu0 0
      %5130 = vmatmul.mubr.bf16.gmra.mxu0 %v4799
      %v5131 = vpop.f32.mrf.mxu0
      %v5132 = vadd.f32 0.0, %v5131
      %v5133 = vpop.f32.mrf.mxu0
      %v5134 = vpop.f32.mrf.mxu0
      %v5135 = vadd.f32 0.0, %v5134
      %v5136 = vpop.f32.mrf.mxu0
      %5137 = vmatprep.mubr.bf16.mxu0 0
      %5138 = vmatmul.mubr.bf16.gmra.mxu0 %v4802
      %v5139 = vpop.f32.mrf.mxu0
      %v5140 = vadd.f32 0.0, %v5139
      %v5141 = vpop.f32.mrf.mxu0
      %v5142 = vpop.f32.mrf.mxu0
      %v5143 = vadd.f32 0.0, %v5142
      %v5144 = vpop.f32.mrf.mxu0
      %5145 = vmatprep.mubr.bf16.mxu0 0
      %5146 = vmatmul.mubr.bf16.gmra.mxu0 %v4805
      %v5147 = vpop.f32.mrf.mxu0
      %v5148 = vadd.f32 0.0, %v5147
      %v5149 = vpop.f32.mrf.mxu0
      %v5150 = vpop.f32.mrf.mxu0
      %v5151 = vadd.f32 0.0, %v5150
      %v5152 = vpop.f32.mrf.mxu0
      %5153 = vmatprep.mubr.bf16.mxu0 0
      %5154 = vmatmul.mubr.bf16.gmra.mxu0 %v4808
      %v5155 = vpop.f32.mrf.mxu0
      %v5156 = vadd.f32 0.0, %v5155
      %v5157 = vpop.f32.mrf.mxu0
      %v5158 = vpop.f32.mrf.mxu0
      %v5159 = vadd.f32 0.0, %v5158
      %v5160 = vpop.f32.mrf.mxu0
      %5161 = vmatprep.mubr.bf16.mxu0 0
      %5162 = vmatmul.mubr.bf16.gmra.mxu0 %v4811
      %v5163 = vpop.f32.mrf.mxu0
      %v5164 = vadd.f32 0.0, %v5163
      %v5165 = vpop.f32.mrf.mxu0
      %v5166 = vpop.f32.mrf.mxu0
      %v5167 = vadd.f32 0.0, %v5166
      %v5168 = vpop.f32.mrf.mxu0
      %5169 = vmatprep.mubr.bf16.mxu0 0
      %5170 = vmatmul.mubr.bf16.gmra.mxu0 %v4814
      %v5171 = vpop.f32.mrf.mxu0
      %v5172 = vadd.f32 0.0, %v5171
      %v5173 = vpop.f32.mrf.mxu0
      %v5174 = vpop.f32.mrf.mxu0
      %v5175 = vadd.f32 0.0, %v5174
      %v5176 = vpop.f32.mrf.mxu0
      %5177 = vmatprep.mubr.bf16.mxu0 0
      %5178 = vmatmul.mubr.bf16.gmra.mxu0 %v4817
      %v5179 = vpop.f32.mrf.mxu0
      %v5180 = vadd.f32 0.0, %v5179
      %v5181 = vpop.f32.mrf.mxu0
      %v5182 = vpop.f32.mrf.mxu0
      %v5183 = vadd.f32 0.0, %v5182
      %v5184 = vpop.f32.mrf.mxu0
      %5185 = vmatprep.mubr.bf16.mxu0 0
      %5186 = vmatmul.mubr.bf16.gmra.mxu0 %v4820
      %v5187 = vpop.f32.mrf.mxu0
      %v5188 = vadd.f32 0.0, %v5187
      %v5189 = vpop.f32.mrf.mxu0
      %v5190 = vpop.f32.mrf.mxu0
      %v5191 = vadd.f32 0.0, %v5190
      %v5192 = vpop.f32.mrf.mxu0
      %5193 = vmatprep.mubr.bf16.mxu0 0
      %5194 = vmatmul.mubr.bf16.gmra.mxu0 %v4823
      %v5195 = vpop.f32.mrf.mxu0
      %v5196 = vadd.f32 0.0, %v5195
      %v5197 = vpop.f32.mrf.mxu0
      %v5198 = vpop.f32.mrf.mxu0
      %v5199 = vadd.f32 0.0, %v5198
      %v5200 = vpop.f32.mrf.mxu0
      %5201 = vmatprep.mubr.bf16.mxu0 0
      %5202 = vmatmul.mubr.bf16.gmra.mxu0 %v4826
      %v5203 = vpop.f32.mrf.mxu0
      %v5204 = vadd.f32 0.0, %v5203
      %v5205 = vpop.f32.mrf.mxu0
      %v5206 = vpop.f32.mrf.mxu0
      %v5207 = vadd.f32 0.0, %v5206
      %v5208 = vpop.f32.mrf.mxu0
      %5209 = vmatprep.mubr.bf16.mxu0 0
      %5210 = vmatmul.mubr.bf16.gmra.mxu0 %v4829
      %v5211 = vpop.f32.mrf.mxu0
      %v5212 = vadd.f32 0.0, %v5211
      %v5213 = vpop.f32.mrf.mxu0
      %v5214 = vpop.f32.mrf.mxu0
      %v5215 = vadd.f32 0.0, %v5214
      %v5216 = vpop.f32.mrf.mxu0
      %5217 = vmatprep.mubr.bf16.mxu0 0
      %5218 = vmatmul.mubr.bf16.gmra.mxu0 %v4832
      %v5219 = vpop.f32.mrf.mxu0
      %v5220 = vadd.f32 0.0, %v5219
      %v5221 = vpop.f32.mrf.mxu0
      %v5222 = vpop.f32.mrf.mxu0
      %v5223 = vadd.f32 0.0, %v5222
      %v5224 = vpop.f32.mrf.mxu0
      %5225 = vmatprep.mubr.bf16.mxu0 0
      %5226 = vmatmul.mubr.bf16.gmra.mxu0 %v4835
      %v5227 = vpop.f32.mrf.mxu0
      %v5228 = vadd.f32 0.0, %v5227
      %v5229 = vpop.f32.mrf.mxu0
      %v5230 = vpop.f32.mrf.mxu0
      %v5231 = vadd.f32 0.0, %v5230
      %v5232 = vpop.f32.mrf.mxu0
      %5233 = vmatprep.mubr.bf16.mxu0 0
      %5234 = vmatmul.mubr.bf16.gmra.mxu0 %v4838
      %v5235 = vpop.f32.mrf.mxu0
      %v5236 = vadd.f32 0.0, %v5235
      %v5237 = vpop.f32.mrf.mxu0
      %v5238 = vpop.f32.mrf.mxu0
      %v5239 = vadd.f32 0.0, %v5238
      %v5240 = vpop.f32.mrf.mxu0
      %5241 = vmatprep.mubr.bf16.mxu0 0
      %5242 = vmatmul.mubr.bf16.gmra.mxu0 %v4841
      %v5243 = vpop.f32.mrf.mxu0
      %v5244 = vadd.f32 0.0, %v5243
      %v5245 = vpop.f32.mrf.mxu0
      %v5246 = vpop.f32.mrf.mxu0
      %v5247 = vadd.f32 0.0, %v5246
      %v5248 = vpop.f32.mrf.mxu0
      %5249 = vmatprep.mubr.bf16.mxu0 0
      %5250 = vmatmul.mubr.bf16.gmra.mxu0 %v4844
      %v5251 = vpop.f32.mrf.mxu0
      %v5252 = vadd.f32 0.0, %v5251
      %v5253 = vpop.f32.mrf.mxu0
      %v5254 = vpop.f32.mrf.mxu0
      %v5255 = vadd.f32 0.0, %v5254
      %v5256 = vpop.f32.mrf.mxu0
      %5257 = vmatprep.mubr.bf16.mxu0 0
      %5258 = vmatmul.mubr.bf16.gmra.mxu0 %v4847
      %v5259 = vpop.f32.mrf.mxu0
      %v5260 = vadd.f32 0.0, %v5259
      %v5261 = vpop.f32.mrf.mxu0
      %v5262 = vpop.f32.mrf.mxu0
      %v5263 = vadd.f32 0.0, %v5262
      %v5264 = vpop.f32.mrf.mxu0
      %5265 = vmatprep.mubr.bf16.mxu0 0
      %5266 = vmatmul.mubr.bf16.gmra.mxu0 %v4850
      %v5267 = vpop.f32.mrf.mxu0
      %v5268 = vadd.f32 0.0, %v5267
      %v5269 = vpop.f32.mrf.mxu0
      %v5270 = vpop.f32.mrf.mxu0
      %v5271 = vadd.f32 0.0, %v5270
      %v5272 = vpop.f32.mrf.mxu0
      %5273 = vmatprep.mubr.bf16.mxu0 0
      %5274 = vmatmul.mubr.bf16.gmra.mxu0 %v4853
      %v5275 = vpop.f32.mrf.mxu0
      %v5276 = vadd.f32 0.0, %v5275
      %v5277 = vpop.f32.mrf.mxu0
      %v5278 = vpop.f32.mrf.mxu0
      %v5279 = vadd.f32 0.0, %v5278
      %v5280 = vpop.f32.mrf.mxu0
      %5281 = vmatprep.mubr.bf16.mxu0 0
      %5282 = vmatmul.mubr.bf16.gmra.mxu0 %v4856
      %v5283 = vpop.f32.mrf.mxu0
      %v5284 = vadd.f32 0.0, %v5283
      %v5285 = vpop.f32.mrf.mxu0
      %v5286 = vpop.f32.mrf.mxu0
      %v5287 = vadd.f32 0.0, %v5286
      %v5288 = vpop.f32.mrf.mxu0
      %5289 = vmatprep.mubr.bf16.mxu0 0
      %5290 = vmatmul.mubr.bf16.gmra.mxu0 %v4859
      %v5291 = vpop.f32.mrf.mxu0
      %v5292 = vadd.f32 0.0, %v5291
      %v5293 = vpop.f32.mrf.mxu0
      %v5294 = vpop.f32.mrf.mxu0
      %v5295 = vadd.f32 0.0, %v5294
      %v5296 = vpop.f32.mrf.mxu0
      %5297 = vmatprep.mubr.bf16.mxu0 0
      %5298 = vmatmul.mubr.bf16.gmra.mxu0 %v4862
      %v5299 = vpop.f32.mrf.mxu0
      %v5300 = vadd.f32 0.0, %v5299
      %v5301 = vpop.f32.mrf.mxu0
      %v5302 = vpop.f32.mrf.mxu0
      %v5303 = vadd.f32 0.0, %v5302
      %v5304 = vpop.f32.mrf.mxu0
      %5305 = vmatprep.mubr.bf16.mxu0 0
      %5306 = vmatmul.mubr.bf16.gmra.mxu0 %v4865
      %v5307 = vpop.f32.mrf.mxu0
      %v5308 = vadd.f32 0.0, %v5307
      %v5309 = vpop.f32.mrf.mxu0
      %v5310 = vpop.f32.mrf.mxu0
      %v5311 = vadd.f32 0.0, %v5310
      %v5312 = vpop.f32.mrf.mxu0
      %5313 = vmatprep.mubr.bf16.mxu0 0
      %5314 = vmatmul.mubr.bf16.gmra.mxu0 %v4868
      %v5315 = vpop.f32.mrf.mxu0
      %v5316 = vadd.f32 0.0, %v5315
      %v5317 = vpop.f32.mrf.mxu0
      %v5318 = vpop.f32.mrf.mxu0
      %v5319 = vadd.f32 0.0, %v5318
      %v5320 = vpop.f32.mrf.mxu0
      %5321 = vmatprep.mubr.bf16.mxu0 0
      %5322 = vmatmul.mubr.bf16.gmra.mxu0 %v4871
      %v5323 = vpop.f32.mrf.mxu0
      %v5324 = vadd.f32 0.0, %v5323
      %v5325 = vpop.f32.mrf.mxu0
      %v5326 = vpop.f32.mrf.mxu0
      %v5327 = vadd.f32 0.0, %v5326
      %v5328 = vpop.f32.mrf.mxu0
      %5329 = vmatprep.mubr.bf16.mxu0 0
      %5330 = vmatmul.mubr.bf16.gmra.mxu0 %v4874
      %v5331 = vpop.f32.mrf.mxu0
      %v5332 = vadd.f32 0.0, %v5331
      %v5333 = vpop.f32.mrf.mxu0
      %v5334 = vpop.f32.mrf.mxu0
      %v5335 = vadd.f32 0.0, %v5334
      %v5336 = vpop.f32.mrf.mxu0
      %5337 = vmatprep.mubr.bf16.mxu0 0
      %5338 = vmatmul.mubr.bf16.gmra.mxu0 %v4877
      %v5339 = vpop.f32.mrf.mxu0
      %v5340 = vadd.f32 0.0, %v5339
      %v5341 = vpop.f32.mrf.mxu0
      %v5342 = vpop.f32.mrf.mxu0
      %v5343 = vadd.f32 0.0, %v5342
      %v5344 = vpop.f32.mrf.mxu0
      %5345 = vmatprep.mubr.bf16.mxu0 0
      %5346 = vmatmul.mubr.bf16.gmra.mxu0 %v4880
      %v5347 = vpop.f32.mrf.mxu0
      %v5348 = vadd.f32 0.0, %v5347
      %v5349 = vpop.f32.mrf.mxu0
      %v5350 = vpop.f32.mrf.mxu0
      %v5351 = vadd.f32 0.0, %v5350
      %v5352 = vpop.f32.mrf.mxu0
      %5353 = vmatprep.mubr.bf16.mxu0 0
      %5354 = vmatmul.mubr.bf16.gmra.mxu0 %v4883
      %v5355 = vpop.f32.mrf.mxu0
      %v5356 = vadd.f32 0.0, %v5355
      %v5357 = vpop.f32.mrf.mxu0
      %v5358 = vpop.f32.mrf.mxu0
      %v5359 = vadd.f32 0.0, %v5358
      %v5360 = vpop.f32.mrf.mxu0
      %5361 = vmatprep.mubr.bf16.mxu0 0
      %5362 = vmatmul.mubr.bf16.gmra.mxu0 %v4886
      %v5363 = vpop.f32.mrf.mxu0
      %v5364 = vadd.f32 0.0, %v5363
      %v5365 = vpop.f32.mrf.mxu0
      %v5366 = vpop.f32.mrf.mxu0
      %v5367 = vadd.f32 0.0, %v5366
      %v5368 = vpop.f32.mrf.mxu0
      %5369 = vmatprep.mubr.bf16.mxu0 0
      %5370 = vmatmul.mubr.bf16.gmra.mxu0 %v4889
      %v5371 = vpop.f32.mrf.mxu0
      %v5372 = vadd.f32 0.0, %v5371
      %v5373 = vpop.f32.mrf.mxu0
      %v5374 = vpop.f32.mrf.mxu0
      %v5375 = vadd.f32 0.0, %v5374
      %v5376 = vpop.f32.mrf.mxu0
      %5377 = vmatprep.mubr.bf16.mxu0 0
      %5378 = vmatmul.mubr.bf16.gmra.mxu0 %v4892
      %v5379 = vpop.f32.mrf.mxu0
      %v5380 = vadd.f32 0.0, %v5379
      %v5381 = vpop.f32.mrf.mxu0
      %v5382 = vpop.f32.mrf.mxu0
      %v5383 = vadd.f32 0.0, %v5382
      %v5384 = vpop.f32.mrf.mxu0
      %5385 = vmatprep.mubr.bf16.mxu0 0
      %5386 = vmatmul.mubr.bf16.gmra.mxu0 %v4895
      %v5387 = vpop.f32.mrf.mxu0
      %v5388 = vadd.f32 0.0, %v5387
      %v5389 = vpop.f32.mrf.mxu0
      %v5390 = vpop.f32.mrf.mxu0
      %v5391 = vadd.f32 0.0, %v5390
      %v5392 = vpop.f32.mrf.mxu0
      %5393 = vmatprep.mubr.bf16.mxu0 0
      %5394 = vmatmul.mubr.bf16.gmra.mxu0 %v4898
      %v5395 = vpop.f32.mrf.mxu0
      %v5396 = vadd.f32 0.0, %v5395
      %v5397 = vpop.f32.mrf.mxu0
      %v5398 = vpop.f32.mrf.mxu0
      %v5399 = vadd.f32 0.0, %v5398
      %v5400 = vpop.f32.mrf.mxu0
      %5401 = vmatprep.mubr.bf16.mxu0 0
      %5402 = vmatmul.mubr.bf16.gmra.mxu0 %v4901
      %v5403 = vpop.f32.mrf.mxu0
      %v5404 = vadd.f32 0.0, %v5403
      %v5405 = vpop.f32.mrf.mxu0
      %v5406 = vpop.f32.mrf.mxu0
      %v5407 = vadd.f32 0.0, %v5406
      %v5408 = vpop.f32.mrf.mxu0
      %5409 = vmatprep.mubr.bf16.mxu0 0
      %5410 = vmatmul.mubr.bf16.gmra.mxu0 %v4904
      %v5411 = vpop.f32.mrf.mxu0
      %v5412 = vadd.f32 0.0, %v5411
      %v5413 = vpop.f32.mrf.mxu0
      %v5414 = vpop.f32.mrf.mxu0
      %v5415 = vadd.f32 0.0, %v5414
      %v5416 = vpop.f32.mrf.mxu0
      %5417 = vmatprep.mubr.bf16.mxu0 0
      %5418 = vmatmul.mubr.bf16.gmra.mxu0 %v4907
      %v5419 = vpop.f32.mrf.mxu0
      %v5420 = vadd.f32 0.0, %v5419
      %v5421 = vpop.f32.mrf.mxu0
      %v5422 = vpop.f32.mrf.mxu0
      %v5423 = vadd.f32 0.0, %v5422
      %v5424 = vpop.f32.mrf.mxu0
      %5425 = vmatprep.mubr.bf16.mxu0 0
      %5426 = vmatmul.mubr.bf16.gmra.mxu0 %v4910
      %v5427 = vpop.f32.mrf.mxu0
      %v5428 = vadd.f32 0.0, %v5427
      %v5429 = vpop.f32.mrf.mxu0
      %v5430 = vpop.f32.mrf.mxu0
      %v5431 = vadd.f32 0.0, %v5430
      %v5432 = vpop.f32.mrf.mxu0
      %5433 = vmatprep.mubr.bf16.mxu0 0
      %5434 = vmatmul.mubr.bf16.gmra.mxu0 %v4913
      %v5435 = vpop.f32.mrf.mxu0
      %v5436 = vadd.f32 0.0, %v5435
      %v5437 = vpop.f32.mrf.mxu0
      %v5438 = vpop.f32.mrf.mxu0
      %v5439 = vadd.f32 0.0, %v5438
      %v5440 = vpop.f32.mrf.mxu0
      %5441 = vmatprep.mubr.bf16.mxu0 0
      %5442 = vmatmul.mubr.bf16.gmra.mxu0 %v4916
      %v5443 = vpop.f32.mrf.mxu0
      %v5444 = vadd.f32 0.0, %v5443
      %v5445 = vpop.f32.mrf.mxu0
      %v5446 = vpop.f32.mrf.mxu0
      %v5447 = vadd.f32 0.0, %v5446
      %v5448 = vpop.f32.mrf.mxu0
      %5449 = vdwg.mxu0
      %v5450 = vadd.f32 %v3662, %v4956
      %v5451 = vadd.f32 %v3663, %v4959
      %v5452 = vadd.f32 %v3664, %v4964
      %v5453 = vadd.f32 %v3665, %v4967
      %v5454 = vadd.f32 %v3666, %v4972
      %v5455 = vadd.f32 %v3667, %v4975
      %v5456 = vadd.f32 %v3668, %v4980
      %v5457 = vadd.f32 %v3669, %v4983
      %v5458 = vadd.f32 %v3670, %v4988
      %v5459 = vadd.f32 %v3671, %v4991
      %v5460 = vadd.f32 %v3672, %v4996
      %v5461 = vadd.f32 %v3673, %v4999
      %v5462 = vadd.f32 %v3674, %v5004
      %v5463 = vadd.f32 %v3675, %v5007
      %v5464 = vadd.f32 %v3676, %v5012
      %v5465 = vadd.f32 %v3677, %v5015
      %v5466 = vadd.f32 %v3678, %v5020
      %v5467 = vadd.f32 %v3679, %v5023
      %v5468 = vadd.f32 %v3680, %v5028
      %v5469 = vadd.f32 %v3681, %v5031
      %v5470 = vadd.f32 %v3682, %v5036
      %v5471 = vadd.f32 %v3683, %v5039
      %v5472 = vadd.f32 %v3684, %v5044
      %v5473 = vadd.f32 %v3685, %v5047
      %v5474 = vadd.f32 %v3686, %v5052
      %v5475 = vadd.f32 %v3687, %v5055
      %v5476 = vadd.f32 %v3688, %v5060
      %v5477 = vadd.f32 %v3689, %v5063
      %v5478 = vadd.f32 %v3690, %v5068
      %v5479 = vadd.f32 %v3691, %v5071
      %v5480 = vadd.f32 %v3692, %v5076
      %v5481 = vadd.f32 %v3693, %v5079
      %v5482 = vadd.f32 %v3694, %v5084
      %v5483 = vadd.f32 %v3695, %v5087
      %v5484 = vadd.f32 %v3696, %v5092
      %v5485 = vadd.f32 %v3697, %v5095
      %v5486 = vadd.f32 %v3698, %v5100
      %v5487 = vadd.f32 %v3699, %v5103
      %v5488 = vadd.f32 %v3700, %v5108
      %v5489 = vadd.f32 %v3701, %v5111
      %v5490 = vadd.f32 %v3702, %v5116
      %v5491 = vadd.f32 %v3703, %v5119
      %v5492 = vadd.f32 %v3704, %v5124
      %v5493 = vadd.f32 %v3705, %v5127
      %v5494 = vadd.f32 %v3706, %v5132
      %v5495 = vadd.f32 %v3707, %v5135
      %v5496 = vadd.f32 %v3708, %v5140
      %v5497 = vadd.f32 %v3709, %v5143
      %v5498 = vadd.f32 %v3710, %v5148
      %v5499 = vadd.f32 %v3711, %v5151
      %v5500 = vadd.f32 %v3712, %v5156
      %v5501 = vadd.f32 %v3713, %v5159
      %v5502 = vadd.f32 %v3714, %v5164
      %v5503 = vadd.f32 %v3715, %v5167
      %v5504 = vadd.f32 %v3716, %v5172
      %v5505 = vadd.f32 %v3717, %v5175
      %v5506 = vadd.f32 %v3718, %v5180
      %v5507 = vadd.f32 %v3719, %v5183
      %v5508 = vadd.f32 %v3720, %v5188
      %v5509 = vadd.f32 %v3721, %v5191
      %v5510 = vadd.f32 %v3722, %v5196
      %v5511 = vadd.f32 %v3723, %v5199
      %v5512 = vadd.f32 %v3724, %v5204
      %v5513 = vadd.f32 %v3725, %v5207
      %v5514 = vadd.f32 %v3726, %v5212
      %v5515 = vadd.f32 %v3727, %v5215
      %v5516 = vadd.f32 %v3728, %v5220
      %v5517 = vadd.f32 %v3729, %v5223
      %v5518 = vadd.f32 %v3730, %v5228
      %v5519 = vadd.f32 %v3731, %v5231
      %v5520 = vadd.f32 %v3732, %v5236
      %v5521 = vadd.f32 %v3733, %v5239
      %v5522 = vadd.f32 %v3734, %v5244
      %v5523 = vadd.f32 %v3735, %v5247
      %v5524 = vadd.f32 %v3736, %v5252
      %v5525 = vadd.f32 %v3737, %v5255
      %v5526 = vadd.f32 %v3738, %v5260
      %v5527 = vadd.f32 %v3739, %v5263
      %v5528 = vadd.f32 %v3740, %v5268
      %v5529 = vadd.f32 %v3741, %v5271
      %v5530 = vadd.f32 %v3742, %v5276
      %v5531 = vadd.f32 %v3743, %v5279
      %v5532 = vadd.f32 %v3744, %v5284
      %v5533 = vadd.f32 %v3745, %v5287
      %v5534 = vadd.f32 %v3746, %v5292
      %v5535 = vadd.f32 %v3747, %v5295
      %v5536 = vadd.f32 %v3748, %v5300
      %v5537 = vadd.f32 %v3749, %v5303
      %v5538 = vadd.f32 %v3750, %v5308
      %v5539 = vadd.f32 %v3751, %v5311
      %v5540 = vadd.f32 %v3752, %v5316
      %v5541 = vadd.f32 %v3753, %v5319
      %v5542 = vadd.f32 %v3754, %v5324
      %v5543 = vadd.f32 %v3755, %v5327
      %v5544 = vadd.f32 %v3756, %v5332
      %v5545 = vadd.f32 %v3757, %v5335
      %v5546 = vadd.f32 %v3758, %v5340
      %v5547 = vadd.f32 %v3759, %v5343
      %v5548 = vadd.f32 %v3760, %v5348
      %v5549 = vadd.f32 %v3761, %v5351
      %v5550 = vadd.f32 %v3762, %v5356
      %v5551 = vadd.f32 %v3763, %v5359
      %v5552 = vadd.f32 %v3764, %v5364
      %v5553 = vadd.f32 %v3765, %v5367
      %v5554 = vadd.f32 %v3766, %v5372
      %v5555 = vadd.f32 %v3767, %v5375
      %v5556 = vadd.f32 %v3768, %v5380
      %v5557 = vadd.f32 %v3769, %v5383
      %v5558 = vadd.f32 %v3770, %v5388
      %v5559 = vadd.f32 %v3771, %v5391
      %v5560 = vadd.f32 %v3772, %v5396
      %v5561 = vadd.f32 %v3773, %v5399
      %v5562 = vadd.f32 %v3774, %v5404
      %v5563 = vadd.f32 %v3775, %v5407
      %v5564 = vadd.f32 %v3776, %v5412
      %v5565 = vadd.f32 %v3777, %v5415
      %v5566 = vadd.f32 %v3778, %v5420
      %v5567 = vadd.f32 %v3779, %v5423
      %v5568 = vadd.f32 %v3780, %v5428
      %v5569 = vadd.f32 %v3781, %v5431
      %v5570 = vadd.f32 %v3782, %v5436
      %v5571 = vadd.f32 %v3783, %v5439
      %v5572 = vadd.f32 %v3784, %v5444
      %v5573 = vadd.f32 %v3785, %v5447
      %v5575 = vlaneseq
      %v5576 = vshrl.u32 %v5575, 7
      %v5577 = vsub.s32 0, %v5576
      %v5578 = vrot.slane %v172, %v5577
      %v5580 = vadd.f32 %v5450, %v5578
      %v5581 = vadd.f32 %v5451, %v5578
      %v5582 = vadd.f32 %v5452, %v5578
      %v5583 = vadd.f32 %v5453, %v5578
      %v5584 = vadd.f32 %v5454, %v5578
      %v5585 = vadd.f32 %v5455, %v5578
      %v5586 = vadd.f32 %v5456, %v5578
      %v5587 = vadd.f32 %v5457, %v5578
      %v5588 = vadd.f32 %v5458, %v5578
      %v5589 = vadd.f32 %v5459, %v5578
      %v5590 = vadd.f32 %v5460, %v5578
      %v5591 = vadd.f32 %v5461, %v5578
      %v5592 = vadd.f32 %v5462, %v5578
      %v5593 = vadd.f32 %v5463, %v5578
      %v5594 = vadd.f32 %v5464, %v5578
      %v5595 = vadd.f32 %v5465, %v5578
      %v5596 = vadd.f32 %v5466, %v5578
      %v5597 = vadd.f32 %v5467, %v5578
      %v5598 = vadd.f32 %v5468, %v5578
      %v5599 = vadd.f32 %v5469, %v5578
      %v5600 = vadd.f32 %v5470, %v5578
      %v5601 = vadd.f32 %v5471, %v5578
      %v5602 = vadd.f32 %v5472, %v5578
      %v5603 = vadd.f32 %v5473, %v5578
      %v5604 = vadd.f32 %v5474, %v5578
      %v5605 = vadd.f32 %v5475, %v5578
      %v5606 = vadd.f32 %v5476, %v5578
      %v5607 = vadd.f32 %v5477, %v5578
      %v5608 = vadd.f32 %v5478, %v5578
      %v5609 = vadd.f32 %v5479, %v5578
      %v5610 = vadd.f32 %v5480, %v5578
      %v5611 = vadd.f32 %v5481, %v5578
      %v5612 = vadd.f32 %v5482, %v5578
      %v5613 = vadd.f32 %v5483, %v5578
      %v5614 = vadd.f32 %v5484, %v5578
      %v5615 = vadd.f32 %v5485, %v5578
      %v5616 = vadd.f32 %v5486, %v5578
      %v5617 = vadd.f32 %v5487, %v5578
      %v5618 = vadd.f32 %v5488, %v5578
      %v5619 = vadd.f32 %v5489, %v5578
      %v5620 = vadd.f32 %v5490, %v5578
      %v5621 = vadd.f32 %v5491, %v5578
      %v5622 = vadd.f32 %v5492, %v5578
      %v5623 = vadd.f32 %v5493, %v5578
      %v5624 = vadd.f32 %v5494, %v5578
      %v5625 = vadd.f32 %v5495, %v5578
      %v5626 = vadd.f32 %v5496, %v5578
      %v5627 = vadd.f32 %v5497, %v5578
      %v5628 = vadd.f32 %v5498, %v5578
      %v5629 = vadd.f32 %v5499, %v5578
      %v5630 = vadd.f32 %v5500, %v5578
      %v5631 = vadd.f32 %v5501, %v5578
      %v5632 = vadd.f32 %v5502, %v5578
      %v5633 = vadd.f32 %v5503, %v5578
      %v5634 = vadd.f32 %v5504, %v5578
      %v5635 = vadd.f32 %v5505, %v5578
      %v5636 = vadd.f32 %v5506, %v5578
      %v5637 = vadd.f32 %v5507, %v5578
      %v5638 = vadd.f32 %v5508, %v5578
      %v5639 = vadd.f32 %v5509, %v5578
      %v5640 = vadd.f32 %v5510, %v5578
      %v5641 = vadd.f32 %v5511, %v5578
      %v5642 = vadd.f32 %v5512, %v5578
      %v5643 = vadd.f32 %v5513, %v5578
      %v5644 = vadd.f32 %v5514, %v5578
      %v5645 = vadd.f32 %v5515, %v5578
      %v5646 = vadd.f32 %v5516, %v5578
      %v5647 = vadd.f32 %v5517, %v5578
      %v5648 = vadd.f32 %v5518, %v5578
      %v5649 = vadd.f32 %v5519, %v5578
      %v5650 = vadd.f32 %v5520, %v5578
      %v5651 = vadd.f32 %v5521, %v5578
      %v5652 = vadd.f32 %v5522, %v5578
      %v5653 = vadd.f32 %v5523, %v5578
      %v5654 = vadd.f32 %v5524, %v5578
      %v5655 = vadd.f32 %v5525, %v5578
      %v5656 = vadd.f32 %v5526, %v5578
      %v5657 = vadd.f32 %v5527, %v5578
      %v5658 = vadd.f32 %v5528, %v5578
      %v5659 = vadd.f32 %v5529, %v5578
      %v5660 = vadd.f32 %v5530, %v5578
      %v5661 = vadd.f32 %v5531, %v5578
      %v5662 = vadd.f32 %v5532, %v5578
      %v5663 = vadd.f32 %v5533, %v5578
      %v5664 = vadd.f32 %v5534, %v5578
      %v5665 = vadd.f32 %v5535, %v5578
      %v5666 = vadd.f32 %v5536, %v5578
      %v5667 = vadd.f32 %v5537, %v5578
      %v5668 = vadd.f32 %v5538, %v5578
      %v5669 = vadd.f32 %v5539, %v5578
      %v5670 = vadd.f32 %v5540, %v5578
      %v5671 = vadd.f32 %v5541, %v5578
      %v5672 = vadd.f32 %v5542, %v5578
      %v5673 = vadd.f32 %v5543, %v5578
      %v5674 = vadd.f32 %v5544, %v5578
      %v5675 = vadd.f32 %v5545, %v5578
      %v5676 = vadd.f32 %v5546, %v5578
      %v5677 = vadd.f32 %v5547, %v5578
      %v5678 = vadd.f32 %v5548, %v5578
      %v5679 = vadd.f32 %v5549, %v5578
      %v5680 = vadd.f32 %v5550, %v5578
      %v5681 = vadd.f32 %v5551, %v5578
      %v5682 = vadd.f32 %v5552, %v5578
      %v5683 = vadd.f32 %v5553, %v5578
      %v5684 = vadd.f32 %v5554, %v5578
      %v5685 = vadd.f32 %v5555, %v5578
      %v5686 = vadd.f32 %v5556, %v5578
      %v5687 = vadd.f32 %v5557, %v5578
      %v5688 = vadd.f32 %v5558, %v5578
      %v5689 = vadd.f32 %v5559, %v5578
      %v5690 = vadd.f32 %v5560, %v5578
      %v5691 = vadd.f32 %v5561, %v5578
      %v5692 = vadd.f32 %v5562, %v5578
      %v5693 = vadd.f32 %v5563, %v5578
      %v5694 = vadd.f32 %v5564, %v5578
      %v5695 = vadd.f32 %v5565, %v5578
      %v5696 = vadd.f32 %v5566, %v5578
      %v5697 = vadd.f32 %v5567, %v5578
      %v5698 = vadd.f32 %v5568, %v5578
      %v5699 = vadd.f32 %v5569, %v5578
      %v5700 = vadd.f32 %v5570, %v5578
      %v5701 = vadd.f32 %v5571, %v5578
      %v5702 = vadd.f32 %v5572, %v5578
      %v5703 = vadd.f32 %v5573, %v5578
      %v5704 = vmax.f32 %v5580, 0.0
      %v5705 = vmax.f32 %v5581, 0.0
      %v5706 = vmax.f32 %v5582, 0.0
      %v5707 = vmax.f32 %v5583, 0.0
      %v5708 = vmax.f32 %v5584, 0.0
      %v5709 = vmax.f32 %v5585, 0.0
      %v5710 = vmax.f32 %v5586, 0.0
      %v5711 = vmax.f32 %v5587, 0.0
      %v5712 = vmax.f32 %v5588, 0.0
      %v5713 = vmax.f32 %v5589, 0.0
      %v5714 = vmax.f32 %v5590, 0.0
      %v5715 = vmax.f32 %v5591, 0.0
      %v5716 = vmax.f32 %v5592, 0.0
      %v5717 = vmax.f32 %v5593, 0.0
      %v5718 = vmax.f32 %v5594, 0.0
      %v5719 = vmax.f32 %v5595, 0.0
      %v5720 = vmax.f32 %v5596, 0.0
      %v5721 = vmax.f32 %v5597, 0.0
      %v5722 = vmax.f32 %v5598, 0.0
      %v5723 = vmax.f32 %v5599, 0.0
      %v5724 = vmax.f32 %v5600, 0.0
      %v5725 = vmax.f32 %v5601, 0.0
      %v5726 = vmax.f32 %v5602, 0.0
      %v5727 = vmax.f32 %v5603, 0.0
      %v5728 = vmax.f32 %v5604, 0.0
      %v5729 = vmax.f32 %v5605, 0.0
      %v5730 = vmax.f32 %v5606, 0.0
      %v5731 = vmax.f32 %v5607, 0.0
      %v5732 = vmax.f32 %v5608, 0.0
      %v5733 = vmax.f32 %v5609, 0.0
      %v5734 = vmax.f32 %v5610, 0.0
      %v5735 = vmax.f32 %v5611, 0.0
      %v5736 = vmax.f32 %v5612, 0.0
      %v5737 = vmax.f32 %v5613, 0.0
      %v5738 = vmax.f32 %v5614, 0.0
      %v5739 = vmax.f32 %v5615, 0.0
      %v5740 = vmax.f32 %v5616, 0.0
      %v5741 = vmax.f32 %v5617, 0.0
      %v5742 = vmax.f32 %v5618, 0.0
      %v5743 = vmax.f32 %v5619, 0.0
      %v5744 = vmax.f32 %v5620, 0.0
      %v5745 = vmax.f32 %v5621, 0.0
      %v5746 = vmax.f32 %v5622, 0.0
      %v5747 = vmax.f32 %v5623, 0.0
      %v5748 = vmax.f32 %v5624, 0.0
      %v5749 = vmax.f32 %v5625, 0.0
      %v5750 = vmax.f32 %v5626, 0.0
      %v5751 = vmax.f32 %v5627, 0.0
      %v5752 = vmax.f32 %v5628, 0.0
      %v5753 = vmax.f32 %v5629, 0.0
      %v5754 = vmax.f32 %v5630, 0.0
      %v5755 = vmax.f32 %v5631, 0.0
      %v5756 = vmax.f32 %v5632, 0.0
      %v5757 = vmax.f32 %v5633, 0.0
      %v5758 = vmax.f32 %v5634, 0.0
      %v5759 = vmax.f32 %v5635, 0.0
      %v5760 = vmax.f32 %v5636, 0.0
      %v5761 = vmax.f32 %v5637, 0.0
      %v5762 = vmax.f32 %v5638, 0.0
      %v5763 = vmax.f32 %v5639, 0.0
      %v5764 = vmax.f32 %v5640, 0.0
      %v5765 = vmax.f32 %v5641, 0.0
      %v5766 = vmax.f32 %v5642, 0.0
      %v5767 = vmax.f32 %v5643, 0.0
      %v5768 = vmax.f32 %v5644, 0.0
      %v5769 = vmax.f32 %v5645, 0.0
      %v5770 = vmax.f32 %v5646, 0.0
      %v5771 = vmax.f32 %v5647, 0.0
      %v5772 = vmax.f32 %v5648, 0.0
      %v5773 = vmax.f32 %v5649, 0.0
      %v5774 = vmax.f32 %v5650, 0.0
      %v5775 = vmax.f32 %v5651, 0.0
      %v5776 = vmax.f32 %v5652, 0.0
      %v5777 = vmax.f32 %v5653, 0.0
      %v5778 = vmax.f32 %v5654, 0.0
      %v5779 = vmax.f32 %v5655, 0.0
      %v5780 = vmax.f32 %v5656, 0.0
      %v5781 = vmax.f32 %v5657, 0.0
      %v5782 = vmax.f32 %v5658, 0.0
      %v5783 = vmax.f32 %v5659, 0.0
      %v5784 = vmax.f32 %v5660, 0.0
      %v5785 = vmax.f32 %v5661, 0.0
      %v5786 = vmax.f32 %v5662, 0.0
      %v5787 = vmax.f32 %v5663, 0.0
      %v5788 = vmax.f32 %v5664, 0.0
      %v5789 = vmax.f32 %v5665, 0.0
      %v5790 = vmax.f32 %v5666, 0.0
      %v5791 = vmax.f32 %v5667, 0.0
      %v5792 = vmax.f32 %v5668, 0.0
      %v5793 = vmax.f32 %v5669, 0.0
      %v5794 = vmax.f32 %v5670, 0.0
      %v5795 = vmax.f32 %v5671, 0.0
      %v5796 = vmax.f32 %v5672, 0.0
      %v5797 = vmax.f32 %v5673, 0.0
      %v5798 = vmax.f32 %v5674, 0.0
      %v5799 = vmax.f32 %v5675, 0.0
      %v5800 = vmax.f32 %v5676, 0.0
      %v5801 = vmax.f32 %v5677, 0.0
      %v5802 = vmax.f32 %v5678, 0.0
      %v5803 = vmax.f32 %v5679, 0.0
      %v5804 = vmax.f32 %v5680, 0.0
      %v5805 = vmax.f32 %v5681, 0.0
      %v5806 = vmax.f32 %v5682, 0.0
      %v5807 = vmax.f32 %v5683, 0.0
      %v5808 = vmax.f32 %v5684, 0.0
      %v5809 = vmax.f32 %v5685, 0.0
      %v5810 = vmax.f32 %v5686, 0.0
      %v5811 = vmax.f32 %v5687, 0.0
      %v5812 = vmax.f32 %v5688, 0.0
      %v5813 = vmax.f32 %v5689, 0.0
      %v5814 = vmax.f32 %v5690, 0.0
      %v5815 = vmax.f32 %v5691, 0.0
      %v5816 = vmax.f32 %v5692, 0.0
      %v5817 = vmax.f32 %v5693, 0.0
      %v5818 = vmax.f32 %v5694, 0.0
      %v5819 = vmax.f32 %v5695, 0.0
      %v5820 = vmax.f32 %v5696, 0.0
      %v5821 = vmax.f32 %v5697, 0.0
      %v5822 = vmax.f32 %v5698, 0.0
      %v5823 = vmax.f32 %v5699, 0.0
      %v5824 = vmax.f32 %v5700, 0.0
      %v5825 = vmax.f32 %v5701, 0.0
      %v5826 = vmax.f32 %v5702, 0.0
      %v5827 = vmax.f32 %v5703, 0.0
      %v5828 = vpack.c.bf16 %v5705, %v5704
      %v5829 = vpack.c.bf16 %v5707, %v5706
      %v5830 = vpack.c.bf16 %v5709, %v5708
      %v5831 = vpack.c.bf16 %v5711, %v5710
      %v5832 = vpack.c.bf16 %v5713, %v5712
      %v5833 = vpack.c.bf16 %v5715, %v5714
      %v5834 = vpack.c.bf16 %v5717, %v5716
      %v5835 = vpack.c.bf16 %v5719, %v5718
      %v5836 = vpack.c.bf16 %v5721, %v5720
      %v5837 = vpack.c.bf16 %v5723, %v5722
      %v5838 = vpack.c.bf16 %v5725, %v5724
      %v5839 = vpack.c.bf16 %v5727, %v5726
      %v5840 = vpack.c.bf16 %v5729, %v5728
      %v5841 = vpack.c.bf16 %v5731, %v5730
      %v5842 = vpack.c.bf16 %v5733, %v5732
      %v5843 = vpack.c.bf16 %v5735, %v5734
      %v5844 = vpack.c.bf16 %v5737, %v5736
      %v5845 = vpack.c.bf16 %v5739, %v5738
      %v5846 = vpack.c.bf16 %v5741, %v5740
      %v5847 = vpack.c.bf16 %v5743, %v5742
      %v5848 = vpack.c.bf16 %v5745, %v5744
      %v5849 = vpack.c.bf16 %v5747, %v5746
      %v5850 = vpack.c.bf16 %v5749, %v5748
      %v5851 = vpack.c.bf16 %v5751, %v5750
      %v5852 = vpack.c.bf16 %v5753, %v5752
      %v5853 = vpack.c.bf16 %v5755, %v5754
      %v5854 = vpack.c.bf16 %v5757, %v5756
      %v5855 = vpack.c.bf16 %v5759, %v5758
      %v5856 = vpack.c.bf16 %v5761, %v5760
      %v5857 = vpack.c.bf16 %v5763, %v5762
      %v5858 = vpack.c.bf16 %v5765, %v5764
      %v5859 = vpack.c.bf16 %v5767, %v5766
      %v5860 = vpack.c.bf16 %v5769, %v5768
      %v5861 = vpack.c.bf16 %v5771, %v5770
      %v5862 = vpack.c.bf16 %v5773, %v5772
      %v5863 = vpack.c.bf16 %v5775, %v5774
      %v5864 = vpack.c.bf16 %v5777, %v5776
      %v5865 = vpack.c.bf16 %v5779, %v5778
      %v5866 = vpack.c.bf16 %v5781, %v5780
      %v5867 = vpack.c.bf16 %v5783, %v5782
      %v5868 = vpack.c.bf16 %v5785, %v5784
      %v5869 = vpack.c.bf16 %v5787, %v5786
      %v5870 = vpack.c.bf16 %v5789, %v5788
      %v5871 = vpack.c.bf16 %v5791, %v5790
      %v5872 = vpack.c.bf16 %v5793, %v5792
      %v5873 = vpack.c.bf16 %v5795, %v5794
      %v5874 = vpack.c.bf16 %v5797, %v5796
      %v5875 = vpack.c.bf16 %v5799, %v5798
      %v5876 = vpack.c.bf16 %v5801, %v5800
      %v5877 = vpack.c.bf16 %v5803, %v5802
      %v5878 = vpack.c.bf16 %v5805, %v5804
      %v5879 = vpack.c.bf16 %v5807, %v5806
      %v5880 = vpack.c.bf16 %v5809, %v5808
      %v5881 = vpack.c.bf16 %v5811, %v5810
      %v5882 = vpack.c.bf16 %v5813, %v5812
      %v5883 = vpack.c.bf16 %v5815, %v5814
      %v5884 = vpack.c.bf16 %v5817, %v5816
      %v5885 = vpack.c.bf16 %v5819, %v5818
      %v5886 = vpack.c.bf16 %v5821, %v5820
      %v5887 = vpack.c.bf16 %v5823, %v5822
      %v5888 = vpack.c.bf16 %v5825, %v5824
      %v5889 = vpack.c.bf16 %v5827, %v5826
      %v5952 = vunpack.c.l.b16 %v5828
      %v5953 = vunpack.c.h.b16 %v5828
      %v5954 = vunpack.c.l.b16 %v5829
      %v5955 = vunpack.c.h.b16 %v5829
      %v5956 = vunpack.c.l.b16 %v5830
      %v5957 = vunpack.c.h.b16 %v5830
      %v5958 = vunpack.c.l.b16 %v5831
      %v5959 = vunpack.c.h.b16 %v5831
      %v5960 = vunpack.c.l.b16 %v5832
      %v5961 = vunpack.c.h.b16 %v5832
      %v5962 = vunpack.c.l.b16 %v5833
      %v5963 = vunpack.c.h.b16 %v5833
      %v5964 = vunpack.c.l.b16 %v5834
      %v5965 = vunpack.c.h.b16 %v5834
      %v5966 = vunpack.c.l.b16 %v5835
      %v5967 = vunpack.c.h.b16 %v5835
      %v5968 = vunpack.c.l.b16 %v5836
      %v5969 = vunpack.c.h.b16 %v5836
      %v5970 = vunpack.c.l.b16 %v5837
      %v5971 = vunpack.c.h.b16 %v5837
      %v5972 = vunpack.c.l.b16 %v5838
      %v5973 = vunpack.c.h.b16 %v5838
      %v5974 = vunpack.c.l.b16 %v5839
      %v5975 = vunpack.c.h.b16 %v5839
      %v5976 = vunpack.c.l.b16 %v5840
      %v5977 = vunpack.c.h.b16 %v5840
      %v5978 = vunpack.c.l.b16 %v5841
      %v5979 = vunpack.c.h.b16 %v5841
      %v5980 = vunpack.c.l.b16 %v5842
      %v5981 = vunpack.c.h.b16 %v5842
      %v5982 = vunpack.c.l.b16 %v5843
      %v5983 = vunpack.c.h.b16 %v5843
      %v5984 = vunpack.c.l.b16 %v5844
      %v5985 = vunpack.c.h.b16 %v5844
      %v5986 = vunpack.c.l.b16 %v5845
      %v5987 = vunpack.c.h.b16 %v5845
      %v5988 = vunpack.c.l.b16 %v5846
      %v5989 = vunpack.c.h.b16 %v5846
      %v5990 = vunpack.c.l.b16 %v5847
      %v5991 = vunpack.c.h.b16 %v5847
      %v5992 = vunpack.c.l.b16 %v5848
      %v5993 = vunpack.c.h.b16 %v5848
      %v5994 = vunpack.c.l.b16 %v5849
      %v5995 = vunpack.c.h.b16 %v5849
      %v5996 = vunpack.c.l.b16 %v5850
      %v5997 = vunpack.c.h.b16 %v5850
      %v5998 = vunpack.c.l.b16 %v5851
      %v5999 = vunpack.c.h.b16 %v5851
      %v6000 = vunpack.c.l.b16 %v5852
      %v6001 = vunpack.c.h.b16 %v5852
      %v6002 = vunpack.c.l.b16 %v5853
      %v6003 = vunpack.c.h.b16 %v5853
      %v6004 = vunpack.c.l.b16 %v5854
      %v6005 = vunpack.c.h.b16 %v5854
      %v6006 = vunpack.c.l.b16 %v5855
      %v6007 = vunpack.c.h.b16 %v5855
      %v6008 = vunpack.c.l.b16 %v5856
      %v6009 = vunpack.c.h.b16 %v5856
      %v6010 = vunpack.c.l.b16 %v5857
      %v6011 = vunpack.c.h.b16 %v5857
      %v6012 = vunpack.c.l.b16 %v5858
      %v6013 = vunpack.c.h.b16 %v5858
      %v6014 = vunpack.c.l.b16 %v5859
      %v6015 = vunpack.c.h.b16 %v5859
      %v6016 = vunpack.c.l.b16 %v5860
      %v6017 = vunpack.c.h.b16 %v5860
      %v6018 = vunpack.c.l.b16 %v5861
      %v6019 = vunpack.c.h.b16 %v5861
      %v6020 = vunpack.c.l.b16 %v5862
      %v6021 = vunpack.c.h.b16 %v5862
      %v6022 = vunpack.c.l.b16 %v5863
      %v6023 = vunpack.c.h.b16 %v5863
      %v6024 = vunpack.c.l.b16 %v5864
      %v6025 = vunpack.c.h.b16 %v5864
      %v6026 = vunpack.c.l.b16 %v5865
      %v6027 = vunpack.c.h.b16 %v5865
      %v6028 = vunpack.c.l.b16 %v5866
      %v6029 = vunpack.c.h.b16 %v5866
      %v6030 = vunpack.c.l.b16 %v5867
      %v6031 = vunpack.c.h.b16 %v5867
      %v6032 = vunpack.c.l.b16 %v5868
      %v6033 = vunpack.c.h.b16 %v5868
      %v6034 = vunpack.c.l.b16 %v5869
      %v6035 = vunpack.c.h.b16 %v5869
      %v6036 = vunpack.c.l.b16 %v5870
      %v6037 = vunpack.c.h.b16 %v5870
      %v6038 = vunpack.c.l.b16 %v5871
      %v6039 = vunpack.c.h.b16 %v5871
      %v6040 = vunpack.c.l.b16 %v5872
      %v6041 = vunpack.c.h.b16 %v5872
      %v6042 = vunpack.c.l.b16 %v5873
      %v6043 = vunpack.c.h.b16 %v5873
      %v6044 = vunpack.c.l.b16 %v5874
      %v6045 = vunpack.c.h.b16 %v5874
      %v6046 = vunpack.c.l.b16 %v5875
      %v6047 = vunpack.c.h.b16 %v5875
      %v6048 = vunpack.c.l.b16 %v5876
      %v6049 = vunpack.c.h.b16 %v5876
      %v6050 = vunpack.c.l.b16 %v5877
      %v6051 = vunpack.c.h.b16 %v5877
      %v6052 = vunpack.c.l.b16 %v5878
      %v6053 = vunpack.c.h.b16 %v5878
      %v6054 = vunpack.c.l.b16 %v5879
      %v6055 = vunpack.c.h.b16 %v5879
      %v6056 = vunpack.c.l.b16 %v5880
      %v6057 = vunpack.c.h.b16 %v5880
      %v6058 = vunpack.c.l.b16 %v5881
      %v6059 = vunpack.c.h.b16 %v5881
      %v6060 = vunpack.c.l.b16 %v5882
      %v6061 = vunpack.c.h.b16 %v5882
      %v6062 = vunpack.c.l.b16 %v5883
      %v6063 = vunpack.c.h.b16 %v5883
      %v6064 = vunpack.c.l.b16 %v5884
      %v6065 = vunpack.c.h.b16 %v5884
      %v6066 = vunpack.c.l.b16 %v5885
      %v6067 = vunpack.c.h.b16 %v5885
      %v6068 = vunpack.c.l.b16 %v5886
      %v6069 = vunpack.c.h.b16 %v5886
      %v6070 = vunpack.c.l.b16 %v5887
      %v6071 = vunpack.c.h.b16 %v5887
      %v6072 = vunpack.c.l.b16 %v5888
      %v6073 = vunpack.c.h.b16 %v5888
      %v6074 = vunpack.c.l.b16 %v5889
      %v6075 = vunpack.c.h.b16 %v5889
      %v6076 = vpack.c.b16 %v5952, %v5952
      %v6077 = vpack.c.b16 %v5953, %v5953
      %v6078 = vpack.c.b16 %v5954, %v5954
      %v6079 = vpack.c.b16 %v5955, %v5955
      %v6080 = vpack.c.b16 %v5956, %v5956
      %v6081 = vpack.c.b16 %v5957, %v5957
      %v6082 = vpack.c.b16 %v5958, %v5958
      %v6083 = vpack.c.b16 %v5959, %v5959
      %v6084 = vpack.c.b16 %v5960, %v5960
      %v6085 = vpack.c.b16 %v5961, %v5961
      %v6086 = vpack.c.b16 %v5962, %v5962
      %v6087 = vpack.c.b16 %v5963, %v5963
      %v6088 = vpack.c.b16 %v5964, %v5964
      %v6089 = vpack.c.b16 %v5965, %v5965
      %v6090 = vpack.c.b16 %v5966, %v5966
      %v6091 = vpack.c.b16 %v5967, %v5967
      %v6092 = vpack.c.b16 %v5968, %v5968
      %v6093 = vpack.c.b16 %v5969, %v5969
      %v6094 = vpack.c.b16 %v5970, %v5970
      %v6095 = vpack.c.b16 %v5971, %v5971
      %v6096 = vpack.c.b16 %v5972, %v5972
      %v6097 = vpack.c.b16 %v5973, %v5973
      %v6098 = vpack.c.b16 %v5974, %v5974
      %v6099 = vpack.c.b16 %v5975, %v5975
      %v6100 = vpack.c.b16 %v5976, %v5976
      %v6101 = vpack.c.b16 %v5977, %v5977
      %v6102 = vpack.c.b16 %v5978, %v5978
      %v6103 = vpack.c.b16 %v5979, %v5979
      %v6104 = vpack.c.b16 %v5980, %v5980
      %v6105 = vpack.c.b16 %v5981, %v5981
      %v6106 = vpack.c.b16 %v5982, %v5982
      %v6107 = vpack.c.b16 %v5983, %v5983
      %v6108 = vpack.c.b16 %v5984, %v5984
      %v6109 = vpack.c.b16 %v5985, %v5985
      %v6110 = vpack.c.b16 %v5986, %v5986
      %v6111 = vpack.c.b16 %v5987, %v5987
      %v6112 = vpack.c.b16 %v5988, %v5988
      %v6113 = vpack.c.b16 %v5989, %v5989
      %v6114 = vpack.c.b16 %v5990, %v5990
      %v6115 = vpack.c.b16 %v5991, %v5991
      %v6116 = vpack.c.b16 %v5992, %v5992
      %v6117 = vpack.c.b16 %v5993, %v5993
      %v6118 = vpack.c.b16 %v5994, %v5994
      %v6119 = vpack.c.b16 %v5995, %v5995
      %v6120 = vpack.c.b16 %v5996, %v5996
      %v6121 = vpack.c.b16 %v5997, %v5997
      %v6122 = vpack.c.b16 %v5998, %v5998
      %v6123 = vpack.c.b16 %v5999, %v5999
      %v6124 = vpack.c.b16 %v6000, %v6000
      %v6125 = vpack.c.b16 %v6001, %v6001
      %v6126 = vpack.c.b16 %v6002, %v6002
      %v6127 = vpack.c.b16 %v6003, %v6003
      %v6128 = vpack.c.b16 %v6004, %v6004
      %v6129 = vpack.c.b16 %v6005, %v6005
      %v6130 = vpack.c.b16 %v6006, %v6006
      %v6131 = vpack.c.b16 %v6007, %v6007
      %v6132 = vpack.c.b16 %v6008, %v6008
      %v6133 = vpack.c.b16 %v6009, %v6009
      %v6134 = vpack.c.b16 %v6010, %v6010
      %v6135 = vpack.c.b16 %v6011, %v6011
      %v6136 = vpack.c.b16 %v6012, %v6012
      %v6137 = vpack.c.b16 %v6013, %v6013
      %v6138 = vpack.c.b16 %v6014, %v6014
      %v6139 = vpack.c.b16 %v6015, %v6015
      %v6140 = vpack.c.b16 %v6016, %v6016
      %v6141 = vpack.c.b16 %v6017, %v6017
      %v6142 = vpack.c.b16 %v6018, %v6018
      %v6143 = vpack.c.b16 %v6019, %v6019
      %v6144 = vpack.c.b16 %v6020, %v6020
      %v6145 = vpack.c.b16 %v6021, %v6021
      %v6146 = vpack.c.b16 %v6022, %v6022
      %v6147 = vpack.c.b16 %v6023, %v6023
      %v6148 = vpack.c.b16 %v6024, %v6024
      %v6149 = vpack.c.b16 %v6025, %v6025
      %v6150 = vpack.c.b16 %v6026, %v6026
      %v6151 = vpack.c.b16 %v6027, %v6027
      %v6152 = vpack.c.b16 %v6028, %v6028
      %v6153 = vpack.c.b16 %v6029, %v6029
      %v6154 = vpack.c.b16 %v6030, %v6030
      %v6155 = vpack.c.b16 %v6031, %v6031
      %v6156 = vpack.c.b16 %v6032, %v6032
      %v6157 = vpack.c.b16 %v6033, %v6033
      %v6158 = vpack.c.b16 %v6034, %v6034
      %v6159 = vpack.c.b16 %v6035, %v6035
      %v6160 = vpack.c.b16 %v6036, %v6036
      %v6161 = vpack.c.b16 %v6037, %v6037
      %v6162 = vpack.c.b16 %v6038, %v6038
      %v6163 = vpack.c.b16 %v6039, %v6039
      %v6164 = vpack.c.b16 %v6040, %v6040
      %v6165 = vpack.c.b16 %v6041, %v6041
      %v6166 = vpack.c.b16 %v6042, %v6042
      %v6167 = vpack.c.b16 %v6043, %v6043
      %v6168 = vpack.c.b16 %v6044, %v6044
      %v6169 = vpack.c.b16 %v6045, %v6045
      %v6170 = vpack.c.b16 %v6046, %v6046
      %v6171 = vpack.c.b16 %v6047, %v6047
      %v6172 = vpack.c.b16 %v6048, %v6048
      %v6173 = vpack.c.b16 %v6049, %v6049
      %v6174 = vpack.c.b16 %v6050, %v6050
      %v6175 = vpack.c.b16 %v6051, %v6051
      %v6176 = vpack.c.b16 %v6052, %v6052
      %v6177 = vpack.c.b16 %v6053, %v6053
      %v6178 = vpack.c.b16 %v6054, %v6054
      %v6179 = vpack.c.b16 %v6055, %v6055
      %v6180 = vpack.c.b16 %v6056, %v6056
      %v6181 = vpack.c.b16 %v6057, %v6057
      %v6182 = vpack.c.b16 %v6058, %v6058
      %v6183 = vpack.c.b16 %v6059, %v6059
      %v6184 = vpack.c.b16 %v6060, %v6060
      %v6185 = vpack.c.b16 %v6061, %v6061
      %v6186 = vpack.c.b16 %v6062, %v6062
      %v6187 = vpack.c.b16 %v6063, %v6063
      %v6188 = vpack.c.b16 %v6064, %v6064
      %v6189 = vpack.c.b16 %v6065, %v6065
      %v6190 = vpack.c.b16 %v6066, %v6066
      %v6191 = vpack.c.b16 %v6067, %v6067
      %v6192 = vpack.c.b16 %v6068, %v6068
      %v6193 = vpack.c.b16 %v6069, %v6069
      %v6194 = vpack.c.b16 %v6070, %v6070
      %v6195 = vpack.c.b16 %v6071, %v6071
      %v6196 = vpack.c.b16 %v6072, %v6072
      %v6197 = vpack.c.b16 %v6073, %v6073
      %v6198 = vpack.c.b16 %v6074, %v6074
      %v6199 = vpack.c.b16 %v6075, %v6075
      %vm6324 = vcmask 60416
      %6325 = vst.msk [vmem:[%s170] sm:$0xf] %vm6324, %v6076
      %6326 = vst.msk [vmem:[%s170 + $0x4] sm:$0xf] %vm6324, %v6077
      %6327 = vst.msk [vmem:[%s170 + $0x8] sm:$0xf] %vm6324, %v6078
      %6328 = vst.msk [vmem:[%s170 + $0xc] sm:$0xf] %vm6324, %v6079
      %6329 = vst.msk [vmem:[%s170 + $0x10] sm:$0xf] %vm6324, %v6080
      %6330 = vst.msk [vmem:[%s170 + $0x14] sm:$0xf] %vm6324, %v6081
      %6331 = vst.msk [vmem:[%s170 + $0x18] sm:$0xf] %vm6324, %v6082
      %6332 = vst.msk [vmem:[%s170 + $0x1c] sm:$0xf] %vm6324, %v6083
      %6333 = vst.msk [vmem:[%s170 + $0x20] sm:$0xf] %vm6324, %v6084
      %6334 = vst.msk [vmem:[%s170 + $0x24] sm:$0xf] %vm6324, %v6085
      %6335 = vst.msk [vmem:[%s170 + $0x28] sm:$0xf] %vm6324, %v6086
      %6336 = vst.msk [vmem:[%s170 + $0x2c] sm:$0xf] %vm6324, %v6087
      %6337 = vst.msk [vmem:[%s170 + $0x30] sm:$0xf] %vm6324, %v6088
      %6338 = vst.msk [vmem:[%s170 + $0x34] sm:$0xf] %vm6324, %v6089
      %6339 = vst.msk [vmem:[%s170 + $0x38] sm:$0xf] %vm6324, %v6090
      %6340 = vst.msk [vmem:[%s170 + $0x3c] sm:$0xf] %vm6324, %v6091
      %6341 = vst.msk [vmem:[%s170 + $0x40] sm:$0xf] %vm6324, %v6092
      %6342 = vst.msk [vmem:[%s170 + $0x44] sm:$0xf] %vm6324, %v6093
      %6343 = vst.msk [vmem:[%s170 + $0x48] sm:$0xf] %vm6324, %v6094
      %6344 = vst.msk [vmem:[%s170 + $0x4c] sm:$0xf] %vm6324, %v6095
      %6345 = vst.msk [vmem:[%s170 + $0x50] sm:$0xf] %vm6324, %v6096
      %6346 = vst.msk [vmem:[%s170 + $0x54] sm:$0xf] %vm6324, %v6097
      %6347 = vst.msk [vmem:[%s170 + $0x58] sm:$0xf] %vm6324, %v6098
      %6348 = vst.msk [vmem:[%s170 + $0x5c] sm:$0xf] %vm6324, %v6099
      %6349 = vst.msk [vmem:[%s170 + $0x60] sm:$0xf] %vm6324, %v6100
      %6350 = vst.msk [vmem:[%s170 + $0x64] sm:$0xf] %vm6324, %v6101
      %6351 = vst.msk [vmem:[%s170 + $0x68] sm:$0xf] %vm6324, %v6102
      %6352 = vst.msk [vmem:[%s170 + $0x6c] sm:$0xf] %vm6324, %v6103
      %6353 = vst.msk [vmem:[%s170 + $0x70] sm:$0xf] %vm6324, %v6104
      %6354 = vst.msk [vmem:[%s170 + $0x74] sm:$0xf] %vm6324, %v6105
      %6355 = vst.msk [vmem:[%s170 + $0x78] sm:$0xf] %vm6324, %v6106
      %6356 = vst.msk [vmem:[%s170 + $0x7c] sm:$0xf] %vm6324, %v6107
      %6357 = vst.msk [vmem:[%s170 + $0x80] sm:$0xf] %vm6324, %v6108
      %6358 = vst.msk [vmem:[%s170 + $0x84] sm:$0xf] %vm6324, %v6109
      %6359 = vst.msk [vmem:[%s170 + $0x88] sm:$0xf] %vm6324, %v6110
      %6360 = vst.msk [vmem:[%s170 + $0x8c] sm:$0xf] %vm6324, %v6111
      %6361 = vst.msk [vmem:[%s170 + $0x90] sm:$0xf] %vm6324, %v6112
      %6362 = vst.msk [vmem:[%s170 + $0x94] sm:$0xf] %vm6324, %v6113
      %6363 = vst.msk [vmem:[%s170 + $0x98] sm:$0xf] %vm6324, %v6114
      %6364 = vst.msk [vmem:[%s170 + $0x9c] sm:$0xf] %vm6324, %v6115
      %6365 = vst.msk [vmem:[%s170 + $0xa0] sm:$0xf] %vm6324, %v6116
      %6366 = vst.msk [vmem:[%s170 + $0xa4] sm:$0xf] %vm6324, %v6117
      %6367 = vst.msk [vmem:[%s170 + $0xa8] sm:$0xf] %vm6324, %v6118
      %6368 = vst.msk [vmem:[%s170 + $0xac] sm:$0xf] %vm6324, %v6119
      %6369 = vst.msk [vmem:[%s170 + $0xb0] sm:$0xf] %vm6324, %v6120
      %6370 = vst.msk [vmem:[%s170 + $0xb4] sm:$0xf] %vm6324, %v6121
      %6371 = vst.msk [vmem:[%s170 + $0xb8] sm:$0xf] %vm6324, %v6122
      %6372 = vst.msk [vmem:[%s170 + $0xbc] sm:$0xf] %vm6324, %v6123
      %6373 = vst.msk [vmem:[%s170 + $0xc0] sm:$0xf] %vm6324, %v6124
      %6374 = vst.msk [vmem:[%s170 + $0xc4] sm:$0xf] %vm6324, %v6125
      %6375 = vst.msk [vmem:[%s170 + $0xc8] sm:$0xf] %vm6324, %v6126
      %6376 = vst.msk [vmem:[%s170 + $0xcc] sm:$0xf] %vm6324, %v6127
      %6377 = vst.msk [vmem:[%s170 + $0xd0] sm:$0xf] %vm6324, %v6128
      %6378 = vst.msk [vmem:[%s170 + $0xd4] sm:$0xf] %vm6324, %v6129
      %6379 = vst.msk [vmem:[%s170 + $0xd8] sm:$0xf] %vm6324, %v6130
      %6380 = vst.msk [vmem:[%s170 + $0xdc] sm:$0xf] %vm6324, %v6131
      %6381 = vst.msk [vmem:[%s170 + $0xe0] sm:$0xf] %vm6324, %v6132
      %6382 = vst.msk [vmem:[%s170 + $0xe4] sm:$0xf] %vm6324, %v6133
      %6383 = vst.msk [vmem:[%s170 + $0xe8] sm:$0xf] %vm6324, %v6134
      %6384 = vst.msk [vmem:[%s170 + $0xec] sm:$0xf] %vm6324, %v6135
      %6385 = vst.msk [vmem:[%s170 + $0xf0] sm:$0xf] %vm6324, %v6136
      %6386 = vst.msk [vmem:[%s170 + $0xf4] sm:$0xf] %vm6324, %v6137
      %6387 = vst.msk [vmem:[%s170 + $0xf8] sm:$0xf] %vm6324, %v6138
      %6388 = vst.msk [vmem:[%s170 + $0xfc] sm:$0xf] %vm6324, %v6139
      %6389 = vst.msk [vmem:[%s170 + $0x100] sm:$0xf] %vm6324, %v6140
      %6390 = vst.msk [vmem:[%s170 + $0x104] sm:$0xf] %vm6324, %v6141
      %6391 = vst.msk [vmem:[%s170 + $0x108] sm:$0xf] %vm6324, %v6142
      %6392 = vst.msk [vmem:[%s170 + $0x10c] sm:$0xf] %vm6324, %v6143
      %6393 = vst.msk [vmem:[%s170 + $0x110] sm:$0xf] %vm6324, %v6144
      %6394 = vst.msk [vmem:[%s170 + $0x114] sm:$0xf] %vm6324, %v6145
      %6395 = vst.msk [vmem:[%s170 + $0x118] sm:$0xf] %vm6324, %v6146
      %6396 = vst.msk [vmem:[%s170 + $0x11c] sm:$0xf] %vm6324, %v6147
      %6397 = vst.msk [vmem:[%s170 + $0x120] sm:$0xf] %vm6324, %v6148
      %6398 = vst.msk [vmem:[%s170 + $0x124] sm:$0xf] %vm6324, %v6149
      %6399 = vst.msk [vmem:[%s170 + $0x128] sm:$0xf] %vm6324, %v6150
      %6400 = vst.msk [vmem:[%s170 + $0x12c] sm:$0xf] %vm6324, %v6151
      %6401 = vst.msk [vmem:[%s170 + $0x130] sm:$0xf] %vm6324, %v6152
      %6402 = vst.msk [vmem:[%s170 + $0x134] sm:$0xf] %vm6324, %v6153
      %6403 = vst.msk [vmem:[%s170 + $0x138] sm:$0xf] %vm6324, %v6154
      %6404 = vst.msk [vmem:[%s170 + $0x13c] sm:$0xf] %vm6324, %v6155
      %6405 = vst.msk [vmem:[%s170 + $0x140] sm:$0xf] %vm6324, %v6156
      %6406 = vst.msk [vmem:[%s170 + $0x144] sm:$0xf] %vm6324, %v6157
      %6407 = vst.msk [vmem:[%s170 + $0x148] sm:$0xf] %vm6324, %v6158
      %6408 = vst.msk [vmem:[%s170 + $0x14c] sm:$0xf] %vm6324, %v6159
      %6409 = vst.msk [vmem:[%s170 + $0x150] sm:$0xf] %vm6324, %v6160
      %6410 = vst.msk [vmem:[%s170 + $0x154] sm:$0xf] %vm6324, %v6161
      %6411 = vst.msk [vmem:[%s170 + $0x158] sm:$0xf] %vm6324, %v6162
      %6412 = vst.msk [vmem:[%s170 + $0x15c] sm:$0xf] %vm6324, %v6163
      %6413 = vst.msk [vmem:[%s170 + $0x160] sm:$0xf] %vm6324, %v6164
      %6414 = vst.msk [vmem:[%s170 + $0x164] sm:$0xf] %vm6324, %v6165
      %6415 = vst.msk [vmem:[%s170 + $0x168] sm:$0xf] %vm6324, %v6166
      %6416 = vst.msk [vmem:[%s170 + $0x16c] sm:$0xf] %vm6324, %v6167
      %6417 = vst.msk [vmem:[%s170 + $0x170] sm:$0xf] %vm6324, %v6168
      %6418 = vst.msk [vmem:[%s170 + $0x174] sm:$0xf] %vm6324, %v6169
      %6419 = vst.msk [vmem:[%s170 + $0x178] sm:$0xf] %vm6324, %v6170
      %6420 = vst.msk [vmem:[%s170 + $0x17c] sm:$0xf] %vm6324, %v6171
      %6421 = vst.msk [vmem:[%s170 + $0x180] sm:$0xf] %vm6324, %v6172
      %6422 = vst.msk [vmem:[%s170 + $0x184] sm:$0xf] %vm6324, %v6173
      %6423 = vst.msk [vmem:[%s170 + $0x188] sm:$0xf] %vm6324, %v6174
      %6424 = vst.msk [vmem:[%s170 + $0x18c] sm:$0xf] %vm6324, %v6175
      %6425 = vst.msk [vmem:[%s170 + $0x190] sm:$0xf] %vm6324, %v6176
      %6426 = vst.msk [vmem:[%s170 + $0x194] sm:$0xf] %vm6324, %v6177
      %6427 = vst.msk [vmem:[%s170 + $0x198] sm:$0xf] %vm6324, %v6178
      %6428 = vst.msk [vmem:[%s170 + $0x19c] sm:$0xf] %vm6324, %v6179
      %6429 = vst.msk [vmem:[%s170 + $0x1a0] sm:$0xf] %vm6324, %v6180
      %6430 = vst.msk [vmem:[%s170 + $0x1a4] sm:$0xf] %vm6324, %v6181
      %6431 = vst.msk [vmem:[%s170 + $0x1a8] sm:$0xf] %vm6324, %v6182
      %6432 = vst.msk [vmem:[%s170 + $0x1ac] sm:$0xf] %vm6324, %v6183
      %6433 = vst.msk [vmem:[%s170 + $0x1b0] sm:$0xf] %vm6324, %v6184
      %6434 = vst.msk [vmem:[%s170 + $0x1b4] sm:$0xf] %vm6324, %v6185
      %6435 = vst.msk [vmem:[%s170 + $0x1b8] sm:$0xf] %vm6324, %v6186
      %6436 = vst.msk [vmem:[%s170 + $0x1bc] sm:$0xf] %vm6324, %v6187
      %6437 = vst.msk [vmem:[%s170 + $0x1c0] sm:$0xf] %vm6324, %v6188
      %6438 = vst.msk [vmem:[%s170 + $0x1c4] sm:$0xf] %vm6324, %v6189
      %6439 = vst.msk [vmem:[%s170 + $0x1c8] sm:$0xf] %vm6324, %v6190
      %6440 = vst.msk [vmem:[%s170 + $0x1cc] sm:$0xf] %vm6324, %v6191
      %6441 = vst.msk [vmem:[%s170 + $0x1d0] sm:$0xf] %vm6324, %v6192
      %6442 = vst.msk [vmem:[%s170 + $0x1d4] sm:$0xf] %vm6324, %v6193
      %6443 = vst.msk [vmem:[%s170 + $0x1d8] sm:$0xf] %vm6324, %v6194
      %6444 = vst.msk [vmem:[%s170 + $0x1dc] sm:$0xf] %vm6324, %v6195
      %6445 = vst.msk [vmem:[%s170 + $0x1e0] sm:$0xf] %vm6324, %v6196
      %6446 = vst.msk [vmem:[%s170 + $0x1e4] sm:$0xf] %vm6324, %v6197
      %6447 = vst.msk [vmem:[%s170 + $0x1e8] sm:$0xf] %vm6324, %v6198
      %6448 = vst.msk [vmem:[%s170 + $0x1ec] sm:$0xf] %vm6324, %v6199
      %p6449 = scmp.lt.s32.totalorder %s14, 1
      %s6450 = scalar_select %p6449, %s14, 1
      %s6451 = smul.addr %s6450, 124
      %s6452 = smul.addr %s6451, 4
      %s6453 = scalar_lea.vmem %s3, %s6452
      // Predicated region
      $region33: #{observation_encoder_forward.4} parent=31 // pred_check
        %p6454 = pneg %p100
      $region34: #{observation_encoder_forward.4} parent=31 // pred_check_branch
        %6456 = sbr.rel (%p6454) target = $region36
      $region35: #{observation_encoder_forward.4} parent=31 // pred_region
        _
      $region36: #{observation_encoder_forward.4} parent=31 // pred_fallthru
        _
    $region32: #{observation_encoder_forward.4} parent=5 // pred_fallthru
      _
    %p6457 = scmp.le.s32.totalorder 2, %s9
    // Predicated region
    $region37: #{observation_encoder_forward.4} parent=5 // pred_check
      %p6458 = pneg %p6457
    $region38: #{observation_encoder_forward.4} parent=5 // pred_check_branch
      %6460 = sbr.rel (%p6458) target = $region40
    $region39: #{observation_encoder_forward.4} parent=5 // pred_region
      %s6461 = ssub.s32 %s9, 2
      // Predicated region
      $region41: #{observation_encoder_forward.4} parent=39 // pred_check
        %p6462 = pneg %p106
      $region42: #{observation_encoder_forward.4} parent=39 // pred_check_branch
        %6464 = sbr.rel (%p6462) target = $region44
      $region43: #{observation_encoder_forward.4} parent=39 // pred_region
        %p6465 = scmp.lt.s32.totalorder %s15, 1
        %s6466 = scalar_select %p6465, %s15, 1
        %s6467 = smul.addr %s6466, 124
        %s6468 = smul.addr %s6467, 4
        %s6469 = scalar_lea.vmem %s3, %s6468
      $region44: #{observation_encoder_forward.4} parent=39 // pred_fallthru
        _
    $region40: #{observation_encoder_forward.4} parent=5 // pred_fallthru
      _
  $region6: #{observation_encoder_forward.4} parent=0 // loop_footer
    %s13 = sadd.s32 1, %s9
  $region7: #{observation_encoder_forward.4} parent=0 // loop_footer_branch
    %8 = sbr.rel target = $region3
  $region8: #{observation_encoder_forward.4} parent=0 // loop_exit
    _

// kernel: observation_encoder_forward.5
$region0: #{observation_encoder_forward.5}
  #allocation0 [shape = 'u32[]', space=smem, size = 0x4, offset = 0x4, fixed_abs, tag = 'smem constant byte address 0x4 - core index']
  #allocation1 [shape = 'u32[144,128]{1,0:T(1,128)}', space=vmem, size = 0x12000, scoped, tag = 'internal scratch']
  %s0 = inlined_call_operand.vmem [shape: bf16[2,264,32], index: 0, kind: input, shape index: {}]
  %s1 = inlined_call_operand.vmem [shape: bf16[128,16], index: 1, kind: input, shape index: {}]
  %s2 = inlined_call_operand.vmem [shape: f32[1,16], index: 2, kind: input, shape index: {}]
  %s3 = inlined_call_operand.vmem [shape: bf16[2,240,16], index: 3, kind: output, shape index: {}]
  %s4 = sld [smem:[#allocation0]]
  $region22: #{observation_encoder_forward.5} parent=0
    _
  %s6 = ssub.s32 1, %s4
  %s7 = scalar_select 0, %s6, %s4
  // Predicated region
  $region2: #{observation_encoder_forward.5} parent=0 // pred_check
    _
  $region3: #{observation_encoder_forward.5} parent=0 // pred_check_branch
    %9 = sbr.rel (0) target = $region5
  $region4: #{observation_encoder_forward.5} parent=0 // pred_region
    _
  $region5: #{observation_encoder_forward.5} parent=0 // pred_fallthru
    _
  // Predicated region
  $region6: #{observation_encoder_forward.5} parent=0 // pred_check
    _
  $region7: #{observation_encoder_forward.5} parent=0 // pred_check_branch
    %11 = sbr.rel (0) target = $region9
  $region8: #{observation_encoder_forward.5} parent=0 // pred_region
    _
  $region9: #{observation_encoder_forward.5} parent=0 // pred_fallthru
    _
  // Predicated region
  $region10: #{observation_encoder_forward.5} parent=0 // pred_check
    _
  $region11: #{observation_encoder_forward.5} parent=0 // pred_check_branch
    %13 = sbr.rel (0) target = $region13
  $region12: #{observation_encoder_forward.5} parent=0 // pred_region
    _
  $region13: #{observation_encoder_forward.5} parent=0 // pred_fallthru
    _
  %v15 = vld [vmem:[%s2] sm:$0x1]
  %v16 = vld [vmem:[%s0] sm:$0xf]
  %v17 = vld [vmem:[%s0 + $0x4] sm:$0xf]
  %v18 = vld [vmem:[%s0 + $0x8] sm:$0xf]
  %v19 = vld [vmem:[%s0 + $0xc] sm:$0xf]
  %v20 = vld [vmem:[%s0 + $0x10] sm:$0xf]
  %v21 = vld [vmem:[%s0 + $0x14] sm:$0xf]
  %v22 = vld [vmem:[%s0 + $0x18] sm:$0xf]
  %v23 = vld [vmem:[%s0 + $0x1c] sm:$0xf]
  %v24 = vld [vmem:[%s0 + $0x20] sm:$0xf]
  %v25 = vld [vmem:[%s0 + $0x24] sm:$0xf]
  %v26 = vld [vmem:[%s0 + $0x28] sm:$0xf]
  %v27 = vld [vmem:[%s0 + $0x2c] sm:$0xf]
  %v28 = vld [vmem:[%s0 + $0x30] sm:$0xf]
  %v29 = vld [vmem:[%s0 + $0x34] sm:$0xf]
  %v30 = vld [vmem:[%s0 + $0x38] sm:$0xf]
  %v31 = vld [vmem:[%s0 + $0x3c] sm:$0xf]
  %v32 = vld [vmem:[%s0 + $0x40] sm:$0xf]
  %v33 = vld [vmem:[%s0 + $0x44] sm:$0xf]
  %v34 = vld [vmem:[%s0 + $0x48] sm:$0xf]
  %v35 = vld [vmem:[%s0 + $0x4c] sm:$0xf]
  %v36 = vld [vmem:[%s0 + $0x50] sm:$0xf]
  %v37 = vld [vmem:[%s0 + $0x54] sm:$0xf]
  %v38 = vld [vmem:[%s0 + $0x58] sm:$0xf]
  %v39 = vld [vmem:[%s0 + $0x5c] sm:$0xf]
  %v40 = vld [vmem:[%s0 + $0x60] sm:$0xf]
  %v41 = vld [vmem:[%s0 + $0x64] sm:$0xf]
  %v42 = vld [vmem:[%s0 + $0x68] sm:$0xf]
  %v43 = vld [vmem:[%s0 + $0x6c] sm:$0xf]
  %v44 = vld [vmem:[%s0 + $0x70] sm:$0xf]
  %v45 = vld [vmem:[%s0 + $0x74] sm:$0xf]
  %v46 = vld [vmem:[%s1] sm:$0xf]
  %v47 = vld [vmem:[%s1 + $0x4] sm:$0xf]
  %v48 = vld [vmem:[%s1 + $0x8] sm:$0xf]
  %v49 = vld [vmem:[%s1 + $0xc] sm:$0xf]
  %v50 = vld [vmem:[%s0 + $0x78] sm:$0x1]
  %v51 = vld [vmem:[%s1 + $0x10] sm:$0xf]
  %v52 = vld [vmem:[%s1 + $0x14] sm:$0xf]
  %v53 = vld [vmem:[%s1 + $0x18] sm:$0xf]
  %v54 = vld [vmem:[%s1 + $0x1c] sm:$0xf]
  %v86 = vunpack.c.l.b16 %v16
  %v87 = vunpack.c.l.b16 %v17
  %v88 = vunpack.c.l.b16 %v18
  %v89 = vunpack.c.l.b16 %v19
  %v90 = vunpack.c.l.b16 %v20
  %v91 = vunpack.c.l.b16 %v21
  %v92 = vunpack.c.l.b16 %v22
  %v93 = vunpack.c.l.b16 %v23
  %v94 = vunpack.c.l.b16 %v24
  %v95 = vunpack.c.l.b16 %v25
  %v96 = vunpack.c.l.b16 %v26
  %v97 = vunpack.c.l.b16 %v27
  %v98 = vunpack.c.l.b16 %v28
  %v99 = vunpack.c.l.b16 %v29
  %v100 = vunpack.c.l.b16 %v30
  %v101 = vunpack.c.l.b16 %v31
  %v102 = vunpack.c.l.b16 %v32
  %v103 = vunpack.c.l.b16 %v33
  %v104 = vunpack.c.l.b16 %v34
  %v105 = vunpack.c.l.b16 %v35
  %v106 = vunpack.c.l.b16 %v36
  %v107 = vunpack.c.l.b16 %v37
  %v108 = vunpack.c.l.b16 %v38
  %v109 = vunpack.c.l.b16 %v39
  %v110 = vunpack.c.l.b16 %v40
  %v111 = vunpack.c.l.b16 %v41
  %v112 = vunpack.c.l.b16 %v42
  %v113 = vunpack.c.l.b16 %v43
  %v114 = vunpack.c.l.b16 %v44
  %v115 = vunpack.c.l.b16 %v45
  %v116 = vunpack.c.l.b16 %v50
  %v117 = vpack.c.b16 %v87, %v86
  %v118 = vpack.c.b16 %v89, %v88
  %v119 = vpack.c.b16 %v91, %v90
  %v120 = vpack.c.b16 %v93, %v92
  %v121 = vpack.c.b16 %v95, %v94
  %v122 = vpack.c.b16 %v97, %v96
  %v123 = vpack.c.b16 %v99, %v98
  %v124 = vpack.c.b16 %v101, %v100
  %v125 = vpack.c.b16 %v103, %v102
  %v126 = vpack.c.b16 %v105, %v104
  %v127 = vpack.c.b16 %v107, %v106
  %v128 = vpack.c.b16 %v109, %v108
  %v129 = vpack.c.b16 %v111, %v110
  %v130 = vpack.c.b16 %v113, %v112
  %v131 = vpack.c.b16 %v115, %v114
  %v132 = vpack.c.b16 %v116, %v116
  %vm133 = vsmask.f32 7424
  %v135 = vshrl.u32 %v117, 16
  %v137 = vshll.u32 %v117, 16
  %v139 = vrot.slane %v137, 1
  %v140 = vor.u32 %v135, %v139
  %v142 = vshll.u32 %v118, 16
  %v144 = vrot.slane %v142, 1
  %v145 = vsel %vm133, %v140, %v144
  %v146 = vshrl.u32 %v118, 16
  %v148 = vor.u32 %v146, %v144
  %v150 = vshll.u32 %v119, 16
  %v152 = vrot.slane %v150, 1
  %v153 = vsel %vm133, %v148, %v152
  %v154 = vshrl.u32 %v119, 16
  %v156 = vor.u32 %v154, %v152
  %v158 = vshll.u32 %v120, 16
  %v160 = vrot.slane %v158, 1
  %v161 = vsel %vm133, %v156, %v160
  %v162 = vshrl.u32 %v120, 16
  %v164 = vor.u32 %v162, %v160
  %v166 = vshll.u32 %v121, 16
  %v168 = vrot.slane %v166, 1
  %v169 = vsel %vm133, %v164, %v168
  %v170 = vshrl.u32 %v121, 16
  %v172 = vor.u32 %v170, %v168
  %v174 = vshll.u32 %v122, 16
  %v176 = vrot.slane %v174, 1
  %v177 = vsel %vm133, %v172, %v176
  %v178 = vshrl.u32 %v122, 16
  %v180 = vor.u32 %v178, %v176
  %v182 = vshll.u32 %v123, 16
  %v184 = vrot.slane %v182, 1
  %v185 = vsel %vm133, %v180, %v184
  %v186 = vshrl.u32 %v123, 16
  %v188 = vor.u32 %v186, %v184
  %v190 = vshll.u32 %v124, 16
  %v192 = vrot.slane %v190, 1
  %v193 = vsel %vm133, %v188, %v192
  %v194 = vshrl.u32 %v124, 16
  %v196 = vor.u32 %v194, %v192
  %v198 = vshll.u32 %v125, 16
  %v200 = vrot.slane %v198, 1
  %v201 = vsel %vm133, %v196, %v200
  %v202 = vshrl.u32 %v125, 16
  %v204 = vor.u32 %v202, %v200
  %v206 = vshll.u32 %v126, 16
  %v208 = vrot.slane %v206, 1
  %v209 = vsel %vm133, %v204, %v208
  %v210 = vshrl.u32 %v126, 16
  %v212 = vor.u32 %v210, %v208
  %v214 = vshll.u32 %v127, 16
  %v216 = vrot.slane %v214, 1
  %v217 = vsel %vm133, %v212, %v216
  %v218 = vshrl.u32 %v127, 16
  %v220 = vor.u32 %v218, %v216
  %v222 = vshll.u32 %v128, 16
  %v224 = vrot.slane %v222, 1
  %v225 = vsel %vm133, %v220, %v224
  %v226 = vshrl.u32 %v128, 16
  %v228 = vor.u32 %v226, %v224
  %v230 = vshll.u32 %v129, 16
  %v232 = vrot.slane %v230, 1
  %v233 = vsel %vm133, %v228, %v232
  %v234 = vshrl.u32 %v129, 16
  %v236 = vor.u32 %v234, %v232
  %v238 = vshll.u32 %v130, 16
  %v240 = vrot.slane %v238, 1
  %v241 = vsel %vm133, %v236, %v240
  %v242 = vshrl.u32 %v130, 16
  %v244 = vor.u32 %v242, %v240
  %v246 = vshll.u32 %v131, 16
  %v248 = vrot.slane %v246, 1
  %v249 = vsel %vm133, %v244, %v248
  %v250 = vshrl.u32 %v131, 16
  %v252 = vor.u32 %v250, %v248
  %v254 = vshll.u32 %v132, 16
  %v256 = vrot.slane %v254, 1
  %v257 = vsel %vm133, %v252, %v256
  %v262 = vunpack.c.l.b16 %v51
  %v263 = vunpack.c.l.b16 %v52
  %v264 = vunpack.c.l.b16 %v53
  %v265 = vunpack.c.l.b16 %v54
  %v266 = vpack.c.b16 %v263, %v262
  %v267 = vpack.c.b16 %v265, %v264
  %vm270 = vcmask 261120
  %v272 = vsel %vm270, %v145, 0
  %v275 = vsel %vm270, %v153, 0
  %v278 = vsel %vm270, %v161, 0
  %v281 = vsel %vm270, %v169, 0
  %v284 = vsel %vm270, %v177, 0
  %v287 = vsel %vm270, %v185, 0
  %v290 = vsel %vm270, %v193, 0
  %v293 = vsel %vm270, %v201, 0
  %v296 = vsel %vm270, %v209, 0
  %v299 = vsel %vm270, %v217, 0
  %v302 = vsel %vm270, %v225, 0
  %v305 = vsel %vm270, %v233, 0
  %v308 = vsel %vm270, %v241, 0
  %v311 = vsel %vm270, %v249, 0
  %v314 = vsel %vm270, %v257, 0
  %316 = vmatprep.subr.bf16.mxu0 0
  %317 = vmatpush1.bf16.msra.mxu0 0
  %318 = vmatprep.subr.bf16.mxu0 0
  %319 = vmatpush1.bf16.msra.mxu0 0
  %320 = vmatprep.subr.bf16.mxu0 0
  %321 = vmatpush1.bf16.msra.mxu0 0
  %322 = vmatprep.subr.bf16.mxu0 0
  %323 = vmatpush1.bf16.msra.mxu0 0
  %324 = vmatprep.subr.bf16.mxu0 0
  %325 = vmatpush1.bf16.msra.mxu0 0
  %326 = vmatprep.subr.bf16.mxu0 0
  %327 = vmatpush1.bf16.msra.mxu0 0
  %328 = vmatprep.subr.bf16.mxu0 0
  %329 = vmatpush1.bf16.msra.mxu0 %v267
  %330 = vmatprep.subr.bf16.mxu0 0
  %331 = vmatpush1.bf16.msra.mxu0 %v266
  %332 = vmatprep.subr.bf16.mxu0 0
  %333 = vmatpush2.bf16.msra.mxu0 0
  %334 = vmatprep.subr.bf16.mxu0 0
  %335 = vmatpush2.bf16.msra.mxu0 0
  %336 = vmatprep.subr.bf16.mxu0 0
  %337 = vmatpush2.bf16.msra.mxu0 0
  %338 = vmatprep.subr.bf16.mxu0 0
  %339 = vmatpush2.bf16.msra.mxu0 0
  %340 = vmatprep.subr.bf16.mxu0 0
  %341 = vmatpush2.bf16.msra.mxu0 0
  %342 = vmatprep.subr.bf16.mxu0 0
  %343 = vmatpush2.bf16.msra.mxu0 0
  %344 = vmatprep.subr.bf16.mxu0 0
  %345 = vmatpush2.bf16.msra.mxu0 0
  %346 = vmatprep.subr.bf16.mxu0 0
  %347 = vmatpush2.bf16.msra.mxu0 0
  %348 = vmatprep.mubr.bf16.mxu0 0
  %349 = vmatmul.mubr.bf16.gmra.mxu0 %v272
  %v350 = vpop.f32.mrf.mxu0
  %v351 = vadd.f32 0.0, %v350
  %v352 = vpop.f32.mrf.mxu0
  %v353 = vpop.f32.mrf.mxu0
  %v354 = vadd.f32 0.0, %v353
  %v355 = vpop.f32.mrf.mxu0
  %356 = vmatprep.mubr.bf16.mxu0 0
  %357 = vmatmul.mubr.bf16.gmra.mxu0 %v275
  %v358 = vpop.f32.mrf.mxu0
  %v359 = vadd.f32 0.0, %v358
  %v360 = vpop.f32.mrf.mxu0
  %v361 = vpop.f32.mrf.mxu0
  %v362 = vadd.f32 0.0, %v361
  %v363 = vpop.f32.mrf.mxu0
  %364 = vmatprep.mubr.bf16.mxu0 0
  %365 = vmatmul.mubr.bf16.gmra.mxu0 %v278
  %v366 = vpop.f32.mrf.mxu0
  %v367 = vadd.f32 0.0, %v366
  %v368 = vpop.f32.mrf.mxu0
  %v369 = vpop.f32.mrf.mxu0
  %v370 = vadd.f32 0.0, %v369
  %v371 = vpop.f32.mrf.mxu0
  %372 = vmatprep.mubr.bf16.mxu0 0
  %373 = vmatmul.mubr.bf16.gmra.mxu0 %v281
  %v374 = vpop.f32.mrf.mxu0
  %v375 = vadd.f32 0.0, %v374
  %v376 = vpop.f32.mrf.mxu0
  %v377 = vpop.f32.mrf.mxu0
  %v378 = vadd.f32 0.0, %v377
  %v379 = vpop.f32.mrf.mxu0
  %380 = vmatprep.mubr.bf16.mxu0 0
  %381 = vmatmul.mubr.bf16.gmra.mxu0 %v284
  %v382 = vpop.f32.mrf.mxu0
  %v383 = vadd.f32 0.0, %v382
  %v384 = vpop.f32.mrf.mxu0
  %v385 = vpop.f32.mrf.mxu0
  %v386 = vadd.f32 0.0, %v385
  %v387 = vpop.f32.mrf.mxu0
  %388 = vmatprep.mubr.bf16.mxu0 0
  %389 = vmatmul.mubr.bf16.gmra.mxu0 %v287
  %v390 = vpop.f32.mrf.mxu0
  %v391 = vadd.f32 0.0, %v390
  %v392 = vpop.f32.mrf.mxu0
  %v393 = vpop.f32.mrf.mxu0
  %v394 = vadd.f32 0.0, %v393
  %v395 = vpop.f32.mrf.mxu0
  %396 = vmatprep.mubr.bf16.mxu0 0
  %397 = vmatmul.mubr.bf16.gmra.mxu0 %v290
  %v398 = vpop.f32.mrf.mxu0
  %v399 = vadd.f32 0.0, %v398
  %v400 = vpop.f32.mrf.mxu0
  %v401 = vpop.f32.mrf.mxu0
  %v402 = vadd.f32 0.0, %v401
  %v403 = vpop.f32.mrf.mxu0
  %404 = vmatprep.mubr.bf16.mxu0 0
  %405 = vmatmul.mubr.bf16.gmra.mxu0 %v293
  %v406 = vpop.f32.mrf.mxu0
  %v407 = vadd.f32 0.0, %v406
  %v408 = vpop.f32.mrf.mxu0
  %v409 = vpop.f32.mrf.mxu0
  %v410 = vadd.f32 0.0, %v409
  %v411 = vpop.f32.mrf.mxu0
  %412 = vmatprep.mubr.bf16.mxu0 0
  %413 = vmatmul.mubr.bf16.gmra.mxu0 %v296
  %v414 = vpop.f32.mrf.mxu0
  %v415 = vadd.f32 0.0, %v414
  %v416 = vpop.f32.mrf.mxu0
  %v417 = vpop.f32.mrf.mxu0
  %v418 = vadd.f32 0.0, %v417
  %v419 = vpop.f32.mrf.mxu0
  %420 = vmatprep.mubr.bf16.mxu0 0
  %421 = vmatmul.mubr.bf16.gmra.mxu0 %v299
  %v422 = vpop.f32.mrf.mxu0
  %v423 = vadd.f32 0.0, %v422
  %v424 = vpop.f32.mrf.mxu0
  %v425 = vpop.f32.mrf.mxu0
  %v426 = vadd.f32 0.0, %v425
  %v427 = vpop.f32.mrf.mxu0
  %428 = vmatprep.mubr.bf16.mxu0 0
  %429 = vmatmul.mubr.bf16.gmra.mxu0 %v302
  %v430 = vpop.f32.mrf.mxu0
  %v431 = vadd.f32 0.0, %v430
  %v432 = vpop.f32.mrf.mxu0
  %v433 = vpop.f32.mrf.mxu0
  %v434 = vadd.f32 0.0, %v433
  %v435 = vpop.f32.mrf.mxu0
  %436 = vmatprep.mubr.bf16.mxu0 0
  %437 = vmatmul.mubr.bf16.gmra.mxu0 %v305
  %v438 = vpop.f32.mrf.mxu0
  %v439 = vadd.f32 0.0, %v438
  %v440 = vpop.f32.mrf.mxu0
  %v441 = vpop.f32.mrf.mxu0
  %v442 = vadd.f32 0.0, %v441
  %v443 = vpop.f32.mrf.mxu0
  %444 = vmatprep.mubr.bf16.mxu0 0
  %445 = vmatmul.mubr.bf16.gmra.mxu0 %v308
  %v446 = vpop.f32.mrf.mxu0
  %v447 = vadd.f32 0.0, %v446
  %v448 = vpop.f32.mrf.mxu0
  %v449 = vpop.f32.mrf.mxu0
  %v450 = vadd.f32 0.0, %v449
  %v451 = vpop.f32.mrf.mxu0
  %452 = vmatprep.mubr.bf16.mxu0 0
  %453 = vmatmul.mubr.bf16.gmra.mxu0 %v311
  %v454 = vpop.f32.mrf.mxu0
  %v455 = vadd.f32 0.0, %v454
  %v456 = vpop.f32.mrf.mxu0
  %v457 = vpop.f32.mrf.mxu0
  %v458 = vadd.f32 0.0, %v457
  %v459 = vpop.f32.mrf.mxu0
  %460 = vmatprep.mubr.bf16.mxu0 0
  %461 = vmatmul.mubr.bf16.gmra.mxu0 %v314
  %v462 = vpop.f32.mrf.mxu0
  %v463 = vadd.f32 0.0, %v462
  %v464 = vpop.f32.mrf.mxu0
  %v465 = vpop.f32.mrf.mxu0
  %v466 = vadd.f32 0.0, %v465
  %v467 = vpop.f32.mrf.mxu0
  %468 = vdwg.mxu0
  %v473 = vunpack.c.l.b16 %v46
  %v474 = vunpack.c.l.b16 %v47
  %v475 = vunpack.c.l.b16 %v48
  %v476 = vunpack.c.l.b16 %v49
  %v477 = vpack.c.b16 %v474, %v473
  %v478 = vpack.c.b16 %v476, %v475
  %v481 = vsel %vm270, %v117, 0
  %v483 = vsel %vm270, %v118, 0
  %v485 = vsel %vm270, %v119, 0
  %v487 = vsel %vm270, %v120, 0
  %v489 = vsel %vm270, %v121, 0
  %v491 = vsel %vm270, %v122, 0
  %v493 = vsel %vm270, %v123, 0
  %v495 = vsel %vm270, %v124, 0
  %v497 = vsel %vm270, %v125, 0
  %v499 = vsel %vm270, %v126, 0
  %v501 = vsel %vm270, %v127, 0
  %v503 = vsel %vm270, %v128, 0
  %v505 = vsel %vm270, %v129, 0
  %v507 = vsel %vm270, %v130, 0
  %v509 = vsel %vm270, %v131, 0
  %511 = vmatprep.subr.bf16.mxu0 0
  %512 = vmatpush1.bf16.msra.mxu0 0
  %513 = vmatprep.subr.bf16.mxu0 0
  %514 = vmatpush1.bf16.msra.mxu0 0
  %515 = vmatprep.subr.bf16.mxu0 0
  %516 = vmatpush1.bf16.msra.mxu0 0
  %517 = vmatprep.subr.bf16.mxu0 0
  %518 = vmatpush1.bf16.msra.mxu0 0
  %519 = vmatprep.subr.bf16.mxu0 0
  %520 = vmatpush1.bf16.msra.mxu0 0
  %521 = vmatprep.subr.bf16.mxu0 0
  %522 = vmatpush1.bf16.msra.mxu0 0
  %523 = vmatprep.subr.bf16.mxu0 0
  %524 = vmatpush1.bf16.msra.mxu0 %v478
  %525 = vmatprep.subr.bf16.mxu0 0
  %526 = vmatpush1.bf16.msra.mxu0 %v477
  %527 = vmatprep.subr.bf16.mxu0 0
  %528 = vmatpush2.bf16.msra.mxu0 0
  %529 = vmatprep.subr.bf16.mxu0 0
  %530 = vmatpush2.bf16.msra.mxu0 0
  %531 = vmatprep.subr.bf16.mxu0 0
  %532 = vmatpush2.bf16.msra.mxu0 0
  %533 = vmatprep.subr.bf16.mxu0 0
  %534 = vmatpush2.bf16.msra.mxu0 0
  %535 = vmatprep.subr.bf16.mxu0 0
  %536 = vmatpush2.bf16.msra.mxu0 0
  %537 = vmatprep.subr.bf16.mxu0 0
  %538 = vmatpush2.bf16.msra.mxu0 0
  %539 = vmatprep.subr.bf16.mxu0 0
  %540 = vmatpush2.bf16.msra.mxu0 0
  %541 = vmatprep.subr.bf16.mxu0 0
  %542 = vmatpush2.bf16.msra.mxu0 0
  %543 = vmatprep.mubr.bf16.mxu0 0
  %544 = vmatmul.mubr.bf16.gmra.mxu0 %v481
  %v545 = vpop.f32.mrf.mxu0
  %v546 = vadd.f32 %v351, %v545
  %v547 = vpop.f32.mrf.mxu0
  %v548 = vpop.f32.mrf.mxu0
  %v549 = vadd.f32 %v354, %v548
  %v550 = vpop.f32.mrf.mxu0
  %551 = vmatprep.mubr.bf16.mxu0 0
  %552 = vmatmul.mubr.bf16.gmra.mxu0 %v483
  %v553 = vpop.f32.mrf.mxu0
  %v554 = vadd.f32 %v359, %v553
  %v555 = vpop.f32.mrf.mxu0
  %v556 = vpop.f32.mrf.mxu0
  %v557 = vadd.f32 %v362, %v556
  %v558 = vpop.f32.mrf.mxu0
  %559 = vmatprep.mubr.bf16.mxu0 0
  %560 = vmatmul.mubr.bf16.gmra.mxu0 %v485
  %v561 = vpop.f32.mrf.mxu0
  %v562 = vadd.f32 %v367, %v561
  %v563 = vpop.f32.mrf.mxu0
  %v564 = vpop.f32.mrf.mxu0
  %v565 = vadd.f32 %v370, %v564
  %v566 = vpop.f32.mrf.mxu0
  %567 = vmatprep.mubr.bf16.mxu0 0
  %568 = vmatmul.mubr.bf16.gmra.mxu0 %v487
  %v569 = vpop.f32.mrf.mxu0
  %v570 = vadd.f32 %v375, %v569
  %v571 = vpop.f32.mrf.mxu0
  %v572 = vpop.f32.mrf.mxu0
  %v573 = vadd.f32 %v378, %v572
  %v574 = vpop.f32.mrf.mxu0
  %575 = vmatprep.mubr.bf16.mxu0 0
  %576 = vmatmul.mubr.bf16.gmra.mxu0 %v489
  %v577 = vpop.f32.mrf.mxu0
  %v578 = vadd.f32 %v383, %v577
  %v579 = vpop.f32.mrf.mxu0
  %v580 = vpop.f32.mrf.mxu0
  %v581 = vadd.f32 %v386, %v580
  %v582 = vpop.f32.mrf.mxu0
  %583 = vmatprep.mubr.bf16.mxu0 0
  %584 = vmatmul.mubr.bf16.gmra.mxu0 %v491
  %v585 = vpop.f32.mrf.mxu0
  %v586 = vadd.f32 %v391, %v585
  %v587 = vpop.f32.mrf.mxu0
  %v588 = vpop.f32.mrf.mxu0
  %v589 = vadd.f32 %v394, %v588
  %v590 = vpop.f32.mrf.mxu0
  %591 = vmatprep.mubr.bf16.mxu0 0
  %592 = vmatmul.mubr.bf16.gmra.mxu0 %v493
  %v593 = vpop.f32.mrf.mxu0
  %v594 = vadd.f32 %v399, %v593
  %v595 = vpop.f32.mrf.mxu0
  %v596 = vpop.f32.mrf.mxu0
  %v597 = vadd.f32 %v402, %v596
  %v598 = vpop.f32.mrf.mxu0
  %599 = vmatprep.mubr.bf16.mxu0 0
  %600 = vmatmul.mubr.bf16.gmra.mxu0 %v495
  %v601 = vpop.f32.mrf.mxu0
  %v602 = vadd.f32 %v407, %v601
  %v603 = vpop.f32.mrf.mxu0
  %v604 = vpop.f32.mrf.mxu0
  %v605 = vadd.f32 %v410, %v604
  %v606 = vpop.f32.mrf.mxu0
  %607 = vmatprep.mubr.bf16.mxu0 0
  %608 = vmatmul.mubr.bf16.gmra.mxu0 %v497
  %v609 = vpop.f32.mrf.mxu0
  %v610 = vadd.f32 %v415, %v609
  %v611 = vpop.f32.mrf.mxu0
  %v612 = vpop.f32.mrf.mxu0
  %v613 = vadd.f32 %v418, %v612
  %v614 = vpop.f32.mrf.mxu0
  %615 = vmatprep.mubr.bf16.mxu0 0
  %616 = vmatmul.mubr.bf16.gmra.mxu0 %v499
  %v617 = vpop.f32.mrf.mxu0
  %v618 = vadd.f32 %v423, %v617
  %v619 = vpop.f32.mrf.mxu0
  %v620 = vpop.f32.mrf.mxu0
  %v621 = vadd.f32 %v426, %v620
  %v622 = vpop.f32.mrf.mxu0
  %623 = vmatprep.mubr.bf16.mxu0 0
  %624 = vmatmul.mubr.bf16.gmra.mxu0 %v501
  %v625 = vpop.f32.mrf.mxu0
  %v626 = vadd.f32 %v431, %v625
  %v627 = vpop.f32.mrf.mxu0
  %v628 = vpop.f32.mrf.mxu0
  %v629 = vadd.f32 %v434, %v628
  %v630 = vpop.f32.mrf.mxu0
  %631 = vmatprep.mubr.bf16.mxu0 0
  %632 = vmatmul.mubr.bf16.gmra.mxu0 %v503
  %v633 = vpop.f32.mrf.mxu0
  %v634 = vadd.f32 %v439, %v633
  %v635 = vpop.f32.mrf.mxu0
  %v636 = vpop.f32.mrf.mxu0
  %v637 = vadd.f32 %v442, %v636
  %v638 = vpop.f32.mrf.mxu0
  %639 = vmatprep.mubr.bf16.mxu0 0
  %640 = vmatmul.mubr.bf16.gmra.mxu0 %v505
  %v641 = vpop.f32.mrf.mxu0
  %v642 = vadd.f32 %v447, %v641
  %v643 = vpop.f32.mrf.mxu0
  %v644 = vpop.f32.mrf.mxu0
  %v645 = vadd.f32 %v450, %v644
  %v646 = vpop.f32.mrf.mxu0
  %647 = vmatprep.mubr.bf16.mxu0 0
  %648 = vmatmul.mubr.bf16.gmra.mxu0 %v507
  %v649 = vpop.f32.mrf.mxu0
  %v650 = vadd.f32 %v455, %v649
  %v651 = vpop.f32.mrf.mxu0
  %v652 = vpop.f32.mrf.mxu0
  %v653 = vadd.f32 %v458, %v652
  %v654 = vpop.f32.mrf.mxu0
  %655 = vmatprep.mubr.bf16.mxu0 0
  %656 = vmatmul.mubr.bf16.gmra.mxu0 %v509
  %v657 = vpop.f32.mrf.mxu0
  %v658 = vadd.f32 %v463, %v657
  %v659 = vpop.f32.mrf.mxu0
  %v660 = vpop.f32.mrf.mxu0
  %v661 = vadd.f32 %v466, %v660
  %v662 = vpop.f32.mrf.mxu0
  %663 = vdwg.mxu0
  %v664 = vld [vmem:[%s0 + $0x8] sm:$0xf]
  %v665 = vld [vmem:[%s0 + $0xc] sm:$0xf]
  %v666 = vld [vmem:[%s0 + $0x10] sm:$0xf]
  %v667 = vld [vmem:[%s0 + $0x14] sm:$0xf]
  %v668 = vld [vmem:[%s0 + $0x18] sm:$0xf]
  %v669 = vld [vmem:[%s0 + $0x1c] sm:$0xf]
  %v670 = vld [vmem:[%s0 + $0x20] sm:$0xf]
  %v671 = vld [vmem:[%s0 + $0x24] sm:$0xf]
  %v672 = vld [vmem:[%s0 + $0x28] sm:$0xf]
  %v673 = vld [vmem:[%s0 + $0x2c] sm:$0xf]
  %v674 = vld [vmem:[%s0 + $0x30] sm:$0xf]
  %v675 = vld [vmem:[%s0 + $0x34] sm:$0xf]
  %v676 = vld [vmem:[%s0 + $0x38] sm:$0xf]
  %v677 = vld [vmem:[%s0 + $0x3c] sm:$0xf]
  %v678 = vld [vmem:[%s0 + $0x40] sm:$0xf]
  %v679 = vld [vmem:[%s0 + $0x44] sm:$0xf]
  %v680 = vld [vmem:[%s0 + $0x48] sm:$0xf]
  %v681 = vld [vmem:[%s0 + $0x4c] sm:$0xf]
  %v682 = vld [vmem:[%s0 + $0x50] sm:$0xf]
  %v683 = vld [vmem:[%s0 + $0x54] sm:$0xf]
  %v684 = vld [vmem:[%s0 + $0x58] sm:$0xf]
  %v685 = vld [vmem:[%s0 + $0x5c] sm:$0xf]
  %v686 = vld [vmem:[%s0 + $0x60] sm:$0xf]
  %v687 = vld [vmem:[%s0 + $0x64] sm:$0xf]
  %v688 = vld [vmem:[%s0 + $0x68] sm:$0xf]
  %v689 = vld [vmem:[%s0 + $0x6c] sm:$0xf]
  %v690 = vld [vmem:[%s0 + $0x70] sm:$0xf]
  %v691 = vld [vmem:[%s0 + $0x74] sm:$0xf]
  %v692 = vld [vmem:[%s0 + $0x78] sm:$0xf]
  %v693 = vld [vmem:[%s0 + $0x7c] sm:$0xf]
  %v694 = vld [vmem:[%s1 + $0x20] sm:$0xf]
  %v695 = vld [vmem:[%s1 + $0x24] sm:$0xf]
  %v696 = vld [vmem:[%s1 + $0x28] sm:$0xf]
  %v697 = vld [vmem:[%s1 + $0x2c] sm:$0xf]
  %v728 = vunpack.c.l.b16 %v664
  %v729 = vunpack.c.l.b16 %v665
  %v730 = vunpack.c.l.b16 %v666
  %v731 = vunpack.c.l.b16 %v667
  %v732 = vunpack.c.l.b16 %v668
  %v733 = vunpack.c.l.b16 %v669
  %v734 = vunpack.c.l.b16 %v670
  %v735 = vunpack.c.l.b16 %v671
  %v736 = vunpack.c.l.b16 %v672
  %v737 = vunpack.c.l.b16 %v673
  %v738 = vunpack.c.l.b16 %v674
  %v739 = vunpack.c.l.b16 %v675
  %v740 = vunpack.c.l.b16 %v676
  %v741 = vunpack.c.l.b16 %v677
  %v742 = vunpack.c.l.b16 %v678
  %v743 = vunpack.c.l.b16 %v679
  %v744 = vunpack.c.l.b16 %v680
  %v745 = vunpack.c.l.b16 %v681
  %v746 = vunpack.c.l.b16 %v682
  %v747 = vunpack.c.l.b16 %v683
  %v748 = vunpack.c.l.b16 %v684
  %v749 = vunpack.c.l.b16 %v685
  %v750 = vunpack.c.l.b16 %v686
  %v751 = vunpack.c.l.b16 %v687
  %v752 = vunpack.c.l.b16 %v688
  %v753 = vunpack.c.l.b16 %v689
  %v754 = vunpack.c.l.b16 %v690
  %v755 = vunpack.c.l.b16 %v691
  %v756 = vunpack.c.l.b16 %v692
  %v757 = vunpack.c.l.b16 %v693
  %v758 = vpack.c.b16 %v729, %v728
  %v759 = vpack.c.b16 %v731, %v730
  %v760 = vpack.c.b16 %v733, %v732
  %v761 = vpack.c.b16 %v735, %v734
  %v762 = vpack.c.b16 %v737, %v736
  %v763 = vpack.c.b16 %v739, %v738
  %v764 = vpack.c.b16 %v741, %v740
  %v765 = vpack.c.b16 %v743, %v742
  %v766 = vpack.c.b16 %v745, %v744
  %v767 = vpack.c.b16 %v747, %v746
  %v768 = vpack.c.b16 %v749, %v748
  %v769 = vpack.c.b16 %v751, %v750
  %v770 = vpack.c.b16 %v753, %v752
  %v771 = vpack.c.b16 %v755, %v754
  %v772 = vpack.c.b16 %v757, %v756
  %v777 = vunpack.c.l.b16 %v694
  %v778 = vunpack.c.l.b16 %v695
  %v779 = vunpack.c.l.b16 %v696
  %v780 = vunpack.c.l.b16 %v697
  %v781 = vpack.c.b16 %v778, %v777
  %v782 = vpack.c.b16 %v780, %v779
  %v786 = vsel %vm270, %v758, 0
  %v789 = vsel %vm270, %v759, 0
  %v792 = vsel %vm270, %v760, 0
  %v795 = vsel %vm270, %v761, 0
  %v798 = vsel %vm270, %v762, 0
  %v801 = vsel %vm270, %v763, 0
  %v804 = vsel %vm270, %v764, 0
  %v807 = vsel %vm270, %v765, 0
  %v810 = vsel %vm270, %v766, 0
  %v813 = vsel %vm270, %v767, 0
  %v816 = vsel %vm270, %v768, 0
  %v819 = vsel %vm270, %v769, 0
  %v822 = vsel %vm270, %v770, 0
  %v825 = vsel %vm270, %v771, 0
  %v828 = vsel %vm270, %v772, 0
  %830 = vmatprep.subr.bf16.mxu0 0
  %831 = vmatpush1.bf16.msra.mxu0 0
  %832 = vmatprep.subr.bf16.mxu0 0
  %833 = vmatpush1.bf16.msra.mxu0 0
  %834 = vmatprep.subr.bf16.mxu0 0
  %835 = vmatpush1.bf16.msra.mxu0 0
  %836 = vmatprep.subr.bf16.mxu0 0
  %837 = vmatpush1.bf16.msra.mxu0 0
  %838 = vmatprep.subr.bf16.mxu0 0
  %839 = vmatpush1.bf16.msra.mxu0 0
  %840 = vmatprep.subr.bf16.mxu0 0
  %841 = vmatpush1.bf16.msra.mxu0 0
  %842 = vmatprep.subr.bf16.mxu0 0
  %843 = vmatpush1.bf16.msra.mxu0 %v782
  %844 = vmatprep.subr.bf16.mxu0 0
  %845 = vmatpush1.bf16.msra.mxu0 %v781
  %846 = vmatprep.subr.bf16.mxu0 0
  %847 = vmatpush2.bf16.msra.mxu0 0
  %848 = vmatprep.subr.bf16.mxu0 0
  %849 = vmatpush2.bf16.msra.mxu0 0
  %850 = vmatprep.subr.bf16.mxu0 0
  %851 = vmatpush2.bf16.msra.mxu0 0
  %852 = vmatprep.subr.bf16.mxu0 0
  %853 = vmatpush2.bf16.msra.mxu0 0
  %854 = vmatprep.subr.bf16.mxu0 0
  %855 = vmatpush2.bf16.msra.mxu0 0
  %856 = vmatprep.subr.bf16.mxu0 0
  %857 = vmatpush2.bf16.msra.mxu0 0
  %858 = vmatprep.subr.bf16.mxu0 0
  %859 = vmatpush2.bf16.msra.mxu0 0
  %860 = vmatprep.subr.bf16.mxu0 0
  %861 = vmatpush2.bf16.msra.mxu0 0
  %862 = vmatprep.mubr.bf16.mxu0 0
  %863 = vmatmul.mubr.bf16.gmra.mxu0 %v786
  %v864 = vpop.f32.mrf.mxu0
  %v865 = vadd.f32 0.0, %v864
  %v866 = vpop.f32.mrf.mxu0
  %v867 = vpop.f32.mrf.mxu0
  %v868 = vadd.f32 0.0, %v867
  %v869 = vpop.f32.mrf.mxu0
  %870 = vmatprep.mubr.bf16.mxu0 0
  %871 = vmatmul.mubr.bf16.gmra.mxu0 %v789
  %v872 = vpop.f32.mrf.mxu0
  %v873 = vadd.f32 0.0, %v872
  %v874 = vpop.f32.mrf.mxu0
  %v875 = vpop.f32.mrf.mxu0
  %v876 = vadd.f32 0.0, %v875
  %v877 = vpop.f32.mrf.mxu0
  %878 = vmatprep.mubr.bf16.mxu0 0
  %879 = vmatmul.mubr.bf16.gmra.mxu0 %v792
  %v880 = vpop.f32.mrf.mxu0
  %v881 = vadd.f32 0.0, %v880
  %v882 = vpop.f32.mrf.mxu0
  %v883 = vpop.f32.mrf.mxu0
  %v884 = vadd.f32 0.0, %v883
  %v885 = vpop.f32.mrf.mxu0
  %886 = vmatprep.mubr.bf16.mxu0 0
  %887 = vmatmul.mubr.bf16.gmra.mxu0 %v795
  %v888 = vpop.f32.mrf.mxu0
  %v889 = vadd.f32 0.0, %v888
  %v890 = vpop.f32.mrf.mxu0
  %v891 = vpop.f32.mrf.mxu0
  %v892 = vadd.f32 0.0, %v891
  %v893 = vpop.f32.mrf.mxu0
  %894 = vmatprep.mubr.bf16.mxu0 0
  %895 = vmatmul.mubr.bf16.gmra.mxu0 %v798
  %v896 = vpop.f32.mrf.mxu0
  %v897 = vadd.f32 0.0, %v896
  %v898 = vpop.f32.mrf.mxu0
  %v899 = vpop.f32.mrf.mxu0
  %v900 = vadd.f32 0.0, %v899
  %v901 = vpop.f32.mrf.mxu0
  %902 = vmatprep.mubr.bf16.mxu0 0
  %903 = vmatmul.mubr.bf16.gmra.mxu0 %v801
  %v904 = vpop.f32.mrf.mxu0
  %v905 = vadd.f32 0.0, %v904
  %v906 = vpop.f32.mrf.mxu0
  %v907 = vpop.f32.mrf.mxu0
  %v908 = vadd.f32 0.0, %v907
  %v909 = vpop.f32.mrf.mxu0
  %910 = vmatprep.mubr.bf16.mxu0 0
  %911 = vmatmul.mubr.bf16.gmra.mxu0 %v804
  %v912 = vpop.f32.mrf.mxu0
  %v913 = vadd.f32 0.0, %v912
  %v914 = vpop.f32.mrf.mxu0
  %v915 = vpop.f32.mrf.mxu0
  %v916 = vadd.f32 0.0, %v915
  %v917 = vpop.f32.mrf.mxu0
  %918 = vmatprep.mubr.bf16.mxu0 0
  %919 = vmatmul.mubr.bf16.gmra.mxu0 %v807
  %v920 = vpop.f32.mrf.mxu0
  %v921 = vadd.f32 0.0, %v920
  %v922 = vpop.f32.mrf.mxu0
  %v923 = vpop.f32.mrf.mxu0
  %v924 = vadd.f32 0.0, %v923
  %v925 = vpop.f32.mrf.mxu0
  %926 = vmatprep.mubr.bf16.mxu0 0
  %927 = vmatmul.mubr.bf16.gmra.mxu0 %v810
  %v928 = vpop.f32.mrf.mxu0
  %v929 = vadd.f32 0.0, %v928
  %v930 = vpop.f32.mrf.mxu0
  %v931 = vpop.f32.mrf.mxu0
  %v932 = vadd.f32 0.0, %v931
  %v933 = vpop.f32.mrf.mxu0
  %934 = vmatprep.mubr.bf16.mxu0 0
  %935 = vmatmul.mubr.bf16.gmra.mxu0 %v813
  %v936 = vpop.f32.mrf.mxu0
  %v937 = vadd.f32 0.0, %v936
  %v938 = vpop.f32.mrf.mxu0
  %v939 = vpop.f32.mrf.mxu0
  %v940 = vadd.f32 0.0, %v939
  %v941 = vpop.f32.mrf.mxu0
  %942 = vmatprep.mubr.bf16.mxu0 0
  %943 = vmatmul.mubr.bf16.gmra.mxu0 %v816
  %v944 = vpop.f32.mrf.mxu0
  %v945 = vadd.f32 0.0, %v944
  %v946 = vpop.f32.mrf.mxu0
  %v947 = vpop.f32.mrf.mxu0
  %v948 = vadd.f32 0.0, %v947
  %v949 = vpop.f32.mrf.mxu0
  %950 = vmatprep.mubr.bf16.mxu0 0
  %951 = vmatmul.mubr.bf16.gmra.mxu0 %v819
  %v952 = vpop.f32.mrf.mxu0
  %v953 = vadd.f32 0.0, %v952
  %v954 = vpop.f32.mrf.mxu0
  %v955 = vpop.f32.mrf.mxu0
  %v956 = vadd.f32 0.0, %v955
  %v957 = vpop.f32.mrf.mxu0
  %958 = vmatprep.mubr.bf16.mxu0 0
  %959 = vmatmul.mubr.bf16.gmra.mxu0 %v822
  %v960 = vpop.f32.mrf.mxu0
  %v961 = vadd.f32 0.0, %v960
  %v962 = vpop.f32.mrf.mxu0
  %v963 = vpop.f32.mrf.mxu0
  %v964 = vadd.f32 0.0, %v963
  %v965 = vpop.f32.mrf.mxu0
  %966 = vmatprep.mubr.bf16.mxu0 0
  %967 = vmatmul.mubr.bf16.gmra.mxu0 %v825
  %v968 = vpop.f32.mrf.mxu0
  %v969 = vadd.f32 0.0, %v968
  %v970 = vpop.f32.mrf.mxu0
  %v971 = vpop.f32.mrf.mxu0
  %v972 = vadd.f32 0.0, %v971
  %v973 = vpop.f32.mrf.mxu0
  %974 = vmatprep.mubr.bf16.mxu0 0
  %975 = vmatmul.mubr.bf16.gmra.mxu0 %v828
  %v976 = vpop.f32.mrf.mxu0
  %v977 = vadd.f32 0.0, %v976
  %v978 = vpop.f32.mrf.mxu0
  %v979 = vpop.f32.mrf.mxu0
  %v980 = vadd.f32 0.0, %v979
  %v981 = vpop.f32.mrf.mxu0
  %982 = vdwg.mxu0
  %v983 = vadd.f32 %v546, %v865
  %v984 = vadd.f32 %v549, %v868
  %v985 = vadd.f32 %v554, %v873
  %v986 = vadd.f32 %v557, %v876
  %v987 = vadd.f32 %v562, %v881
  %v988 = vadd.f32 %v565, %v884
  %v989 = vadd.f32 %v570, %v889
  %v990 = vadd.f32 %v573, %v892
  %v991 = vadd.f32 %v578, %v897
  %v992 = vadd.f32 %v581, %v900
  %v993 = vadd.f32 %v586, %v905
  %v994 = vadd.f32 %v589, %v908
  %v995 = vadd.f32 %v594, %v913
  %v996 = vadd.f32 %v597, %v916
  %v997 = vadd.f32 %v602, %v921
  %v998 = vadd.f32 %v605, %v924
  %v999 = vadd.f32 %v610, %v929
  %v1000 = vadd.f32 %v613, %v932
  %v1001 = vadd.f32 %v618, %v937
  %v1002 = vadd.f32 %v621, %v940
  %v1003 = vadd.f32 %v626, %v945
  %v1004 = vadd.f32 %v629, %v948
  %v1005 = vadd.f32 %v634, %v953
  %v1006 = vadd.f32 %v637, %v956
  %v1007 = vadd.f32 %v642, %v961
  %v1008 = vadd.f32 %v645, %v964
  %v1009 = vadd.f32 %v650, %v969
  %v1010 = vadd.f32 %v653, %v972
  %v1011 = vadd.f32 %v658, %v977
  %v1012 = vadd.f32 %v661, %v980
  %v1013 = vld [vmem:[%s0 + $0x8] sm:$0xf]
  %v1014 = vld [vmem:[%s0 + $0xc] sm:$0xf]
  %v1015 = vld [vmem:[%s0 + $0x10] sm:$0xf]
  %v1016 = vld [vmem:[%s0 + $0x14] sm:$0xf]
  %v1017 = vld [vmem:[%s0 + $0x18] sm:$0xf]
  %v1018 = vld [vmem:[%s0 + $0x1c] sm:$0xf]
  %v1019 = vld [vmem:[%s0 + $0x20] sm:$0xf]
  %v1020 = vld [vmem:[%s0 + $0x24] sm:$0xf]
  %v1021 = vld [vmem:[%s0 + $0x28] sm:$0xf]
  %v1022 = vld [vmem:[%s0 + $0x2c] sm:$0xf]
  %v1023 = vld [vmem:[%s0 + $0x30] sm:$0xf]
  %v1024 = vld [vmem:[%s0 + $0x34] sm:$0xf]
  %v1025 = vld [vmem:[%s0 + $0x38] sm:$0xf]
  %v1026 = vld [vmem:[%s0 + $0x3c] sm:$0xf]
  %v1027 = vld [vmem:[%s0 + $0x40] sm:$0xf]
  %v1028 = vld [vmem:[%s0 + $0x44] sm:$0xf]
  %v1029 = vld [vmem:[%s0 + $0x48] sm:$0xf]
  %v1030 = vld [vmem:[%s0 + $0x4c] sm:$0xf]
  %v1031 = vld [vmem:[%s0 + $0x50] sm:$0xf]
  %v1032 = vld [vmem:[%s0 + $0x54] sm:$0xf]
  %v1033 = vld [vmem:[%s0 + $0x58] sm:$0xf]
  %v1034 = vld [vmem:[%s0 + $0x5c] sm:$0xf]
  %v1035 = vld [vmem:[%s0 + $0x60] sm:$0xf]
  %v1036 = vld [vmem:[%s0 + $0x64] sm:$0xf]
  %v1037 = vld [vmem:[%s0 + $0x68] sm:$0xf]
  %v1038 = vld [vmem:[%s0 + $0x6c] sm:$0xf]
  %v1039 = vld [vmem:[%s0 + $0x70] sm:$0xf]
  %v1040 = vld [vmem:[%s0 + $0x74] sm:$0xf]
  %v1041 = vld [vmem:[%s0 + $0x78] sm:$0xf]
  %v1042 = vld [vmem:[%s0 + $0x7c] sm:$0xf]
  %v1043 = vld [vmem:[%s0 + $0x80] sm:$0x1]
  %v1044 = vld [vmem:[%s1 + $0x30] sm:$0xf]
  %v1045 = vld [vmem:[%s1 + $0x34] sm:$0xf]
  %v1046 = vld [vmem:[%s1 + $0x38] sm:$0xf]
  %v1047 = vld [vmem:[%s1 + $0x3c] sm:$0xf]
  %v1079 = vunpack.c.l.b16 %v1013
  %v1080 = vunpack.c.l.b16 %v1014
  %v1081 = vunpack.c.l.b16 %v1015
  %v1082 = vunpack.c.l.b16 %v1016
  %v1083 = vunpack.c.l.b16 %v1017
  %v1084 = vunpack.c.l.b16 %v1018
  %v1085 = vunpack.c.l.b16 %v1019
  %v1086 = vunpack.c.l.b16 %v1020
  %v1087 = vunpack.c.l.b16 %v1021
  %v1088 = vunpack.c.l.b16 %v1022
  %v1089 = vunpack.c.l.b16 %v1023
  %v1090 = vunpack.c.l.b16 %v1024
  %v1091 = vunpack.c.l.b16 %v1025
  %v1092 = vunpack.c.l.b16 %v1026
  %v1093 = vunpack.c.l.b16 %v1027
  %v1094 = vunpack.c.l.b16 %v1028
  %v1095 = vunpack.c.l.b16 %v1029
  %v1096 = vunpack.c.l.b16 %v1030
  %v1097 = vunpack.c.l.b16 %v1031
  %v1098 = vunpack.c.l.b16 %v1032
  %v1099 = vunpack.c.l.b16 %v1033
  %v1100 = vunpack.c.l.b16 %v1034
  %v1101 = vunpack.c.l.b16 %v1035
  %v1102 = vunpack.c.l.b16 %v1036
  %v1103 = vunpack.c.l.b16 %v1037
  %v1104 = vunpack.c.l.b16 %v1038
  %v1105 = vunpack.c.l.b16 %v1039
  %v1106 = vunpack.c.l.b16 %v1040
  %v1107 = vunpack.c.l.b16 %v1041
  %v1108 = vunpack.c.l.b16 %v1042
  %v1109 = vunpack.c.l.b16 %v1043
  %v1110 = vpack.c.b16 %v1080, %v1079
  %v1111 = vpack.c.b16 %v1082, %v1081
  %v1112 = vpack.c.b16 %v1084, %v1083
  %v1113 = vpack.c.b16 %v1086, %v1085
  %v1114 = vpack.c.b16 %v1088, %v1087
  %v1115 = vpack.c.b16 %v1090, %v1089
  %v1116 = vpack.c.b16 %v1092, %v1091
  %v1117 = vpack.c.b16 %v1094, %v1093
  %v1118 = vpack.c.b16 %v1096, %v1095
  %v1119 = vpack.c.b16 %v1098, %v1097
  %v1120 = vpack.c.b16 %v1100, %v1099
  %v1121 = vpack.c.b16 %v1102, %v1101
  %v1122 = vpack.c.b16 %v1104, %v1103
  %v1123 = vpack.c.b16 %v1106, %v1105
  %v1124 = vpack.c.b16 %v1108, %v1107
  %v1125 = vpack.c.b16 %v1109, %v1109
  %v1127 = vshrl.u32 %v1110, 16
  %v1129 = vshll.u32 %v1110, 16
  %v1131 = vrot.slane %v1129, 1
  %v1132 = vor.u32 %v1127, %v1131
  %v1134 = vshll.u32 %v1111, 16
  %v1136 = vrot.slane %v1134, 1
  %v1137 = vsel %vm133, %v1132, %v1136
  %v1138 = vshrl.u32 %v1111, 16
  %v1140 = vor.u32 %v1138, %v1136
  %v1142 = vshll.u32 %v1112, 16
  %v1144 = vrot.slane %v1142, 1
  %v1145 = vsel %vm133, %v1140, %v1144
  %v1146 = vshrl.u32 %v1112, 16
  %v1148 = vor.u32 %v1146, %v1144
  %v1150 = vshll.u32 %v1113, 16
  %v1152 = vrot.slane %v1150, 1
  %v1153 = vsel %vm133, %v1148, %v1152
  %v1154 = vshrl.u32 %v1113, 16
  %v1156 = vor.u32 %v1154, %v1152
  %v1158 = vshll.u32 %v1114, 16
  %v1160 = vrot.slane %v1158, 1
  %v1161 = vsel %vm133, %v1156, %v1160
  %v1162 = vshrl.u32 %v1114, 16
  %v1164 = vor.u32 %v1162, %v1160
  %v1166 = vshll.u32 %v1115, 16
  %v1168 = vrot.slane %v1166, 1
  %v1169 = vsel %vm133, %v1164, %v1168
  %v1170 = vshrl.u32 %v1115, 16
  %v1172 = vor.u32 %v1170, %v1168
  %v1174 = vshll.u32 %v1116, 16
  %v1176 = vrot.slane %v1174, 1
  %v1177 = vsel %vm133, %v1172, %v1176
  %v1178 = vshrl.u32 %v1116, 16
  %v1180 = vor.u32 %v1178, %v1176
  %v1182 = vshll.u32 %v1117, 16
  %v1184 = vrot.slane %v1182, 1
  %v1185 = vsel %vm133, %v1180, %v1184
  %v1186 = vshrl.u32 %v1117, 16
  %v1188 = vor.u32 %v1186, %v1184
  %v1190 = vshll.u32 %v1118, 16
  %v1192 = vrot.slane %v1190, 1
  %v1193 = vsel %vm133, %v1188, %v1192
  %v1194 = vshrl.u32 %v1118, 16
  %v1196 = vor.u32 %v1194, %v1192
  %v1198 = vshll.u32 %v1119, 16
  %v1200 = vrot.slane %v1198, 1
  %v1201 = vsel %vm133, %v1196, %v1200
  %v1202 = vshrl.u32 %v1119, 16
  %v1204 = vor.u32 %v1202, %v1200
  %v1206 = vshll.u32 %v1120, 16
  %v1208 = vrot.slane %v1206, 1
  %v1209 = vsel %vm133, %v1204, %v1208
  %v1210 = vshrl.u32 %v1120, 16
  %v1212 = vor.u32 %v1210, %v1208
  %v1214 = vshll.u32 %v1121, 16
  %v1216 = vrot.slane %v1214, 1
  %v1217 = vsel %vm133, %v1212, %v1216
  %v1218 = vshrl.u32 %v1121, 16
  %v1220 = vor.u32 %v1218, %v1216
  %v1222 = vshll.u32 %v1122, 16
  %v1224 = vrot.slane %v1222, 1
  %v1225 = vsel %vm133, %v1220, %v1224
  %v1226 = vshrl.u32 %v1122, 16
  %v1228 = vor.u32 %v1226, %v1224
  %v1230 = vshll.u32 %v1123, 16
  %v1232 = vrot.slane %v1230, 1
  %v1233 = vsel %vm133, %v1228, %v1232
  %v1234 = vshrl.u32 %v1123, 16
  %v1236 = vor.u32 %v1234, %v1232
  %v1238 = vshll.u32 %v1124, 16
  %v1240 = vrot.slane %v1238, 1
  %v1241 = vsel %vm133, %v1236, %v1240
  %v1242 = vshrl.u32 %v1124, 16
  %v1244 = vor.u32 %v1242, %v1240
  %v1246 = vshll.u32 %v1125, 16
  %v1248 = vrot.slane %v1246, 1
  %v1249 = vsel %vm133, %v1244, %v1248
  %v1254 = vunpack.c.l.b16 %v1044
  %v1255 = vunpack.c.l.b16 %v1045
  %v1256 = vunpack.c.l.b16 %v1046
  %v1257 = vunpack.c.l.b16 %v1047
  %v1258 = vpack.c.b16 %v1255, %v1254
  %v1259 = vpack.c.b16 %v1257, %v1256
  %v1263 = vsel %vm270, %v1137, 0
  %v1266 = vsel %vm270, %v1145, 0
  %v1269 = vsel %vm270, %v1153, 0
  %v1272 = vsel %vm270, %v1161, 0
  %v1275 = vsel %vm270, %v1169, 0
  %v1278 = vsel %vm270, %v1177, 0
  %v1281 = vsel %vm270, %v1185, 0
  %v1284 = vsel %vm270, %v1193, 0
  %v1287 = vsel %vm270, %v1201, 0
  %v1290 = vsel %vm270, %v1209, 0
  %v1293 = vsel %vm270, %v1217, 0
  %v1296 = vsel %vm270, %v1225, 0
  %v1299 = vsel %vm270, %v1233, 0
  %v1302 = vsel %vm270, %v1241, 0
  %v1305 = vsel %vm270, %v1249, 0
  %1307 = vmatprep.subr.bf16.mxu0 0
  %1308 = vmatpush1.bf16.msra.mxu0 0
  %1309 = vmatprep.subr.bf16.mxu0 0
  %1310 = vmatpush1.bf16.msra.mxu0 0
  %1311 = vmatprep.subr.bf16.mxu0 0
  %1312 = vmatpush1.bf16.msra.mxu0 0
  %1313 = vmatprep.subr.bf16.mxu0 0
  %1314 = vmatpush1.bf16.msra.mxu0 0
  %1315 = vmatprep.subr.bf16.mxu0 0
  %1316 = vmatpush1.bf16.msra.mxu0 0
  %1317 = vmatprep.subr.bf16.mxu0 0
  %1318 = vmatpush1.bf16.msra.mxu0 0
  %1319 = vmatprep.subr.bf16.mxu0 0
  %1320 = vmatpush1.bf16.msra.mxu0 %v1259
  %1321 = vmatprep.subr.bf16.mxu0 0
  %1322 = vmatpush1.bf16.msra.mxu0 %v1258
  %1323 = vmatprep.subr.bf16.mxu0 0
  %1324 = vmatpush2.bf16.msra.mxu0 0
  %1325 = vmatprep.subr.bf16.mxu0 0
  %1326 = vmatpush2.bf16.msra.mxu0 0
  %1327 = vmatprep.subr.bf16.mxu0 0
  %1328 = vmatpush2.bf16.msra.mxu0 0
  %1329 = vmatprep.subr.bf16.mxu0 0
  %1330 = vmatpush2.bf16.msra.mxu0 0
  %1331 = vmatprep.subr.bf16.mxu0 0
  %1332 = vmatpush2.bf16.msra.mxu0 0
  %1333 = vmatprep.subr.bf16.mxu0 0
  %1334 = vmatpush2.bf16.msra.mxu0 0
  %1335 = vmatprep.subr.bf16.mxu0 0
  %1336 = vmatpush2.bf16.msra.mxu0 0
  %1337 = vmatprep.subr.bf16.mxu0 0
  %1338 = vmatpush2.bf16.msra.mxu0 0
  %1339 = vmatprep.mubr.bf16.mxu0 0
  %1340 = vmatmul.mubr.bf16.gmra.mxu0 %v1263
  %v1341 = vpop.f32.mrf.mxu0
  %v1342 = vadd.f32 0.0, %v1341
  %v1343 = vpop.f32.mrf.mxu0
  %v1344 = vpop.f32.mrf.mxu0
  %v1345 = vadd.f32 0.0, %v1344
  %v1346 = vpop.f32.mrf.mxu0
  %1347 = vmatprep.mubr.bf16.mxu0 0
  %1348 = vmatmul.mubr.bf16.gmra.mxu0 %v1266
  %v1349 = vpop.f32.mrf.mxu0
  %v1350 = vadd.f32 0.0, %v1349
  %v1351 = vpop.f32.mrf.mxu0
  %v1352 = vpop.f32.mrf.mxu0
  %v1353 = vadd.f32 0.0, %v1352
  %v1354 = vpop.f32.mrf.mxu0
  %1355 = vmatprep.mubr.bf16.mxu0 0
  %1356 = vmatmul.mubr.bf16.gmra.mxu0 %v1269
  %v1357 = vpop.f32.mrf.mxu0
  %v1358 = vadd.f32 0.0, %v1357
  %v1359 = vpop.f32.mrf.mxu0
  %v1360 = vpop.f32.mrf.mxu0
  %v1361 = vadd.f32 0.0, %v1360
  %v1362 = vpop.f32.mrf.mxu0
  %1363 = vmatprep.mubr.bf16.mxu0 0
  %1364 = vmatmul.mubr.bf16.gmra.mxu0 %v1272
  %v1365 = vpop.f32.mrf.mxu0
  %v1366 = vadd.f32 0.0, %v1365
  %v1367 = vpop.f32.mrf.mxu0
  %v1368 = vpop.f32.mrf.mxu0
  %v1369 = vadd.f32 0.0, %v1368
  %v1370 = vpop.f32.mrf.mxu0
  %1371 = vmatprep.mubr.bf16.mxu0 0
  %1372 = vmatmul.mubr.bf16.gmra.mxu0 %v1275
  %v1373 = vpop.f32.mrf.mxu0
  %v1374 = vadd.f32 0.0, %v1373
  %v1375 = vpop.f32.mrf.mxu0
  %v1376 = vpop.f32.mrf.mxu0
  %v1377 = vadd.f32 0.0, %v1376
  %v1378 = vpop.f32.mrf.mxu0
  %1379 = vmatprep.mubr.bf16.mxu0 0
  %1380 = vmatmul.mubr.bf16.gmra.mxu0 %v1278
  %v1381 = vpop.f32.mrf.mxu0
  %v1382 = vadd.f32 0.0, %v1381
  %v1383 = vpop.f32.mrf.mxu0
  %v1384 = vpop.f32.mrf.mxu0
  %v1385 = vadd.f32 0.0, %v1384
  %v1386 = vpop.f32.mrf.mxu0
  %1387 = vmatprep.mubr.bf16.mxu0 0
  %1388 = vmatmul.mubr.bf16.gmra.mxu0 %v1281
  %v1389 = vpop.f32.mrf.mxu0
  %v1390 = vadd.f32 0.0, %v1389
  %v1391 = vpop.f32.mrf.mxu0
  %v1392 = vpop.f32.mrf.mxu0
  %v1393 = vadd.f32 0.0, %v1392
  %v1394 = vpop.f32.mrf.mxu0
  %1395 = vmatprep.mubr.bf16.mxu0 0
  %1396 = vmatmul.mubr.bf16.gmra.mxu0 %v1284
  %v1397 = vpop.f32.mrf.mxu0
  %v1398 = vadd.f32 0.0, %v1397
  %v1399 = vpop.f32.mrf.mxu0
  %v1400 = vpop.f32.mrf.mxu0
  %v1401 = vadd.f32 0.0, %v1400
  %v1402 = vpop.f32.mrf.mxu0
  %1403 = vmatprep.mubr.bf16.mxu0 0
  %1404 = vmatmul.mubr.bf16.gmra.mxu0 %v1287
  %v1405 = vpop.f32.mrf.mxu0
  %v1406 = vadd.f32 0.0, %v1405
  %v1407 = vpop.f32.mrf.mxu0
  %v1408 = vpop.f32.mrf.mxu0
  %v1409 = vadd.f32 0.0, %v1408
  %v1410 = vpop.f32.mrf.mxu0
  %1411 = vmatprep.mubr.bf16.mxu0 0
  %1412 = vmatmul.mubr.bf16.gmra.mxu0 %v1290
  %v1413 = vpop.f32.mrf.mxu0
  %v1414 = vadd.f32 0.0, %v1413
  %v1415 = vpop.f32.mrf.mxu0
  %v1416 = vpop.f32.mrf.mxu0
  %v1417 = vadd.f32 0.0, %v1416
  %v1418 = vpop.f32.mrf.mxu0
  %1419 = vmatprep.mubr.bf16.mxu0 0
  %1420 = vmatmul.mubr.bf16.gmra.mxu0 %v1293
  %v1421 = vpop.f32.mrf.mxu0
  %v1422 = vadd.f32 0.0, %v1421
  %v1423 = vpop.f32.mrf.mxu0
  %v1424 = vpop.f32.mrf.mxu0
  %v1425 = vadd.f32 0.0, %v1424
  %v1426 = vpop.f32.mrf.mxu0
  %1427 = vmatprep.mubr.bf16.mxu0 0
  %1428 = vmatmul.mubr.bf16.gmra.mxu0 %v1296
  %v1429 = vpop.f32.mrf.mxu0
  %v1430 = vadd.f32 0.0, %v1429
  %v1431 = vpop.f32.mrf.mxu0
  %v1432 = vpop.f32.mrf.mxu0
  %v1433 = vadd.f32 0.0, %v1432
  %v1434 = vpop.f32.mrf.mxu0
  %1435 = vmatprep.mubr.bf16.mxu0 0
  %1436 = vmatmul.mubr.bf16.gmra.mxu0 %v1299
  %v1437 = vpop.f32.mrf.mxu0
  %v1438 = vadd.f32 0.0, %v1437
  %v1439 = vpop.f32.mrf.mxu0
  %v1440 = vpop.f32.mrf.mxu0
  %v1441 = vadd.f32 0.0, %v1440
  %v1442 = vpop.f32.mrf.mxu0
  %1443 = vmatprep.mubr.bf16.mxu0 0
  %1444 = vmatmul.mubr.bf16.gmra.mxu0 %v1302
  %v1445 = vpop.f32.mrf.mxu0
  %v1446 = vadd.f32 0.0, %v1445
  %v1447 = vpop.f32.mrf.mxu0
  %v1448 = vpop.f32.mrf.mxu0
  %v1449 = vadd.f32 0.0, %v1448
  %v1450 = vpop.f32.mrf.mxu0
  %1451 = vmatprep.mubr.bf16.mxu0 0
  %1452 = vmatmul.mubr.bf16.gmra.mxu0 %v1305
  %v1453 = vpop.f32.mrf.mxu0
  %v1454 = vadd.f32 0.0, %v1453
  %v1455 = vpop.f32.mrf.mxu0
  %v1456 = vpop.f32.mrf.mxu0
  %v1457 = vadd.f32 0.0, %v1456
  %v1458 = vpop.f32.mrf.mxu0
  %1459 = vdwg.mxu0
  %v1460 = vadd.f32 %v983, %v1342
  %v1461 = vadd.f32 %v984, %v1345
  %v1462 = vadd.f32 %v985, %v1350
  %v1463 = vadd.f32 %v986, %v1353
  %v1464 = vadd.f32 %v987, %v1358
  %v1465 = vadd.f32 %v988, %v1361
  %v1466 = vadd.f32 %v989, %v1366
  %v1467 = vadd.f32 %v990, %v1369
  %v1468 = vadd.f32 %v991, %v1374
  %v1469 = vadd.f32 %v992, %v1377
  %v1470 = vadd.f32 %v993, %v1382
  %v1471 = vadd.f32 %v994, %v1385
  %v1472 = vadd.f32 %v995, %v1390
  %v1473 = vadd.f32 %v996, %v1393
  %v1474 = vadd.f32 %v997, %v1398
  %v1475 = vadd.f32 %v998, %v1401
  %v1476 = vadd.f32 %v999, %v1406
  %v1477 = vadd.f32 %v1000, %v1409
  %v1478 = vadd.f32 %v1001, %v1414
  %v1479 = vadd.f32 %v1002, %v1417
  %v1480 = vadd.f32 %v1003, %v1422
  %v1481 = vadd.f32 %v1004, %v1425
  %v1482 = vadd.f32 %v1005, %v1430
  %v1483 = vadd.f32 %v1006, %v1433
  %v1484 = vadd.f32 %v1007, %v1438
  %v1485 = vadd.f32 %v1008, %v1441
  %v1486 = vadd.f32 %v1009, %v1446
  %v1487 = vadd.f32 %v1010, %v1449
  %v1488 = vadd.f32 %v1011, %v1454
  %v1489 = vadd.f32 %v1012, %v1457
  %v1491 = vlaneseq
  %v1492 = vshrl.u32 %v1491, 7
  %v1493 = vsub.s32 0, %v1492
  %v1494 = vrot.slane %v15, %v1493
  %v1496 = vadd.f32 %v1460, %v1494
  %v1497 = vadd.f32 %v1461, %v1494
  %v1498 = vadd.f32 %v1462, %v1494
  %v1499 = vadd.f32 %v1463, %v1494
  %v1500 = vadd.f32 %v1464, %v1494
  %v1501 = vadd.f32 %v1465, %v1494
  %v1502 = vadd.f32 %v1466, %v1494
  %v1503 = vadd.f32 %v1467, %v1494
  %v1504 = vadd.f32 %v1468, %v1494
  %v1505 = vadd.f32 %v1469, %v1494
  %v1506 = vadd.f32 %v1470, %v1494
  %v1507 = vadd.f32 %v1471, %v1494
  %v1508 = vadd.f32 %v1472, %v1494
  %v1509 = vadd.f32 %v1473, %v1494
  %v1510 = vadd.f32 %v1474, %v1494
  %v1511 = vadd.f32 %v1475, %v1494
  %v1512 = vadd.f32 %v1476, %v1494
  %v1513 = vadd.f32 %v1477, %v1494
  %v1514 = vadd.f32 %v1478, %v1494
  %v1515 = vadd.f32 %v1479, %v1494
  %v1516 = vadd.f32 %v1480, %v1494
  %v1517 = vadd.f32 %v1481, %v1494
  %v1518 = vadd.f32 %v1482, %v1494
  %v1519 = vadd.f32 %v1483, %v1494
  %v1520 = vadd.f32 %v1484, %v1494
  %v1521 = vadd.f32 %v1485, %v1494
  %v1522 = vadd.f32 %v1486, %v1494
  %v1523 = vadd.f32 %v1487, %v1494
  %v1524 = vadd.f32 %v1488, %v1494
  %v1525 = vadd.f32 %v1489, %v1494
  %v1526 = vmax.f32 %v1496, 0.0
  %v1527 = vmax.f32 %v1497, 0.0
  %v1528 = vmax.f32 %v1498, 0.0
  %v1529 = vmax.f32 %v1499, 0.0
  %v1530 = vmax.f32 %v1500, 0.0
  %v1531 = vmax.f32 %v1501, 0.0
  %v1532 = vmax.f32 %v1502, 0.0
  %v1533 = vmax.f32 %v1503, 0.0
  %v1534 = vmax.f32 %v1504, 0.0
  %v1535 = vmax.f32 %v1505, 0.0
  %v1536 = vmax.f32 %v1506, 0.0
  %v1537 = vmax.f32 %v1507, 0.0
  %v1538 = vmax.f32 %v1508, 0.0
  %v1539 = vmax.f32 %v1509, 0.0
  %v1540 = vmax.f32 %v1510, 0.0
  %v1541 = vmax.f32 %v1511, 0.0
  %v1542 = vmax.f32 %v1512, 0.0
  %v1543 = vmax.f32 %v1513, 0.0
  %v1544 = vmax.f32 %v1514, 0.0
  %v1545 = vmax.f32 %v1515, 0.0
  %v1546 = vmax.f32 %v1516, 0.0
  %v1547 = vmax.f32 %v1517, 0.0
  %v1548 = vmax.f32 %v1518, 0.0
  %v1549 = vmax.f32 %v1519, 0.0
  %v1550 = vmax.f32 %v1520, 0.0
  %v1551 = vmax.f32 %v1521, 0.0
  %v1552 = vmax.f32 %v1522, 0.0
  %v1553 = vmax.f32 %v1523, 0.0
  %v1554 = vmax.f32 %v1524, 0.0
  %v1555 = vmax.f32 %v1525, 0.0
  %v1556 = vpack.c.bf16 %v1527, %v1526
  %v1557 = vpack.c.bf16 %v1529, %v1528
  %v1558 = vpack.c.bf16 %v1531, %v1530
  %v1559 = vpack.c.bf16 %v1533, %v1532
  %v1560 = vpack.c.bf16 %v1535, %v1534
  %v1561 = vpack.c.bf16 %v1537, %v1536
  %v1562 = vpack.c.bf16 %v1539, %v1538
  %v1563 = vpack.c.bf16 %v1541, %v1540
  %v1564 = vpack.c.bf16 %v1543, %v1542
  %v1565 = vpack.c.bf16 %v1545, %v1544
  %v1566 = vpack.c.bf16 %v1547, %v1546
  %v1567 = vpack.c.bf16 %v1549, %v1548
  %v1568 = vpack.c.bf16 %v1551, %v1550
  %v1569 = vpack.c.bf16 %v1553, %v1552
  %v1570 = vpack.c.bf16 %v1555, %v1554
  %v1586 = vunpack.c.l.b16 %v1556
  %v1587 = vunpack.c.h.b16 %v1556
  %v1588 = vunpack.c.l.b16 %v1557
  %v1589 = vunpack.c.h.b16 %v1557
  %v1590 = vunpack.c.l.b16 %v1558
  %v1591 = vunpack.c.h.b16 %v1558
  %v1592 = vunpack.c.l.b16 %v1559
  %v1593 = vunpack.c.h.b16 %v1559
  %v1594 = vunpack.c.l.b16 %v1560
  %v1595 = vunpack.c.h.b16 %v1560
  %v1596 = vunpack.c.l.b16 %v1561
  %v1597 = vunpack.c.h.b16 %v1561
  %v1598 = vunpack.c.l.b16 %v1562
  %v1599 = vunpack.c.h.b16 %v1562
  %v1600 = vunpack.c.l.b16 %v1563
  %v1601 = vunpack.c.h.b16 %v1563
  %v1602 = vunpack.c.l.b16 %v1564
  %v1603 = vunpack.c.h.b16 %v1564
  %v1604 = vunpack.c.l.b16 %v1565
  %v1605 = vunpack.c.h.b16 %v1565
  %v1606 = vunpack.c.l.b16 %v1566
  %v1607 = vunpack.c.h.b16 %v1566
  %v1608 = vunpack.c.l.b16 %v1567
  %v1609 = vunpack.c.h.b16 %v1567
  %v1610 = vunpack.c.l.b16 %v1568
  %v1611 = vunpack.c.h.b16 %v1568
  %v1612 = vunpack.c.l.b16 %v1569
  %v1613 = vunpack.c.h.b16 %v1569
  %v1614 = vunpack.c.l.b16 %v1570
  %v1615 = vunpack.c.h.b16 %v1570
  %v1616 = vpack.c.b16 %v1586, %v1586
  %v1617 = vpack.c.b16 %v1587, %v1587
  %v1618 = vpack.c.b16 %v1588, %v1588
  %v1619 = vpack.c.b16 %v1589, %v1589
  %v1620 = vpack.c.b16 %v1590, %v1590
  %v1621 = vpack.c.b16 %v1591, %v1591
  %v1622 = vpack.c.b16 %v1592, %v1592
  %v1623 = vpack.c.b16 %v1593, %v1593
  %v1624 = vpack.c.b16 %v1594, %v1594
  %v1625 = vpack.c.b16 %v1595, %v1595
  %v1626 = vpack.c.b16 %v1596, %v1596
  %v1627 = vpack.c.b16 %v1597, %v1597
  %v1628 = vpack.c.b16 %v1598, %v1598
  %v1629 = vpack.c.b16 %v1599, %v1599
  %v1630 = vpack.c.b16 %v1600, %v1600
  %v1631 = vpack.c.b16 %v1601, %v1601
  %v1632 = vpack.c.b16 %v1602, %v1602
  %v1633 = vpack.c.b16 %v1603, %v1603
  %v1634 = vpack.c.b16 %v1604, %v1604
  %v1635 = vpack.c.b16 %v1605, %v1605
  %v1636 = vpack.c.b16 %v1606, %v1606
  %v1637 = vpack.c.b16 %v1607, %v1607
  %v1638 = vpack.c.b16 %v1608, %v1608
  %v1639 = vpack.c.b16 %v1609, %v1609
  %v1640 = vpack.c.b16 %v1610, %v1610
  %v1641 = vpack.c.b16 %v1611, %v1611
  %v1642 = vpack.c.b16 %v1612, %v1612
  %v1643 = vpack.c.b16 %v1613, %v1613
  %v1644 = vpack.c.b16 %v1614, %v1614
  %v1645 = vpack.c.b16 %v1615, %v1615
  %vm1676 = vcmask 125952
  %1677 = vst.msk [vmem:[%s3] sm:$0xf] %vm1676, %v1616
  %1678 = vst.msk [vmem:[%s3 + $0x4] sm:$0xf] %vm1676, %v1617
  %1679 = vst.msk [vmem:[%s3 + $0x8] sm:$0xf] %vm1676, %v1618
  %1680 = vst.msk [vmem:[%s3 + $0xc] sm:$0xf] %vm1676, %v1619
  %1681 = vst.msk [vmem:[%s3 + $0x10] sm:$0xf] %vm1676, %v1620
  %1682 = vst.msk [vmem:[%s3 + $0x14] sm:$0xf] %vm1676, %v1621
  %1683 = vst.msk [vmem:[%s3 + $0x18] sm:$0xf] %vm1676, %v1622
  %1684 = vst.msk [vmem:[%s3 + $0x1c] sm:$0xf] %vm1676, %v1623
  %1685 = vst.msk [vmem:[%s3 + $0x20] sm:$0xf] %vm1676, %v1624
  %1686 = vst.msk [vmem:[%s3 + $0x24] sm:$0xf] %vm1676, %v1625
  %1687 = vst.msk [vmem:[%s3 + $0x28] sm:$0xf] %vm1676, %v1626
  %1688 = vst.msk [vmem:[%s3 + $0x2c] sm:$0xf] %vm1676, %v1627
  %1689 = vst.msk [vmem:[%s3 + $0x30] sm:$0xf] %vm1676, %v1628
  %1690 = vst.msk [vmem:[%s3 + $0x34] sm:$0xf] %vm1676, %v1629
  %1691 = vst.msk [vmem:[%s3 + $0x38] sm:$0xf] %vm1676, %v1630
  %1692 = vst.msk [vmem:[%s3 + $0x3c] sm:$0xf] %vm1676, %v1631
  %1693 = vst.msk [vmem:[%s3 + $0x40] sm:$0xf] %vm1676, %v1632
  %1694 = vst.msk [vmem:[%s3 + $0x44] sm:$0xf] %vm1676, %v1633
  %1695 = vst.msk [vmem:[%s3 + $0x48] sm:$0xf] %vm1676, %v1634
  %1696 = vst.msk [vmem:[%s3 + $0x4c] sm:$0xf] %vm1676, %v1635
  %1697 = vst.msk [vmem:[%s3 + $0x50] sm:$0xf] %vm1676, %v1636
  %1698 = vst.msk [vmem:[%s3 + $0x54] sm:$0xf] %vm1676, %v1637
  %1699 = vst.msk [vmem:[%s3 + $0x58] sm:$0xf] %vm1676, %v1638
  %1700 = vst.msk [vmem:[%s3 + $0x5c] sm:$0xf] %vm1676, %v1639
  %1701 = vst.msk [vmem:[%s3 + $0x60] sm:$0xf] %vm1676, %v1640
  %1702 = vst.msk [vmem:[%s3 + $0x64] sm:$0xf] %vm1676, %v1641
  %1703 = vst.msk [vmem:[%s3 + $0x68] sm:$0xf] %vm1676, %v1642
  %1704 = vst.msk [vmem:[%s3 + $0x6c] sm:$0xf] %vm1676, %v1643
  %1705 = vst.msk [vmem:[%s3 + $0x70] sm:$0xf] %vm1676, %v1644
  %1706 = vst.msk [vmem:[%s3 + $0x74] sm:$0xf] %vm1676, %v1645
  %s1707 = scalar_lea.vmem %s0, 132
  %v1708 = vld [vmem:[%s1707] sm:$0xf]
  %v1709 = vld [vmem:[%s1707 + $0x4] sm:$0xf]
  %v1710 = vld [vmem:[%s1707 + $0x8] sm:$0xf]
  %v1711 = vld [vmem:[%s1707 + $0xc] sm:$0xf]
  %v1712 = vld [vmem:[%s1707 + $0x10] sm:$0xf]
  %v1713 = vld [vmem:[%s1707 + $0x14] sm:$0xf]
  %v1714 = vld [vmem:[%s1707 + $0x18] sm:$0xf]
  %v1715 = vld [vmem:[%s1707 + $0x1c] sm:$0xf]
  %v1716 = vld [vmem:[%s1707 + $0x20] sm:$0xf]
  %v1717 = vld [vmem:[%s1707 + $0x24] sm:$0xf]
  %v1718 = vld [vmem:[%s1707 + $0x28] sm:$0xf]
  %v1719 = vld [vmem:[%s1707 + $0x2c] sm:$0xf]
  %v1720 = vld [vmem:[%s1707 + $0x30] sm:$0xf]
  %v1721 = vld [vmem:[%s1707 + $0x34] sm:$0xf]
  %v1722 = vld [vmem:[%s1707 + $0x38] sm:$0xf]
  %v1723 = vld [vmem:[%s1707 + $0x3c] sm:$0xf]
  %v1724 = vld [vmem:[%s1707 + $0x40] sm:$0xf]
  %v1725 = vld [vmem:[%s1707 + $0x44] sm:$0xf]
  %v1726 = vld [vmem:[%s1707 + $0x48] sm:$0xf]
  %v1727 = vld [vmem:[%s1707 + $0x4c] sm:$0xf]
  %v1728 = vld [vmem:[%s1707 + $0x50] sm:$0xf]
  %v1729 = vld [vmem:[%s1707 + $0x54] sm:$0xf]
  %v1730 = vld [vmem:[%s1707 + $0x58] sm:$0xf]
  %v1731 = vld [vmem:[%s1707 + $0x5c] sm:$0xf]
  %v1732 = vld [vmem:[%s1707 + $0x60] sm:$0xf]
  %v1733 = vld [vmem:[%s1707 + $0x64] sm:$0xf]
  %v1734 = vld [vmem:[%s1707 + $0x68] sm:$0xf]
  %v1735 = vld [vmem:[%s1707 + $0x6c] sm:$0xf]
  %v1736 = vld [vmem:[%s1707 + $0x70] sm:$0xf]
  %v1737 = vld [vmem:[%s1707 + $0x74] sm:$0xf]
  %v1738 = vld [vmem:[%s1] sm:$0xf]
  %v1739 = vld [vmem:[%s1 + $0x4] sm:$0xf]
  %v1740 = vld [vmem:[%s1 + $0x8] sm:$0xf]
  %v1741 = vld [vmem:[%s1 + $0xc] sm:$0xf]
  %v1742 = vld [vmem:[%s1707 + $0x78] sm:$0x1]
  %v1743 = vld [vmem:[%s1 + $0x10] sm:$0xf]
  %v1744 = vld [vmem:[%s1 + $0x14] sm:$0xf]
  %v1745 = vld [vmem:[%s1 + $0x18] sm:$0xf]
  %v1746 = vld [vmem:[%s1 + $0x1c] sm:$0xf]
  %v1778 = vunpack.c.l.b16 %v1708
  %v1779 = vunpack.c.l.b16 %v1709
  %v1780 = vunpack.c.l.b16 %v1710
  %v1781 = vunpack.c.l.b16 %v1711
  %v1782 = vunpack.c.l.b16 %v1712
  %v1783 = vunpack.c.l.b16 %v1713
  %v1784 = vunpack.c.l.b16 %v1714
  %v1785 = vunpack.c.l.b16 %v1715
  %v1786 = vunpack.c.l.b16 %v1716
  %v1787 = vunpack.c.l.b16 %v1717
  %v1788 = vunpack.c.l.b16 %v1718
  %v1789 = vunpack.c.l.b16 %v1719
  %v1790 = vunpack.c.l.b16 %v1720
  %v1791 = vunpack.c.l.b16 %v1721
  %v1792 = vunpack.c.l.b16 %v1722
  %v1793 = vunpack.c.l.b16 %v1723
  %v1794 = vunpack.c.l.b16 %v1724
  %v1795 = vunpack.c.l.b16 %v1725
  %v1796 = vunpack.c.l.b16 %v1726
  %v1797 = vunpack.c.l.b16 %v1727
  %v1798 = vunpack.c.l.b16 %v1728
  %v1799 = vunpack.c.l.b16 %v1729
  %v1800 = vunpack.c.l.b16 %v1730
  %v1801 = vunpack.c.l.b16 %v1731
  %v1802 = vunpack.c.l.b16 %v1732
  %v1803 = vunpack.c.l.b16 %v1733
  %v1804 = vunpack.c.l.b16 %v1734
  %v1805 = vunpack.c.l.b16 %v1735
  %v1806 = vunpack.c.l.b16 %v1736
  %v1807 = vunpack.c.l.b16 %v1737
  %v1808 = vunpack.c.l.b16 %v1742
  %v1809 = vpack.c.b16 %v1779, %v1778
  %v1810 = vpack.c.b16 %v1781, %v1780
  %v1811 = vpack.c.b16 %v1783, %v1782
  %v1812 = vpack.c.b16 %v1785, %v1784
  %v1813 = vpack.c.b16 %v1787, %v1786
  %v1814 = vpack.c.b16 %v1789, %v1788
  %v1815 = vpack.c.b16 %v1791, %v1790
  %v1816 = vpack.c.b16 %v1793, %v1792
  %v1817 = vpack.c.b16 %v1795, %v1794
  %v1818 = vpack.c.b16 %v1797, %v1796
  %v1819 = vpack.c.b16 %v1799, %v1798
  %v1820 = vpack.c.b16 %v1801, %v1800
  %v1821 = vpack.c.b16 %v1803, %v1802
  %v1822 = vpack.c.b16 %v1805, %v1804
  %v1823 = vpack.c.b16 %v1807, %v1806
  %v1824 = vpack.c.b16 %v1808, %v1808
  %v1826 = vshrl.u32 %v1809, 16
  %v1828 = vshll.u32 %v1809, 16
  %v1830 = vrot.slane %v1828, 1
  %v1831 = vor.u32 %v1826, %v1830
  %v1833 = vshll.u32 %v1810, 16
  %v1835 = vrot.slane %v1833, 1
  %v1836 = vsel %vm133, %v1831, %v1835
  %v1837 = vshrl.u32 %v1810, 16
  %v1839 = vor.u32 %v1837, %v1835
  %v1841 = vshll.u32 %v1811, 16
  %v1843 = vrot.slane %v1841, 1
  %v1844 = vsel %vm133, %v1839, %v1843
  %v1845 = vshrl.u32 %v1811, 16
  %v1847 = vor.u32 %v1845, %v1843
  %v1849 = vshll.u32 %v1812, 16
  %v1851 = vrot.slane %v1849, 1
  %v1852 = vsel %vm133, %v1847, %v1851
  %v1853 = vshrl.u32 %v1812, 16
  %v1855 = vor.u32 %v1853, %v1851
  %v1857 = vshll.u32 %v1813, 16
  %v1859 = vrot.slane %v1857, 1
  %v1860 = vsel %vm133, %v1855, %v1859
  %v1861 = vshrl.u32 %v1813, 16
  %v1863 = vor.u32 %v1861, %v1859
  %v1865 = vshll.u32 %v1814, 16
  %v1867 = vrot.slane %v1865, 1
  %v1868 = vsel %vm133, %v1863, %v1867
  %v1869 = vshrl.u32 %v1814, 16
  %v1871 = vor.u32 %v1869, %v1867
  %v1873 = vshll.u32 %v1815, 16
  %v1875 = vrot.slane %v1873, 1
  %v1876 = vsel %vm133, %v1871, %v1875
  %v1877 = vshrl.u32 %v1815, 16
  %v1879 = vor.u32 %v1877, %v1875
  %v1881 = vshll.u32 %v1816, 16
  %v1883 = vrot.slane %v1881, 1
  %v1884 = vsel %vm133, %v1879, %v1883
  %v1885 = vshrl.u32 %v1816, 16
  %v1887 = vor.u32 %v1885, %v1883
  %v1889 = vshll.u32 %v1817, 16
  %v1891 = vrot.slane %v1889, 1
  %v1892 = vsel %vm133, %v1887, %v1891
  %v1893 = vshrl.u32 %v1817, 16
  %v1895 = vor.u32 %v1893, %v1891
  %v1897 = vshll.u32 %v1818, 16
  %v1899 = vrot.slane %v1897, 1
  %v1900 = vsel %vm133, %v1895, %v1899
  %v1901 = vshrl.u32 %v1818, 16
  %v1903 = vor.u32 %v1901, %v1899
  %v1905 = vshll.u32 %v1819, 16
  %v1907 = vrot.slane %v1905, 1
  %v1908 = vsel %vm133, %v1903, %v1907
  %v1909 = vshrl.u32 %v1819, 16
  %v1911 = vor.u32 %v1909, %v1907
  %v1913 = vshll.u32 %v1820, 16
  %v1915 = vrot.slane %v1913, 1
  %v1916 = vsel %vm133, %v1911, %v1915
  %v1917 = vshrl.u32 %v1820, 16
  %v1919 = vor.u32 %v1917, %v1915
  %v1921 = vshll.u32 %v1821, 16
  %v1923 = vrot.slane %v1921, 1
  %v1924 = vsel %vm133, %v1919, %v1923
  %v1925 = vshrl.u32 %v1821, 16
  %v1927 = vor.u32 %v1925, %v1923
  %v1929 = vshll.u32 %v1822, 16
  %v1931 = vrot.slane %v1929, 1
  %v1932 = vsel %vm133, %v1927, %v1931
  %v1933 = vshrl.u32 %v1822, 16
  %v1935 = vor.u32 %v1933, %v1931
  %v1937 = vshll.u32 %v1823, 16
  %v1939 = vrot.slane %v1937, 1
  %v1940 = vsel %vm133, %v1935, %v1939
  %v1941 = vshrl.u32 %v1823, 16
  %v1943 = vor.u32 %v1941, %v1939
  %v1945 = vshll.u32 %v1824, 16
  %v1947 = vrot.slane %v1945, 1
  %v1948 = vsel %vm133, %v1943, %v1947
  %v1953 = vunpack.c.l.b16 %v1743
  %v1954 = vunpack.c.l.b16 %v1744
  %v1955 = vunpack.c.l.b16 %v1745
  %v1956 = vunpack.c.l.b16 %v1746
  %v1957 = vpack.c.b16 %v1954, %v1953
  %v1958 = vpack.c.b16 %v1956, %v1955
  %v1962 = vsel %vm270, %v1836, 0
  %v1965 = vsel %vm270, %v1844, 0
  %v1968 = vsel %vm270, %v1852, 0
  %v1971 = vsel %vm270, %v1860, 0
  %v1974 = vsel %vm270, %v1868, 0
  %v1977 = vsel %vm270, %v1876, 0
  %v1980 = vsel %vm270, %v1884, 0
  %v1983 = vsel %vm270, %v1892, 0
  %v1986 = vsel %vm270, %v1900, 0
  %v1989 = vsel %vm270, %v1908, 0
  %v1992 = vsel %vm270, %v1916, 0
  %v1995 = vsel %vm270, %v1924, 0
  %v1998 = vsel %vm270, %v1932, 0
  %v2001 = vsel %vm270, %v1940, 0
  %v2004 = vsel %vm270, %v1948, 0
  %2006 = vmatprep.subr.bf16.mxu0 0
  %2007 = vmatpush1.bf16.msra.mxu0 0
  %2008 = vmatprep.subr.bf16.mxu0 0
  %2009 = vmatpush1.bf16.msra.mxu0 0
  %2010 = vmatprep.subr.bf16.mxu0 0
  %2011 = vmatpush1.bf16.msra.mxu0 0
  %2012 = vmatprep.subr.bf16.mxu0 0
  %2013 = vmatpush1.bf16.msra.mxu0 0
  %2014 = vmatprep.subr.bf16.mxu0 0
  %2015 = vmatpush1.bf16.msra.mxu0 0
  %2016 = vmatprep.subr.bf16.mxu0 0
  %2017 = vmatpush1.bf16.msra.mxu0 0
  %2018 = vmatprep.subr.bf16.mxu0 0
  %2019 = vmatpush1.bf16.msra.mxu0 %v1958
  %2020 = vmatprep.subr.bf16.mxu0 0
  %2021 = vmatpush1.bf16.msra.mxu0 %v1957
  %2022 = vmatprep.subr.bf16.mxu0 0
  %2023 = vmatpush2.bf16.msra.mxu0 0
  %2024 = vmatprep.subr.bf16.mxu0 0
  %2025 = vmatpush2.bf16.msra.mxu0 0
  %2026 = vmatprep.subr.bf16.mxu0 0
  %2027 = vmatpush2.bf16.msra.mxu0 0
  %2028 = vmatprep.subr.bf16.mxu0 0
  %2029 = vmatpush2.bf16.msra.mxu0 0
  %2030 = vmatprep.subr.bf16.mxu0 0
  %2031 = vmatpush2.bf16.msra.mxu0 0
  %2032 = vmatprep.subr.bf16.mxu0 0
  %2033 = vmatpush2.bf16.msra.mxu0 0
  %2034 = vmatprep.subr.bf16.mxu0 0
  %2035 = vmatpush2.bf16.msra.mxu0 0
  %2036 = vmatprep.subr.bf16.mxu0 0
  %2037 = vmatpush2.bf16.msra.mxu0 0
  %2038 = vmatprep.mubr.bf16.mxu0 0
  %2039 = vmatmul.mubr.bf16.gmra.mxu0 %v1962
  %v2040 = vpop.f32.mrf.mxu0
  %v2041 = vadd.f32 0.0, %v2040
  %v2042 = vpop.f32.mrf.mxu0
  %v2043 = vpop.f32.mrf.mxu0
  %v2044 = vadd.f32 0.0, %v2043
  %v2045 = vpop.f32.mrf.mxu0
  %2046 = vmatprep.mubr.bf16.mxu0 0
  %2047 = vmatmul.mubr.bf16.gmra.mxu0 %v1965
  %v2048 = vpop.f32.mrf.mxu0
  %v2049 = vadd.f32 0.0, %v2048
  %v2050 = vpop.f32.mrf.mxu0
  %v2051 = vpop.f32.mrf.mxu0
  %v2052 = vadd.f32 0.0, %v2051
  %v2053 = vpop.f32.mrf.mxu0
  %2054 = vmatprep.mubr.bf16.mxu0 0
  %2055 = vmatmul.mubr.bf16.gmra.mxu0 %v1968
  %v2056 = vpop.f32.mrf.mxu0
  %v2057 = vadd.f32 0.0, %v2056
  %v2058 = vpop.f32.mrf.mxu0
  %v2059 = vpop.f32.mrf.mxu0
  %v2060 = vadd.f32 0.0, %v2059
  %v2061 = vpop.f32.mrf.mxu0
  %2062 = vmatprep.mubr.bf16.mxu0 0
  %2063 = vmatmul.mubr.bf16.gmra.mxu0 %v1971
  %v2064 = vpop.f32.mrf.mxu0
  %v2065 = vadd.f32 0.0, %v2064
  %v2066 = vpop.f32.mrf.mxu0
  %v2067 = vpop.f32.mrf.mxu0
  %v2068 = vadd.f32 0.0, %v2067
  %v2069 = vpop.f32.mrf.mxu0
  %2070 = vmatprep.mubr.bf16.mxu0 0
  %2071 = vmatmul.mubr.bf16.gmra.mxu0 %v1974
  %v2072 = vpop.f32.mrf.mxu0
  %v2073 = vadd.f32 0.0, %v2072
  %v2074 = vpop.f32.mrf.mxu0
  %v2075 = vpop.f32.mrf.mxu0
  %v2076 = vadd.f32 0.0, %v2075
  %v2077 = vpop.f32.mrf.mxu0
  %2078 = vmatprep.mubr.bf16.mxu0 0
  %2079 = vmatmul.mubr.bf16.gmra.mxu0 %v1977
  %v2080 = vpop.f32.mrf.mxu0
  %v2081 = vadd.f32 0.0, %v2080
  %v2082 = vpop.f32.mrf.mxu0
  %v2083 = vpop.f32.mrf.mxu0
  %v2084 = vadd.f32 0.0, %v2083
  %v2085 = vpop.f32.mrf.mxu0
  %2086 = vmatprep.mubr.bf16.mxu0 0
  %2087 = vmatmul.mubr.bf16.gmra.mxu0 %v1980
  %v2088 = vpop.f32.mrf.mxu0
  %v2089 = vadd.f32 0.0, %v2088
  %v2090 = vpop.f32.mrf.mxu0
  %v2091 = vpop.f32.mrf.mxu0
  %v2092 = vadd.f32 0.0, %v2091
  %v2093 = vpop.f32.mrf.mxu0
  %2094 = vmatprep.mubr.bf16.mxu0 0
  %2095 = vmatmul.mubr.bf16.gmra.mxu0 %v1983
  %v2096 = vpop.f32.mrf.mxu0
  %v2097 = vadd.f32 0.0, %v2096
  %v2098 = vpop.f32.mrf.mxu0
  %v2099 = vpop.f32.mrf.mxu0
  %v2100 = vadd.f32 0.0, %v2099
  %v2101 = vpop.f32.mrf.mxu0
  %2102 = vmatprep.mubr.bf16.mxu0 0
  %2103 = vmatmul.mubr.bf16.gmra.mxu0 %v1986
  %v2104 = vpop.f32.mrf.mxu0
  %v2105 = vadd.f32 0.0, %v2104
  %v2106 = vpop.f32.mrf.mxu0
  %v2107 = vpop.f32.mrf.mxu0
  %v2108 = vadd.f32 0.0, %v2107
  %v2109 = vpop.f32.mrf.mxu0
  %2110 = vmatprep.mubr.bf16.mxu0 0
  %2111 = vmatmul.mubr.bf16.gmra.mxu0 %v1989
  %v2112 = vpop.f32.mrf.mxu0
  %v2113 = vadd.f32 0.0, %v2112
  %v2114 = vpop.f32.mrf.mxu0
  %v2115 = vpop.f32.mrf.mxu0
  %v2116 = vadd.f32 0.0, %v2115
  %v2117 = vpop.f32.mrf.mxu0
  %2118 = vmatprep.mubr.bf16.mxu0 0
  %2119 = vmatmul.mubr.bf16.gmra.mxu0 %v1992
  %v2120 = vpop.f32.mrf.mxu0
  %v2121 = vadd.f32 0.0, %v2120
  %v2122 = vpop.f32.mrf.mxu0
  %v2123 = vpop.f32.mrf.mxu0
  %v2124 = vadd.f32 0.0, %v2123
  %v2125 = vpop.f32.mrf.mxu0
  %2126 = vmatprep.mubr.bf16.mxu0 0
  %2127 = vmatmul.mubr.bf16.gmra.mxu0 %v1995
  %v2128 = vpop.f32.mrf.mxu0
  %v2129 = vadd.f32 0.0, %v2128
  %v2130 = vpop.f32.mrf.mxu0
  %v2131 = vpop.f32.mrf.mxu0
  %v2132 = vadd.f32 0.0, %v2131
  %v2133 = vpop.f32.mrf.mxu0
  %2134 = vmatprep.mubr.bf16.mxu0 0
  %2135 = vmatmul.mubr.bf16.gmra.mxu0 %v1998
  %v2136 = vpop.f32.mrf.mxu0
  %v2137 = vadd.f32 0.0, %v2136
  %v2138 = vpop.f32.mrf.mxu0
  %v2139 = vpop.f32.mrf.mxu0
  %v2140 = vadd.f32 0.0, %v2139
  %v2141 = vpop.f32.mrf.mxu0
  %2142 = vmatprep.mubr.bf16.mxu0 0
  %2143 = vmatmul.mubr.bf16.gmra.mxu0 %v2001
  %v2144 = vpop.f32.mrf.mxu0
  %v2145 = vadd.f32 0.0, %v2144
  %v2146 = vpop.f32.mrf.mxu0
  %v2147 = vpop.f32.mrf.mxu0
  %v2148 = vadd.f32 0.0, %v2147
  %v2149 = vpop.f32.mrf.mxu0
  %2150 = vmatprep.mubr.bf16.mxu0 0
  %2151 = vmatmul.mubr.bf16.gmra.mxu0 %v2004
  %v2152 = vpop.f32.mrf.mxu0
  %v2153 = vadd.f32 0.0, %v2152
  %v2154 = vpop.f32.mrf.mxu0
  %v2155 = vpop.f32.mrf.mxu0
  %v2156 = vadd.f32 0.0, %v2155
  %v2157 = vpop.f32.mrf.mxu0
  %2158 = vdwg.mxu0
  %v2163 = vunpack.c.l.b16 %v1738
  %v2164 = vunpack.c.l.b16 %v1739
  %v2165 = vunpack.c.l.b16 %v1740
  %v2166 = vunpack.c.l.b16 %v1741
  %v2167 = vpack.c.b16 %v2164, %v2163
  %v2168 = vpack.c.b16 %v2166, %v2165
  %v2171 = vsel %vm270, %v1809, 0
  %v2173 = vsel %vm270, %v1810, 0
  %v2175 = vsel %vm270, %v1811, 0
  %v2177 = vsel %vm270, %v1812, 0
  %v2179 = vsel %vm270, %v1813, 0
  %v2181 = vsel %vm270, %v1814, 0
  %v2183 = vsel %vm270, %v1815, 0
  %v2185 = vsel %vm270, %v1816, 0
  %v2187 = vsel %vm270, %v1817, 0
  %v2189 = vsel %vm270, %v1818, 0
  %v2191 = vsel %vm270, %v1819, 0
  %v2193 = vsel %vm270, %v1820, 0
  %v2195 = vsel %vm270, %v1821, 0
  %v2197 = vsel %vm270, %v1822, 0
  %v2199 = vsel %vm270, %v1823, 0
  %2201 = vmatprep.subr.bf16.mxu0 0
  %2202 = vmatpush1.bf16.msra.mxu0 0
  %2203 = vmatprep.subr.bf16.mxu0 0
  %2204 = vmatpush1.bf16.msra.mxu0 0
  %2205 = vmatprep.subr.bf16.mxu0 0
  %2206 = vmatpush1.bf16.msra.mxu0 0
  %2207 = vmatprep.subr.bf16.mxu0 0
  %2208 = vmatpush1.bf16.msra.mxu0 0
  %2209 = vmatprep.subr.bf16.mxu0 0
  %2210 = vmatpush1.bf16.msra.mxu0 0
  %2211 = vmatprep.subr.bf16.mxu0 0
  %2212 = vmatpush1.bf16.msra.mxu0 0
  %2213 = vmatprep.subr.bf16.mxu0 0
  %2214 = vmatpush1.bf16.msra.mxu0 %v2168
  %2215 = vmatprep.subr.bf16.mxu0 0
  %2216 = vmatpush1.bf16.msra.mxu0 %v2167
  %2217 = vmatprep.subr.bf16.mxu0 0
  %2218 = vmatpush2.bf16.msra.mxu0 0
  %2219 = vmatprep.subr.bf16.mxu0 0
  %2220 = vmatpush2.bf16.msra.mxu0 0
  %2221 = vmatprep.subr.bf16.mxu0 0
  %2222 = vmatpush2.bf16.msra.mxu0 0
  %2223 = vmatprep.subr.bf16.mxu0 0
  %2224 = vmatpush2.bf16.msra.mxu0 0
  %2225 = vmatprep.subr.bf16.mxu0 0
  %2226 = vmatpush2.bf16.msra.mxu0 0
  %2227 = vmatprep.subr.bf16.mxu0 0
  %2228 = vmatpush2.bf16.msra.mxu0 0
  %2229 = vmatprep.subr.bf16.mxu0 0
  %2230 = vmatpush2.bf16.msra.mxu0 0
  %2231 = vmatprep.subr.bf16.mxu0 0
  %2232 = vmatpush2.bf16.msra.mxu0 0
  %2233 = vmatprep.mubr.bf16.mxu0 0
  %2234 = vmatmul.mubr.bf16.gmra.mxu0 %v2171
  %v2235 = vpop.f32.mrf.mxu0
  %v2236 = vadd.f32 %v2041, %v2235
  %v2237 = vpop.f32.mrf.mxu0
  %v2238 = vpop.f32.mrf.mxu0
  %v2239 = vadd.f32 %v2044, %v2238
  %v2240 = vpop.f32.mrf.mxu0
  %2241 = vmatprep.mubr.bf16.mxu0 0
  %2242 = vmatmul.mubr.bf16.gmra.mxu0 %v2173
  %v2243 = vpop.f32.mrf.mxu0
  %v2244 = vadd.f32 %v2049, %v2243
  %v2245 = vpop.f32.mrf.mxu0
  %v2246 = vpop.f32.mrf.mxu0
  %v2247 = vadd.f32 %v2052, %v2246
  %v2248 = vpop.f32.mrf.mxu0
  %2249 = vmatprep.mubr.bf16.mxu0 0
  %2250 = vmatmul.mubr.bf16.gmra.mxu0 %v2175
  %v2251 = vpop.f32.mrf.mxu0
  %v2252 = vadd.f32 %v2057, %v2251
  %v2253 = vpop.f32.mrf.mxu0
  %v2254 = vpop.f32.mrf.mxu0
  %v2255 = vadd.f32 %v2060, %v2254
  %v2256 = vpop.f32.mrf.mxu0
  %2257 = vmatprep.mubr.bf16.mxu0 0
  %2258 = vmatmul.mubr.bf16.gmra.mxu0 %v2177
  %v2259 = vpop.f32.mrf.mxu0
  %v2260 = vadd.f32 %v2065, %v2259
  %v2261 = vpop.f32.mrf.mxu0
  %v2262 = vpop.f32.mrf.mxu0
  %v2263 = vadd.f32 %v2068, %v2262
  %v2264 = vpop.f32.mrf.mxu0
  %2265 = vmatprep.mubr.bf16.mxu0 0
  %2266 = vmatmul.mubr.bf16.gmra.mxu0 %v2179
  %v2267 = vpop.f32.mrf.mxu0
  %v2268 = vadd.f32 %v2073, %v2267
  %v2269 = vpop.f32.mrf.mxu0
  %v2270 = vpop.f32.mrf.mxu0
  %v2271 = vadd.f32 %v2076, %v2270
  %v2272 = vpop.f32.mrf.mxu0
  %2273 = vmatprep.mubr.bf16.mxu0 0
  %2274 = vmatmul.mubr.bf16.gmra.mxu0 %v2181
  %v2275 = vpop.f32.mrf.mxu0
  %v2276 = vadd.f32 %v2081, %v2275
  %v2277 = vpop.f32.mrf.mxu0
  %v2278 = vpop.f32.mrf.mxu0
  %v2279 = vadd.f32 %v2084, %v2278
  %v2280 = vpop.f32.mrf.mxu0
  %2281 = vmatprep.mubr.bf16.mxu0 0
  %2282 = vmatmul.mubr.bf16.gmra.mxu0 %v2183
  %v2283 = vpop.f32.mrf.mxu0
  %v2284 = vadd.f32 %v2089, %v2283
  %v2285 = vpop.f32.mrf.mxu0
  %v2286 = vpop.f32.mrf.mxu0
  %v2287 = vadd.f32 %v2092, %v2286
  %v2288 = vpop.f32.mrf.mxu0
  %2289 = vmatprep.mubr.bf16.mxu0 0
  %2290 = vmatmul.mubr.bf16.gmra.mxu0 %v2185
  %v2291 = vpop.f32.mrf.mxu0
  %v2292 = vadd.f32 %v2097, %v2291
  %v2293 = vpop.f32.mrf.mxu0
  %v2294 = vpop.f32.mrf.mxu0
  %v2295 = vadd.f32 %v2100, %v2294
  %v2296 = vpop.f32.mrf.mxu0
  %2297 = vmatprep.mubr.bf16.mxu0 0
  %2298 = vmatmul.mubr.bf16.gmra.mxu0 %v2187
  %v2299 = vpop.f32.mrf.mxu0
  %v2300 = vadd.f32 %v2105, %v2299
  %v2301 = vpop.f32.mrf.mxu0
  %v2302 = vpop.f32.mrf.mxu0
  %v2303 = vadd.f32 %v2108, %v2302
  %v2304 = vpop.f32.mrf.mxu0
  %2305 = vmatprep.mubr.bf16.mxu0 0
  %2306 = vmatmul.mubr.bf16.gmra.mxu0 %v2189
  %v2307 = vpop.f32.mrf.mxu0
  %v2308 = vadd.f32 %v2113, %v2307
  %v2309 = vpop.f32.mrf.mxu0
  %v2310 = vpop.f32.mrf.mxu0
  %v2311 = vadd.f32 %v2116, %v2310
  %v2312 = vpop.f32.mrf.mxu0
  %2313 = vmatprep.mubr.bf16.mxu0 0
  %2314 = vmatmul.mubr.bf16.gmra.mxu0 %v2191
  %v2315 = vpop.f32.mrf.mxu0
  %v2316 = vadd.f32 %v2121, %v2315
  %v2317 = vpop.f32.mrf.mxu0
  %v2318 = vpop.f32.mrf.mxu0
  %v2319 = vadd.f32 %v2124, %v2318
  %v2320 = vpop.f32.mrf.mxu0
  %2321 = vmatprep.mubr.bf16.mxu0 0
  %2322 = vmatmul.mubr.bf16.gmra.mxu0 %v2193
  %v2323 = vpop.f32.mrf.mxu0
  %v2324 = vadd.f32 %v2129, %v2323
  %v2325 = vpop.f32.mrf.mxu0
  %v2326 = vpop.f32.mrf.mxu0
  %v2327 = vadd.f32 %v2132, %v2326
  %v2328 = vpop.f32.mrf.mxu0
  %2329 = vmatprep.mubr.bf16.mxu0 0
  %2330 = vmatmul.mubr.bf16.gmra.mxu0 %v2195
  %v2331 = vpop.f32.mrf.mxu0
  %v2332 = vadd.f32 %v2137, %v2331
  %v2333 = vpop.f32.mrf.mxu0
  %v2334 = vpop.f32.mrf.mxu0
  %v2335 = vadd.f32 %v2140, %v2334
  %v2336 = vpop.f32.mrf.mxu0
  %2337 = vmatprep.mubr.bf16.mxu0 0
  %2338 = vmatmul.mubr.bf16.gmra.mxu0 %v2197
  %v2339 = vpop.f32.mrf.mxu0
  %v2340 = vadd.f32 %v2145, %v2339
  %v2341 = vpop.f32.mrf.mxu0
  %v2342 = vpop.f32.mrf.mxu0
  %v2343 = vadd.f32 %v2148, %v2342
  %v2344 = vpop.f32.mrf.mxu0
  %2345 = vmatprep.mubr.bf16.mxu0 0
  %2346 = vmatmul.mubr.bf16.gmra.mxu0 %v2199
  %v2347 = vpop.f32.mrf.mxu0
  %v2348 = vadd.f32 %v2153, %v2347
  %v2349 = vpop.f32.mrf.mxu0
  %v2350 = vpop.f32.mrf.mxu0
  %v2351 = vadd.f32 %v2156, %v2350
  %v2352 = vpop.f32.mrf.mxu0
  %2353 = vdwg.mxu0
  %v2354 = vld [vmem:[%s1707 + $0x8] sm:$0xf]
  %v2355 = vld [vmem:[%s1707 + $0xc] sm:$0xf]
  %v2356 = vld [vmem:[%s1707 + $0x10] sm:$0xf]
  %v2357 = vld [vmem:[%s1707 + $0x14] sm:$0xf]
  %v2358 = vld [vmem:[%s1707 + $0x18] sm:$0xf]
  %v2359 = vld [vmem:[%s1707 + $0x1c] sm:$0xf]
  %v2360 = vld [vmem:[%s1707 + $0x20] sm:$0xf]
  %v2361 = vld [vmem:[%s1707 + $0x24] sm:$0xf]
  %v2362 = vld [vmem:[%s1707 + $0x28] sm:$0xf]
  %v2363 = vld [vmem:[%s1707 + $0x2c] sm:$0xf]
  %v2364 = vld [vmem:[%s1707 + $0x30] sm:$0xf]
  %v2365 = vld [vmem:[%s1707 + $0x34] sm:$0xf]
  %v2366 = vld [vmem:[%s1707 + $0x38] sm:$0xf]
  %v2367 = vld [vmem:[%s1707 + $0x3c] sm:$0xf]
  %v2368 = vld [vmem:[%s1707 + $0x40] sm:$0xf]
  %v2369 = vld [vmem:[%s1707 + $0x44] sm:$0xf]
  %v2370 = vld [vmem:[%s1707 + $0x48] sm:$0xf]
  %v2371 = vld [vmem:[%s1707 + $0x4c] sm:$0xf]
  %v2372 = vld [vmem:[%s1707 + $0x50] sm:$0xf]
  %v2373 = vld [vmem:[%s1707 + $0x54] sm:$0xf]
  %v2374 = vld [vmem:[%s1707 + $0x58] sm:$0xf]
  %v2375 = vld [vmem:[%s1707 + $0x5c] sm:$0xf]
  %v2376 = vld [vmem:[%s1707 + $0x60] sm:$0xf]
  %v2377 = vld [vmem:[%s1707 + $0x64] sm:$0xf]
  %v2378 = vld [vmem:[%s1707 + $0x68] sm:$0xf]
  %v2379 = vld [vmem:[%s1707 + $0x6c] sm:$0xf]
  %v2380 = vld [vmem:[%s1707 + $0x70] sm:$0xf]
  %v2381 = vld [vmem:[%s1707 + $0x74] sm:$0xf]
  %v2382 = vld [vmem:[%s1707 + $0x78] sm:$0xf]
  %v2383 = vld [vmem:[%s1707 + $0x7c] sm:$0xf]
  %v2384 = vld [vmem:[%s1 + $0x20] sm:$0xf]
  %v2385 = vld [vmem:[%s1 + $0x24] sm:$0xf]
  %v2386 = vld [vmem:[%s1 + $0x28] sm:$0xf]
  %v2387 = vld [vmem:[%s1 + $0x2c] sm:$0xf]
  %v2418 = vunpack.c.l.b16 %v2354
  %v2419 = vunpack.c.l.b16 %v2355
  %v2420 = vunpack.c.l.b16 %v2356
  %v2421 = vunpack.c.l.b16 %v2357
  %v2422 = vunpack.c.l.b16 %v2358
  %v2423 = vunpack.c.l.b16 %v2359
  %v2424 = vunpack.c.l.b16 %v2360
  %v2425 = vunpack.c.l.b16 %v2361
  %v2426 = vunpack.c.l.b16 %v2362
  %v2427 = vunpack.c.l.b16 %v2363
  %v2428 = vunpack.c.l.b16 %v2364
  %v2429 = vunpack.c.l.b16 %v2365
  %v2430 = vunpack.c.l.b16 %v2366
  %v2431 = vunpack.c.l.b16 %v2367
  %v2432 = vunpack.c.l.b16 %v2368
  %v2433 = vunpack.c.l.b16 %v2369
  %v2434 = vunpack.c.l.b16 %v2370
  %v2435 = vunpack.c.l.b16 %v2371
  %v2436 = vunpack.c.l.b16 %v2372
  %v2437 = vunpack.c.l.b16 %v2373
  %v2438 = vunpack.c.l.b16 %v2374
  %v2439 = vunpack.c.l.b16 %v2375
  %v2440 = vunpack.c.l.b16 %v2376
  %v2441 = vunpack.c.l.b16 %v2377
  %v2442 = vunpack.c.l.b16 %v2378
  %v2443 = vunpack.c.l.b16 %v2379
  %v2444 = vunpack.c.l.b16 %v2380
  %v2445 = vunpack.c.l.b16 %v2381
  %v2446 = vunpack.c.l.b16 %v2382
  %v2447 = vunpack.c.l.b16 %v2383
  %v2448 = vpack.c.b16 %v2419, %v2418
  %v2449 = vpack.c.b16 %v2421, %v2420
  %v2450 = vpack.c.b16 %v2423, %v2422
  %v2451 = vpack.c.b16 %v2425, %v2424
  %v2452 = vpack.c.b16 %v2427, %v2426
  %v2453 = vpack.c.b16 %v2429, %v2428
  %v2454 = vpack.c.b16 %v2431, %v2430
  %v2455 = vpack.c.b16 %v2433, %v2432
  %v2456 = vpack.c.b16 %v2435, %v2434
  %v2457 = vpack.c.b16 %v2437, %v2436
  %v2458 = vpack.c.b16 %v2439, %v2438
  %v2459 = vpack.c.b16 %v2441, %v2440
  %v2460 = vpack.c.b16 %v2443, %v2442
  %v2461 = vpack.c.b16 %v2445, %v2444
  %v2462 = vpack.c.b16 %v2447, %v2446
  %v2467 = vunpack.c.l.b16 %v2384
  %v2468 = vunpack.c.l.b16 %v2385
  %v2469 = vunpack.c.l.b16 %v2386
  %v2470 = vunpack.c.l.b16 %v2387
  %v2471 = vpack.c.b16 %v2468, %v2467
  %v2472 = vpack.c.b16 %v2470, %v2469
  %v2476 = vsel %vm270, %v2448, 0
  %v2479 = vsel %vm270, %v2449, 0
  %v2482 = vsel %vm270, %v2450, 0
  %v2485 = vsel %vm270, %v2451, 0
  %v2488 = vsel %vm270, %v2452, 0
  %v2491 = vsel %vm270, %v2453, 0
  %v2494 = vsel %vm270, %v2454, 0
  %v2497 = vsel %vm270, %v2455, 0
  %v2500 = vsel %vm270, %v2456, 0
  %v2503 = vsel %vm270, %v2457, 0
  %v2506 = vsel %vm270, %v2458, 0
  %v2509 = vsel %vm270, %v2459, 0
  %v2512 = vsel %vm270, %v2460, 0
  %v2515 = vsel %vm270, %v2461, 0
  %v2518 = vsel %vm270, %v2462, 0
  %2520 = vmatprep.subr.bf16.mxu0 0
  %2521 = vmatpush1.bf16.msra.mxu0 0
  %2522 = vmatprep.subr.bf16.mxu0 0
  %2523 = vmatpush1.bf16.msra.mxu0 0
  %2524 = vmatprep.subr.bf16.mxu0 0
  %2525 = vmatpush1.bf16.msra.mxu0 0
  %2526 = vmatprep.subr.bf16.mxu0 0
  %2527 = vmatpush1.bf16.msra.mxu0 0
  %2528 = vmatprep.subr.bf16.mxu0 0
  %2529 = vmatpush1.bf16.msra.mxu0 0
  %2530 = vmatprep.subr.bf16.mxu0 0
  %2531 = vmatpush1.bf16.msra.mxu0 0
  %2532 = vmatprep.subr.bf16.mxu0 0
  %2533 = vmatpush1.bf16.msra.mxu0 %v2472
  %2534 = vmatprep.subr.bf16.mxu0 0
  %2535 = vmatpush1.bf16.msra.mxu0 %v2471
  %2536 = vmatprep.subr.bf16.mxu0 0
  %2537 = vmatpush2.bf16.msra.mxu0 0
  %2538 = vmatprep.subr.bf16.mxu0 0
  %2539 = vmatpush2.bf16.msra.mxu0 0
  %2540 = vmatprep.subr.bf16.mxu0 0
  %2541 = vmatpush2.bf16.msra.mxu0 0
  %2542 = vmatprep.subr.bf16.mxu0 0
  %2543 = vmatpush2.bf16.msra.mxu0 0
  %2544 = vmatprep.subr.bf16.mxu0 0
  %2545 = vmatpush2.bf16.msra.mxu0 0
  %2546 = vmatprep.subr.bf16.mxu0 0
  %2547 = vmatpush2.bf16.msra.mxu0 0
  %2548 = vmatprep.subr.bf16.mxu0 0
  %2549 = vmatpush2.bf16.msra.mxu0 0
  %2550 = vmatprep.subr.bf16.mxu0 0
  %2551 = vmatpush2.bf16.msra.mxu0 0
  %2552 = vmatprep.mubr.bf16.mxu0 0
  %2553 = vmatmul.mubr.bf16.gmra.mxu0 %v2476
  %v2554 = vpop.f32.mrf.mxu0
  %v2555 = vadd.f32 0.0, %v2554
  %v2556 = vpop.f32.mrf.mxu0
  %v2557 = vpop.f32.mrf.mxu0
  %v2558 = vadd.f32 0.0, %v2557
  %v2559 = vpop.f32.mrf.mxu0
  %2560 = vmatprep.mubr.bf16.mxu0 0
  %2561 = vmatmul.mubr.bf16.gmra.mxu0 %v2479
  %v2562 = vpop.f32.mrf.mxu0
  %v2563 = vadd.f32 0.0, %v2562
  %v2564 = vpop.f32.mrf.mxu0
  %v2565 = vpop.f32.mrf.mxu0
  %v2566 = vadd.f32 0.0, %v2565
  %v2567 = vpop.f32.mrf.mxu0
  %2568 = vmatprep.mubr.bf16.mxu0 0
  %2569 = vmatmul.mubr.bf16.gmra.mxu0 %v2482
  %v2570 = vpop.f32.mrf.mxu0
  %v2571 = vadd.f32 0.0, %v2570
  %v2572 = vpop.f32.mrf.mxu0
  %v2573 = vpop.f32.mrf.mxu0
  %v2574 = vadd.f32 0.0, %v2573
  %v2575 = vpop.f32.mrf.mxu0
  %2576 = vmatprep.mubr.bf16.mxu0 0
  %2577 = vmatmul.mubr.bf16.gmra.mxu0 %v2485
  %v2578 = vpop.f32.mrf.mxu0
  %v2579 = vadd.f32 0.0, %v2578
  %v2580 = vpop.f32.mrf.mxu0
  %v2581 = vpop.f32.mrf.mxu0
  %v2582 = vadd.f32 0.0, %v2581
  %v2583 = vpop.f32.mrf.mxu0
  %2584 = vmatprep.mubr.bf16.mxu0 0
  %2585 = vmatmul.mubr.bf16.gmra.mxu0 %v2488
  %v2586 = vpop.f32.mrf.mxu0
  %v2587 = vadd.f32 0.0, %v2586
  %v2588 = vpop.f32.mrf.mxu0
  %v2589 = vpop.f32.mrf.mxu0
  %v2590 = vadd.f32 0.0, %v2589
  %v2591 = vpop.f32.mrf.mxu0
  %2592 = vmatprep.mubr.bf16.mxu0 0
  %2593 = vmatmul.mubr.bf16.gmra.mxu0 %v2491
  %v2594 = vpop.f32.mrf.mxu0
  %v2595 = vadd.f32 0.0, %v2594
  %v2596 = vpop.f32.mrf.mxu0
  %v2597 = vpop.f32.mrf.mxu0
  %v2598 = vadd.f32 0.0, %v2597
  %v2599 = vpop.f32.mrf.mxu0
  %2600 = vmatprep.mubr.bf16.mxu0 0
  %2601 = vmatmul.mubr.bf16.gmra.mxu0 %v2494
  %v2602 = vpop.f32.mrf.mxu0
  %v2603 = vadd.f32 0.0, %v2602
  %v2604 = vpop.f32.mrf.mxu0
  %v2605 = vpop.f32.mrf.mxu0
  %v2606 = vadd.f32 0.0, %v2605
  %v2607 = vpop.f32.mrf.mxu0
  %2608 = vmatprep.mubr.bf16.mxu0 0
  %2609 = vmatmul.mubr.bf16.gmra.mxu0 %v2497
  %v2610 = vpop.f32.mrf.mxu0
  %v2611 = vadd.f32 0.0, %v2610
  %v2612 = vpop.f32.mrf.mxu0
  %v2613 = vpop.f32.mrf.mxu0
  %v2614 = vadd.f32 0.0, %v2613
  %v2615 = vpop.f32.mrf.mxu0
  %2616 = vmatprep.mubr.bf16.mxu0 0
  %2617 = vmatmul.mubr.bf16.gmra.mxu0 %v2500
  %v2618 = vpop.f32.mrf.mxu0
  %v2619 = vadd.f32 0.0, %v2618
  %v2620 = vpop.f32.mrf.mxu0
  %v2621 = vpop.f32.mrf.mxu0
  %v2622 = vadd.f32 0.0, %v2621
  %v2623 = vpop.f32.mrf.mxu0
  %2624 = vmatprep.mubr.bf16.mxu0 0
  %2625 = vmatmul.mubr.bf16.gmra.mxu0 %v2503
  %v2626 = vpop.f32.mrf.mxu0
  %v2627 = vadd.f32 0.0, %v2626
  %v2628 = vpop.f32.mrf.mxu0
  %v2629 = vpop.f32.mrf.mxu0
  %v2630 = vadd.f32 0.0, %v2629
  %v2631 = vpop.f32.mrf.mxu0
  %2632 = vmatprep.mubr.bf16.mxu0 0
  %2633 = vmatmul.mubr.bf16.gmra.mxu0 %v2506
  %v2634 = vpop.f32.mrf.mxu0
  %v2635 = vadd.f32 0.0, %v2634
  %v2636 = vpop.f32.mrf.mxu0
  %v2637 = vpop.f32.mrf.mxu0
  %v2638 = vadd.f32 0.0, %v2637
  %v2639 = vpop.f32.mrf.mxu0
  %2640 = vmatprep.mubr.bf16.mxu0 0
  %2641 = vmatmul.mubr.bf16.gmra.mxu0 %v2509
  %v2642 = vpop.f32.mrf.mxu0
  %v2643 = vadd.f32 0.0, %v2642
  %v2644 = vpop.f32.mrf.mxu0
  %v2645 = vpop.f32.mrf.mxu0
  %v2646 = vadd.f32 0.0, %v2645
  %v2647 = vpop.f32.mrf.mxu0
  %2648 = vmatprep.mubr.bf16.mxu0 0
  %2649 = vmatmul.mubr.bf16.gmra.mxu0 %v2512
  %v2650 = vpop.f32.mrf.mxu0
  %v2651 = vadd.f32 0.0, %v2650
  %v2652 = vpop.f32.mrf.mxu0
  %v2653 = vpop.f32.mrf.mxu0
  %v2654 = vadd.f32 0.0, %v2653
  %v2655 = vpop.f32.mrf.mxu0
  %2656 = vmatprep.mubr.bf16.mxu0 0
  %2657 = vmatmul.mubr.bf16.gmra.mxu0 %v2515
  %v2658 = vpop.f32.mrf.mxu0
  %v2659 = vadd.f32 0.0, %v2658
  %v2660 = vpop.f32.mrf.mxu0
  %v2661 = vpop.f32.mrf.mxu0
  %v2662 = vadd.f32 0.0, %v2661
  %v2663 = vpop.f32.mrf.mxu0
  %2664 = vmatprep.mubr.bf16.mxu0 0
  %2665 = vmatmul.mubr.bf16.gmra.mxu0 %v2518
  %v2666 = vpop.f32.mrf.mxu0
  %v2667 = vadd.f32 0.0, %v2666
  %v2668 = vpop.f32.mrf.mxu0
  %v2669 = vpop.f32.mrf.mxu0
  %v2670 = vadd.f32 0.0, %v2669
  %v2671 = vpop.f32.mrf.mxu0
  %2672 = vdwg.mxu0
  %v2673 = vadd.f32 %v2236, %v2555
  %v2674 = vadd.f32 %v2239, %v2558
  %v2675 = vadd.f32 %v2244, %v2563
  %v2676 = vadd.f32 %v2247, %v2566
  %v2677 = vadd.f32 %v2252, %v2571
  %v2678 = vadd.f32 %v2255, %v2574
  %v2679 = vadd.f32 %v2260, %v2579
  %v2680 = vadd.f32 %v2263, %v2582
  %v2681 = vadd.f32 %v2268, %v2587
  %v2682 = vadd.f32 %v2271, %v2590
  %v2683 = vadd.f32 %v2276, %v2595
  %v2684 = vadd.f32 %v2279, %v2598
  %v2685 = vadd.f32 %v2284, %v2603
  %v2686 = vadd.f32 %v2287, %v2606
  %v2687 = vadd.f32 %v2292, %v2611
  %v2688 = vadd.f32 %v2295, %v2614
  %v2689 = vadd.f32 %v2300, %v2619
  %v2690 = vadd.f32 %v2303, %v2622
  %v2691 = vadd.f32 %v2308, %v2627
  %v2692 = vadd.f32 %v2311, %v2630
  %v2693 = vadd.f32 %v2316, %v2635
  %v2694 = vadd.f32 %v2319, %v2638
  %v2695 = vadd.f32 %v2324, %v2643
  %v2696 = vadd.f32 %v2327, %v2646
  %v2697 = vadd.f32 %v2332, %v2651
  %v2698 = vadd.f32 %v2335, %v2654
  %v2699 = vadd.f32 %v2340, %v2659
  %v2700 = vadd.f32 %v2343, %v2662
  %v2701 = vadd.f32 %v2348, %v2667
  %v2702 = vadd.f32 %v2351, %v2670
  %v2703 = vld [vmem:[%s1707 + $0x8] sm:$0xf]
  %v2704 = vld [vmem:[%s1707 + $0xc] sm:$0xf]
  %v2705 = vld [vmem:[%s1707 + $0x10] sm:$0xf]
  %v2706 = vld [vmem:[%s1707 + $0x14] sm:$0xf]
  %v2707 = vld [vmem:[%s1707 + $0x18] sm:$0xf]
  %v2708 = vld [vmem:[%s1707 + $0x1c] sm:$0xf]
  %v2709 = vld [vmem:[%s1707 + $0x20] sm:$0xf]
  %v2710 = vld [vmem:[%s1707 + $0x24] sm:$0xf]
  %v2711 = vld [vmem:[%s1707 + $0x28] sm:$0xf]
  %v2712 = vld [vmem:[%s1707 + $0x2c] sm:$0xf]
  %v2713 = vld [vmem:[%s1707 + $0x30] sm:$0xf]
  %v2714 = vld [vmem:[%s1707 + $0x34] sm:$0xf]
  %v2715 = vld [vmem:[%s1707 + $0x38] sm:$0xf]
  %v2716 = vld [vmem:[%s1707 + $0x3c] sm:$0xf]
  %v2717 = vld [vmem:[%s1707 + $0x40] sm:$0xf]
  %v2718 = vld [vmem:[%s1707 + $0x44] sm:$0xf]
  %v2719 = vld [vmem:[%s1707 + $0x48] sm:$0xf]
  %v2720 = vld [vmem:[%s1707 + $0x4c] sm:$0xf]
  %v2721 = vld [vmem:[%s1707 + $0x50] sm:$0xf]
  %v2722 = vld [vmem:[%s1707 + $0x54] sm:$0xf]
  %v2723 = vld [vmem:[%s1707 + $0x58] sm:$0xf]
  %v2724 = vld [vmem:[%s1707 + $0x5c] sm:$0xf]
  %v2725 = vld [vmem:[%s1707 + $0x60] sm:$0xf]
  %v2726 = vld [vmem:[%s1707 + $0x64] sm:$0xf]
  %v2727 = vld [vmem:[%s1707 + $0x68] sm:$0xf]
  %v2728 = vld [vmem:[%s1707 + $0x6c] sm:$0xf]
  %v2729 = vld [vmem:[%s1707 + $0x70] sm:$0xf]
  %v2730 = vld [vmem:[%s1707 + $0x74] sm:$0xf]
  %v2731 = vld [vmem:[%s1707 + $0x78] sm:$0xf]
  %v2732 = vld [vmem:[%s1707 + $0x7c] sm:$0xf]
  %v2733 = vld [vmem:[%s1707 + $0x80] sm:$0x1]
  %v2734 = vld [vmem:[%s1 + $0x30] sm:$0xf]
  %v2735 = vld [vmem:[%s1 + $0x34] sm:$0xf]
  %v2736 = vld [vmem:[%s1 + $0x38] sm:$0xf]
  %v2737 = vld [vmem:[%s1 + $0x3c] sm:$0xf]
  %v2769 = vunpack.c.l.b16 %v2703
  %v2770 = vunpack.c.l.b16 %v2704
  %v2771 = vunpack.c.l.b16 %v2705
  %v2772 = vunpack.c.l.b16 %v2706
  %v2773 = vunpack.c.l.b16 %v2707
  %v2774 = vunpack.c.l.b16 %v2708
  %v2775 = vunpack.c.l.b16 %v2709
  %v2776 = vunpack.c.l.b16 %v2710
  %v2777 = vunpack.c.l.b16 %v2711
  %v2778 = vunpack.c.l.b16 %v2712
  %v2779 = vunpack.c.l.b16 %v2713
  %v2780 = vunpack.c.l.b16 %v2714
  %v2781 = vunpack.c.l.b16 %v2715
  %v2782 = vunpack.c.l.b16 %v2716
  %v2783 = vunpack.c.l.b16 %v2717
  %v2784 = vunpack.c.l.b16 %v2718
  %v2785 = vunpack.c.l.b16 %v2719
  %v2786 = vunpack.c.l.b16 %v2720
  %v2787 = vunpack.c.l.b16 %v2721
  %v2788 = vunpack.c.l.b16 %v2722
  %v2789 = vunpack.c.l.b16 %v2723
  %v2790 = vunpack.c.l.b16 %v2724
  %v2791 = vunpack.c.l.b16 %v2725
  %v2792 = vunpack.c.l.b16 %v2726
  %v2793 = vunpack.c.l.b16 %v2727
  %v2794 = vunpack.c.l.b16 %v2728
  %v2795 = vunpack.c.l.b16 %v2729
  %v2796 = vunpack.c.l.b16 %v2730
  %v2797 = vunpack.c.l.b16 %v2731
  %v2798 = vunpack.c.l.b16 %v2732
  %v2799 = vunpack.c.l.b16 %v2733
  %v2800 = vpack.c.b16 %v2770, %v2769
  %v2801 = vpack.c.b16 %v2772, %v2771
  %v2802 = vpack.c.b16 %v2774, %v2773
  %v2803 = vpack.c.b16 %v2776, %v2775
  %v2804 = vpack.c.b16 %v2778, %v2777
  %v2805 = vpack.c.b16 %v2780, %v2779
  %v2806 = vpack.c.b16 %v2782, %v2781
  %v2807 = vpack.c.b16 %v2784, %v2783
  %v2808 = vpack.c.b16 %v2786, %v2785
  %v2809 = vpack.c.b16 %v2788, %v2787
  %v2810 = vpack.c.b16 %v2790, %v2789
  %v2811 = vpack.c.b16 %v2792, %v2791
  %v2812 = vpack.c.b16 %v2794, %v2793
  %v2813 = vpack.c.b16 %v2796, %v2795
  %v2814 = vpack.c.b16 %v2798, %v2797
  %v2815 = vpack.c.b16 %v2799, %v2799
  %v2817 = vshrl.u32 %v2800, 16
  %v2819 = vshll.u32 %v2800, 16
  %v2821 = vrot.slane %v2819, 1
  %v2822 = vor.u32 %v2817, %v2821
  %v2824 = vshll.u32 %v2801, 16
  %v2826 = vrot.slane %v2824, 1
  %v2827 = vsel %vm133, %v2822, %v2826
  %v2828 = vshrl.u32 %v2801, 16
  %v2830 = vor.u32 %v2828, %v2826
  %v2832 = vshll.u32 %v2802, 16
  %v2834 = vrot.slane %v2832, 1
  %v2835 = vsel %vm133, %v2830, %v2834
  %v2836 = vshrl.u32 %v2802, 16
  %v2838 = vor.u32 %v2836, %v2834
  %v2840 = vshll.u32 %v2803, 16
  %v2842 = vrot.slane %v2840, 1
  %v2843 = vsel %vm133, %v2838, %v2842
  %v2844 = vshrl.u32 %v2803, 16
  %v2846 = vor.u32 %v2844, %v2842
  %v2848 = vshll.u32 %v2804, 16
  %v2850 = vrot.slane %v2848, 1
  %v2851 = vsel %vm133, %v2846, %v2850
  %v2852 = vshrl.u32 %v2804, 16
  %v2854 = vor.u32 %v2852, %v2850
  %v2856 = vshll.u32 %v2805, 16
  %v2858 = vrot.slane %v2856, 1
  %v2859 = vsel %vm133, %v2854, %v2858
  %v2860 = vshrl.u32 %v2805, 16
  %v2862 = vor.u32 %v2860, %v2858
  %v2864 = vshll.u32 %v2806, 16
  %v2866 = vrot.slane %v2864, 1
  %v2867 = vsel %vm133, %v2862, %v2866
  %v2868 = vshrl.u32 %v2806, 16
  %v2870 = vor.u32 %v2868, %v2866
  %v2872 = vshll.u32 %v2807, 16
  %v2874 = vrot.slane %v2872, 1
  %v2875 = vsel %vm133, %v2870, %v2874
  %v2876 = vshrl.u32 %v2807, 16
  %v2878 = vor.u32 %v2876, %v2874
  %v2880 = vshll.u32 %v2808, 16
  %v2882 = vrot.slane %v2880, 1
  %v2883 = vsel %vm133, %v2878, %v2882
  %v2884 = vshrl.u32 %v2808, 16
  %v2886 = vor.u32 %v2884, %v2882
  %v2888 = vshll.u32 %v2809, 16
  %v2890 = vrot.slane %v2888, 1
  %v2891 = vsel %vm133, %v2886, %v2890
  %v2892 = vshrl.u32 %v2809, 16
  %v2894 = vor.u32 %v2892, %v2890
  %v2896 = vshll.u32 %v2810, 16
  %v2898 = vrot.slane %v2896, 1
  %v2899 = vsel %vm133, %v2894, %v2898
  %v2900 = vshrl.u32 %v2810, 16
  %v2902 = vor.u32 %v2900, %v2898
  %v2904 = vshll.u32 %v2811, 16
  %v2906 = vrot.slane %v2904, 1
  %v2907 = vsel %vm133, %v2902, %v2906
  %v2908 = vshrl.u32 %v2811, 16
  %v2910 = vor.u32 %v2908, %v2906
  %v2912 = vshll.u32 %v2812, 16
  %v2914 = vrot.slane %v2912, 1
  %v2915 = vsel %vm133, %v2910, %v2914
  %v2916 = vshrl.u32 %v2812, 16
  %v2918 = vor.u32 %v2916, %v2914
  %v2920 = vshll.u32 %v2813, 16
  %v2922 = vrot.slane %v2920, 1
  %v2923 = vsel %vm133, %v2918, %v2922
  %v2924 = vshrl.u32 %v2813, 16
  %v2926 = vor.u32 %v2924, %v2922
  %v2928 = vshll.u32 %v2814, 16
  %v2930 = vrot.slane %v2928, 1
  %v2931 = vsel %vm133, %v2926, %v2930
  %v2932 = vshrl.u32 %v2814, 16
  %v2934 = vor.u32 %v2932, %v2930
  %v2936 = vshll.u32 %v2815, 16
  %v2938 = vrot.slane %v2936, 1
  %v2939 = vsel %vm133, %v2934, %v2938
  %v2944 = vunpack.c.l.b16 %v2734
  %v2945 = vunpack.c.l.b16 %v2735
  %v2946 = vunpack.c.l.b16 %v2736
  %v2947 = vunpack.c.l.b16 %v2737
  %v2948 = vpack.c.b16 %v2945, %v2944
  %v2949 = vpack.c.b16 %v2947, %v2946
  %v2953 = vsel %vm270, %v2827, 0
  %v2956 = vsel %vm270, %v2835, 0
  %v2959 = vsel %vm270, %v2843, 0
  %v2962 = vsel %vm270, %v2851, 0
  %v2965 = vsel %vm270, %v2859, 0
  %v2968 = vsel %vm270, %v2867, 0
  %v2971 = vsel %vm270, %v2875, 0
  %v2974 = vsel %vm270, %v2883, 0
  %v2977 = vsel %vm270, %v2891, 0
  %v2980 = vsel %vm270, %v2899, 0
  %v2983 = vsel %vm270, %v2907, 0
  %v2986 = vsel %vm270, %v2915, 0
  %v2989 = vsel %vm270, %v2923, 0
  %v2992 = vsel %vm270, %v2931, 0
  %v2995 = vsel %vm270, %v2939, 0
  %2997 = vmatprep.subr.bf16.mxu0 0
  %2998 = vmatpush1.bf16.msra.mxu0 0
  %2999 = vmatprep.subr.bf16.mxu0 0
  %3000 = vmatpush1.bf16.msra.mxu0 0
  %3001 = vmatprep.subr.bf16.mxu0 0
  %3002 = vmatpush1.bf16.msra.mxu0 0
  %3003 = vmatprep.subr.bf16.mxu0 0
  %3004 = vmatpush1.bf16.msra.mxu0 0
  %3005 = vmatprep.subr.bf16.mxu0 0
  %3006 = vmatpush1.bf16.msra.mxu0 0
  %3007 = vmatprep.subr.bf16.mxu0 0
  %3008 = vmatpush1.bf16.msra.mxu0 0
  %3009 = vmatprep.subr.bf16.mxu0 0
  %3010 = vmatpush1.bf16.msra.mxu0 %v2949
  %3011 = vmatprep.subr.bf16.mxu0 0
  %3012 = vmatpush1.bf16.msra.mxu0 %v2948
  %3013 = vmatprep.subr.bf16.mxu0 0
  %3014 = vmatpush2.bf16.msra.mxu0 0
  %3015 = vmatprep.subr.bf16.mxu0 0
  %3016 = vmatpush2.bf16.msra.mxu0 0
  %3017 = vmatprep.subr.bf16.mxu0 0
  %3018 = vmatpush2.bf16.msra.mxu0 0
  %3019 = vmatprep.subr.bf16.mxu0 0
  %3020 = vmatpush2.bf16.msra.mxu0 0
  %3021 = vmatprep.subr.bf16.mxu0 0
  %3022 = vmatpush2.bf16.msra.mxu0 0
  %3023 = vmatprep.subr.bf16.mxu0 0
  %3024 = vmatpush2.bf16.msra.mxu0 0
  %3025 = vmatprep.subr.bf16.mxu0 0
  %3026 = vmatpush2.bf16.msra.mxu0 0
  %3027 = vmatprep.subr.bf16.mxu0 0
  %3028 = vmatpush2.bf16.msra.mxu0 0
  %3029 = vmatprep.mubr.bf16.mxu0 0
  %3030 = vmatmul.mubr.bf16.gmra.mxu0 %v2953
  %v3031 = vpop.f32.mrf.mxu0
  %v3032 = vadd.f32 0.0, %v3031
  %v3033 = vpop.f32.mrf.mxu0
  %v3034 = vpop.f32.mrf.mxu0
  %v3035 = vadd.f32 0.0, %v3034
  %v3036 = vpop.f32.mrf.mxu0
  %3037 = vmatprep.mubr.bf16.mxu0 0
  %3038 = vmatmul.mubr.bf16.gmra.mxu0 %v2956
  %v3039 = vpop.f32.mrf.mxu0
  %v3040 = vadd.f32 0.0, %v3039
  %v3041 = vpop.f32.mrf.mxu0
  %v3042 = vpop.f32.mrf.mxu0
  %v3043 = vadd.f32 0.0, %v3042
  %v3044 = vpop.f32.mrf.mxu0
  %3045 = vmatprep.mubr.bf16.mxu0 0
  %3046 = vmatmul.mubr.bf16.gmra.mxu0 %v2959
  %v3047 = vpop.f32.mrf.mxu0
  %v3048 = vadd.f32 0.0, %v3047
  %v3049 = vpop.f32.mrf.mxu0
  %v3050 = vpop.f32.mrf.mxu0
  %v3051 = vadd.f32 0.0, %v3050
  %v3052 = vpop.f32.mrf.mxu0
  %3053 = vmatprep.mubr.bf16.mxu0 0
  %3054 = vmatmul.mubr.bf16.gmra.mxu0 %v2962
  %v3055 = vpop.f32.mrf.mxu0
  %v3056 = vadd.f32 0.0, %v3055
  %v3057 = vpop.f32.mrf.mxu0
  %v3058 = vpop.f32.mrf.mxu0
  %v3059 = vadd.f32 0.0, %v3058
  %v3060 = vpop.f32.mrf.mxu0
  %3061 = vmatprep.mubr.bf16.mxu0 0
  %3062 = vmatmul.mubr.bf16.gmra.mxu0 %v2965
  %v3063 = vpop.f32.mrf.mxu0
  %v3064 = vadd.f32 0.0, %v3063
  %v3065 = vpop.f32.mrf.mxu0
  %v3066 = vpop.f32.mrf.mxu0
  %v3067 = vadd.f32 0.0, %v3066
  %v3068 = vpop.f32.mrf.mxu0
  %3069 = vmatprep.mubr.bf16.mxu0 0
  %3070 = vmatmul.mubr.bf16.gmra.mxu0 %v2968
  %v3071 = vpop.f32.mrf.mxu0
  %v3072 = vadd.f32 0.0, %v3071
  %v3073 = vpop.f32.mrf.mxu0
  %v3074 = vpop.f32.mrf.mxu0
  %v3075 = vadd.f32 0.0, %v3074
  %v3076 = vpop.f32.mrf.mxu0
  %3077 = vmatprep.mubr.bf16.mxu0 0
  %3078 = vmatmul.mubr.bf16.gmra.mxu0 %v2971
  %v3079 = vpop.f32.mrf.mxu0
  %v3080 = vadd.f32 0.0, %v3079
  %v3081 = vpop.f32.mrf.mxu0
  %v3082 = vpop.f32.mrf.mxu0
  %v3083 = vadd.f32 0.0, %v3082
  %v3084 = vpop.f32.mrf.mxu0
  %3085 = vmatprep.mubr.bf16.mxu0 0
  %3086 = vmatmul.mubr.bf16.gmra.mxu0 %v2974
  %v3087 = vpop.f32.mrf.mxu0
  %v3088 = vadd.f32 0.0, %v3087
  %v3089 = vpop.f32.mrf.mxu0
  %v3090 = vpop.f32.mrf.mxu0
  %v3091 = vadd.f32 0.0, %v3090
  %v3092 = vpop.f32.mrf.mxu0
  %3093 = vmatprep.mubr.bf16.mxu0 0
  %3094 = vmatmul.mubr.bf16.gmra.mxu0 %v2977
  %v3095 = vpop.f32.mrf.mxu0
  %v3096 = vadd.f32 0.0, %v3095
  %v3097 = vpop.f32.mrf.mxu0
  %v3098 = vpop.f32.mrf.mxu0
  %v3099 = vadd.f32 0.0, %v3098
  %v3100 = vpop.f32.mrf.mxu0
  %3101 = vmatprep.mubr.bf16.mxu0 0
  %3102 = vmatmul.mubr.bf16.gmra.mxu0 %v2980
  %v3103 = vpop.f32.mrf.mxu0
  %v3104 = vadd.f32 0.0, %v3103
  %v3105 = vpop.f32.mrf.mxu0
  %v3106 = vpop.f32.mrf.mxu0
  %v3107 = vadd.f32 0.0, %v3106
  %v3108 = vpop.f32.mrf.mxu0
  %3109 = vmatprep.mubr.bf16.mxu0 0
  %3110 = vmatmul.mubr.bf16.gmra.mxu0 %v2983
  %v3111 = vpop.f32.mrf.mxu0
  %v3112 = vadd.f32 0.0, %v3111
  %v3113 = vpop.f32.mrf.mxu0
  %v3114 = vpop.f32.mrf.mxu0
  %v3115 = vadd.f32 0.0, %v3114
  %v3116 = vpop.f32.mrf.mxu0
  %3117 = vmatprep.mubr.bf16.mxu0 0
  %3118 = vmatmul.mubr.bf16.gmra.mxu0 %v2986
  %v3119 = vpop.f32.mrf.mxu0
  %v3120 = vadd.f32 0.0, %v3119
  %v3121 = vpop.f32.mrf.mxu0
  %v3122 = vpop.f32.mrf.mxu0
  %v3123 = vadd.f32 0.0, %v3122
  %v3124 = vpop.f32.mrf.mxu0
  %3125 = vmatprep.mubr.bf16.mxu0 0
  %3126 = vmatmul.mubr.bf16.gmra.mxu0 %v2989
  %v3127 = vpop.f32.mrf.mxu0
  %v3128 = vadd.f32 0.0, %v3127
  %v3129 = vpop.f32.mrf.mxu0
  %v3130 = vpop.f32.mrf.mxu0
  %v3131 = vadd.f32 0.0, %v3130
  %v3132 = vpop.f32.mrf.mxu0
  %3133 = vmatprep.mubr.bf16.mxu0 0
  %3134 = vmatmul.mubr.bf16.gmra.mxu0 %v2992
  %v3135 = vpop.f32.mrf.mxu0
  %v3136 = vadd.f32 0.0, %v3135
  %v3137 = vpop.f32.mrf.mxu0
  %v3138 = vpop.f32.mrf.mxu0
  %v3139 = vadd.f32 0.0, %v3138
  %v3140 = vpop.f32.mrf.mxu0
  %3141 = vmatprep.mubr.bf16.mxu0 0
  %3142 = vmatmul.mubr.bf16.gmra.mxu0 %v2995
  %v3143 = vpop.f32.mrf.mxu0
  %v3144 = vadd.f32 0.0, %v3143
  %v3145 = vpop.f32.mrf.mxu0
  %v3146 = vpop.f32.mrf.mxu0
  %v3147 = vadd.f32 0.0, %v3146
  %v3148 = vpop.f32.mrf.mxu0
  %3149 = vdwg.mxu0
  %v3150 = vadd.f32 %v2673, %v3032
  %v3151 = vadd.f32 %v2674, %v3035
  %v3152 = vadd.f32 %v2675, %v3040
  %v3153 = vadd.f32 %v2676, %v3043
  %v3154 = vadd.f32 %v2677, %v3048
  %v3155 = vadd.f32 %v2678, %v3051
  %v3156 = vadd.f32 %v2679, %v3056
  %v3157 = vadd.f32 %v2680, %v3059
  %v3158 = vadd.f32 %v2681, %v3064
  %v3159 = vadd.f32 %v2682, %v3067
  %v3160 = vadd.f32 %v2683, %v3072
  %v3161 = vadd.f32 %v2684, %v3075
  %v3162 = vadd.f32 %v2685, %v3080
  %v3163 = vadd.f32 %v2686, %v3083
  %v3164 = vadd.f32 %v2687, %v3088
  %v3165 = vadd.f32 %v2688, %v3091
  %v3166 = vadd.f32 %v2689, %v3096
  %v3167 = vadd.f32 %v2690, %v3099
  %v3168 = vadd.f32 %v2691, %v3104
  %v3169 = vadd.f32 %v2692, %v3107
  %v3170 = vadd.f32 %v2693, %v3112
  %v3171 = vadd.f32 %v2694, %v3115
  %v3172 = vadd.f32 %v2695, %v3120
  %v3173 = vadd.f32 %v2696, %v3123
  %v3174 = vadd.f32 %v2697, %v3128
  %v3175 = vadd.f32 %v2698, %v3131
  %v3176 = vadd.f32 %v2699, %v3136
  %v3177 = vadd.f32 %v2700, %v3139
  %v3178 = vadd.f32 %v2701, %v3144
  %v3179 = vadd.f32 %v2702, %v3147
  %v3180 = vadd.f32 %v3150, %v1494
  %v3181 = vadd.f32 %v3151, %v1494
  %v3182 = vadd.f32 %v3152, %v1494
  %v3183 = vadd.f32 %v3153, %v1494
  %v3184 = vadd.f32 %v3154, %v1494
  %v3185 = vadd.f32 %v3155, %v1494
  %v3186 = vadd.f32 %v3156, %v1494
  %v3187 = vadd.f32 %v3157, %v1494
  %v3188 = vadd.f32 %v3158, %v1494
  %v3189 = vadd.f32 %v3159, %v1494
  %v3190 = vadd.f32 %v3160, %v1494
  %v3191 = vadd.f32 %v3161, %v1494
  %v3192 = vadd.f32 %v3162, %v1494
  %v3193 = vadd.f32 %v3163, %v1494
  %v3194 = vadd.f32 %v3164, %v1494
  %v3195 = vadd.f32 %v3165, %v1494
  %v3196 = vadd.f32 %v3166, %v1494
  %v3197 = vadd.f32 %v3167, %v1494
  %v3198 = vadd.f32 %v3168, %v1494
  %v3199 = vadd.f32 %v3169, %v1494
  %v3200 = vadd.f32 %v3170, %v1494
  %v3201 = vadd.f32 %v3171, %v1494
  %v3202 = vadd.f32 %v3172, %v1494
  %v3203 = vadd.f32 %v3173, %v1494
  %v3204 = vadd.f32 %v3174, %v1494
  %v3205 = vadd.f32 %v3175, %v1494
  %v3206 = vadd.f32 %v3176, %v1494
  %v3207 = vadd.f32 %v3177, %v1494
  %v3208 = vadd.f32 %v3178, %v1494
  %v3209 = vadd.f32 %v3179, %v1494
  %v3210 = vmax.f32 %v3180, 0.0
  %v3211 = vmax.f32 %v3181, 0.0
  %v3212 = vmax.f32 %v3182, 0.0
  %v3213 = vmax.f32 %v3183, 0.0
  %v3214 = vmax.f32 %v3184, 0.0
  %v3215 = vmax.f32 %v3185, 0.0
  %v3216 = vmax.f32 %v3186, 0.0
  %v3217 = vmax.f32 %v3187, 0.0
  %v3218 = vmax.f32 %v3188, 0.0
  %v3219 = vmax.f32 %v3189, 0.0
  %v3220 = vmax.f32 %v3190, 0.0
  %v3221 = vmax.f32 %v3191, 0.0
  %v3222 = vmax.f32 %v3192, 0.0
  %v3223 = vmax.f32 %v3193, 0.0
  %v3224 = vmax.f32 %v3194, 0.0
  %v3225 = vmax.f32 %v3195, 0.0
  %v3226 = vmax.f32 %v3196, 0.0
  %v3227 = vmax.f32 %v3197, 0.0
  %v3228 = vmax.f32 %v3198, 0.0
  %v3229 = vmax.f32 %v3199, 0.0
  %v3230 = vmax.f32 %v3200, 0.0
  %v3231 = vmax.f32 %v3201, 0.0
  %v3232 = vmax.f32 %v3202, 0.0
  %v3233 = vmax.f32 %v3203, 0.0
  %v3234 = vmax.f32 %v3204, 0.0
  %v3235 = vmax.f32 %v3205, 0.0
  %v3236 = vmax.f32 %v3206, 0.0
  %v3237 = vmax.f32 %v3207, 0.0
  %v3238 = vmax.f32 %v3208, 0.0
  %v3239 = vmax.f32 %v3209, 0.0
  %v3240 = vpack.c.bf16 %v3211, %v3210
  %v3241 = vpack.c.bf16 %v3213, %v3212
  %v3242 = vpack.c.bf16 %v3215, %v3214
  %v3243 = vpack.c.bf16 %v3217, %v3216
  %v3244 = vpack.c.bf16 %v3219, %v3218
  %v3245 = vpack.c.bf16 %v3221, %v3220
  %v3246 = vpack.c.bf16 %v3223, %v3222
  %v3247 = vpack.c.bf16 %v3225, %v3224
  %v3248 = vpack.c.bf16 %v3227, %v3226
  %v3249 = vpack.c.bf16 %v3229, %v3228
  %v3250 = vpack.c.bf16 %v3231, %v3230
  %v3251 = vpack.c.bf16 %v3233, %v3232
  %v3252 = vpack.c.bf16 %v3235, %v3234
  %v3253 = vpack.c.bf16 %v3237, %v3236
  %v3254 = vpack.c.bf16 %v3239, %v3238
  %v3270 = vunpack.c.l.b16 %v3240
  %v3271 = vunpack.c.h.b16 %v3240
  %v3272 = vunpack.c.l.b16 %v3241
  %v3273 = vunpack.c.h.b16 %v3241
  %v3274 = vunpack.c.l.b16 %v3242
  %v3275 = vunpack.c.h.b16 %v3242
  %v3276 = vunpack.c.l.b16 %v3243
  %v3277 = vunpack.c.h.b16 %v3243
  %v3278 = vunpack.c.l.b16 %v3244
  %v3279 = vunpack.c.h.b16 %v3244
  %v3280 = vunpack.c.l.b16 %v3245
  %v3281 = vunpack.c.h.b16 %v3245
  %v3282 = vunpack.c.l.b16 %v3246
  %v3283 = vunpack.c.h.b16 %v3246
  %v3284 = vunpack.c.l.b16 %v3247
  %v3285 = vunpack.c.h.b16 %v3247
  %v3286 = vunpack.c.l.b16 %v3248
  %v3287 = vunpack.c.h.b16 %v3248
  %v3288 = vunpack.c.l.b16 %v3249
  %v3289 = vunpack.c.h.b16 %v3249
  %v3290 = vunpack.c.l.b16 %v3250
  %v3291 = vunpack.c.h.b16 %v3250
  %v3292 = vunpack.c.l.b16 %v3251
  %v3293 = vunpack.c.h.b16 %v3251
  %v3294 = vunpack.c.l.b16 %v3252
  %v3295 = vunpack.c.h.b16 %v3252
  %v3296 = vunpack.c.l.b16 %v3253
  %v3297 = vunpack.c.h.b16 %v3253
  %v3298 = vunpack.c.l.b16 %v3254
  %v3299 = vunpack.c.h.b16 %v3254
  %v3300 = vpack.c.b16 %v3270, %v3270
  %v3301 = vpack.c.b16 %v3271, %v3271
  %v3302 = vpack.c.b16 %v3272, %v3272
  %v3303 = vpack.c.b16 %v3273, %v3273
  %v3304 = vpack.c.b16 %v3274, %v3274
  %v3305 = vpack.c.b16 %v3275, %v3275
  %v3306 = vpack.c.b16 %v3276, %v3276
  %v3307 = vpack.c.b16 %v3277, %v3277
  %v3308 = vpack.c.b16 %v3278, %v3278
  %v3309 = vpack.c.b16 %v3279, %v3279
  %v3310 = vpack.c.b16 %v3280, %v3280
  %v3311 = vpack.c.b16 %v3281, %v3281
  %v3312 = vpack.c.b16 %v3282, %v3282
  %v3313 = vpack.c.b16 %v3283, %v3283
  %v3314 = vpack.c.b16 %v3284, %v3284
  %v3315 = vpack.c.b16 %v3285, %v3285
  %v3316 = vpack.c.b16 %v3286, %v3286
  %v3317 = vpack.c.b16 %v3287, %v3287
  %v3318 = vpack.c.b16 %v3288, %v3288
  %v3319 = vpack.c.b16 %v3289, %v3289
  %v3320 = vpack.c.b16 %v3290, %v3290
  %v3321 = vpack.c.b16 %v3291, %v3291
  %v3322 = vpack.c.b16 %v3292, %v3292
  %v3323 = vpack.c.b16 %v3293, %v3293
  %v3324 = vpack.c.b16 %v3294, %v3294
  %v3325 = vpack.c.b16 %v3295, %v3295
  %v3326 = vpack.c.b16 %v3296, %v3296
  %v3327 = vpack.c.b16 %v3297, %v3297
  %v3328 = vpack.c.b16 %v3298, %v3298
  %v3329 = vpack.c.b16 %v3299, %v3299
  %s3360 = scalar_lea.vmem %s3, 120
  %3361 = vst.msk [vmem:[%s3360] sm:$0xf] %vm1676, %v3300
  %3362 = vst.msk [vmem:[%s3360 + $0x4] sm:$0xf] %vm1676, %v3301
  %3363 = vst.msk [vmem:[%s3360 + $0x8] sm:$0xf] %vm1676, %v3302
  %3364 = vst.msk [vmem:[%s3360 + $0xc] sm:$0xf] %vm1676, %v3303
  %3365 = vst.msk [vmem:[%s3360 + $0x10] sm:$0xf] %vm1676, %v3304
  %3366 = vst.msk [vmem:[%s3360 + $0x14] sm:$0xf] %vm1676, %v3305
  %3367 = vst.msk [vmem:[%s3360 + $0x18] sm:$0xf] %vm1676, %v3306
  %3368 = vst.msk [vmem:[%s3360 + $0x1c] sm:$0xf] %vm1676, %v3307
  %3369 = vst.msk [vmem:[%s3360 + $0x20] sm:$0xf] %vm1676, %v3308
  %3370 = vst.msk [vmem:[%s3360 + $0x24] sm:$0xf] %vm1676, %v3309
  %3371 = vst.msk [vmem:[%s3360 + $0x28] sm:$0xf] %vm1676, %v3310
  %3372 = vst.msk [vmem:[%s3360 + $0x2c] sm:$0xf] %vm1676, %v3311
  %3373 = vst.msk [vmem:[%s3360 + $0x30] sm:$0xf] %vm1676, %v3312
  %3374 = vst.msk [vmem:[%s3360 + $0x34] sm:$0xf] %vm1676, %v3313
  %3375 = vst.msk [vmem:[%s3360 + $0x38] sm:$0xf] %vm1676, %v3314
  %3376 = vst.msk [vmem:[%s3360 + $0x3c] sm:$0xf] %vm1676, %v3315
  %3377 = vst.msk [vmem:[%s3360 + $0x40] sm:$0xf] %vm1676, %v3316
  %3378 = vst.msk [vmem:[%s3360 + $0x44] sm:$0xf] %vm1676, %v3317
  %3379 = vst.msk [vmem:[%s3360 + $0x48] sm:$0xf] %vm1676, %v3318
  %3380 = vst.msk [vmem:[%s3360 + $0x4c] sm:$0xf] %vm1676, %v3319
  %3381 = vst.msk [vmem:[%s3360 + $0x50] sm:$0xf] %vm1676, %v3320
  %3382 = vst.msk [vmem:[%s3360 + $0x54] sm:$0xf] %vm1676, %v3321
  %3383 = vst.msk [vmem:[%s3360 + $0x58] sm:$0xf] %vm1676, %v3322
  %3384 = vst.msk [vmem:[%s3360 + $0x5c] sm:$0xf] %vm1676, %v3323
  %3385 = vst.msk [vmem:[%s3360 + $0x60] sm:$0xf] %vm1676, %v3324
  %3386 = vst.msk [vmem:[%s3360 + $0x64] sm:$0xf] %vm1676, %v3325
  %3387 = vst.msk [vmem:[%s3360 + $0x68] sm:$0xf] %vm1676, %v3326
  %3388 = vst.msk [vmem:[%s3360 + $0x6c] sm:$0xf] %vm1676, %v3327
  %3389 = vst.msk [vmem:[%s3360 + $0x70] sm:$0xf] %vm1676, %v3328
  %3390 = vst.msk [vmem:[%s3360 + $0x74] sm:$0xf] %vm1676, %v3329
  // Predicated region
  $region14: #{observation_encoder_forward.5} parent=0 // pred_check
    _
  $region15: #{observation_encoder_forward.5} parent=0 // pred_check_branch
    %3392 = sbr.rel (0) target = $region17
  $region16: #{observation_encoder_forward.5} parent=0 // pred_region
    _
  $region17: #{observation_encoder_forward.5} parent=0 // pred_fallthru
    _
  // Predicated region
  $region18: #{observation_encoder_forward.5} parent=0 // pred_check
    _
  $region19: #{observation_encoder_forward.5} parent=0 // pred_check_branch
    %3394 = sbr.rel (0) target = $region21
  $region20: #{observation_encoder_forward.5} parent=0 // pred_region
    _
  $region21: #{observation_encoder_forward.5} parent=0 // pred_fallthru
    _

// kernel: observation_encoder_forward.6
$region0: #{observation_encoder_forward.6}
  #allocation0 [shape = 'u32[]', space=smem, size = 0x4, offset = 0x4, fixed_abs, tag = 'smem constant byte address 0x4 - core index']
  #allocation1 [shape = 'u32[144,128]{1,0:T(1,128)}', space=vmem, size = 0x12000, scoped, tag = 'internal scratch']
  %s0 = inlined_call_operand.vmem [shape: bf16[2,57,64], index: 0, kind: input, shape index: {}]
  %s1 = inlined_call_operand.vmem [shape: bf16[256,32], index: 1, kind: input, shape index: {}]
  %s2 = inlined_call_operand.vmem [shape: f32[1,32], index: 2, kind: input, shape index: {}]
  %s3 = inlined_call_operand.vmem [shape: bf16[2,42,32], index: 3, kind: output, shape index: {}]
  %s4 = sld [smem:[#allocation0]]
  $region22: #{observation_encoder_forward.6} parent=0
    _
  %s6 = ssub.s32 1, %s4
  %s7 = scalar_select 0, %s6, %s4
  // Predicated region
  $region2: #{observation_encoder_forward.6} parent=0 // pred_check
    _
  $region3: #{observation_encoder_forward.6} parent=0 // pred_check_branch
    %9 = sbr.rel (0) target = $region5
  $region4: #{observation_encoder_forward.6} parent=0 // pred_region
    _
  $region5: #{observation_encoder_forward.6} parent=0 // pred_fallthru
    _
  // Predicated region
  $region6: #{observation_encoder_forward.6} parent=0 // pred_check
    _
  $region7: #{observation_encoder_forward.6} parent=0 // pred_check_branch
    %11 = sbr.rel (0) target = $region9
  $region8: #{observation_encoder_forward.6} parent=0 // pred_region
    _
  $region9: #{observation_encoder_forward.6} parent=0 // pred_fallthru
    _
  // Predicated region
  $region10: #{observation_encoder_forward.6} parent=0 // pred_check
    _
  $region11: #{observation_encoder_forward.6} parent=0 // pred_check_branch
    %13 = sbr.rel (0) target = $region13
  $region12: #{observation_encoder_forward.6} parent=0 // pred_region
    _
  $region13: #{observation_encoder_forward.6} parent=0 // pred_fallthru
    _
  %v15 = vld [vmem:[%s2] sm:$0x1]
  %v16 = vld [vmem:[%s0] sm:$0xf]
  %v17 = vld [vmem:[%s0 + $0x4] sm:$0xf]
  %v18 = vld [vmem:[%s0 + $0x8] sm:$0xf]
  %v19 = vld [vmem:[%s0 + $0xc] sm:$0xf]
  %v20 = vld [vmem:[%s0 + $0x10] sm:$0xf]
  %v21 = vld [vmem:[%s0 + $0x14] sm:$0x1]
  %v22 = vld [vmem:[%s1] sm:$0xf]
  %v23 = vld [vmem:[%s1 + $0x4] sm:$0xf]
  %v24 = vld [vmem:[%s1 + $0x8] sm:$0xf]
  %v25 = vld [vmem:[%s1 + $0xc] sm:$0xf]
  %v26 = vld [vmem:[%s1 + $0x10] sm:$0xf]
  %v27 = vld [vmem:[%s1 + $0x14] sm:$0xf]
  %v28 = vld [vmem:[%s1 + $0x18] sm:$0xf]
  %v29 = vld [vmem:[%s1 + $0x1c] sm:$0xf]
  %v30 = vld [vmem:[%s0 + $0x14] sm:$0x3]
  %v31 = vld [vmem:[%s1 + $0x20] sm:$0xf]
  %v32 = vld [vmem:[%s1 + $0x24] sm:$0xf]
  %v33 = vld [vmem:[%s1 + $0x28] sm:$0xf]
  %v34 = vld [vmem:[%s1 + $0x2c] sm:$0xf]
  %v35 = vld [vmem:[%s1 + $0x30] sm:$0xf]
  %v36 = vld [vmem:[%s1 + $0x34] sm:$0xf]
  %v37 = vld [vmem:[%s1 + $0x38] sm:$0xf]
  %v38 = vld [vmem:[%s1 + $0x3c] sm:$0xf]
  %v45 = vunpack.c.l.b16 %v16
  %v46 = vunpack.c.l.b16 %v17
  %v47 = vunpack.c.l.b16 %v18
  %v48 = vunpack.c.l.b16 %v19
  %v49 = vunpack.c.l.b16 %v20
  %v50 = vunpack.c.l.b16 %v30
  %v51 = vpack.c.b16 %v46, %v45
  %v52 = vpack.c.b16 %v48, %v47
  %v53 = vpack.c.b16 %v50, %v49
  %vm54 = vsmask.f32 7424
  %v56 = vshrl.u32 %v51, 16
  %v58 = vshll.u32 %v51, 16
  %v60 = vrot.slane %v58, 1
  %v61 = vor.u32 %v56, %v60
  %v63 = vshll.u32 %v52, 16
  %v65 = vrot.slane %v63, 1
  %v66 = vsel %vm54, %v61, %v65
  %v67 = vshrl.u32 %v52, 16
  %v69 = vor.u32 %v67, %v65
  %v71 = vshll.u32 %v53, 16
  %v73 = vrot.slane %v71, 1
  %v74 = vsel %vm54, %v69, %v73
  %v75 = vshrl.u32 %v53, 16
  %v77 = vor.u32 %v75, %v73
  %v86 = vunpack.c.l.b16 %v31
  %v87 = vunpack.c.l.b16 %v32
  %v88 = vunpack.c.l.b16 %v33
  %v89 = vunpack.c.l.b16 %v34
  %v90 = vunpack.c.l.b16 %v35
  %v91 = vunpack.c.l.b16 %v36
  %v92 = vunpack.c.l.b16 %v37
  %v93 = vunpack.c.l.b16 %v38
  %v94 = vpack.c.b16 %v87, %v86
  %v95 = vpack.c.b16 %v89, %v88
  %v96 = vpack.c.b16 %v91, %v90
  %v97 = vpack.c.b16 %v93, %v92
  %vm102 = vcmask 523264
  %v104 = vsel %vm102, %v66, 0
  %v107 = vsel %vm102, %v74, 0
  %v110 = vsel %vm102, %v77, 0
  %112 = vmatprep.subr.bf16.mxu0 0
  %113 = vmatpush1.bf16.msra.mxu0 0
  %114 = vmatprep.subr.bf16.mxu0 0
  %115 = vmatpush1.bf16.msra.mxu0 0
  %116 = vmatprep.subr.bf16.mxu0 0
  %117 = vmatpush1.bf16.msra.mxu0 0
  %118 = vmatprep.subr.bf16.mxu0 0
  %119 = vmatpush1.bf16.msra.mxu0 0
  %120 = vmatprep.subr.bf16.mxu0 0
  %121 = vmatpush1.bf16.msra.mxu0 %v97
  %122 = vmatprep.subr.bf16.mxu0 0
  %123 = vmatpush1.bf16.msra.mxu0 %v96
  %124 = vmatprep.subr.bf16.mxu0 0
  %125 = vmatpush1.bf16.msra.mxu0 %v95
  %126 = vmatprep.subr.bf16.mxu0 0
  %127 = vmatpush1.bf16.msra.mxu0 %v94
  %128 = vmatprep.subr.bf16.mxu0 0
  %129 = vmatpush2.bf16.msra.mxu0 0
  %130 = vmatprep.subr.bf16.mxu0 0
  %131 = vmatpush2.bf16.msra.mxu0 0
  %132 = vmatprep.subr.bf16.mxu0 0
  %133 = vmatpush2.bf16.msra.mxu0 0
  %134 = vmatprep.subr.bf16.mxu0 0
  %135 = vmatpush2.bf16.msra.mxu0 0
  %136 = vmatprep.subr.bf16.mxu0 0
  %137 = vmatpush2.bf16.msra.mxu0 0
  %138 = vmatprep.subr.bf16.mxu0 0
  %139 = vmatpush2.bf16.msra.mxu0 0
  %140 = vmatprep.subr.bf16.mxu0 0
  %141 = vmatpush2.bf16.msra.mxu0 0
  %142 = vmatprep.subr.bf16.mxu0 0
  %143 = vmatpush2.bf16.msra.mxu0 0
  %144 = vmatprep.mubr.bf16.mxu0 0
  %145 = vmatmul.mubr.bf16.gmra.mxu0 %v104
  %v146 = vpop.f32.mrf.mxu0
  %v147 = vadd.f32 0.0, %v146
  %v148 = vpop.f32.mrf.mxu0
  %v149 = vpop.f32.mrf.mxu0
  %v150 = vadd.f32 0.0, %v149
  %v151 = vpop.f32.mrf.mxu0
  %152 = vmatprep.mubr.bf16.mxu0 0
  %153 = vmatmul.mubr.bf16.gmra.mxu0 %v107
  %v154 = vpop.f32.mrf.mxu0
  %v155 = vadd.f32 0.0, %v154
  %v156 = vpop.f32.mrf.mxu0
  %v157 = vpop.f32.mrf.mxu0
  %v158 = vadd.f32 0.0, %v157
  %v159 = vpop.f32.mrf.mxu0
  %160 = vmatprep.mubr.bf16.mxu0 0
  %161 = vmatmul.mubr.bf16.gmra.mxu0 %v110
  %v162 = vpop.f32.mrf.mxu0
  %v163 = vadd.f32 0.0, %v162
  %v164 = vpop.f32.mrf.mxu0
  %v165 = vpop.f32.mrf.mxu0
  %v166 = vadd.f32 0.0, %v165
  %v167 = vpop.f32.mrf.mxu0
  %168 = vdwg.mxu0
  %v170 = vunpack.c.l.b16 %v21
  %v171 = vpack.c.b16 %v170, %v49
  %v180 = vunpack.c.l.b16 %v22
  %v181 = vunpack.c.l.b16 %v23
  %v182 = vunpack.c.l.b16 %v24
  %v183 = vunpack.c.l.b16 %v25
  %v184 = vunpack.c.l.b16 %v26
  %v185 = vunpack.c.l.b16 %v27
  %v186 = vunpack.c.l.b16 %v28
  %v187 = vunpack.c.l.b16 %v29
  %v188 = vpack.c.b16 %v181, %v180
  %v189 = vpack.c.b16 %v183, %v182
  %v190 = vpack.c.b16 %v185, %v184
  %v191 = vpack.c.b16 %v187, %v186
  %v196 = vsel %vm102, %v51, 0
  %v198 = vsel %vm102, %v52, 0
  %v201 = vsel %vm102, %v171, 0
  %203 = vmatprep.subr.bf16.mxu0 0
  %204 = vmatpush1.bf16.msra.mxu0 0
  %205 = vmatprep.subr.bf16.mxu0 0
  %206 = vmatpush1.bf16.msra.mxu0 0
  %207 = vmatprep.subr.bf16.mxu0 0
  %208 = vmatpush1.bf16.msra.mxu0 0
  %209 = vmatprep.subr.bf16.mxu0 0
  %210 = vmatpush1.bf16.msra.mxu0 0
  %211 = vmatprep.subr.bf16.mxu0 0
  %212 = vmatpush1.bf16.msra.mxu0 %v191
  %213 = vmatprep.subr.bf16.mxu0 0
  %214 = vmatpush1.bf16.msra.mxu0 %v190
  %215 = vmatprep.subr.bf16.mxu0 0
  %216 = vmatpush1.bf16.msra.mxu0 %v189
  %217 = vmatprep.subr.bf16.mxu0 0
  %218 = vmatpush1.bf16.msra.mxu0 %v188
  %219 = vmatprep.subr.bf16.mxu0 0
  %220 = vmatpush2.bf16.msra.mxu0 0
  %221 = vmatprep.subr.bf16.mxu0 0
  %222 = vmatpush2.bf16.msra.mxu0 0
  %223 = vmatprep.subr.bf16.mxu0 0
  %224 = vmatpush2.bf16.msra.mxu0 0
  %225 = vmatprep.subr.bf16.mxu0 0
  %226 = vmatpush2.bf16.msra.mxu0 0
  %227 = vmatprep.subr.bf16.mxu0 0
  %228 = vmatpush2.bf16.msra.mxu0 0
  %229 = vmatprep.subr.bf16.mxu0 0
  %230 = vmatpush2.bf16.msra.mxu0 0
  %231 = vmatprep.subr.bf16.mxu0 0
  %232 = vmatpush2.bf16.msra.mxu0 0
  %233 = vmatprep.subr.bf16.mxu0 0
  %234 = vmatpush2.bf16.msra.mxu0 0
  %235 = vmatprep.mubr.bf16.mxu0 0
  %236 = vmatmul.mubr.bf16.gmra.mxu0 %v196
  %v237 = vpop.f32.mrf.mxu0
  %v238 = vadd.f32 %v147, %v237
  %v239 = vpop.f32.mrf.mxu0
  %v240 = vpop.f32.mrf.mxu0
  %v241 = vadd.f32 %v150, %v240
  %v242 = vpop.f32.mrf.mxu0
  %243 = vmatprep.mubr.bf16.mxu0 0
  %244 = vmatmul.mubr.bf16.gmra.mxu0 %v198
  %v245 = vpop.f32.mrf.mxu0
  %v246 = vadd.f32 %v155, %v245
  %v247 = vpop.f32.mrf.mxu0
  %v248 = vpop.f32.mrf.mxu0
  %v249 = vadd.f32 %v158, %v248
  %v250 = vpop.f32.mrf.mxu0
  %251 = vmatprep.mubr.bf16.mxu0 0
  %252 = vmatmul.mubr.bf16.gmra.mxu0 %v201
  %v253 = vpop.f32.mrf.mxu0
  %v254 = vadd.f32 %v163, %v253
  %v255 = vpop.f32.mrf.mxu0
  %v256 = vpop.f32.mrf.mxu0
  %v257 = vadd.f32 %v166, %v256
  %v258 = vpop.f32.mrf.mxu0
  %259 = vdwg.mxu0
  %v260 = vld [vmem:[%s0] sm:$0x8]
  %v261 = vld [vmem:[%s0 + $0x4] sm:$0xf]
  %v262 = vld [vmem:[%s0 + $0x8] sm:$0xf]
  %v263 = vld [vmem:[%s0 + $0xc] sm:$0xf]
  %v264 = vld [vmem:[%s0 + $0x10] sm:$0xf]
  %v265 = vld [vmem:[%s0 + $0x14] sm:$0xf]
  %v266 = vld [vmem:[%s0 + $0x18] sm:$0x1]
  %v267 = vld [vmem:[%s1 + $0x40] sm:$0xf]
  %v268 = vld [vmem:[%s1 + $0x44] sm:$0xf]
  %v269 = vld [vmem:[%s1 + $0x48] sm:$0xf]
  %v270 = vld [vmem:[%s1 + $0x4c] sm:$0xf]
  %v271 = vld [vmem:[%s1 + $0x50] sm:$0xf]
  %v272 = vld [vmem:[%s1 + $0x54] sm:$0xf]
  %v273 = vld [vmem:[%s1 + $0x58] sm:$0xf]
  %v274 = vld [vmem:[%s1 + $0x5c] sm:$0xf]
  %v282 = vunpack.c.l.b16 %v260
  %v283 = vunpack.c.l.b16 %v261
  %v284 = vunpack.c.l.b16 %v262
  %v285 = vunpack.c.l.b16 %v263
  %v286 = vunpack.c.l.b16 %v264
  %v287 = vunpack.c.l.b16 %v265
  %v288 = vunpack.c.l.b16 %v266
  %v289 = vpack.c.b16 %v283, %v282
  %v290 = vpack.c.b16 %v285, %v284
  %v291 = vpack.c.b16 %v287, %v286
  %v292 = vpack.c.b16 %v288, %v288
  %vm293 = vsmask.f32 4352
  %v295 = vshrl.u32 %v289, 16
  %v297 = vrot.slane %v295, 3
  %v298 = vshll.u32 %v289, 16
  %v300 = vrot.slane %v298, 4
  %v301 = vor.u32 %v297, %v300
  %v303 = vshrl.u32 %v290, 16
  %v305 = vrot.slane %v303, 3
  %v306 = vshll.u32 %v290, 16
  %v308 = vrot.slane %v306, 4
  %v309 = vor.u32 %v305, %v308
  %v310 = vsel %vm293, %v301, %v309
  %v312 = vshrl.u32 %v291, 16
  %v314 = vrot.slane %v312, 3
  %v315 = vshll.u32 %v291, 16
  %v317 = vrot.slane %v315, 4
  %v318 = vor.u32 %v314, %v317
  %v319 = vsel %vm293, %v309, %v318
  %v321 = vshll.u32 %v292, 16
  %v323 = vrot.slane %v321, 4
  %v324 = vsel %vm293, %v318, %v323
  %v333 = vunpack.c.l.b16 %v267
  %v334 = vunpack.c.l.b16 %v268
  %v335 = vunpack.c.l.b16 %v269
  %v336 = vunpack.c.l.b16 %v270
  %v337 = vunpack.c.l.b16 %v271
  %v338 = vunpack.c.l.b16 %v272
  %v339 = vunpack.c.l.b16 %v273
  %v340 = vunpack.c.l.b16 %v274
  %v341 = vpack.c.b16 %v334, %v333
  %v342 = vpack.c.b16 %v336, %v335
  %v343 = vpack.c.b16 %v338, %v337
  %v344 = vpack.c.b16 %v340, %v339
  %v350 = vsel %vm102, %v310, 0
  %v353 = vsel %vm102, %v319, 0
  %v356 = vsel %vm102, %v324, 0
  %358 = vmatprep.subr.bf16.mxu0 0
  %359 = vmatpush1.bf16.msra.mxu0 0
  %360 = vmatprep.subr.bf16.mxu0 0
  %361 = vmatpush1.bf16.msra.mxu0 0
  %362 = vmatprep.subr.bf16.mxu0 0
  %363 = vmatpush1.bf16.msra.mxu0 0
  %364 = vmatprep.subr.bf16.mxu0 0
  %365 = vmatpush1.bf16.msra.mxu0 0
  %366 = vmatprep.subr.bf16.mxu0 0
  %367 = vmatpush1.bf16.msra.mxu0 %v344
  %368 = vmatprep.subr.bf16.mxu0 0
  %369 = vmatpush1.bf16.msra.mxu0 %v343
  %370 = vmatprep.subr.bf16.mxu0 0
  %371 = vmatpush1.bf16.msra.mxu0 %v342
  %372 = vmatprep.subr.bf16.mxu0 0
  %373 = vmatpush1.bf16.msra.mxu0 %v341
  %374 = vmatprep.subr.bf16.mxu0 0
  %375 = vmatpush2.bf16.msra.mxu0 0
  %376 = vmatprep.subr.bf16.mxu0 0
  %377 = vmatpush2.bf16.msra.mxu0 0
  %378 = vmatprep.subr.bf16.mxu0 0
  %379 = vmatpush2.bf16.msra.mxu0 0
  %380 = vmatprep.subr.bf16.mxu0 0
  %381 = vmatpush2.bf16.msra.mxu0 0
  %382 = vmatprep.subr.bf16.mxu0 0
  %383 = vmatpush2.bf16.msra.mxu0 0
  %384 = vmatprep.subr.bf16.mxu0 0
  %385 = vmatpush2.bf16.msra.mxu0 0
  %386 = vmatprep.subr.bf16.mxu0 0
  %387 = vmatpush2.bf16.msra.mxu0 0
  %388 = vmatprep.subr.bf16.mxu0 0
  %389 = vmatpush2.bf16.msra.mxu0 0
  %390 = vmatprep.mubr.bf16.mxu0 0
  %391 = vmatmul.mubr.bf16.gmra.mxu0 %v350
  %v392 = vpop.f32.mrf.mxu0
  %v393 = vadd.f32 0.0, %v392
  %v394 = vpop.f32.mrf.mxu0
  %v395 = vpop.f32.mrf.mxu0
  %v396 = vadd.f32 0.0, %v395
  %v397 = vpop.f32.mrf.mxu0
  %398 = vmatprep.mubr.bf16.mxu0 0
  %399 = vmatmul.mubr.bf16.gmra.mxu0 %v353
  %v400 = vpop.f32.mrf.mxu0
  %v401 = vadd.f32 0.0, %v400
  %v402 = vpop.f32.mrf.mxu0
  %v403 = vpop.f32.mrf.mxu0
  %v404 = vadd.f32 0.0, %v403
  %v405 = vpop.f32.mrf.mxu0
  %406 = vmatprep.mubr.bf16.mxu0 0
  %407 = vmatmul.mubr.bf16.gmra.mxu0 %v356
  %v408 = vpop.f32.mrf.mxu0
  %v409 = vadd.f32 0.0, %v408
  %v410 = vpop.f32.mrf.mxu0
  %v411 = vpop.f32.mrf.mxu0
  %v412 = vadd.f32 0.0, %v411
  %v413 = vpop.f32.mrf.mxu0
  %414 = vdwg.mxu0
  %v415 = vadd.f32 %v238, %v393
  %v416 = vadd.f32 %v241, %v396
  %v417 = vadd.f32 %v246, %v401
  %v418 = vadd.f32 %v249, %v404
  %v419 = vadd.f32 %v254, %v409
  %v420 = vadd.f32 %v257, %v412
  %v421 = vld [vmem:[%s1 + $0x60] sm:$0xf]
  %v422 = vld [vmem:[%s1 + $0x64] sm:$0xf]
  %v423 = vld [vmem:[%s1 + $0x68] sm:$0xf]
  %v424 = vld [vmem:[%s1 + $0x6c] sm:$0xf]
  %v425 = vld [vmem:[%s1 + $0x70] sm:$0xf]
  %v426 = vld [vmem:[%s1 + $0x74] sm:$0xf]
  %v427 = vld [vmem:[%s1 + $0x78] sm:$0xf]
  %v428 = vld [vmem:[%s1 + $0x7c] sm:$0xf]
  %v429 = vpack.c.b16 %v284, %v283
  %v430 = vpack.c.b16 %v286, %v285
  %v431 = vpack.c.b16 %v288, %v287
  %v440 = vunpack.c.l.b16 %v421
  %v441 = vunpack.c.l.b16 %v422
  %v442 = vunpack.c.l.b16 %v423
  %v443 = vunpack.c.l.b16 %v424
  %v444 = vunpack.c.l.b16 %v425
  %v445 = vunpack.c.l.b16 %v426
  %v446 = vunpack.c.l.b16 %v427
  %v447 = vunpack.c.l.b16 %v428
  %v448 = vpack.c.b16 %v441, %v440
  %v449 = vpack.c.b16 %v443, %v442
  %v450 = vpack.c.b16 %v445, %v444
  %v451 = vpack.c.b16 %v447, %v446
  %v457 = vsel %vm102, %v429, 0
  %v460 = vsel %vm102, %v430, 0
  %v463 = vsel %vm102, %v431, 0
  %465 = vmatprep.subr.bf16.mxu0 0
  %466 = vmatpush1.bf16.msra.mxu0 0
  %467 = vmatprep.subr.bf16.mxu0 0
  %468 = vmatpush1.bf16.msra.mxu0 0
  %469 = vmatprep.subr.bf16.mxu0 0
  %470 = vmatpush1.bf16.msra.mxu0 0
  %471 = vmatprep.subr.bf16.mxu0 0
  %472 = vmatpush1.bf16.msra.mxu0 0
  %473 = vmatprep.subr.bf16.mxu0 0
  %474 = vmatpush1.bf16.msra.mxu0 %v451
  %475 = vmatprep.subr.bf16.mxu0 0
  %476 = vmatpush1.bf16.msra.mxu0 %v450
  %477 = vmatprep.subr.bf16.mxu0 0
  %478 = vmatpush1.bf16.msra.mxu0 %v449
  %479 = vmatprep.subr.bf16.mxu0 0
  %480 = vmatpush1.bf16.msra.mxu0 %v448
  %481 = vmatprep.subr.bf16.mxu0 0
  %482 = vmatpush2.bf16.msra.mxu0 0
  %483 = vmatprep.subr.bf16.mxu0 0
  %484 = vmatpush2.bf16.msra.mxu0 0
  %485 = vmatprep.subr.bf16.mxu0 0
  %486 = vmatpush2.bf16.msra.mxu0 0
  %487 = vmatprep.subr.bf16.mxu0 0
  %488 = vmatpush2.bf16.msra.mxu0 0
  %489 = vmatprep.subr.bf16.mxu0 0
  %490 = vmatpush2.bf16.msra.mxu0 0
  %491 = vmatprep.subr.bf16.mxu0 0
  %492 = vmatpush2.bf16.msra.mxu0 0
  %493 = vmatprep.subr.bf16.mxu0 0
  %494 = vmatpush2.bf16.msra.mxu0 0
  %495 = vmatprep.subr.bf16.mxu0 0
  %496 = vmatpush2.bf16.msra.mxu0 0
  %497 = vmatprep.mubr.bf16.mxu0 0
  %498 = vmatmul.mubr.bf16.gmra.mxu0 %v457
  %v499 = vpop.f32.mrf.mxu0
  %v500 = vadd.f32 0.0, %v499
  %v501 = vpop.f32.mrf.mxu0
  %v502 = vpop.f32.mrf.mxu0
  %v503 = vadd.f32 0.0, %v502
  %v504 = vpop.f32.mrf.mxu0
  %505 = vmatprep.mubr.bf16.mxu0 0
  %506 = vmatmul.mubr.bf16.gmra.mxu0 %v460
  %v507 = vpop.f32.mrf.mxu0
  %v508 = vadd.f32 0.0, %v507
  %v509 = vpop.f32.mrf.mxu0
  %v510 = vpop.f32.mrf.mxu0
  %v511 = vadd.f32 0.0, %v510
  %v512 = vpop.f32.mrf.mxu0
  %513 = vmatprep.mubr.bf16.mxu0 0
  %514 = vmatmul.mubr.bf16.gmra.mxu0 %v463
  %v515 = vpop.f32.mrf.mxu0
  %v516 = vadd.f32 0.0, %v515
  %v517 = vpop.f32.mrf.mxu0
  %v518 = vpop.f32.mrf.mxu0
  %v519 = vadd.f32 0.0, %v518
  %v520 = vpop.f32.mrf.mxu0
  %521 = vdwg.mxu0
  %v522 = vadd.f32 %v415, %v500
  %v523 = vadd.f32 %v416, %v503
  %v524 = vadd.f32 %v417, %v508
  %v525 = vadd.f32 %v418, %v511
  %v526 = vadd.f32 %v419, %v516
  %v527 = vadd.f32 %v420, %v519
  %v529 = vlaneseq
  %v530 = vshrl.u32 %v529, 7
  %v531 = vsub.s32 0, %v530
  %v532 = vrot.slane %v15, %v531
  %v534 = vadd.f32 %v522, %v532
  %v535 = vadd.f32 %v523, %v532
  %v536 = vadd.f32 %v524, %v532
  %v537 = vadd.f32 %v525, %v532
  %v538 = vadd.f32 %v526, %v532
  %v539 = vadd.f32 %v527, %v532
  %v540 = vmax.f32 %v534, 0.0
  %v541 = vmax.f32 %v535, 0.0
  %v542 = vmax.f32 %v536, 0.0
  %v543 = vmax.f32 %v537, 0.0
  %v544 = vmax.f32 %v538, 0.0
  %v545 = vmax.f32 %v539, 0.0
  %v546 = vpack.c.bf16 %v541, %v540
  %v547 = vpack.c.bf16 %v543, %v542
  %v548 = vpack.c.bf16 %v545, %v544
  %v552 = vunpack.c.l.b16 %v546
  %v553 = vunpack.c.h.b16 %v546
  %v554 = vunpack.c.l.b16 %v547
  %v555 = vunpack.c.h.b16 %v547
  %v556 = vunpack.c.l.b16 %v548
  %v557 = vunpack.c.h.b16 %v548
  %v558 = vpack.c.b16 %v552, %v552
  %v559 = vpack.c.b16 %v553, %v553
  %v560 = vpack.c.b16 %v554, %v554
  %v561 = vpack.c.b16 %v555, %v555
  %v562 = vpack.c.b16 %v556, %v556
  %v563 = vpack.c.b16 %v557, %v557
  %vm570 = vcmask 257024
  %571 = vst.msk [vmem:[%s3] sm:$0xf] %vm570, %v558
  %572 = vst.msk [vmem:[%s3 + $0x4] sm:$0xf] %vm570, %v559
  %573 = vst.msk [vmem:[%s3 + $0x8] sm:$0xf] %vm570, %v560
  %574 = vst.msk [vmem:[%s3 + $0xc] sm:$0xf] %vm570, %v561
  %575 = vst.msk [vmem:[%s3 + $0x10] sm:$0xf] %vm570, %v562
  %vm576 = vcmask 253952
  %577 = vst.msk [vmem:[%s3 + $0x14] sm:$0x1] %vm576, %v563
  %s578 = scalar_lea.vmem %s0, 32
  %v579 = vld [vmem:[%s578] sm:$0xf]
  %v580 = vld [vmem:[%s578 + $0x4] sm:$0xf]
  %v581 = vld [vmem:[%s578 + $0x8] sm:$0xf]
  %v582 = vld [vmem:[%s578 + $0xc] sm:$0xf]
  %v583 = vld [vmem:[%s578 + $0x10] sm:$0xf]
  %v584 = vld [vmem:[%s578 + $0x14] sm:$0x1]
  %v585 = vld [vmem:[%s1] sm:$0xf]
  %v586 = vld [vmem:[%s1 + $0x4] sm:$0xf]
  %v587 = vld [vmem:[%s1 + $0x8] sm:$0xf]
  %v588 = vld [vmem:[%s1 + $0xc] sm:$0xf]
  %v589 = vld [vmem:[%s1 + $0x10] sm:$0xf]
  %v590 = vld [vmem:[%s1 + $0x14] sm:$0xf]
  %v591 = vld [vmem:[%s1 + $0x18] sm:$0xf]
  %v592 = vld [vmem:[%s1 + $0x1c] sm:$0xf]
  %v593 = vld [vmem:[%s578 + $0x14] sm:$0x3]
  %v594 = vld [vmem:[%s1 + $0x20] sm:$0xf]
  %v595 = vld [vmem:[%s1 + $0x24] sm:$0xf]
  %v596 = vld [vmem:[%s1 + $0x28] sm:$0xf]
  %v597 = vld [vmem:[%s1 + $0x2c] sm:$0xf]
  %v598 = vld [vmem:[%s1 + $0x30] sm:$0xf]
  %v599 = vld [vmem:[%s1 + $0x34] sm:$0xf]
  %v600 = vld [vmem:[%s1 + $0x38] sm:$0xf]
  %v601 = vld [vmem:[%s1 + $0x3c] sm:$0xf]
  %v608 = vunpack.c.l.b16 %v579
  %v609 = vunpack.c.l.b16 %v580
  %v610 = vunpack.c.l.b16 %v581
  %v611 = vunpack.c.l.b16 %v582
  %v612 = vunpack.c.l.b16 %v583
  %v613 = vunpack.c.l.b16 %v593
  %v614 = vpack.c.b16 %v609, %v608
  %v615 = vpack.c.b16 %v611, %v610
  %v616 = vpack.c.b16 %v613, %v612
  %v618 = vshrl.u32 %v614, 16
  %v620 = vshll.u32 %v614, 16
  %v622 = vrot.slane %v620, 1
  %v623 = vor.u32 %v618, %v622
  %v625 = vshll.u32 %v615, 16
  %v627 = vrot.slane %v625, 1
  %v628 = vsel %vm54, %v623, %v627
  %v629 = vshrl.u32 %v615, 16
  %v631 = vor.u32 %v629, %v627
  %v633 = vshll.u32 %v616, 16
  %v635 = vrot.slane %v633, 1
  %v636 = vsel %vm54, %v631, %v635
  %v637 = vshrl.u32 %v616, 16
  %v639 = vor.u32 %v637, %v635
  %v648 = vunpack.c.l.b16 %v594
  %v649 = vunpack.c.l.b16 %v595
  %v650 = vunpack.c.l.b16 %v596
  %v651 = vunpack.c.l.b16 %v597
  %v652 = vunpack.c.l.b16 %v598
  %v653 = vunpack.c.l.b16 %v599
  %v654 = vunpack.c.l.b16 %v600
  %v655 = vunpack.c.l.b16 %v601
  %v656 = vpack.c.b16 %v649, %v648
  %v657 = vpack.c.b16 %v651, %v650
  %v658 = vpack.c.b16 %v653, %v652
  %v659 = vpack.c.b16 %v655, %v654
  %v665 = vsel %vm102, %v628, 0
  %v668 = vsel %vm102, %v636, 0
  %v671 = vsel %vm102, %v639, 0
  %673 = vmatprep.subr.bf16.mxu0 0
  %674 = vmatpush1.bf16.msra.mxu0 0
  %675 = vmatprep.subr.bf16.mxu0 0
  %676 = vmatpush1.bf16.msra.mxu0 0
  %677 = vmatprep.subr.bf16.mxu0 0
  %678 = vmatpush1.bf16.msra.mxu0 0
  %679 = vmatprep.subr.bf16.mxu0 0
  %680 = vmatpush1.bf16.msra.mxu0 0
  %681 = vmatprep.subr.bf16.mxu0 0
  %682 = vmatpush1.bf16.msra.mxu0 %v659
  %683 = vmatprep.subr.bf16.mxu0 0
  %684 = vmatpush1.bf16.msra.mxu0 %v658
  %685 = vmatprep.subr.bf16.mxu0 0
  %686 = vmatpush1.bf16.msra.mxu0 %v657
  %687 = vmatprep.subr.bf16.mxu0 0
  %688 = vmatpush1.bf16.msra.mxu0 %v656
  %689 = vmatprep.subr.bf16.mxu0 0
  %690 = vmatpush2.bf16.msra.mxu0 0
  %691 = vmatprep.subr.bf16.mxu0 0
  %692 = vmatpush2.bf16.msra.mxu0 0
  %693 = vmatprep.subr.bf16.mxu0 0
  %694 = vmatpush2.bf16.msra.mxu0 0
  %695 = vmatprep.subr.bf16.mxu0 0
  %696 = vmatpush2.bf16.msra.mxu0 0
  %697 = vmatprep.subr.bf16.mxu0 0
  %698 = vmatpush2.bf16.msra.mxu0 0
  %699 = vmatprep.subr.bf16.mxu0 0
  %700 = vmatpush2.bf16.msra.mxu0 0
  %701 = vmatprep.subr.bf16.mxu0 0
  %702 = vmatpush2.bf16.msra.mxu0 0
  %703 = vmatprep.subr.bf16.mxu0 0
  %704 = vmatpush2.bf16.msra.mxu0 0
  %705 = vmatprep.mubr.bf16.mxu0 0
  %706 = vmatmul.mubr.bf16.gmra.mxu0 %v665
  %v707 = vpop.f32.mrf.mxu0
  %v708 = vadd.f32 0.0, %v707
  %v709 = vpop.f32.mrf.mxu0
  %v710 = vpop.f32.mrf.mxu0
  %v711 = vadd.f32 0.0, %v710
  %v712 = vpop.f32.mrf.mxu0
  %713 = vmatprep.mubr.bf16.mxu0 0
  %714 = vmatmul.mubr.bf16.gmra.mxu0 %v668
  %v715 = vpop.f32.mrf.mxu0
  %v716 = vadd.f32 0.0, %v715
  %v717 = vpop.f32.mrf.mxu0
  %v718 = vpop.f32.mrf.mxu0
  %v719 = vadd.f32 0.0, %v718
  %v720 = vpop.f32.mrf.mxu0
  %721 = vmatprep.mubr.bf16.mxu0 0
  %722 = vmatmul.mubr.bf16.gmra.mxu0 %v671
  %v723 = vpop.f32.mrf.mxu0
  %v724 = vadd.f32 0.0, %v723
  %v725 = vpop.f32.mrf.mxu0
  %v726 = vpop.f32.mrf.mxu0
  %v727 = vadd.f32 0.0, %v726
  %v728 = vpop.f32.mrf.mxu0
  %729 = vdwg.mxu0
  %v731 = vunpack.c.l.b16 %v584
  %v732 = vpack.c.b16 %v731, %v612
  %v741 = vunpack.c.l.b16 %v585
  %v742 = vunpack.c.l.b16 %v586
  %v743 = vunpack.c.l.b16 %v587
  %v744 = vunpack.c.l.b16 %v588
  %v745 = vunpack.c.l.b16 %v589
  %v746 = vunpack.c.l.b16 %v590
  %v747 = vunpack.c.l.b16 %v591
  %v748 = vunpack.c.l.b16 %v592
  %v749 = vpack.c.b16 %v742, %v741
  %v750 = vpack.c.b16 %v744, %v743
  %v751 = vpack.c.b16 %v746, %v745
  %v752 = vpack.c.b16 %v748, %v747
  %v757 = vsel %vm102, %v614, 0
  %v759 = vsel %vm102, %v615, 0
  %v762 = vsel %vm102, %v732, 0
  %764 = vmatprep.subr.bf16.mxu0 0
  %765 = vmatpush1.bf16.msra.mxu0 0
  %766 = vmatprep.subr.bf16.mxu0 0
  %767 = vmatpush1.bf16.msra.mxu0 0
  %768 = vmatprep.subr.bf16.mxu0 0
  %769 = vmatpush1.bf16.msra.mxu0 0
  %770 = vmatprep.subr.bf16.mxu0 0
  %771 = vmatpush1.bf16.msra.mxu0 0
  %772 = vmatprep.subr.bf16.mxu0 0
  %773 = vmatpush1.bf16.msra.mxu0 %v752
  %774 = vmatprep.subr.bf16.mxu0 0
  %775 = vmatpush1.bf16.msra.mxu0 %v751
  %776 = vmatprep.subr.bf16.mxu0 0
  %777 = vmatpush1.bf16.msra.mxu0 %v750
  %778 = vmatprep.subr.bf16.mxu0 0
  %779 = vmatpush1.bf16.msra.mxu0 %v749
  %780 = vmatprep.subr.bf16.mxu0 0
  %781 = vmatpush2.bf16.msra.mxu0 0
  %782 = vmatprep.subr.bf16.mxu0 0
  %783 = vmatpush2.bf16.msra.mxu0 0
  %784 = vmatprep.subr.bf16.mxu0 0
  %785 = vmatpush2.bf16.msra.mxu0 0
  %786 = vmatprep.subr.bf16.mxu0 0
  %787 = vmatpush2.bf16.msra.mxu0 0
  %788 = vmatprep.subr.bf16.mxu0 0
  %789 = vmatpush2.bf16.msra.mxu0 0
  %790 = vmatprep.subr.bf16.mxu0 0
  %791 = vmatpush2.bf16.msra.mxu0 0
  %792 = vmatprep.subr.bf16.mxu0 0
  %793 = vmatpush2.bf16.msra.mxu0 0
  %794 = vmatprep.subr.bf16.mxu0 0
  %795 = vmatpush2.bf16.msra.mxu0 0
  %796 = vmatprep.mubr.bf16.mxu0 0
  %797 = vmatmul.mubr.bf16.gmra.mxu0 %v757
  %v798 = vpop.f32.mrf.mxu0
  %v799 = vadd.f32 %v708, %v798
  %v800 = vpop.f32.mrf.mxu0
  %v801 = vpop.f32.mrf.mxu0
  %v802 = vadd.f32 %v711, %v801
  %v803 = vpop.f32.mrf.mxu0
  %804 = vmatprep.mubr.bf16.mxu0 0
  %805 = vmatmul.mubr.bf16.gmra.mxu0 %v759
  %v806 = vpop.f32.mrf.mxu0
  %v807 = vadd.f32 %v716, %v806
  %v808 = vpop.f32.mrf.mxu0
  %v809 = vpop.f32.mrf.mxu0
  %v810 = vadd.f32 %v719, %v809
  %v811 = vpop.f32.mrf.mxu0
  %812 = vmatprep.mubr.bf16.mxu0 0
  %813 = vmatmul.mubr.bf16.gmra.mxu0 %v762
  %v814 = vpop.f32.mrf.mxu0
  %v815 = vadd.f32 %v724, %v814
  %v816 = vpop.f32.mrf.mxu0
  %v817 = vpop.f32.mrf.mxu0
  %v818 = vadd.f32 %v727, %v817
  %v819 = vpop.f32.mrf.mxu0
  %820 = vdwg.mxu0
  %v821 = vld [vmem:[%s578] sm:$0x8]
  %v822 = vld [vmem:[%s578 + $0x4] sm:$0xf]
  %v823 = vld [vmem:[%s578 + $0x8] sm:$0xf]
  %v824 = vld [vmem:[%s578 + $0xc] sm:$0xf]
  %v825 = vld [vmem:[%s578 + $0x10] sm:$0xf]
  %v826 = vld [vmem:[%s578 + $0x14] sm:$0xf]
  %v827 = vld [vmem:[%s578 + $0x18] sm:$0x1]
  %v828 = vld [vmem:[%s1 + $0x40] sm:$0xf]
  %v829 = vld [vmem:[%s1 + $0x44] sm:$0xf]
  %v830 = vld [vmem:[%s1 + $0x48] sm:$0xf]
  %v831 = vld [vmem:[%s1 + $0x4c] sm:$0xf]
  %v832 = vld [vmem:[%s1 + $0x50] sm:$0xf]
  %v833 = vld [vmem:[%s1 + $0x54] sm:$0xf]
  %v834 = vld [vmem:[%s1 + $0x58] sm:$0xf]
  %v835 = vld [vmem:[%s1 + $0x5c] sm:$0xf]
  %v843 = vunpack.c.l.b16 %v821
  %v844 = vunpack.c.l.b16 %v822
  %v845 = vunpack.c.l.b16 %v823
  %v846 = vunpack.c.l.b16 %v824
  %v847 = vunpack.c.l.b16 %v825
  %v848 = vunpack.c.l.b16 %v826
  %v849 = vunpack.c.l.b16 %v827
  %v850 = vpack.c.b16 %v844, %v843
  %v851 = vpack.c.b16 %v846, %v845
  %v852 = vpack.c.b16 %v848, %v847
  %v853 = vpack.c.b16 %v849, %v849
  %v855 = vshrl.u32 %v850, 16
  %v857 = vrot.slane %v855, 3
  %v858 = vshll.u32 %v850, 16
  %v860 = vrot.slane %v858, 4
  %v861 = vor.u32 %v857, %v860
  %v863 = vshrl.u32 %v851, 16
  %v865 = vrot.slane %v863, 3
  %v866 = vshll.u32 %v851, 16
  %v868 = vrot.slane %v866, 4
  %v869 = vor.u32 %v865, %v868
  %v870 = vsel %vm293, %v861, %v869
  %v872 = vshrl.u32 %v852, 16
  %v874 = vrot.slane %v872, 3
  %v875 = vshll.u32 %v852, 16
  %v877 = vrot.slane %v875, 4
  %v878 = vor.u32 %v874, %v877
  %v879 = vsel %vm293, %v869, %v878
  %v881 = vshll.u32 %v853, 16
  %v883 = vrot.slane %v881, 4
  %v884 = vsel %vm293, %v878, %v883
  %v893 = vunpack.c.l.b16 %v828
  %v894 = vunpack.c.l.b16 %v829
  %v895 = vunpack.c.l.b16 %v830
  %v896 = vunpack.c.l.b16 %v831
  %v897 = vunpack.c.l.b16 %v832
  %v898 = vunpack.c.l.b16 %v833
  %v899 = vunpack.c.l.b16 %v834
  %v900 = vunpack.c.l.b16 %v835
  %v901 = vpack.c.b16 %v894, %v893
  %v902 = vpack.c.b16 %v896, %v895
  %v903 = vpack.c.b16 %v898, %v897
  %v904 = vpack.c.b16 %v900, %v899
  %v910 = vsel %vm102, %v870, 0
  %v913 = vsel %vm102, %v879, 0
  %v916 = vsel %vm102, %v884, 0
  %918 = vmatprep.subr.bf16.mxu0 0
  %919 = vmatpush1.bf16.msra.mxu0 0
  %920 = vmatprep.subr.bf16.mxu0 0
  %921 = vmatpush1.bf16.msra.mxu0 0
  %922 = vmatprep.subr.bf16.mxu0 0
  %923 = vmatpush1.bf16.msra.mxu0 0
  %924 = vmatprep.subr.bf16.mxu0 0
  %925 = vmatpush1.bf16.msra.mxu0 0
  %926 = vmatprep.subr.bf16.mxu0 0
  %927 = vmatpush1.bf16.msra.mxu0 %v904
  %928 = vmatprep.subr.bf16.mxu0 0
  %929 = vmatpush1.bf16.msra.mxu0 %v903
  %930 = vmatprep.subr.bf16.mxu0 0
  %931 = vmatpush1.bf16.msra.mxu0 %v902
  %932 = vmatprep.subr.bf16.mxu0 0
  %933 = vmatpush1.bf16.msra.mxu0 %v901
  %934 = vmatprep.subr.bf16.mxu0 0
  %935 = vmatpush2.bf16.msra.mxu0 0
  %936 = vmatprep.subr.bf16.mxu0 0
  %937 = vmatpush2.bf16.msra.mxu0 0
  %938 = vmatprep.subr.bf16.mxu0 0
  %939 = vmatpush2.bf16.msra.mxu0 0
  %940 = vmatprep.subr.bf16.mxu0 0
  %941 = vmatpush2.bf16.msra.mxu0 0
  %942 = vmatprep.subr.bf16.mxu0 0
  %943 = vmatpush2.bf16.msra.mxu0 0
  %944 = vmatprep.subr.bf16.mxu0 0
  %945 = vmatpush2.bf16.msra.mxu0 0
  %946 = vmatprep.subr.bf16.mxu0 0
  %947 = vmatpush2.bf16.msra.mxu0 0
  %948 = vmatprep.subr.bf16.mxu0 0
  %949 = vmatpush2.bf16.msra.mxu0 0
  %950 = vmatprep.mubr.bf16.mxu0 0
  %951 = vmatmul.mubr.bf16.gmra.mxu0 %v910
  %v952 = vpop.f32.mrf.mxu0
  %v953 = vadd.f32 0.0, %v952
  %v954 = vpop.f32.mrf.mxu0
  %v955 = vpop.f32.mrf.mxu0
  %v956 = vadd.f32 0.0, %v955
  %v957 = vpop.f32.mrf.mxu0
  %958 = vmatprep.mubr.bf16.mxu0 0
  %959 = vmatmul.mubr.bf16.gmra.mxu0 %v913
  %v960 = vpop.f32.mrf.mxu0
  %v961 = vadd.f32 0.0, %v960
  %v962 = vpop.f32.mrf.mxu0
  %v963 = vpop.f32.mrf.mxu0
  %v964 = vadd.f32 0.0, %v963
  %v965 = vpop.f32.mrf.mxu0
  %966 = vmatprep.mubr.bf16.mxu0 0
  %967 = vmatmul.mubr.bf16.gmra.mxu0 %v916
  %v968 = vpop.f32.mrf.mxu0
  %v969 = vadd.f32 0.0, %v968
  %v970 = vpop.f32.mrf.mxu0
  %v971 = vpop.f32.mrf.mxu0
  %v972 = vadd.f32 0.0, %v971
  %v973 = vpop.f32.mrf.mxu0
  %974 = vdwg.mxu0
  %v975 = vadd.f32 %v799, %v953
  %v976 = vadd.f32 %v802, %v956
  %v977 = vadd.f32 %v807, %v961
  %v978 = vadd.f32 %v810, %v964
  %v979 = vadd.f32 %v815, %v969
  %v980 = vadd.f32 %v818, %v972
  %v981 = vld [vmem:[%s1 + $0x60] sm:$0xf]
  %v982 = vld [vmem:[%s1 + $0x64] sm:$0xf]
  %v983 = vld [vmem:[%s1 + $0x68] sm:$0xf]
  %v984 = vld [vmem:[%s1 + $0x6c] sm:$0xf]
  %v985 = vld [vmem:[%s1 + $0x70] sm:$0xf]
  %v986 = vld [vmem:[%s1 + $0x74] sm:$0xf]
  %v987 = vld [vmem:[%s1 + $0x78] sm:$0xf]
  %v988 = vld [vmem:[%s1 + $0x7c] sm:$0xf]
  %v989 = vpack.c.b16 %v845, %v844
  %v990 = vpack.c.b16 %v847, %v846
  %v991 = vpack.c.b16 %v849, %v848
  %v1000 = vunpack.c.l.b16 %v981
  %v1001 = vunpack.c.l.b16 %v982
  %v1002 = vunpack.c.l.b16 %v983
  %v1003 = vunpack.c.l.b16 %v984
  %v1004 = vunpack.c.l.b16 %v985
  %v1005 = vunpack.c.l.b16 %v986
  %v1006 = vunpack.c.l.b16 %v987
  %v1007 = vunpack.c.l.b16 %v988
  %v1008 = vpack.c.b16 %v1001, %v1000
  %v1009 = vpack.c.b16 %v1003, %v1002
  %v1010 = vpack.c.b16 %v1005, %v1004
  %v1011 = vpack.c.b16 %v1007, %v1006
  %v1017 = vsel %vm102, %v989, 0
  %v1020 = vsel %vm102, %v990, 0
  %v1023 = vsel %vm102, %v991, 0
  %1025 = vmatprep.subr.bf16.mxu0 0
  %1026 = vmatpush1.bf16.msra.mxu0 0
  %1027 = vmatprep.subr.bf16.mxu0 0
  %1028 = vmatpush1.bf16.msra.mxu0 0
  %1029 = vmatprep.subr.bf16.mxu0 0
  %1030 = vmatpush1.bf16.msra.mxu0 0
  %1031 = vmatprep.subr.bf16.mxu0 0
  %1032 = vmatpush1.bf16.msra.mxu0 0
  %1033 = vmatprep.subr.bf16.mxu0 0
  %1034 = vmatpush1.bf16.msra.mxu0 %v1011
  %1035 = vmatprep.subr.bf16.mxu0 0
  %1036 = vmatpush1.bf16.msra.mxu0 %v1010
  %1037 = vmatprep.subr.bf16.mxu0 0
  %1038 = vmatpush1.bf16.msra.mxu0 %v1009
  %1039 = vmatprep.subr.bf16.mxu0 0
  %1040 = vmatpush1.bf16.msra.mxu0 %v1008
  %1041 = vmatprep.subr.bf16.mxu0 0
  %1042 = vmatpush2.bf16.msra.mxu0 0
  %1043 = vmatprep.subr.bf16.mxu0 0
  %1044 = vmatpush2.bf16.msra.mxu0 0
  %1045 = vmatprep.subr.bf16.mxu0 0
  %1046 = vmatpush2.bf16.msra.mxu0 0
  %1047 = vmatprep.subr.bf16.mxu0 0
  %1048 = vmatpush2.bf16.msra.mxu0 0
  %1049 = vmatprep.subr.bf16.mxu0 0
  %1050 = vmatpush2.bf16.msra.mxu0 0
  %1051 = vmatprep.subr.bf16.mxu0 0
  %1052 = vmatpush2.bf16.msra.mxu0 0
  %1053 = vmatprep.subr.bf16.mxu0 0
  %1054 = vmatpush2.bf16.msra.mxu0 0
  %1055 = vmatprep.subr.bf16.mxu0 0
  %1056 = vmatpush2.bf16.msra.mxu0 0
  %1057 = vmatprep.mubr.bf16.mxu0 0
  %1058 = vmatmul.mubr.bf16.gmra.mxu0 %v1017
  %v1059 = vpop.f32.mrf.mxu0
  %v1060 = vadd.f32 0.0, %v1059
  %v1061 = vpop.f32.mrf.mxu0
  %v1062 = vpop.f32.mrf.mxu0
  %v1063 = vadd.f32 0.0, %v1062
  %v1064 = vpop.f32.mrf.mxu0
  %1065 = vmatprep.mubr.bf16.mxu0 0
  %1066 = vmatmul.mubr.bf16.gmra.mxu0 %v1020
  %v1067 = vpop.f32.mrf.mxu0
  %v1068 = vadd.f32 0.0, %v1067
  %v1069 = vpop.f32.mrf.mxu0
  %v1070 = vpop.f32.mrf.mxu0
  %v1071 = vadd.f32 0.0, %v1070
  %v1072 = vpop.f32.mrf.mxu0
  %1073 = vmatprep.mubr.bf16.mxu0 0
  %1074 = vmatmul.mubr.bf16.gmra.mxu0 %v1023
  %v1075 = vpop.f32.mrf.mxu0
  %v1076 = vadd.f32 0.0, %v1075
  %v1077 = vpop.f32.mrf.mxu0
  %v1078 = vpop.f32.mrf.mxu0
  %v1079 = vadd.f32 0.0, %v1078
  %v1080 = vpop.f32.mrf.mxu0
  %1081 = vdwg.mxu0
  %v1082 = vadd.f32 %v975, %v1060
  %v1083 = vadd.f32 %v976, %v1063
  %v1084 = vadd.f32 %v977, %v1068
  %v1085 = vadd.f32 %v978, %v1071
  %v1086 = vadd.f32 %v979, %v1076
  %v1087 = vadd.f32 %v980, %v1079
  %v1088 = vadd.f32 %v1082, %v532
  %v1089 = vadd.f32 %v1083, %v532
  %v1090 = vadd.f32 %v1084, %v532
  %v1091 = vadd.f32 %v1085, %v532
  %v1092 = vadd.f32 %v1086, %v532
  %v1093 = vadd.f32 %v1087, %v532
  %v1094 = vmax.f32 %v1088, 0.0
  %v1095 = vmax.f32 %v1089, 0.0
  %v1096 = vmax.f32 %v1090, 0.0
  %v1097 = vmax.f32 %v1091, 0.0
  %v1098 = vmax.f32 %v1092, 0.0
  %v1099 = vmax.f32 %v1093, 0.0
  %v1100 = vpack.c.bf16 %v1095, %v1094
  %v1101 = vpack.c.bf16 %v1097, %v1096
  %v1102 = vpack.c.bf16 %v1099, %v1098
  %v1106 = vunpack.c.l.b16 %v1100
  %v1107 = vunpack.c.h.b16 %v1100
  %v1108 = vunpack.c.l.b16 %v1101
  %v1109 = vunpack.c.h.b16 %v1101
  %v1110 = vunpack.c.l.b16 %v1102
  %v1111 = vunpack.c.h.b16 %v1102
  %v1112 = vpack.c.b16 %v1106, %v1106
  %v1113 = vpack.c.b16 %v1107, %v1107
  %v1114 = vpack.c.b16 %v1108, %v1108
  %v1115 = vpack.c.b16 %v1109, %v1109
  %v1116 = vpack.c.b16 %v1110, %v1110
  %v1117 = vpack.c.b16 %v1111, %v1111
  %s1124 = scalar_lea.vmem %s3, 24
  %1125 = vst.msk [vmem:[%s1124] sm:$0xf] %vm570, %v1112
  %1126 = vst.msk [vmem:[%s1124 + $0x4] sm:$0xf] %vm570, %v1113
  %1127 = vst.msk [vmem:[%s1124 + $0x8] sm:$0xf] %vm570, %v1114
  %1128 = vst.msk [vmem:[%s1124 + $0xc] sm:$0xf] %vm570, %v1115
  %1129 = vst.msk [vmem:[%s1124 + $0x10] sm:$0xf] %vm570, %v1116
  %1130 = vst.msk [vmem:[%s1124 + $0x14] sm:$0x1] %vm576, %v1117
  // Predicated region
  $region14: #{observation_encoder_forward.6} parent=0 // pred_check
    _
  $region15: #{observation_encoder_forward.6} parent=0 // pred_check_branch
    %1132 = sbr.rel (0) target = $region17
  $region16: #{observation_encoder_forward.6} parent=0 // pred_region
    _
  $region17: #{observation_encoder_forward.6} parent=0 // pred_fallthru
    _
  // Predicated region
  $region18: #{observation_encoder_forward.6} parent=0 // pred_check
    _
  $region19: #{observation_encoder_forward.6} parent=0 // pred_check_branch
    %1134 = sbr.rel (0) target = $region21
  $region20: #{observation_encoder_forward.6} parent=0 // pred_region
    _
  $region21: #{observation_encoder_forward.6} parent=0 // pred_fallthru
    _

// kernel: observation_encoder_forward.7
$region0: #{observation_encoder_forward.7}
  #allocation0 [shape = 'u32[]', space=smem, size = 0x4, offset = 0x4, fixed_abs, tag = 'smem constant byte address 0x4 - core index']
  #allocation1 [shape = 'u32[144,128]{1,0:T(1,128)}', space=vmem, size = 0x12000, scoped, tag = 'internal scratch']
  %s0 = inlined_call_operand.vmem [shape: bf16[2,17,128], index: 0, kind: input, shape index: {}]
  %s1 = inlined_call_operand.vmem [shape: bf16[512,64], index: 1, kind: input, shape index: {}]
  %s2 = inlined_call_operand.vmem [shape: f32[1,64], index: 2, kind: input, shape index: {}]
  %s3 = inlined_call_operand.vmem [shape: f32[2,6,64], index: 3, kind: output, shape index: {}]
  %s4 = sld [smem:[#allocation0]]
  $region22: #{observation_encoder_forward.7} parent=0
    _
  %s6 = ssub.s32 1, %s4
  %s7 = scalar_select 0, %s6, %s4
  // Predicated region
  $region2: #{observation_encoder_forward.7} parent=0 // pred_check
    _
  $region3: #{observation_encoder_forward.7} parent=0 // pred_check_branch
    %9 = sbr.rel (0) target = $region5
  $region4: #{observation_encoder_forward.7} parent=0 // pred_region
    _
  $region5: #{observation_encoder_forward.7} parent=0 // pred_fallthru
    _
  // Predicated region
  $region6: #{observation_encoder_forward.7} parent=0 // pred_check
    _
  $region7: #{observation_encoder_forward.7} parent=0 // pred_check_branch
    %11 = sbr.rel (0) target = $region9
  $region8: #{observation_encoder_forward.7} parent=0 // pred_region
    _
  $region9: #{observation_encoder_forward.7} parent=0 // pred_fallthru
    _
  // Predicated region
  $region10: #{observation_encoder_forward.7} parent=0 // pred_check
    _
  $region11: #{observation_encoder_forward.7} parent=0 // pred_check_branch
    %13 = sbr.rel (0) target = $region13
  $region12: #{observation_encoder_forward.7} parent=0 // pred_region
    _
  $region13: #{observation_encoder_forward.7} parent=0 // pred_fallthru
    _
  %v15 = vld [vmem:[%s2] sm:$0x1]
  %v16 = vld [vmem:[%s0] sm:$0x7]
  %v17 = vld [vmem:[%s1] sm:$0xf]
  %v18 = vld [vmem:[%s1 + $0x4] sm:$0xf]
  %v19 = vld [vmem:[%s1 + $0x8] sm:$0xf]
  %v20 = vld [vmem:[%s1 + $0xc] sm:$0xf]
  %v21 = vld [vmem:[%s1 + $0x10] sm:$0xf]
  %v22 = vld [vmem:[%s1 + $0x14] sm:$0xf]
  %v23 = vld [vmem:[%s1 + $0x18] sm:$0xf]
  %v24 = vld [vmem:[%s1 + $0x1c] sm:$0xf]
  %v25 = vld [vmem:[%s1 + $0x20] sm:$0xf]
  %v26 = vld [vmem:[%s1 + $0x24] sm:$0xf]
  %v27 = vld [vmem:[%s1 + $0x28] sm:$0xf]
  %v28 = vld [vmem:[%s1 + $0x2c] sm:$0xf]
  %v29 = vld [vmem:[%s1 + $0x30] sm:$0xf]
  %v30 = vld [vmem:[%s1 + $0x34] sm:$0xf]
  %v31 = vld [vmem:[%s1 + $0x38] sm:$0xf]
  %v32 = vld [vmem:[%s1 + $0x3c] sm:$0xf]
  %v33 = vld [vmem:[%s0] sm:$0xf]
  %v34 = vld [vmem:[%s1 + $0x40] sm:$0xf]
  %v35 = vld [vmem:[%s1 + $0x44] sm:$0xf]
  %v36 = vld [vmem:[%s1 + $0x48] sm:$0xf]
  %v37 = vld [vmem:[%s1 + $0x4c] sm:$0xf]
  %v38 = vld [vmem:[%s1 + $0x50] sm:$0xf]
  %v39 = vld [vmem:[%s1 + $0x54] sm:$0xf]
  %v40 = vld [vmem:[%s1 + $0x58] sm:$0xf]
  %v41 = vld [vmem:[%s1 + $0x5c] sm:$0xf]
  %v42 = vld [vmem:[%s1 + $0x60] sm:$0xf]
  %v43 = vld [vmem:[%s1 + $0x64] sm:$0xf]
  %v44 = vld [vmem:[%s1 + $0x68] sm:$0xf]
  %v45 = vld [vmem:[%s1 + $0x6c] sm:$0xf]
  %v46 = vld [vmem:[%s1 + $0x70] sm:$0xf]
  %v47 = vld [vmem:[%s1 + $0x74] sm:$0xf]
  %v48 = vld [vmem:[%s1 + $0x78] sm:$0xf]
  %v49 = vld [vmem:[%s1 + $0x7c] sm:$0xf]
  %v51 = vunpack.c.l.b16 %v33
  %v52 = vpack.c.b16 %v51, %v51
  %v54 = vshrl.u32 %v52, 16
  %v56 = vshll.u32 %v52, 16
  %v58 = vrot.slane %v56, 1
  %v59 = vor.u32 %v54, %v58
  %v77 = vunpack.c.l.b16 %v34
  %v78 = vunpack.c.l.b16 %v35
  %v79 = vunpack.c.l.b16 %v36
  %v80 = vunpack.c.l.b16 %v37
  %v81 = vunpack.c.l.b16 %v38
  %v82 = vunpack.c.l.b16 %v39
  %v83 = vunpack.c.l.b16 %v40
  %v84 = vunpack.c.l.b16 %v41
  %v85 = vunpack.c.l.b16 %v42
  %v86 = vunpack.c.l.b16 %v43
  %v87 = vunpack.c.l.b16 %v44
  %v88 = vunpack.c.l.b16 %v45
  %v89 = vunpack.c.l.b16 %v46
  %v90 = vunpack.c.l.b16 %v47
  %v91 = vunpack.c.l.b16 %v48
  %v92 = vunpack.c.l.b16 %v49
  %v93 = vpack.c.b16 %v78, %v77
  %v94 = vpack.c.b16 %v80, %v79
  %v95 = vpack.c.b16 %v82, %v81
  %v96 = vpack.c.b16 %v84, %v83
  %v97 = vpack.c.b16 %v86, %v85
  %v98 = vpack.c.b16 %v88, %v87
  %v99 = vpack.c.b16 %v90, %v89
  %v100 = vpack.c.b16 %v92, %v91
  %109 = vmatprep.subr.bf16.mxu0 0
  %110 = vmatpush1.bf16.msra.mxu0 %v100
  %111 = vmatprep.subr.bf16.mxu0 0
  %112 = vmatpush1.bf16.msra.mxu0 %v99
  %113 = vmatprep.subr.bf16.mxu0 0
  %114 = vmatpush1.bf16.msra.mxu0 %v98
  %115 = vmatprep.subr.bf16.mxu0 0
  %116 = vmatpush1.bf16.msra.mxu0 %v97
  %117 = vmatprep.subr.bf16.mxu0 0
  %118 = vmatpush1.bf16.msra.mxu0 %v96
  %119 = vmatprep.subr.bf16.mxu0 0
  %120 = vmatpush1.bf16.msra.mxu0 %v95
  %121 = vmatprep.subr.bf16.mxu0 0
  %122 = vmatpush1.bf16.msra.mxu0 %v94
  %123 = vmatprep.subr.bf16.mxu0 0
  %124 = vmatpush1.bf16.msra.mxu0 %v93
  %125 = vmatprep.subr.bf16.mxu0 0
  %126 = vmatpush2.bf16.msra.mxu0 0
  %127 = vmatprep.subr.bf16.mxu0 0
  %128 = vmatpush2.bf16.msra.mxu0 0
  %129 = vmatprep.subr.bf16.mxu0 0
  %130 = vmatpush2.bf16.msra.mxu0 0
  %131 = vmatprep.subr.bf16.mxu0 0
  %132 = vmatpush2.bf16.msra.mxu0 0
  %133 = vmatprep.subr.bf16.mxu0 0
  %134 = vmatpush2.bf16.msra.mxu0 0
  %135 = vmatprep.subr.bf16.mxu0 0
  %136 = vmatpush2.bf16.msra.mxu0 0
  %137 = vmatprep.subr.bf16.mxu0 0
  %138 = vmatpush2.bf16.msra.mxu0 0
  %139 = vmatprep.subr.bf16.mxu0 0
  %140 = vmatpush2.bf16.msra.mxu0 0
  %141 = vmatprep.mubr.bf16.mxu0 0
  %142 = vmatmul.mubr.bf16.gmra.mxu0 %v59
  %v143 = vpop.f32.mrf.mxu0
  %v144 = vadd.f32 0.0, %v143
  %v145 = vpop.f32.mrf.mxu0
  %v146 = vpop.f32.mrf.mxu0
  %v147 = vpop.f32.mrf.mxu0
  %148 = vdwg.mxu0
  %v165 = vunpack.c.l.b16 %v17
  %v166 = vunpack.c.l.b16 %v18
  %v167 = vunpack.c.l.b16 %v19
  %v168 = vunpack.c.l.b16 %v20
  %v169 = vunpack.c.l.b16 %v21
  %v170 = vunpack.c.l.b16 %v22
  %v171 = vunpack.c.l.b16 %v23
  %v172 = vunpack.c.l.b16 %v24
  %v173 = vunpack.c.l.b16 %v25
  %v174 = vunpack.c.l.b16 %v26
  %v175 = vunpack.c.l.b16 %v27
  %v176 = vunpack.c.l.b16 %v28
  %v177 = vunpack.c.l.b16 %v29
  %v178 = vunpack.c.l.b16 %v30
  %v179 = vunpack.c.l.b16 %v31
  %v180 = vunpack.c.l.b16 %v32
  %v181 = vpack.c.b16 %v166, %v165
  %v182 = vpack.c.b16 %v168, %v167
  %v183 = vpack.c.b16 %v170, %v169
  %v184 = vpack.c.b16 %v172, %v171
  %v185 = vpack.c.b16 %v174, %v173
  %v186 = vpack.c.b16 %v176, %v175
  %v187 = vpack.c.b16 %v178, %v177
  %v188 = vpack.c.b16 %v180, %v179
  %197 = vmatprep.subr.bf16.mxu0 0
  %198 = vmatpush1.bf16.msra.mxu0 %v188
  %199 = vmatprep.subr.bf16.mxu0 0
  %200 = vmatpush1.bf16.msra.mxu0 %v187
  %201 = vmatprep.subr.bf16.mxu0 0
  %202 = vmatpush1.bf16.msra.mxu0 %v186
  %203 = vmatprep.subr.bf16.mxu0 0
  %204 = vmatpush1.bf16.msra.mxu0 %v185
  %205 = vmatprep.subr.bf16.mxu0 0
  %206 = vmatpush1.bf16.msra.mxu0 %v184
  %207 = vmatprep.subr.bf16.mxu0 0
  %208 = vmatpush1.bf16.msra.mxu0 %v183
  %209 = vmatprep.subr.bf16.mxu0 0
  %210 = vmatpush1.bf16.msra.mxu0 %v182
  %211 = vmatprep.subr.bf16.mxu0 0
  %212 = vmatpush1.bf16.msra.mxu0 %v181
  %213 = vmatprep.subr.bf16.mxu0 0
  %214 = vmatpush2.bf16.msra.mxu0 0
  %215 = vmatprep.subr.bf16.mxu0 0
  %216 = vmatpush2.bf16.msra.mxu0 0
  %217 = vmatprep.subr.bf16.mxu0 0
  %218 = vmatpush2.bf16.msra.mxu0 0
  %219 = vmatprep.subr.bf16.mxu0 0
  %220 = vmatpush2.bf16.msra.mxu0 0
  %221 = vmatprep.subr.bf16.mxu0 0
  %222 = vmatpush2.bf16.msra.mxu0 0
  %223 = vmatprep.subr.bf16.mxu0 0
  %224 = vmatpush2.bf16.msra.mxu0 0
  %225 = vmatprep.subr.bf16.mxu0 0
  %226 = vmatpush2.bf16.msra.mxu0 0
  %227 = vmatprep.subr.bf16.mxu0 0
  %228 = vmatpush2.bf16.msra.mxu0 0
  %229 = vmatprep.mubr.bf16.mxu0 0
  %230 = vmatmul.mubr.bf16.gmra.mxu0 %v16
  %v231 = vpop.f32.mrf.mxu0
  %v232 = vadd.f32 %v144, %v231
  %v233 = vpop.f32.mrf.mxu0
  %v234 = vpop.f32.mrf.mxu0
  %v235 = vpop.f32.mrf.mxu0
  %236 = vdwg.mxu0
  %v237 = vld [vmem:[%s0] sm:$0xe]
  %v238 = vld [vmem:[%s0 + $0x4] sm:$0x1]
  %v239 = vld [vmem:[%s1 + $0x80] sm:$0xf]
  %v240 = vld [vmem:[%s1 + $0x84] sm:$0xf]
  %v241 = vld [vmem:[%s1 + $0x88] sm:$0xf]
  %v242 = vld [vmem:[%s1 + $0x8c] sm:$0xf]
  %v243 = vld [vmem:[%s1 + $0x90] sm:$0xf]
  %v244 = vld [vmem:[%s1 + $0x94] sm:$0xf]
  %v245 = vld [vmem:[%s1 + $0x98] sm:$0xf]
  %v246 = vld [vmem:[%s1 + $0x9c] sm:$0xf]
  %v247 = vld [vmem:[%s1 + $0xa0] sm:$0xf]
  %v248 = vld [vmem:[%s1 + $0xa4] sm:$0xf]
  %v249 = vld [vmem:[%s1 + $0xa8] sm:$0xf]
  %v250 = vld [vmem:[%s1 + $0xac] sm:$0xf]
  %v251 = vld [vmem:[%s1 + $0xb0] sm:$0xf]
  %v252 = vld [vmem:[%s1 + $0xb4] sm:$0xf]
  %v253 = vld [vmem:[%s1 + $0xb8] sm:$0xf]
  %v254 = vld [vmem:[%s1 + $0xbc] sm:$0xf]
  %v257 = vunpack.c.l.b16 %v237
  %v258 = vunpack.c.l.b16 %v238
  %v259 = vpack.c.b16 %v258, %v257
  %v261 = vshrl.u32 %v259, 16
  %v263 = vrot.slane %v261, 1
  %v264 = vshll.u32 %v259, 16
  %v266 = vrot.slane %v264, 2
  %v267 = vor.u32 %v263, %v266
  %v285 = vunpack.c.l.b16 %v239
  %v286 = vunpack.c.l.b16 %v240
  %v287 = vunpack.c.l.b16 %v241
  %v288 = vunpack.c.l.b16 %v242
  %v289 = vunpack.c.l.b16 %v243
  %v290 = vunpack.c.l.b16 %v244
  %v291 = vunpack.c.l.b16 %v245
  %v292 = vunpack.c.l.b16 %v246
  %v293 = vunpack.c.l.b16 %v247
  %v294 = vunpack.c.l.b16 %v248
  %v295 = vunpack.c.l.b16 %v249
  %v296 = vunpack.c.l.b16 %v250
  %v297 = vunpack.c.l.b16 %v251
  %v298 = vunpack.c.l.b16 %v252
  %v299 = vunpack.c.l.b16 %v253
  %v300 = vunpack.c.l.b16 %v254
  %v301 = vpack.c.b16 %v286, %v285
  %v302 = vpack.c.b16 %v288, %v287
  %v303 = vpack.c.b16 %v290, %v289
  %v304 = vpack.c.b16 %v292, %v291
  %v305 = vpack.c.b16 %v294, %v293
  %v306 = vpack.c.b16 %v296, %v295
  %v307 = vpack.c.b16 %v298, %v297
  %v308 = vpack.c.b16 %v300, %v299
  %317 = vmatprep.subr.bf16.mxu0 0
  %318 = vmatpush1.bf16.msra.mxu0 %v308
  %319 = vmatprep.subr.bf16.mxu0 0
  %320 = vmatpush1.bf16.msra.mxu0 %v307
  %321 = vmatprep.subr.bf16.mxu0 0
  %322 = vmatpush1.bf16.msra.mxu0 %v306
  %323 = vmatprep.subr.bf16.mxu0 0
  %324 = vmatpush1.bf16.msra.mxu0 %v305
  %325 = vmatprep.subr.bf16.mxu0 0
  %326 = vmatpush1.bf16.msra.mxu0 %v304
  %327 = vmatprep.subr.bf16.mxu0 0
  %328 = vmatpush1.bf16.msra.mxu0 %v303
  %329 = vmatprep.subr.bf16.mxu0 0
  %330 = vmatpush1.bf16.msra.mxu0 %v302
  %331 = vmatprep.subr.bf16.mxu0 0
  %332 = vmatpush1.bf16.msra.mxu0 %v301
  %333 = vmatprep.subr.bf16.mxu0 0
  %334 = vmatpush2.bf16.msra.mxu0 0
  %335 = vmatprep.subr.bf16.mxu0 0
  %336 = vmatpush2.bf16.msra.mxu0 0
  %337 = vmatprep.subr.bf16.mxu0 0
  %338 = vmatpush2.bf16.msra.mxu0 0
  %339 = vmatprep.subr.bf16.mxu0 0
  %340 = vmatpush2.bf16.msra.mxu0 0
  %341 = vmatprep.subr.bf16.mxu0 0
  %342 = vmatpush2.bf16.msra.mxu0 0
  %343 = vmatprep.subr.bf16.mxu0 0
  %344 = vmatpush2.bf16.msra.mxu0 0
  %345 = vmatprep.subr.bf16.mxu0 0
  %346 = vmatpush2.bf16.msra.mxu0 0
  %347 = vmatprep.subr.bf16.mxu0 0
  %348 = vmatpush2.bf16.msra.mxu0 0
  %349 = vmatprep.mubr.bf16.mxu0 0
  %350 = vmatmul.mubr.bf16.gmra.mxu0 %v267
  %v351 = vpop.f32.mrf.mxu0
  %v352 = vadd.f32 0.0, %v351
  %v353 = vpop.f32.mrf.mxu0
  %v354 = vpop.f32.mrf.mxu0
  %v355 = vpop.f32.mrf.mxu0
  %356 = vdwg.mxu0
  %v357 = vadd.f32 %v232, %v352
  %v358 = vld [vmem:[%s0] sm:$0xc]
  %v359 = vld [vmem:[%s1 + $0xc0] sm:$0xf]
  %v360 = vld [vmem:[%s1 + $0xc4] sm:$0xf]
  %v361 = vld [vmem:[%s1 + $0xc8] sm:$0xf]
  %v362 = vld [vmem:[%s1 + $0xcc] sm:$0xf]
  %v363 = vld [vmem:[%s1 + $0xd0] sm:$0xf]
  %v364 = vld [vmem:[%s1 + $0xd4] sm:$0xf]
  %v365 = vld [vmem:[%s1 + $0xd8] sm:$0xf]
  %v366 = vld [vmem:[%s1 + $0xdc] sm:$0xf]
  %v367 = vld [vmem:[%s1 + $0xe0] sm:$0xf]
  %v368 = vld [vmem:[%s1 + $0xe4] sm:$0xf]
  %v369 = vld [vmem:[%s1 + $0xe8] sm:$0xf]
  %v370 = vld [vmem:[%s1 + $0xec] sm:$0xf]
  %v371 = vld [vmem:[%s1 + $0xf0] sm:$0xf]
  %v372 = vld [vmem:[%s1 + $0xf4] sm:$0xf]
  %v373 = vld [vmem:[%s1 + $0xf8] sm:$0xf]
  %v374 = vld [vmem:[%s1 + $0xfc] sm:$0xf]
  %v376 = vunpack.c.l.b16 %v358
  %v377 = vpack.c.b16 %v258, %v376
  %v378 = vrot.slane %v377, 2
  %v396 = vunpack.c.l.b16 %v359
  %v397 = vunpack.c.l.b16 %v360
  %v398 = vunpack.c.l.b16 %v361
  %v399 = vunpack.c.l.b16 %v362
  %v400 = vunpack.c.l.b16 %v363
  %v401 = vunpack.c.l.b16 %v364
  %v402 = vunpack.c.l.b16 %v365
  %v403 = vunpack.c.l.b16 %v366
  %v404 = vunpack.c.l.b16 %v367
  %v405 = vunpack.c.l.b16 %v368
  %v406 = vunpack.c.l.b16 %v369
  %v407 = vunpack.c.l.b16 %v370
  %v408 = vunpack.c.l.b16 %v371
  %v409 = vunpack.c.l.b16 %v372
  %v410 = vunpack.c.l.b16 %v373
  %v411 = vunpack.c.l.b16 %v374
  %v412 = vpack.c.b16 %v397, %v396
  %v413 = vpack.c.b16 %v399, %v398
  %v414 = vpack.c.b16 %v401, %v400
  %v415 = vpack.c.b16 %v403, %v402
  %v416 = vpack.c.b16 %v405, %v404
  %v417 = vpack.c.b16 %v407, %v406
  %v418 = vpack.c.b16 %v409, %v408
  %v419 = vpack.c.b16 %v411, %v410
  %428 = vmatprep.subr.bf16.mxu0 0
  %429 = vmatpush1.bf16.msra.mxu0 %v419
  %430 = vmatprep.subr.bf16.mxu0 0
  %431 = vmatpush1.bf16.msra.mxu0 %v418
  %432 = vmatprep.subr.bf16.mxu0 0
  %433 = vmatpush1.bf16.msra.mxu0 %v417
  %434 = vmatprep.subr.bf16.mxu0 0
  %435 = vmatpush1.bf16.msra.mxu0 %v416
  %436 = vmatprep.subr.bf16.mxu0 0
  %437 = vmatpush1.bf16.msra.mxu0 %v415
  %438 = vmatprep.subr.bf16.mxu0 0
  %439 = vmatpush1.bf16.msra.mxu0 %v414
  %440 = vmatprep.subr.bf16.mxu0 0
  %441 = vmatpush1.bf16.msra.mxu0 %v413
  %442 = vmatprep.subr.bf16.mxu0 0
  %443 = vmatpush1.bf16.msra.mxu0 %v412
  %444 = vmatprep.subr.bf16.mxu0 0
  %445 = vmatpush2.bf16.msra.mxu0 0
  %446 = vmatprep.subr.bf16.mxu0 0
  %447 = vmatpush2.bf16.msra.mxu0 0
  %448 = vmatprep.subr.bf16.mxu0 0
  %449 = vmatpush2.bf16.msra.mxu0 0
  %450 = vmatprep.subr.bf16.mxu0 0
  %451 = vmatpush2.bf16.msra.mxu0 0
  %452 = vmatprep.subr.bf16.mxu0 0
  %453 = vmatpush2.bf16.msra.mxu0 0
  %454 = vmatprep.subr.bf16.mxu0 0
  %455 = vmatpush2.bf16.msra.mxu0 0
  %456 = vmatprep.subr.bf16.mxu0 0
  %457 = vmatpush2.bf16.msra.mxu0 0
  %458 = vmatprep.subr.bf16.mxu0 0
  %459 = vmatpush2.bf16.msra.mxu0 0
  %460 = vmatprep.mubr.bf16.mxu0 0
  %461 = vmatmul.mubr.bf16.gmra.mxu0 %v378
  %v462 = vpop.f32.mrf.mxu0
  %v463 = vadd.f32 0.0, %v462
  %v464 = vpop.f32.mrf.mxu0
  %v465 = vpop.f32.mrf.mxu0
  %v466 = vpop.f32.mrf.mxu0
  %467 = vdwg.mxu0
  %v468 = vadd.f32 %v357, %v463
  %v470 = vlaneseq
  %v471 = vshrl.u32 %v470, 7
  %v472 = vsub.s32 0, %v471
  %v473 = vrot.slane %v15, %v472
  %v475 = vadd.f32 %v468, %v473
  %v476 = vmax.f32 %v475, 0.0
  %vm477 = vcmask 521216
  %478 = vst.msk [vmem:[%s3] sm:$0x3f] %vm477, %v476
  %s479 = scalar_lea.vmem %s0, 12
  %v480 = vld [vmem:[%s479] sm:$0x7]
  %v481 = vld [vmem:[%s1] sm:$0xf]
  %v482 = vld [vmem:[%s1 + $0x4] sm:$0xf]
  %v483 = vld [vmem:[%s1 + $0x8] sm:$0xf]
  %v484 = vld [vmem:[%s1 + $0xc] sm:$0xf]
  %v485 = vld [vmem:[%s1 + $0x10] sm:$0xf]
  %v486 = vld [vmem:[%s1 + $0x14] sm:$0xf]
  %v487 = vld [vmem:[%s1 + $0x18] sm:$0xf]
  %v488 = vld [vmem:[%s1 + $0x1c] sm:$0xf]
  %v489 = vld [vmem:[%s1 + $0x20] sm:$0xf]
  %v490 = vld [vmem:[%s1 + $0x24] sm:$0xf]
  %v491 = vld [vmem:[%s1 + $0x28] sm:$0xf]
  %v492 = vld [vmem:[%s1 + $0x2c] sm:$0xf]
  %v493 = vld [vmem:[%s1 + $0x30] sm:$0xf]
  %v494 = vld [vmem:[%s1 + $0x34] sm:$0xf]
  %v495 = vld [vmem:[%s1 + $0x38] sm:$0xf]
  %v496 = vld [vmem:[%s1 + $0x3c] sm:$0xf]
  %v497 = vld [vmem:[%s479] sm:$0xf]
  %v498 = vld [vmem:[%s1 + $0x40] sm:$0xf]
  %v499 = vld [vmem:[%s1 + $0x44] sm:$0xf]
  %v500 = vld [vmem:[%s1 + $0x48] sm:$0xf]
  %v501 = vld [vmem:[%s1 + $0x4c] sm:$0xf]
  %v502 = vld [vmem:[%s1 + $0x50] sm:$0xf]
  %v503 = vld [vmem:[%s1 + $0x54] sm:$0xf]
  %v504 = vld [vmem:[%s1 + $0x58] sm:$0xf]
  %v505 = vld [vmem:[%s1 + $0x5c] sm:$0xf]
  %v506 = vld [vmem:[%s1 + $0x60] sm:$0xf]
  %v507 = vld [vmem:[%s1 + $0x64] sm:$0xf]
  %v508 = vld [vmem:[%s1 + $0x68] sm:$0xf]
  %v509 = vld [vmem:[%s1 + $0x6c] sm:$0xf]
  %v510 = vld [vmem:[%s1 + $0x70] sm:$0xf]
  %v511 = vld [vmem:[%s1 + $0x74] sm:$0xf]
  %v512 = vld [vmem:[%s1 + $0x78] sm:$0xf]
  %v513 = vld [vmem:[%s1 + $0x7c] sm:$0xf]
  %v515 = vunpack.c.l.b16 %v497
  %v516 = vpack.c.b16 %v515, %v515
  %v518 = vshrl.u32 %v516, 16
  %v520 = vshll.u32 %v516, 16
  %v522 = vrot.slane %v520, 1
  %v523 = vor.u32 %v518, %v522
  %v541 = vunpack.c.l.b16 %v498
  %v542 = vunpack.c.l.b16 %v499
  %v543 = vunpack.c.l.b16 %v500
  %v544 = vunpack.c.l.b16 %v501
  %v545 = vunpack.c.l.b16 %v502
  %v546 = vunpack.c.l.b16 %v503
  %v547 = vunpack.c.l.b16 %v504
  %v548 = vunpack.c.l.b16 %v505
  %v549 = vunpack.c.l.b16 %v506
  %v550 = vunpack.c.l.b16 %v507
  %v551 = vunpack.c.l.b16 %v508
  %v552 = vunpack.c.l.b16 %v509
  %v553 = vunpack.c.l.b16 %v510
  %v554 = vunpack.c.l.b16 %v511
  %v555 = vunpack.c.l.b16 %v512
  %v556 = vunpack.c.l.b16 %v513
  %v557 = vpack.c.b16 %v542, %v541
  %v558 = vpack.c.b16 %v544, %v543
  %v559 = vpack.c.b16 %v546, %v545
  %v560 = vpack.c.b16 %v548, %v547
  %v561 = vpack.c.b16 %v550, %v549
  %v562 = vpack.c.b16 %v552, %v551
  %v563 = vpack.c.b16 %v554, %v553
  %v564 = vpack.c.b16 %v556, %v555
  %573 = vmatprep.subr.bf16.mxu0 0
  %574 = vmatpush1.bf16.msra.mxu0 %v564
  %575 = vmatprep.subr.bf16.mxu0 0
  %576 = vmatpush1.bf16.msra.mxu0 %v563
  %577 = vmatprep.subr.bf16.mxu0 0
  %578 = vmatpush1.bf16.msra.mxu0 %v562
  %579 = vmatprep.subr.bf16.mxu0 0
  %580 = vmatpush1.bf16.msra.mxu0 %v561
  %581 = vmatprep.subr.bf16.mxu0 0
  %582 = vmatpush1.bf16.msra.mxu0 %v560
  %583 = vmatprep.subr.bf16.mxu0 0
  %584 = vmatpush1.bf16.msra.mxu0 %v559
  %585 = vmatprep.subr.bf16.mxu0 0
  %586 = vmatpush1.bf16.msra.mxu0 %v558
  %587 = vmatprep.subr.bf16.mxu0 0
  %588 = vmatpush1.bf16.msra.mxu0 %v557
  %589 = vmatprep.subr.bf16.mxu0 0
  %590 = vmatpush2.bf16.msra.mxu0 0
  %591 = vmatprep.subr.bf16.mxu0 0
  %592 = vmatpush2.bf16.msra.mxu0 0
  %593 = vmatprep.subr.bf16.mxu0 0
  %594 = vmatpush2.bf16.msra.mxu0 0
  %595 = vmatprep.subr.bf16.mxu0 0
  %596 = vmatpush2.bf16.msra.mxu0 0
  %597 = vmatprep.subr.bf16.mxu0 0
  %598 = vmatpush2.bf16.msra.mxu0 0
  %599 = vmatprep.subr.bf16.mxu0 0
  %600 = vmatpush2.bf16.msra.mxu0 0
  %601 = vmatprep.subr.bf16.mxu0 0
  %602 = vmatpush2.bf16.msra.mxu0 0
  %603 = vmatprep.subr.bf16.mxu0 0
  %604 = vmatpush2.bf16.msra.mxu0 0
  %605 = vmatprep.mubr.bf16.mxu0 0
  %606 = vmatmul.mubr.bf16.gmra.mxu0 %v523
  %v607 = vpop.f32.mrf.mxu0
  %v608 = vadd.f32 0.0, %v607
  %v609 = vpop.f32.mrf.mxu0
  %v610 = vpop.f32.mrf.mxu0
  %v611 = vpop.f32.mrf.mxu0
  %612 = vdwg.mxu0
  %v629 = vunpack.c.l.b16 %v481
  %v630 = vunpack.c.l.b16 %v482
  %v631 = vunpack.c.l.b16 %v483
  %v632 = vunpack.c.l.b16 %v484
  %v633 = vunpack.c.l.b16 %v485
  %v634 = vunpack.c.l.b16 %v486
  %v635 = vunpack.c.l.b16 %v487
  %v636 = vunpack.c.l.b16 %v488
  %v637 = vunpack.c.l.b16 %v489
  %v638 = vunpack.c.l.b16 %v490
  %v639 = vunpack.c.l.b16 %v491
  %v640 = vunpack.c.l.b16 %v492
  %v641 = vunpack.c.l.b16 %v493
  %v642 = vunpack.c.l.b16 %v494
  %v643 = vunpack.c.l.b16 %v495
  %v644 = vunpack.c.l.b16 %v496
  %v645 = vpack.c.b16 %v630, %v629
  %v646 = vpack.c.b16 %v632, %v631
  %v647 = vpack.c.b16 %v634, %v633
  %v648 = vpack.c.b16 %v636, %v635
  %v649 = vpack.c.b16 %v638, %v637
  %v650 = vpack.c.b16 %v640, %v639
  %v651 = vpack.c.b16 %v642, %v641
  %v652 = vpack.c.b16 %v644, %v643
  %661 = vmatprep.subr.bf16.mxu0 0
  %662 = vmatpush1.bf16.msra.mxu0 %v652
  %663 = vmatprep.subr.bf16.mxu0 0
  %664 = vmatpush1.bf16.msra.mxu0 %v651
  %665 = vmatprep.subr.bf16.mxu0 0
  %666 = vmatpush1.bf16.msra.mxu0 %v650
  %667 = vmatprep.subr.bf16.mxu0 0
  %668 = vmatpush1.bf16.msra.mxu0 %v649
  %669 = vmatprep.subr.bf16.mxu0 0
  %670 = vmatpush1.bf16.msra.mxu0 %v648
  %671 = vmatprep.subr.bf16.mxu0 0
  %672 = vmatpush1.bf16.msra.mxu0 %v647
  %673 = vmatprep.subr.bf16.mxu0 0
  %674 = vmatpush1.bf16.msra.mxu0 %v646
  %675 = vmatprep.subr.bf16.mxu0 0
  %676 = vmatpush1.bf16.msra.mxu0 %v645
  %677 = vmatprep.subr.bf16.mxu0 0
  %678 = vmatpush2.bf16.msra.mxu0 0
  %679 = vmatprep.subr.bf16.mxu0 0
  %680 = vmatpush2.bf16.msra.mxu0 0
  %681 = vmatprep.subr.bf16.mxu0 0
  %682 = vmatpush2.bf16.msra.mxu0 0
  %683 = vmatprep.subr.bf16.mxu0 0
  %684 = vmatpush2.bf16.msra.mxu0 0
  %685 = vmatprep.subr.bf16.mxu0 0
  %686 = vmatpush2.bf16.msra.mxu0 0
  %687 = vmatprep.subr.bf16.mxu0 0
  %688 = vmatpush2.bf16.msra.mxu0 0
  %689 = vmatprep.subr.bf16.mxu0 0
  %690 = vmatpush2.bf16.msra.mxu0 0
  %691 = vmatprep.subr.bf16.mxu0 0
  %692 = vmatpush2.bf16.msra.mxu0 0
  %693 = vmatprep.mubr.bf16.mxu0 0
  %694 = vmatmul.mubr.bf16.gmra.mxu0 %v480
  %v695 = vpop.f32.mrf.mxu0
  %v696 = vadd.f32 %v608, %v695
  %v697 = vpop.f32.mrf.mxu0
  %v698 = vpop.f32.mrf.mxu0
  %v699 = vpop.f32.mrf.mxu0
  %700 = vdwg.mxu0
  %v701 = vld [vmem:[%s479] sm:$0xe]
  %v702 = vld [vmem:[%s479 + $0x4] sm:$0x1]
  %v703 = vld [vmem:[%s1 + $0x80] sm:$0xf]
  %v704 = vld [vmem:[%s1 + $0x84] sm:$0xf]
  %v705 = vld [vmem:[%s1 + $0x88] sm:$0xf]
  %v706 = vld [vmem:[%s1 + $0x8c] sm:$0xf]
  %v707 = vld [vmem:[%s1 + $0x90] sm:$0xf]
  %v708 = vld [vmem:[%s1 + $0x94] sm:$0xf]
  %v709 = vld [vmem:[%s1 + $0x98] sm:$0xf]
  %v710 = vld [vmem:[%s1 + $0x9c] sm:$0xf]
  %v711 = vld [vmem:[%s1 + $0xa0] sm:$0xf]
  %v712 = vld [vmem:[%s1 + $0xa4] sm:$0xf]
  %v713 = vld [vmem:[%s1 + $0xa8] sm:$0xf]
  %v714 = vld [vmem:[%s1 + $0xac] sm:$0xf]
  %v715 = vld [vmem:[%s1 + $0xb0] sm:$0xf]
  %v716 = vld [vmem:[%s1 + $0xb4] sm:$0xf]
  %v717 = vld [vmem:[%s1 + $0xb8] sm:$0xf]
  %v718 = vld [vmem:[%s1 + $0xbc] sm:$0xf]
  %v721 = vunpack.c.l.b16 %v701
  %v722 = vunpack.c.l.b16 %v702
  %v723 = vpack.c.b16 %v722, %v721
  %v725 = vshrl.u32 %v723, 16
  %v727 = vrot.slane %v725, 1
  %v728 = vshll.u32 %v723, 16
  %v730 = vrot.slane %v728, 2
  %v731 = vor.u32 %v727, %v730
  %v749 = vunpack.c.l.b16 %v703
  %v750 = vunpack.c.l.b16 %v704
  %v751 = vunpack.c.l.b16 %v705
  %v752 = vunpack.c.l.b16 %v706
  %v753 = vunpack.c.l.b16 %v707
  %v754 = vunpack.c.l.b16 %v708
  %v755 = vunpack.c.l.b16 %v709
  %v756 = vunpack.c.l.b16 %v710
  %v757 = vunpack.c.l.b16 %v711
  %v758 = vunpack.c.l.b16 %v712
  %v759 = vunpack.c.l.b16 %v713
  %v760 = vunpack.c.l.b16 %v714
  %v761 = vunpack.c.l.b16 %v715
  %v762 = vunpack.c.l.b16 %v716
  %v763 = vunpack.c.l.b16 %v717
  %v764 = vunpack.c.l.b16 %v718
  %v765 = vpack.c.b16 %v750, %v749
  %v766 = vpack.c.b16 %v752, %v751
  %v767 = vpack.c.b16 %v754, %v753
  %v768 = vpack.c.b16 %v756, %v755
  %v769 = vpack.c.b16 %v758, %v757
  %v770 = vpack.c.b16 %v760, %v759
  %v771 = vpack.c.b16 %v762, %v761
  %v772 = vpack.c.b16 %v764, %v763
  %781 = vmatprep.subr.bf16.mxu0 0
  %782 = vmatpush1.bf16.msra.mxu0 %v772
  %783 = vmatprep.subr.bf16.mxu0 0
  %784 = vmatpush1.bf16.msra.mxu0 %v771
  %785 = vmatprep.subr.bf16.mxu0 0
  %786 = vmatpush1.bf16.msra.mxu0 %v770
  %787 = vmatprep.subr.bf16.mxu0 0
  %788 = vmatpush1.bf16.msra.mxu0 %v769
  %789 = vmatprep.subr.bf16.mxu0 0
  %790 = vmatpush1.bf16.msra.mxu0 %v768
  %791 = vmatprep.subr.bf16.mxu0 0
  %792 = vmatpush1.bf16.msra.mxu0 %v767
  %793 = vmatprep.subr.bf16.mxu0 0
  %794 = vmatpush1.bf16.msra.mxu0 %v766
  %795 = vmatprep.subr.bf16.mxu0 0
  %796 = vmatpush1.bf16.msra.mxu0 %v765
  %797 = vmatprep.subr.bf16.mxu0 0
  %798 = vmatpush2.bf16.msra.mxu0 0
  %799 = vmatprep.subr.bf16.mxu0 0
  %800 = vmatpush2.bf16.msra.mxu0 0
  %801 = vmatprep.subr.bf16.mxu0 0
  %802 = vmatpush2.bf16.msra.mxu0 0
  %803 = vmatprep.subr.bf16.mxu0 0
  %804 = vmatpush2.bf16.msra.mxu0 0
  %805 = vmatprep.subr.bf16.mxu0 0
  %806 = vmatpush2.bf16.msra.mxu0 0
  %807 = vmatprep.subr.bf16.mxu0 0
  %808 = vmatpush2.bf16.msra.mxu0 0
  %809 = vmatprep.subr.bf16.mxu0 0
  %810 = vmatpush2.bf16.msra.mxu0 0
  %811 = vmatprep.subr.bf16.mxu0 0
  %812 = vmatpush2.bf16.msra.mxu0 0
  %813 = vmatprep.mubr.bf16.mxu0 0
  %814 = vmatmul.mubr.bf16.gmra.mxu0 %v731
  %v815 = vpop.f32.mrf.mxu0
  %v816 = vadd.f32 0.0, %v815
  %v817 = vpop.f32.mrf.mxu0
  %v818 = vpop.f32.mrf.mxu0
  %v819 = vpop.f32.mrf.mxu0
  %820 = vdwg.mxu0
  %v821 = vadd.f32 %v696, %v816
  %v822 = vld [vmem:[%s479] sm:$0xc]
  %v823 = vld [vmem:[%s1 + $0xc0] sm:$0xf]
  %v824 = vld [vmem:[%s1 + $0xc4] sm:$0xf]
  %v825 = vld [vmem:[%s1 + $0xc8] sm:$0xf]
  %v826 = vld [vmem:[%s1 + $0xcc] sm:$0xf]
  %v827 = vld [vmem:[%s1 + $0xd0] sm:$0xf]
  %v828 = vld [vmem:[%s1 + $0xd4] sm:$0xf]
  %v829 = vld [vmem:[%s1 + $0xd8] sm:$0xf]
  %v830 = vld [vmem:[%s1 + $0xdc] sm:$0xf]
  %v831 = vld [vmem:[%s1 + $0xe0] sm:$0xf]
  %v832 = vld [vmem:[%s1 + $0xe4] sm:$0xf]
  %v833 = vld [vmem:[%s1 + $0xe8] sm:$0xf]
  %v834 = vld [vmem:[%s1 + $0xec] sm:$0xf]
  %v835 = vld [vmem:[%s1 + $0xf0] sm:$0xf]
  %v836 = vld [vmem:[%s1 + $0xf4] sm:$0xf]
  %v837 = vld [vmem:[%s1 + $0xf8] sm:$0xf]
  %v838 = vld [vmem:[%s1 + $0xfc] sm:$0xf]
  %v840 = vunpack.c.l.b16 %v822
  %v841 = vpack.c.b16 %v722, %v840
  %v842 = vrot.slane %v841, 2
  %v860 = vunpack.c.l.b16 %v823
  %v861 = vunpack.c.l.b16 %v824
  %v862 = vunpack.c.l.b16 %v825
  %v863 = vunpack.c.l.b16 %v826
  %v864 = vunpack.c.l.b16 %v827
  %v865 = vunpack.c.l.b16 %v828
  %v866 = vunpack.c.l.b16 %v829
  %v867 = vunpack.c.l.b16 %v830
  %v868 = vunpack.c.l.b16 %v831
  %v869 = vunpack.c.l.b16 %v832
  %v870 = vunpack.c.l.b16 %v833
  %v871 = vunpack.c.l.b16 %v834
  %v872 = vunpack.c.l.b16 %v835
  %v873 = vunpack.c.l.b16 %v836
  %v874 = vunpack.c.l.b16 %v837
  %v875 = vunpack.c.l.b16 %v838
  %v876 = vpack.c.b16 %v861, %v860
  %v877 = vpack.c.b16 %v863, %v862
  %v878 = vpack.c.b16 %v865, %v864
  %v879 = vpack.c.b16 %v867, %v866
  %v880 = vpack.c.b16 %v869, %v868
  %v881 = vpack.c.b16 %v871, %v870
  %v882 = vpack.c.b16 %v873, %v872
  %v883 = vpack.c.b16 %v875, %v874
  %892 = vmatprep.subr.bf16.mxu0 0
  %893 = vmatpush1.bf16.msra.mxu0 %v883
  %894 = vmatprep.subr.bf16.mxu0 0
  %895 = vmatpush1.bf16.msra.mxu0 %v882
  %896 = vmatprep.subr.bf16.mxu0 0
  %897 = vmatpush1.bf16.msra.mxu0 %v881
  %898 = vmatprep.subr.bf16.mxu0 0
  %899 = vmatpush1.bf16.msra.mxu0 %v880
  %900 = vmatprep.subr.bf16.mxu0 0
  %901 = vmatpush1.bf16.msra.mxu0 %v879
  %902 = vmatprep.subr.bf16.mxu0 0
  %903 = vmatpush1.bf16.msra.mxu0 %v878
  %904 = vmatprep.subr.bf16.mxu0 0
  %905 = vmatpush1.bf16.msra.mxu0 %v877
  %906 = vmatprep.subr.bf16.mxu0 0
  %907 = vmatpush1.bf16.msra.mxu0 %v876
  %908 = vmatprep.subr.bf16.mxu0 0
  %909 = vmatpush2.bf16.msra.mxu0 0
  %910 = vmatprep.subr.bf16.mxu0 0
  %911 = vmatpush2.bf16.msra.mxu0 0
  %912 = vmatprep.subr.bf16.mxu0 0
  %913 = vmatpush2.bf16.msra.mxu0 0
  %914 = vmatprep.subr.bf16.mxu0 0
  %915 = vmatpush2.bf16.msra.mxu0 0
  %916 = vmatprep.subr.bf16.mxu0 0
  %917 = vmatpush2.bf16.msra.mxu0 0
  %918 = vmatprep.subr.bf16.mxu0 0
  %919 = vmatpush2.bf16.msra.mxu0 0
  %920 = vmatprep.subr.bf16.mxu0 0
  %921 = vmatpush2.bf16.msra.mxu0 0
  %922 = vmatprep.subr.bf16.mxu0 0
  %923 = vmatpush2.bf16.msra.mxu0 0
  %924 = vmatprep.mubr.bf16.mxu0 0
  %925 = vmatmul.mubr.bf16.gmra.mxu0 %v842
  %v926 = vpop.f32.mrf.mxu0
  %v927 = vadd.f32 0.0, %v926
  %v928 = vpop.f32.mrf.mxu0
  %v929 = vpop.f32.mrf.mxu0
  %v930 = vpop.f32.mrf.mxu0
  %931 = vdwg.mxu0
  %v932 = vadd.f32 %v821, %v927
  %v933 = vadd.f32 %v932, %v473
  %v934 = vmax.f32 %v933, 0.0
  %s935 = scalar_lea.vmem %s3, 8
  %936 = vst.msk [vmem:[%s935] sm:$0x3f] %vm477, %v934
  // Predicated region
  $region14: #{observation_encoder_forward.7} parent=0 // pred_check
    _
  $region15: #{observation_encoder_forward.7} parent=0 // pred_check_branch
    %938 = sbr.rel (0) target = $region17
  $region16: #{observation_encoder_forward.7} parent=0 // pred_region
    _
  $region17: #{observation_encoder_forward.7} parent=0 // pred_fallthru
    _
  // Predicated region
  $region18: #{observation_encoder_forward.7} parent=0 // pred_check
    _
  $region19: #{observation_encoder_forward.7} parent=0 // pred_check_branch
    %940 = sbr.rel (0) target = $region21
  $region20: #{observation_encoder_forward.7} parent=0 // pred_region
    _
  $region21: #{observation_encoder_forward.7} parent=0 // pred_fallthru
    _

</llo_original>
